<compile_context>
chip_gen: v5e
topology: v5e:2x2
jax: 0.10.0
libtpu: 0.0.40
codegen_flags: <defaults>
</compile_context>

<pallas_src>
import functools

import numpy as np
import jax
import jax.numpy as jnp
from jax.experimental import pallas as pl
from jax.experimental.pallas import tpu as pltpu


def _round_up8(n):
    return ((n + 7) // 8) * 8


# ----------------------------------------------------------------------------
# Host-side static constants (built once per call, passed with constant index_maps)
# ----------------------------------------------------------------------------
def _build_tap_masks(H, W, bpg):
    """(8, bpg*H*W) f32 validity masks for the 8 non-center 3x3 taps, tiled over bpg."""
    L = H * W
    n = np.arange(L)
    i, j = n // W, n % W
    rows = []
    for dy in (-1, 0, 1):
        for dx in (-1, 0, 1):
            if dy == 0 and dx == 0:
                continue
            valid = ((i + dy >= 0) & (i + dy < H) & (j + dx >= 0) & (j + dx < W))
            rows.append(np.tile(valid.astype(np.float32), bpg))
    return jnp.asarray(np.stack(rows, axis=0))


def _build_group_matrix(C, groups, L):
    """Fused group-averaging matrix A (C, C): A @ per-channel-sums = per-channel group mean."""
    cg = C // groups
    g = np.arange(C) // cg
    A = (g[:, None] == g[None, :]).astype(np.float32) / float(cg * L)
    return jnp.asarray(A)


# ----------------------------------------------------------------------------
# In-kernel building blocks (channels-first; activations are (C, N), N = bpg*H*W)
# ----------------------------------------------------------------------------
def _conv3x3(h, wt_ref, b_ref, tap_masks, tap_shifts):
    """3x3 'same' conv as one im2col matmul. Taps cast to bf16 before the concat."""
    cols = []
    for mask, shift in zip(tap_masks, tap_shifts):
        if mask is None:                                   # center tap
            cols.append(h.astype(jnp.bfloat16))
        else:
            shifted = pltpu.roll(h, shift=shift, axis=1)   # lane rotation (XLU)
            cols.append((shifted * mask).astype(jnp.bfloat16))
    patches = jnp.concatenate(cols, axis=0)                # (9*Cin, N) bf16
    y = jnp.dot(wt_ref[...], patches, preferred_element_type=jnp.float32)
    return y + b_ref[...]


def _groupnorm_silu(h, gamma_ref, beta_ref, A, bpg, L, eps=1e-5, silu=True):
    """Single-pass GroupNorm (PyTorch semantics) + optional SiLU, per-sample over lane blocks."""
    cols = []
    for b in range(bpg):
        hs = h[:, b * L:(b + 1) * L]
        cols.append(jnp.sum(hs, axis=1, keepdims=True))            # per-channel sum
        cols.append(jnp.sum(hs * hs, axis=1, keepdims=True))       # per-channel sum-of-squares
    stats = jnp.concatenate(cols, axis=1)                          # (C, 2*bpg)
    gstats = jnp.dot(A, stats, preferred_element_type=jnp.float32) # group mean / E[x^2] per channel
    outs = []
    for b in range(bpg):
        mean_c = gstats[:, 2 * b:2 * b + 1]
        var_c = gstats[:, 2 * b + 1:2 * b + 2] - mean_c * mean_c
        hs = h[:, b * L:(b + 1) * L]
        outs.append((hs - mean_c) * jax.lax.rsqrt(var_c + eps))
    y = jnp.concatenate(outs, axis=1) if bpg > 1 else outs[0]
    y = y * gamma_ref[...] + beta_ref[...]
    if silu:
        y = y * jax.nn.sigmoid(y)
    return y


def _cross_attn(h, ctx_ref, ctxT_ref, wqT_ref, wk_ref, wvT_ref, woT_ref, scale, bpg, L):
    """Single-head cross-attention with residual. q / out projections amortized over bpg*L lanes."""
    qT = jnp.dot(wqT_ref[...], h.astype(jnp.bfloat16),
                 preferred_element_type=jnp.float32)                        # (d, N)
    a_cols = []
    for b in range(bpg):                                                    # per-sample context
        k = jnp.dot(ctx_ref[b].astype(jnp.bfloat16), wk_ref[...],
                    preferred_element_type=jnp.float32)                     # (S, d)
        vT = jnp.dot(wvT_ref[...], ctxT_ref[b].astype(jnp.bfloat16),
                     preferred_element_type=jnp.float32)                    # (d, S)
        sT = jnp.dot(k.astype(jnp.bfloat16),
                     qT[:, b * L:(b + 1) * L].astype(jnp.bfloat16),
                     preferred_element_type=jnp.float32) * scale            # (S, L)
        sT = sT - jnp.max(sT, axis=0, keepdims=True)                        # softmax over S
        p = jnp.exp(sT)
        p = p * pl.reciprocal(jnp.sum(p, axis=0, keepdims=True), approx=True)
        a_cols.append(jnp.dot(vT.astype(jnp.bfloat16), p.astype(jnp.bfloat16),
                              preferred_element_type=jnp.float32))          # (d, L)
    aT = jnp.concatenate(a_cols, axis=1) if bpg > 1 else a_cols[0]          # (d, N)
    oT = jnp.dot(woT_ref[...], aT.astype(jnp.bfloat16),
                 preferred_element_type=jnp.float32)                        # (C, N)
    return h + oT


# ----------------------------------------------------------------------------
# Fused forward kernel: one grid step == bpg batch elements, all VMEM-resident.
# ----------------------------------------------------------------------------
def _unet_fused_kernel(*refs, H, W, bpg, attn_scale, use_context):
    L = H * W
    N = bpg * L

    it = iter(refs)
    x_ref = next(it)            # (1, Cin_pad, N)
    emb_ref = next(it)          # (bpg, C, 1)  -- precomputed time-MLP + emb projection
    if use_context:
        ctx_ref = next(it)      # (bpg, S, Cc)
        ctxT_ref = next(it)     # (bpg, Cc, S)
    masks_ref = next(it)        # (8, N) f32 tap masks (constant)
    A_ref = next(it)            # (C, C) f32 group-averaging matrix (constant)
    wci_ref, bci_ref = next(it), next(it)
    g1_ref, be1_ref, wc1_ref, bc1_ref = next(it), next(it), next(it), next(it)
    g2_ref, be2_ref, wc2_ref, bc2_ref = next(it), next(it), next(it), next(it)
    if use_context:
        wqT_ref, wk_ref, wvT_ref, woT_ref = next(it), next(it), next(it), next(it)
    go_ref, bo_ref, wco_ref, bco_ref = next(it), next(it), next(it), next(it)
    out_ref = next(it)          # (1, Cout_pad, N)

    C = wci_ref.shape[0]
    masks_all = masks_ref[...]
    A = A_ref[...]

    # Static tap ordering must match the (Cout, 3, 3, Cin) weight reshape order.
    tap_masks, tap_shifts = [], []
    mrow = 0
    for dy in (-1, 0, 1):
        for dx in (-1, 0, 1):
            if dy == 0 and dx == 0:
                tap_masks.append(None)
                tap_shifts.append(0)
            else:
                tap_masks.append(masks_all[mrow])
                tap_shifts.append((-(dy * W + dx)) % N)
                mrow += 1

    # --- input conv -----------------------------------------------------------
    x = x_ref[0].astype(jnp.float32)                                        # (Cin_pad, N)
    h = _conv3x3(x, wci_ref, bci_ref, tap_masks, tap_shifts)                # (C, N)

    # --- ResBlock with time-embedding injection -------------------------------
    hh = _groupnorm_silu(h, g1_ref, be1_ref, A, bpg, L)
    hh = _conv3x3(hh, wc1_ref, bc1_ref, tap_masks, tap_shifts)
    if bpg > 1:
        emb_full = jnp.concatenate(
            [jnp.broadcast_to(emb_ref[b], (C, L)) for b in range(bpg)], axis=1)
    else:
        emb_full = jnp.broadcast_to(emb_ref[0], (C, L))
    hh = hh + emb_full
    hh = _groupnorm_silu(hh, g2_ref, be2_ref, A, bpg, L)
    hh = _conv3x3(hh, wc2_ref, bc2_ref, tap_masks, tap_shifts)
    h = h + hh

    # --- cross-attention over conditioning tokens (slots) ---------------------
    if use_context:
        h = _cross_attn(h, ctx_ref, ctxT_ref, wqT_ref, wk_ref, wvT_ref, woT_ref,
                        attn_scale, bpg, L)

    # --- output head -----------------------------------------------------------
    h = _groupnorm_silu(h, go_ref, bo_ref, A, bpg, L)
    out_ref[0] = _conv3x3(h, wco_ref, bco_ref, tap_masks, tap_shifts)       # (Cout_pad, N)


# ----------------------------------------------------------------------------
# Synthetic UNetModel: plain-JAX glue + param preparation around the fused kernel
# ----------------------------------------------------------------------------
def timestep_embedding(t, dim, max_period=10000.0):
    half = dim // 2
    freqs = jnp.exp(-jnp.log(max_period) * jnp.arange(half, dtype=jnp.float32) / half)
    args = t.astype(jnp.float32)[:, None] * freqs[None, :]
    return jnp.concatenate([jnp.cos(args), jnp.sin(args)], axis=-1)   # (B, dim)


class UNetModel:
    """Compact deterministic stand-in for the LDM openai UNetModel."""

    def __init__(self, in_channels, model_channels, out_channels,
                 context_dim, num_groups=8):
        assert model_channels % num_groups == 0
        self.in_channels = in_channels
        self.mc = model_channels
        self.out_channels = out_channels
        self.context_dim = context_dim
        self.groups = num_groups
        self.cin_pad = _round_up8(in_channels)     # 8-sublane-aligned conv_in tap slabs
        self.cout_pad = _round_up8(out_channels)   # 8-sublane-aligned output tile

        mc, emb = model_channels, 4 * model_channels
        key = jax.random.PRNGKey(1234)

        def nrm(k, shape, std=0.05):
            return (std * jax.random.normal(k, shape)).astype(jnp.float32)

        ks = jax.random.split(key, 16)
        self.p = {
            "time_w1": nrm(ks[0], (mc, emb)), "time_b1": jnp.zeros((emb,), jnp.float32),
            "time_w2": nrm(ks[1], (emb, emb)), "time_b2": jnp.zeros((emb,), jnp.float32),
            "conv_in_w": nrm(ks[2], (3, 3, in_channels, mc)),
            "conv_in_b": jnp.zeros((mc,), jnp.float32),
            "rb_gn1_g": jnp.ones((mc,), jnp.float32), "rb_gn1_b": jnp.zeros((mc,), jnp.float32),
            "rb_conv1_w": nrm(ks[3], (3, 3, mc, mc)), "rb_conv1_b": jnp.zeros((mc,), jnp.float32),
            "rb_emb_w": nrm(ks[4], (emb, mc)), "rb_emb_b": jnp.zeros((mc,), jnp.float32),
            "rb_gn2_g": jnp.ones((mc,), jnp.float32), "rb_gn2_b": jnp.zeros((mc,), jnp.float32),
            "rb_conv2_w": nrm(ks[5], (3, 3, mc, mc)), "rb_conv2_b": jnp.zeros((mc,), jnp.float32),
            "attn_wq": nrm(ks[6], (mc, mc)), "attn_wk": nrm(ks[7], (context_dim, mc)),
            "attn_wv": nrm(ks[8], (context_dim, mc)), "attn_wo": nrm(ks[9], (mc, mc)),
            "out_gn_g": jnp.ones((mc,), jnp.float32), "out_gn_b": jnp.zeros((mc,), jnp.float32),
            "conv_out_w": nrm(ks[10], (3, 3, mc, out_channels)),
            "conv_out_b": jnp.zeros((out_channels,), jnp.float32),
        }
        self._prepare_kernel_params()

    def _prepare_kernel_params(self):
        """One-time re-layout of params into kernel-friendly orientations/dtypes."""
        p = self.p

        def conv_layout(w):   # (3,3,Cin,Cout) HWIO -> (Cout, 9*Cin) bf16, tap-major
            cout = w.shape[3]
            return jnp.transpose(w, (3, 0, 1, 2)).reshape(cout, -1).astype(jnp.bfloat16)

        def col(v):           # (N,) -> (N, 1) f32 column
            return v.reshape(-1, 1).astype(jnp.float32)

        # Zero-pad conv_in input channels and conv_out output channels to 8-granule.
        w_in = jnp.pad(p["conv_in_w"],
                       ((0, 0), (0, 0), (0, self.cin_pad - self.in_channels), (0, 0)))
        w_out = jnp.pad(p["conv_out_w"],
                        ((0, 0), (0, 0), (0, 0), (0, self.cout_pad - self.out_channels)))
        b_out = jnp.pad(p["conv_out_b"], (0, self.cout_pad - self.out_channels))

        self.kp = dict(
            wci=conv_layout(w_in), bci=col(p["conv_in_b"]),
            g1=col(p["rb_gn1_g"]), be1=col(p["rb_gn1_b"]),
            wc1=conv_layout(p["rb_conv1_w"]), bc1=col(p["rb_conv1_b"]),
            g2=col(p["rb_gn2_g"]), be2=col(p["rb_gn2_b"]),
            wc2=conv_layout(p["rb_conv2_w"]), bc2=col(p["rb_conv2_b"]),
            wqT=p["attn_wq"].T.astype(jnp.bfloat16),
            wk=p["attn_wk"].astype(jnp.bfloat16),
            wvT=p["attn_wv"].T.astype(jnp.bfloat16),
            woT=p["attn_wo"].T.astype(jnp.bfloat16),
            go=col(p["out_gn_g"]), bo=col(p["out_gn_b"]),
            wco=conv_layout(w_out), bco=col(b_out),
        )
        self._w_head = ["wci", "bci", "g1", "be1", "wc1", "bc1",
                        "g2", "be2", "wc2", "bc2"]
        self._w_attn = ["wqT", "wk", "wvT", "woT"]
        self._w_tail = ["go", "bo", "wco", "bco"]

    def __call__(self, x, t, context=None):
        # x: (B, C, H, W) NCHW in, NCHW out (PyTorch convention).
        kp, p = self.kp, self.p
        B, Cin, H, W = x.shape
        assert Cin == self.in_channels
        L = H * W
        mc = self.mc
        use_context = context is not None

        # Fold bpg samples into the lane dim per grid step (amortizes MXU weight pushes).
        bpg = 2 if (B >= 2 and B % 2 == 0) else 1
        G = B // bpg
        N = bpg * L
        cin_pad, cout_pad = self.cin_pad, self.cout_pad

        # --- time-embedding MLP + ResBlock emb projection: hoisted, batched XLA matmuls ---
        t_emb = timestep_embedding(t, mc)                                  # (B, mc)
        e = t_emb @ p["time_w1"] + p["time_b1"]
        e = jax.nn.silu(e) @ p["time_w2"] + p["time_b2"]
        emb_out = jax.nn.silu(e) @ p["rb_emb_w"] + p["rb_emb_b"]           # (B, mc)
        emb_cols = emb_out.reshape(B, mc, 1).astype(jnp.float32)

        # --- NCHW -> padded channels-first, batch folded into lanes -----------------------
        x_cf = x.reshape(B, Cin, L).astype(jnp.float32)
        if cin_pad > Cin:
            x_cf = jnp.pad(x_cf, ((0, 0), (0, cin_pad - Cin), (0, 0)))
        x_folded = (x_cf.reshape(G, bpg, cin_pad, L)
                        .transpose(0, 2, 1, 3)
                        .reshape(G, cin_pad, N))

        # --- static constants (once per call, constant index_maps) ------------------------
        masks = _build_tap_masks(H, W, bpg)                                # (8, N)
        A = _build_group_matrix(mc, self.groups, L)                        # (mc, mc)

        operands = [x_folded, emb_cols]
        in_specs = [
            pl.BlockSpec((1, cin_pad, N), lambda g: (g, 0, 0)),
            pl.BlockSpec((bpg, mc, 1), lambda g: (g, 0, 0)),
        ]
        if use_context:
            ctx = context.astype(jnp.float32)                              # (B, S, Cc)
            ctxT = jnp.transpose(ctx, (0, 2, 1))                           # (B, Cc, S)
            operands += [ctx, ctxT]
            in_specs += [
                pl.BlockSpec((bpg,) + ctx.shape[1:], lambda g: (g, 0, 0)),
                pl.BlockSpec((bpg,) + ctxT.shape[1:], lambda g: (g, 0, 0)),
            ]

        def const_spec(arr):
            zeros = (0,) * arr.ndim
            return pl.BlockSpec(arr.shape, lambda g, _z=zeros: _z)
            # TODO(synk): at LDM scale on v7x, add pipeline_mode=pl.Buffered(1) here so
            #             constant weights are not double-buffered in the 64 MiB VMEM.

        names = self._w_head + (self._w_attn if use_context else []) + self._w_tail
        weights = [kp[n] for n in names]
        operands += [masks, A] + weights
        in_specs += [const_spec(masks), const_spec(A)] + [const_spec(w) for w in weights]

        d = kp["wqT"].shape[0]
        kernel = functools.partial(
            _unet_fused_kernel, H=H, W=W, bpg=bpg,
            attn_scale=1.0 / float(d) ** 0.5, use_context=use_context)

        out = pl.pallas_call(
            kernel,
            out_shape=jax.ShapeDtypeStruct((G, cout_pad, N), jnp.float32),
            grid=(G,),
            in_specs=in_specs,
            out_specs=pl.BlockSpec((1, cout_pad, N), lambda g: (g, 0, 0)),
            compiler_params=pltpu.CompilerParams(
                dimension_semantics=("parallel",),          # grid steps across TCs on v7x
                vmem_limit_bytes=64 * 1024 * 1024),
        )(*operands)

        # Unfold lanes -> batch, drop the channel padding, back to NCHW.
        out = (out.reshape(G, cout_pad, bpg, L)
                  .transpose(0, 2, 1, 3)
                  .reshape(B, cout_pad, L)[:, :self.out_channels, :]
                  .reshape(B, self.out_channels, H, W))
        return out


# ----------------------------------------------------------------------------
# DiffusionWrapper — exact reproduction of the PyTorch forward dispatch
# ----------------------------------------------------------------------------
def _is_list_tuple(x):
    return isinstance(x, (list, tuple))


class DiffusionWrapper:
    """A wrapper for forwarding the diffusion model. Cond/Unconditional one."""

    def __init__(self, diff_model_config, conditioning_key):
        self.diffusion_model = UNetModel(**diff_model_config)
        self.conditioning_key = conditioning_key
        assert self.conditioning_key in [None, 'concat', 'crossattn']

    def __call__(self, x, t, context=None):
        if self.conditioning_key is None:
            return self.diffusion_model(x, t)
        assert context is not None, 'Please provide conditioning data'
        if self.conditioning_key == 'concat':
            if not _is_list_tuple(context):
                context = [context]
            xc = jnp.concatenate([x] + list(context), axis=1)   # NCHW channel dim
            out = self.diffusion_model(xc, t)
        elif self.conditioning_key == 'crossattn':
            if _is_list_tuple(context):
                context = jnp.concatenate(list(context), axis=1)
            out = self.diffusion_model(x, t, context=context)
        else:
            raise NotImplementedError
        return out


# ----------------------------------------------------------------------------
if __name__ == "__main__":
    key = jax.random.PRNGKey(0)
    kx, kt, kc = jax.random.split(key, 3)

    B, Cin, H, W = 2, 4, 16, 16
    S, Cctx = 8, 32

    x = jax.random.normal(kx, (B, Cin, H, W), dtype=jnp.float32)        # NCHW input
    t = jax.random.randint(kt, (B,), 0, 1000, dtype=jnp.int32)
    context = jax.random.normal(kc, (B, S, Cctx), dtype=jnp.float32)    # slot tokens

    cfg = dict(in_channels=Cin, model_channels=32, out_channels=Cin,
               context_dim=Cctx, num_groups=8)
    wrapper = DiffusionWrapper(cfg, 'crossattn')

    out = wrapper(x, t, context=context)
    out = jax.block_until_ready(out)

    assert out.shape == (B, Cin, H, W) and out.dtype == jnp.float32
    assert bool(jnp.all(jnp.isfinite(out)))
    print("KERNEL_OK")
</pallas_src>

<mosaic_0001>
module attributes {stable_mosaic.version = 11 : i64} {
  func.func @_unet_fused_kernel(%arg0: i32, %arg1: memref<1x8x512xf32, #tpu.memory_space<vmem>>, %arg2: memref<2x32x1xf32, #tpu.memory_space<vmem>>, %arg3: memref<2x8x32xf32, #tpu.memory_space<vmem>>, %arg4: memref<2x32x8xf32, #tpu.memory_space<vmem>>, %arg5: memref<8x512xf32, #tpu.memory_space<vmem>>, %arg6: memref<32x32xf32, #tpu.memory_space<vmem>>, %arg7: memref<32x72xbf16, #tpu.memory_space<vmem>>, %arg8: memref<32x1xf32, #tpu.memory_space<vmem>>, %arg9: memref<32x1xf32, #tpu.memory_space<vmem>>, %arg10: memref<32x1xf32, #tpu.memory_space<vmem>>, %arg11: memref<32x288xbf16, #tpu.memory_space<vmem>>, %arg12: memref<32x1xf32, #tpu.memory_space<vmem>>, %arg13: memref<32x1xf32, #tpu.memory_space<vmem>>, %arg14: memref<32x1xf32, #tpu.memory_space<vmem>>, %arg15: memref<32x288xbf16, #tpu.memory_space<vmem>>, %arg16: memref<32x1xf32, #tpu.memory_space<vmem>>, %arg17: memref<32x32xbf16, #tpu.memory_space<vmem>>, %arg18: memref<32x32xbf16, #tpu.memory_space<vmem>>, %arg19: memref<32x32xbf16, #tpu.memory_space<vmem>>, %arg20: memref<32x32xbf16, #tpu.memory_space<vmem>>, %arg21: memref<32x1xf32, #tpu.memory_space<vmem>>, %arg22: memref<32x1xf32, #tpu.memory_space<vmem>>, %arg23: memref<8x288xbf16, #tpu.memory_space<vmem>>, %arg24: memref<8x1xf32, #tpu.memory_space<vmem>>, %arg25: memref<1x8x512xf32, #tpu.memory_space<vmem>>) attributes {dimension_semantics = [#tpu.dimension_semantics<parallel>], iteration_bounds = array<i64: 1>, scalar_prefetch = 0 : i64, scratch_operands = 0 : i64, tpu.core_type = #tpu.core_type<tc>, window_params = [{transform_indices = @transform_0, window_bounds = array<i64: 1, 8, 512>}, {transform_indices = @transform_1, window_bounds = array<i64: 2, 32, 1>}, {transform_indices = @transform_2, window_bounds = array<i64: 2, 8, 32>}, {transform_indices = @transform_3, window_bounds = array<i64: 2, 32, 8>}, {pipeline_mode = #tpu.pipeline_mode<synchronous>, transform_indices = @transform_4, window_bounds = array<i64: 8, 512>}, {pipeline_mode = #tpu.pipeline_mode<synchronous>, transform_indices = @transform_5, window_bounds = array<i64: 32, 32>}, {pipeline_mode = #tpu.pipeline_mode<synchronous>, transform_indices = @transform_6, window_bounds = array<i64: 32, 72>}, {pipeline_mode = #tpu.pipeline_mode<synchronous>, transform_indices = @transform_7, window_bounds = array<i64: 32, 1>}, {pipeline_mode = #tpu.pipeline_mode<synchronous>, transform_indices = @transform_8, window_bounds = array<i64: 32, 1>}, {pipeline_mode = #tpu.pipeline_mode<synchronous>, transform_indices = @transform_9, window_bounds = array<i64: 32, 1>}, {pipeline_mode = #tpu.pipeline_mode<synchronous>, transform_indices = @transform_10, window_bounds = array<i64: 32, 288>}, {pipeline_mode = #tpu.pipeline_mode<synchronous>, transform_indices = @transform_11, window_bounds = array<i64: 32, 1>}, {pipeline_mode = #tpu.pipeline_mode<synchronous>, transform_indices = @transform_12, window_bounds = array<i64: 32, 1>}, {pipeline_mode = #tpu.pipeline_mode<synchronous>, transform_indices = @transform_13, window_bounds = array<i64: 32, 1>}, {pipeline_mode = #tpu.pipeline_mode<synchronous>, transform_indices = @transform_14, window_bounds = array<i64: 32, 288>}, {pipeline_mode = #tpu.pipeline_mode<synchronous>, transform_indices = @transform_15, window_bounds = array<i64: 32, 1>}, {pipeline_mode = #tpu.pipeline_mode<synchronous>, transform_indices = @transform_16, window_bounds = array<i64: 32, 32>}, {pipeline_mode = #tpu.pipeline_mode<synchronous>, transform_indices = @transform_17, window_bounds = array<i64: 32, 32>}, {pipeline_mode = #tpu.pipeline_mode<synchronous>, transform_indices = @transform_18, window_bounds = array<i64: 32, 32>}, {pipeline_mode = #tpu.pipeline_mode<synchronous>, transform_indices = @transform_19, window_bounds = array<i64: 32, 32>}, {pipeline_mode = #tpu.pipeline_mode<synchronous>, transform_indices = @transform_20, window_bounds = array<i64: 32, 1>}, {pipeline_mode = #tpu.pipeline_mode<synchronous>, transform_indices = @transform_21, window_bounds = array<i64: 32, 1>}, {pipeline_mode = #tpu.pipeline_mode<synchronous>, transform_indices = @transform_22, window_bounds = array<i64: 8, 288>}, {pipeline_mode = #tpu.pipeline_mode<synchronous>, transform_indices = @transform_23, window_bounds = array<i64: 8, 1>}, {transform_indices = @transform_24, window_bounds = array<i64: 1, 8, 512>}]} {
    %c0 = arith.constant 0 : index
    %c0_0 = arith.constant 0 : index
    %0 = vector.load %arg5[%c0, %c0_0] : memref<8x512xf32, #tpu.memory_space<vmem>>, vector<8x512xf32>
    %c0_1 = arith.constant 0 : index
    %c0_2 = arith.constant 0 : index
    %1 = vector.load %arg6[%c0_1, %c0_2] : memref<32x32xf32, #tpu.memory_space<vmem>>, vector<32x32xf32>
    %2 = vector.extract_strided_slice %0 {offsets = [0, 0], sizes = [1, 512], strides = [1, 1]} : vector<8x512xf32> to vector<1x512xf32>
    %3 = vector.shape_cast %2 : vector<1x512xf32> to vector<512xf32>
    %4 = vector.extract_strided_slice %0 {offsets = [1, 0], sizes = [1, 512], strides = [1, 1]} : vector<8x512xf32> to vector<1x512xf32>
    %5 = vector.shape_cast %4 : vector<1x512xf32> to vector<512xf32>
    %6 = vector.extract_strided_slice %0 {offsets = [2, 0], sizes = [1, 512], strides = [1, 1]} : vector<8x512xf32> to vector<1x512xf32>
    %7 = vector.shape_cast %6 : vector<1x512xf32> to vector<512xf32>
    %8 = vector.extract_strided_slice %0 {offsets = [3, 0], sizes = [1, 512], strides = [1, 1]} : vector<8x512xf32> to vector<1x512xf32>
    %9 = vector.shape_cast %8 : vector<1x512xf32> to vector<512xf32>
    %10 = vector.extract_strided_slice %0 {offsets = [4, 0], sizes = [1, 512], strides = [1, 1]} : vector<8x512xf32> to vector<1x512xf32>
    %11 = vector.shape_cast %10 : vector<1x512xf32> to vector<512xf32>
    %12 = vector.extract_strided_slice %0 {offsets = [5, 0], sizes = [1, 512], strides = [1, 1]} : vector<8x512xf32> to vector<1x512xf32>
    %13 = vector.shape_cast %12 : vector<1x512xf32> to vector<512xf32>
    %14 = vector.extract_strided_slice %0 {offsets = [6, 0], sizes = [1, 512], strides = [1, 1]} : vector<8x512xf32> to vector<1x512xf32>
    %15 = vector.shape_cast %14 : vector<1x512xf32> to vector<512xf32>
    %16 = vector.extract_strided_slice %0 {offsets = [7, 0], sizes = [1, 512], strides = [1, 1]} : vector<8x512xf32> to vector<1x512xf32>
    %17 = vector.shape_cast %16 : vector<1x512xf32> to vector<512xf32>
    %c0_3 = arith.constant 0 : index
    %c0_4 = arith.constant 0 : index
    %c0_5 = arith.constant 0 : index
    %18 = vector.load %arg1[%c0_3, %c0_4, %c0_5] : memref<1x8x512xf32, #tpu.memory_space<vmem>>, vector<1x8x512xf32>
    %19 = vector.shape_cast %18 : vector<1x8x512xf32> to vector<8x512xf32>
    %c17_i32 = arith.constant 17 : i32
    %20 = tpu.dynamic_rotate %19 by %c17_i32 dim 1 : vector<8x512xf32>, i32 -> vector<8x512xf32>
    %21 = vector.shape_cast %3 : vector<512xf32> to vector<1x512xf32>
    %22 = vector.broadcast %21 : vector<1x512xf32> to vector<8x512xf32>
    %23 = arith.mulf %20, %22 : vector<8x512xf32>
    %24 = arith.truncf %23 : vector<8x512xf32> to vector<8x512xbf16>
    %c16_i32 = arith.constant 16 : i32
    %25 = tpu.dynamic_rotate %19 by %c16_i32 dim 1 : vector<8x512xf32>, i32 -> vector<8x512xf32>
    %26 = vector.shape_cast %5 : vector<512xf32> to vector<1x512xf32>
    %27 = vector.broadcast %26 : vector<1x512xf32> to vector<8x512xf32>
    %28 = arith.mulf %25, %27 : vector<8x512xf32>
    %29 = arith.truncf %28 : vector<8x512xf32> to vector<8x512xbf16>
    %c15_i32 = arith.constant 15 : i32
    %30 = tpu.dynamic_rotate %19 by %c15_i32 dim 1 : vector<8x512xf32>, i32 -> vector<8x512xf32>
    %31 = vector.shape_cast %7 : vector<512xf32> to vector<1x512xf32>
    %32 = vector.broadcast %31 : vector<1x512xf32> to vector<8x512xf32>
    %33 = arith.mulf %30, %32 : vector<8x512xf32>
    %34 = arith.truncf %33 : vector<8x512xf32> to vector<8x512xbf16>
    %c1_i32 = arith.constant 1 : i32
    %35 = tpu.dynamic_rotate %19 by %c1_i32 dim 1 : vector<8x512xf32>, i32 -> vector<8x512xf32>
    %36 = vector.shape_cast %9 : vector<512xf32> to vector<1x512xf32>
    %37 = vector.broadcast %36 : vector<1x512xf32> to vector<8x512xf32>
    %38 = arith.mulf %35, %37 : vector<8x512xf32>
    %39 = arith.truncf %38 : vector<8x512xf32> to vector<8x512xbf16>
    %40 = arith.truncf %19 : vector<8x512xf32> to vector<8x512xbf16>
    %c511_i32 = arith.constant 511 : i32
    %41 = tpu.dynamic_rotate %19 by %c511_i32 dim 1 : vector<8x512xf32>, i32 -> vector<8x512xf32>
    %42 = vector.shape_cast %11 : vector<512xf32> to vector<1x512xf32>
    %43 = vector.broadcast %42 : vector<1x512xf32> to vector<8x512xf32>
    %44 = arith.mulf %41, %43 : vector<8x512xf32>
    %45 = arith.truncf %44 : vector<8x512xf32> to vector<8x512xbf16>
    %c497_i32 = arith.constant 497 : i32
    %46 = tpu.dynamic_rotate %19 by %c497_i32 dim 1 : vector<8x512xf32>, i32 -> vector<8x512xf32>
    %47 = vector.shape_cast %13 : vector<512xf32> to vector<1x512xf32>
    %48 = vector.broadcast %47 : vector<1x512xf32> to vector<8x512xf32>
    %49 = arith.mulf %46, %48 : vector<8x512xf32>
    %50 = arith.truncf %49 : vector<8x512xf32> to vector<8x512xbf16>
    %c496_i32 = arith.constant 496 : i32
    %51 = tpu.dynamic_rotate %19 by %c496_i32 dim 1 : vector<8x512xf32>, i32 -> vector<8x512xf32>
    %52 = vector.shape_cast %15 : vector<512xf32> to vector<1x512xf32>
    %53 = vector.broadcast %52 : vector<1x512xf32> to vector<8x512xf32>
    %54 = arith.mulf %51, %53 : vector<8x512xf32>
    %55 = arith.truncf %54 : vector<8x512xf32> to vector<8x512xbf16>
    %c495_i32 = arith.constant 495 : i32
    %56 = tpu.dynamic_rotate %19 by %c495_i32 dim 1 : vector<8x512xf32>, i32 -> vector<8x512xf32>
    %57 = vector.shape_cast %17 : vector<512xf32> to vector<1x512xf32>
    %58 = vector.broadcast %57 : vector<1x512xf32> to vector<8x512xf32>
    %59 = arith.mulf %56, %58 : vector<8x512xf32>
    %60 = arith.truncf %59 : vector<8x512xf32> to vector<8x512xbf16>
    %61 = tpu.concatenate %24, %29, %34, %39, %40, %45, %50, %55, %60 in 0 : vector<8x512xbf16>, vector<8x512xbf16>, vector<8x512xbf16>, vector<8x512xbf16>, vector<8x512xbf16>, vector<8x512xbf16>, vector<8x512xbf16>, vector<8x512xbf16>, vector<8x512xbf16> -> vector<72x512xbf16>
    %c0_6 = arith.constant 0 : index
    %c0_7 = arith.constant 0 : index
    %62 = vector.load %arg7[%c0_6, %c0_7] : memref<32x72xbf16, #tpu.memory_space<vmem>>, vector<32x72xbf16>
    %cst = arith.constant dense<0.000000e+00> : vector<32x512xf32>
    %63 = tpu.matmul %62, %61, %cst {dimension_numbers = #tpu.dot_dimension_numbers<[1], [0], [0], [1], [0, 0, 1, 1], [], []>} : vector<32x72xbf16>, vector<72x512xbf16>, vector<32x512xf32> -> vector<32x512xf32>
    %c0_8 = arith.constant 0 : index
    %c0_9 = arith.constant 0 : index
    %64 = vector.load %arg8[%c0_8, %c0_9] : memref<32x1xf32, #tpu.memory_space<vmem>>, vector<32x1xf32>
    %65 = vector.broadcast %64 : vector<32x1xf32> to vector<32x512xf32>
    %66 = arith.addf %63, %65 : vector<32x512xf32>
    %67 = vector.extract_strided_slice %66 {offsets = [0, 0], sizes = [32, 256], strides = [1, 1]} : vector<32x512xf32> to vector<32x256xf32>
    %cst_10 = arith.constant dense<0.000000e+00> : vector<32xf32>
    %68 = vector.multi_reduction <add>, %67, %cst_10 [1] : vector<32x256xf32> to vector<32xf32>
    %69 = vector.shape_cast %68 : vector<32xf32> to vector<32x1xf32>
    %70 = arith.mulf %67, %67 : vector<32x256xf32>
    %cst_11 = arith.constant dense<0.000000e+00> : vector<32xf32>
    %71 = vector.multi_reduction <add>, %70, %cst_11 [1] : vector<32x256xf32> to vector<32xf32>
    %72 = vector.shape_cast %71 : vector<32xf32> to vector<32x1xf32>
    %73 = vector.extract_strided_slice %66 {offsets = [0, 256], sizes = [32, 256], strides = [1, 1]} : vector<32x512xf32> to vector<32x256xf32>
    %cst_12 = arith.constant dense<0.000000e+00> : vector<32xf32>
    %74 = vector.multi_reduction <add>, %73, %cst_12 [1] : vector<32x256xf32> to vector<32xf32>
    %75 = vector.shape_cast %74 : vector<32xf32> to vector<32x1xf32>
    %76 = arith.mulf %73, %73 : vector<32x256xf32>
    %cst_13 = arith.constant dense<0.000000e+00> : vector<32xf32>
    %77 = vector.multi_reduction <add>, %76, %cst_13 [1] : vector<32x256xf32> to vector<32xf32>
    %78 = vector.shape_cast %77 : vector<32xf32> to vector<32x1xf32>
    %79 = tpu.concatenate %69, %72, %75, %78 in 1 : vector<32x1xf32>, vector<32x1xf32>, vector<32x1xf32>, vector<32x1xf32> -> vector<32x4xf32>
    %cst_14 = arith.constant dense<0.000000e+00> : vector<32x4xf32>
    %80 = tpu.matmul %1, %79, %cst_14 {dimension_numbers = #tpu.dot_dimension_numbers<[1], [0], [0], [1], [0, 0, 1, 1], [], []>} : vector<32x32xf32>, vector<32x4xf32>, vector<32x4xf32> -> vector<32x4xf32>
    %81 = vector.extract_strided_slice %80 {offsets = [0, 0], sizes = [32, 1], strides = [1, 1]} : vector<32x4xf32> to vector<32x1xf32>
    %82 = vector.extract_strided_slice %80 {offsets = [0, 1], sizes = [32, 1], strides = [1, 1]} : vector<32x4xf32> to vector<32x1xf32>
    %83 = arith.mulf %81, %81 : vector<32x1xf32>
    %84 = arith.subf %82, %83 : vector<32x1xf32>
    %85 = vector.extract_strided_slice %66 {offsets = [0, 0], sizes = [32, 256], strides = [1, 1]} : vector<32x512xf32> to vector<32x256xf32>
    %86 = vector.broadcast %81 : vector<32x1xf32> to vector<32x256xf32>
    %87 = arith.subf %85, %86 : vector<32x256xf32>
    %cst_15 = arith.constant 9.99999974E-6 : f32
    %88 = vector.broadcast %cst_15 : f32 to vector<32x1xf32>
    %89 = arith.addf %84, %88 : vector<32x1xf32>
    %90 = math.rsqrt %89 : vector<32x1xf32>
    %91 = vector.broadcast %90 : vector<32x1xf32> to vector<32x256xf32>
    %92 = arith.mulf %87, %91 : vector<32x256xf32>
    %93 = vector.extract_strided_slice %80 {offsets = [0, 2], sizes = [32, 1], strides = [1, 1]} : vector<32x4xf32> to vector<32x1xf32>
    %94 = vector.extract_strided_slice %80 {offsets = [0, 3], sizes = [32, 1], strides = [1, 1]} : vector<32x4xf32> to vector<32x1xf32>
    %95 = arith.mulf %93, %93 : vector<32x1xf32>
    %96 = arith.subf %94, %95 : vector<32x1xf32>
    %97 = vector.extract_strided_slice %66 {offsets = [0, 256], sizes = [32, 256], strides = [1, 1]} : vector<32x512xf32> to vector<32x256xf32>
    %98 = vector.broadcast %93 : vector<32x1xf32> to vector<32x256xf32>
    %99 = arith.subf %97, %98 : vector<32x256xf32>
    %cst_16 = arith.constant 9.99999974E-6 : f32
    %100 = vector.broadcast %cst_16 : f32 to vector<32x1xf32>
    %101 = arith.addf %96, %100 : vector<32x1xf32>
    %102 = math.rsqrt %101 : vector<32x1xf32>
    %103 = vector.broadcast %102 : vector<32x1xf32> to vector<32x256xf32>
    %104 = arith.mulf %99, %103 : vector<32x256xf32>
    %105 = tpu.concatenate %92, %104 in 1 : vector<32x256xf32>, vector<32x256xf32> -> vector<32x512xf32>
    %c0_17 = arith.constant 0 : index
    %c0_18 = arith.constant 0 : index
    %106 = vector.load %arg9[%c0_17, %c0_18] : memref<32x1xf32, #tpu.memory_space<vmem>>, vector<32x1xf32>
    %107 = vector.broadcast %106 : vector<32x1xf32> to vector<32x512xf32>
    %108 = arith.mulf %105, %107 : vector<32x512xf32>
    %c0_19 = arith.constant 0 : index
    %c0_20 = arith.constant 0 : index
    %109 = vector.load %arg10[%c0_19, %c0_20] : memref<32x1xf32, #tpu.memory_space<vmem>>, vector<32x1xf32>
    %110 = vector.broadcast %109 : vector<32x1xf32> to vector<32x512xf32>
    %111 = arith.addf %108, %110 : vector<32x512xf32>
    %112 = arith.negf %111 : vector<32x512xf32>
    %113 = math.exp %112 : vector<32x512xf32>
    %cst_21 = arith.constant 1.000000e+00 : f32
    %114 = vector.broadcast %cst_21 : f32 to vector<32x512xf32>
    %115 = arith.addf %114, %113 : vector<32x512xf32>
    %116 = arith.divf %114, %115 : vector<32x512xf32>
    %117 = arith.mulf %111, %116 : vector<32x512xf32>
    %c17_i32_22 = arith.constant 17 : i32
    %118 = tpu.dynamic_rotate %117 by %c17_i32_22 dim 1 : vector<32x512xf32>, i32 -> vector<32x512xf32>
    %119 = vector.shape_cast %3 : vector<512xf32> to vector<1x512xf32>
    %120 = vector.broadcast %119 : vector<1x512xf32> to vector<32x512xf32>
    %121 = arith.mulf %118, %120 : vector<32x512xf32>
    %122 = arith.truncf %121 : vector<32x512xf32> to vector<32x512xbf16>
    %c16_i32_23 = arith.constant 16 : i32
    %123 = tpu.dynamic_rotate %117 by %c16_i32_23 dim 1 : vector<32x512xf32>, i32 -> vector<32x512xf32>
    %124 = vector.shape_cast %5 : vector<512xf32> to vector<1x512xf32>
    %125 = vector.broadcast %124 : vector<1x512xf32> to vector<32x512xf32>
    %126 = arith.mulf %123, %125 : vector<32x512xf32>
    %127 = arith.truncf %126 : vector<32x512xf32> to vector<32x512xbf16>
    %c15_i32_24 = arith.constant 15 : i32
    %128 = tpu.dynamic_rotate %117 by %c15_i32_24 dim 1 : vector<32x512xf32>, i32 -> vector<32x512xf32>
    %129 = vector.shape_cast %7 : vector<512xf32> to vector<1x512xf32>
    %130 = vector.broadcast %129 : vector<1x512xf32> to vector<32x512xf32>
    %131 = arith.mulf %128, %130 : vector<32x512xf32>
    %132 = arith.truncf %131 : vector<32x512xf32> to vector<32x512xbf16>
    %c1_i32_25 = arith.constant 1 : i32
    %133 = tpu.dynamic_rotate %117 by %c1_i32_25 dim 1 : vector<32x512xf32>, i32 -> vector<32x512xf32>
    %134 = vector.shape_cast %9 : vector<512xf32> to vector<1x512xf32>
    %135 = vector.broadcast %134 : vector<1x512xf32> to vector<32x512xf32>
    %136 = arith.mulf %133, %135 : vector<32x512xf32>
    %137 = arith.truncf %136 : vector<32x512xf32> to vector<32x512xbf16>
    %138 = arith.truncf %117 : vector<32x512xf32> to vector<32x512xbf16>
    %c511_i32_26 = arith.constant 511 : i32
    %139 = tpu.dynamic_rotate %117 by %c511_i32_26 dim 1 : vector<32x512xf32>, i32 -> vector<32x512xf32>
    %140 = vector.shape_cast %11 : vector<512xf32> to vector<1x512xf32>
    %141 = vector.broadcast %140 : vector<1x512xf32> to vector<32x512xf32>
    %142 = arith.mulf %139, %141 : vector<32x512xf32>
    %143 = arith.truncf %142 : vector<32x512xf32> to vector<32x512xbf16>
    %c497_i32_27 = arith.constant 497 : i32
    %144 = tpu.dynamic_rotate %117 by %c497_i32_27 dim 1 : vector<32x512xf32>, i32 -> vector<32x512xf32>
    %145 = vector.shape_cast %13 : vector<512xf32> to vector<1x512xf32>
    %146 = vector.broadcast %145 : vector<1x512xf32> to vector<32x512xf32>
    %147 = arith.mulf %144, %146 : vector<32x512xf32>
    %148 = arith.truncf %147 : vector<32x512xf32> to vector<32x512xbf16>
    %c496_i32_28 = arith.constant 496 : i32
    %149 = tpu.dynamic_rotate %117 by %c496_i32_28 dim 1 : vector<32x512xf32>, i32 -> vector<32x512xf32>
    %150 = vector.shape_cast %15 : vector<512xf32> to vector<1x512xf32>
    %151 = vector.broadcast %150 : vector<1x512xf32> to vector<32x512xf32>
    %152 = arith.mulf %149, %151 : vector<32x512xf32>
    %153 = arith.truncf %152 : vector<32x512xf32> to vector<32x512xbf16>
    %c495_i32_29 = arith.constant 495 : i32
    %154 = tpu.dynamic_rotate %117 by %c495_i32_29 dim 1 : vector<32x512xf32>, i32 -> vector<32x512xf32>
    %155 = vector.shape_cast %17 : vector<512xf32> to vector<1x512xf32>
    %156 = vector.broadcast %155 : vector<1x512xf32> to vector<32x512xf32>
    %157 = arith.mulf %154, %156 : vector<32x512xf32>
    %158 = arith.truncf %157 : vector<32x512xf32> to vector<32x512xbf16>
    %159 = tpu.concatenate %122, %127, %132, %137, %138, %143, %148, %153, %158 in 0 : vector<32x512xbf16>, vector<32x512xbf16>, vector<32x512xbf16>, vector<32x512xbf16>, vector<32x512xbf16>, vector<32x512xbf16>, vector<32x512xbf16>, vector<32x512xbf16>, vector<32x512xbf16> -> vector<288x512xbf16>
    %c0_30 = arith.constant 0 : index
    %c0_31 = arith.constant 0 : index
    %160 = vector.load %arg11[%c0_30, %c0_31] : memref<32x288xbf16, #tpu.memory_space<vmem>>, vector<32x288xbf16>
    %cst_32 = arith.constant dense<0.000000e+00> : vector<32x512xf32>
    %161 = tpu.matmul %160, %159, %cst_32 {dimension_numbers = #tpu.dot_dimension_numbers<[1], [0], [0], [1], [0, 0, 1, 1], [], []>} : vector<32x288xbf16>, vector<288x512xbf16>, vector<32x512xf32> -> vector<32x512xf32>
    %c0_33 = arith.constant 0 : index
    %c0_34 = arith.constant 0 : index
    %162 = vector.load %arg12[%c0_33, %c0_34] : memref<32x1xf32, #tpu.memory_space<vmem>>, vector<32x1xf32>
    %163 = vector.broadcast %162 : vector<32x1xf32> to vector<32x512xf32>
    %164 = arith.addf %161, %163 : vector<32x512xf32>
    %c0_35 = arith.constant 0 : index
    %c0_36 = arith.constant 0 : index
    %c0_37 = arith.constant 0 : index
    %165 = vector.load %arg2[%c0_35, %c0_36, %c0_37] : memref<2x32x1xf32, #tpu.memory_space<vmem>>, vector<1x32x1xf32>
    %166 = vector.shape_cast %165 : vector<1x32x1xf32> to vector<32x1xf32>
    %167 = vector.shape_cast %166 : vector<32x1xf32> to vector<32x1xf32>
    %168 = vector.broadcast %167 : vector<32x1xf32> to vector<32x256xf32>
    %c1 = arith.constant 1 : index
    %c0_38 = arith.constant 0 : index
    %c0_39 = arith.constant 0 : index
    %169 = vector.load %arg2[%c1, %c0_38, %c0_39] : memref<2x32x1xf32, #tpu.memory_space<vmem>>, vector<1x32x1xf32>
    %170 = vector.shape_cast %169 : vector<1x32x1xf32> to vector<32x1xf32>
    %171 = vector.shape_cast %170 : vector<32x1xf32> to vector<32x1xf32>
    %172 = vector.broadcast %171 : vector<32x1xf32> to vector<32x256xf32>
    %173 = tpu.concatenate %168, %172 in 1 : vector<32x256xf32>, vector<32x256xf32> -> vector<32x512xf32>
    %174 = arith.addf %164, %173 : vector<32x512xf32>
    %175 = vector.extract_strided_slice %174 {offsets = [0, 0], sizes = [32, 256], strides = [1, 1]} : vector<32x512xf32> to vector<32x256xf32>
    %cst_40 = arith.constant dense<0.000000e+00> : vector<32xf32>
    %176 = vector.multi_reduction <add>, %175, %cst_40 [1] : vector<32x256xf32> to vector<32xf32>
    %177 = vector.shape_cast %176 : vector<32xf32> to vector<32x1xf32>
    %178 = arith.mulf %175, %175 : vector<32x256xf32>
    %cst_41 = arith.constant dense<0.000000e+00> : vector<32xf32>
    %179 = vector.multi_reduction <add>, %178, %cst_41 [1] : vector<32x256xf32> to vector<32xf32>
    %180 = vector.shape_cast %179 : vector<32xf32> to vector<32x1xf32>
    %181 = vector.extract_strided_slice %174 {offsets = [0, 256], sizes = [32, 256], strides = [1, 1]} : vector<32x512xf32> to vector<32x256xf32>
    %cst_42 = arith.constant dense<0.000000e+00> : vector<32xf32>
    %182 = vector.multi_reduction <add>, %181, %cst_42 [1] : vector<32x256xf32> to vector<32xf32>
    %183 = vector.shape_cast %182 : vector<32xf32> to vector<32x1xf32>
    %184 = arith.mulf %181, %181 : vector<32x256xf32>
    %cst_43 = arith.constant dense<0.000000e+00> : vector<32xf32>
    %185 = vector.multi_reduction <add>, %184, %cst_43 [1] : vector<32x256xf32> to vector<32xf32>
    %186 = vector.shape_cast %185 : vector<32xf32> to vector<32x1xf32>
    %187 = tpu.concatenate %177, %180, %183, %186 in 1 : vector<32x1xf32>, vector<32x1xf32>, vector<32x1xf32>, vector<32x1xf32> -> vector<32x4xf32>
    %cst_44 = arith.constant dense<0.000000e+00> : vector<32x4xf32>
    %188 = tpu.matmul %1, %187, %cst_44 {dimension_numbers = #tpu.dot_dimension_numbers<[1], [0], [0], [1], [0, 0, 1, 1], [], []>} : vector<32x32xf32>, vector<32x4xf32>, vector<32x4xf32> -> vector<32x4xf32>
    %189 = vector.extract_strided_slice %188 {offsets = [0, 0], sizes = [32, 1], strides = [1, 1]} : vector<32x4xf32> to vector<32x1xf32>
    %190 = vector.extract_strided_slice %188 {offsets = [0, 1], sizes = [32, 1], strides = [1, 1]} : vector<32x4xf32> to vector<32x1xf32>
    %191 = arith.mulf %189, %189 : vector<32x1xf32>
    %192 = arith.subf %190, %191 : vector<32x1xf32>
    %193 = vector.extract_strided_slice %174 {offsets = [0, 0], sizes = [32, 256], strides = [1, 1]} : vector<32x512xf32> to vector<32x256xf32>
    %194 = vector.broadcast %189 : vector<32x1xf32> to vector<32x256xf32>
    %195 = arith.subf %193, %194 : vector<32x256xf32>
    %cst_45 = arith.constant 9.99999974E-6 : f32
    %196 = vector.broadcast %cst_45 : f32 to vector<32x1xf32>
    %197 = arith.addf %192, %196 : vector<32x1xf32>
    %198 = math.rsqrt %197 : vector<32x1xf32>
    %199 = vector.broadcast %198 : vector<32x1xf32> to vector<32x256xf32>
    %200 = arith.mulf %195, %199 : vector<32x256xf32>
    %201 = vector.extract_strided_slice %188 {offsets = [0, 2], sizes = [32, 1], strides = [1, 1]} : vector<32x4xf32> to vector<32x1xf32>
    %202 = vector.extract_strided_slice %188 {offsets = [0, 3], sizes = [32, 1], strides = [1, 1]} : vector<32x4xf32> to vector<32x1xf32>
    %203 = arith.mulf %201, %201 : vector<32x1xf32>
    %204 = arith.subf %202, %203 : vector<32x1xf32>
    %205 = vector.extract_strided_slice %174 {offsets = [0, 256], sizes = [32, 256], strides = [1, 1]} : vector<32x512xf32> to vector<32x256xf32>
    %206 = vector.broadcast %201 : vector<32x1xf32> to vector<32x256xf32>
    %207 = arith.subf %205, %206 : vector<32x256xf32>
    %cst_46 = arith.constant 9.99999974E-6 : f32
    %208 = vector.broadcast %cst_46 : f32 to vector<32x1xf32>
    %209 = arith.addf %204, %208 : vector<32x1xf32>
    %210 = math.rsqrt %209 : vector<32x1xf32>
    %211 = vector.broadcast %210 : vector<32x1xf32> to vector<32x256xf32>
    %212 = arith.mulf %207, %211 : vector<32x256xf32>
    %213 = tpu.concatenate %200, %212 in 1 : vector<32x256xf32>, vector<32x256xf32> -> vector<32x512xf32>
    %c0_47 = arith.constant 0 : index
    %c0_48 = arith.constant 0 : index
    %214 = vector.load %arg13[%c0_47, %c0_48] : memref<32x1xf32, #tpu.memory_space<vmem>>, vector<32x1xf32>
    %215 = vector.broadcast %214 : vector<32x1xf32> to vector<32x512xf32>
    %216 = arith.mulf %213, %215 : vector<32x512xf32>
    %c0_49 = arith.constant 0 : index
    %c0_50 = arith.constant 0 : index
    %217 = vector.load %arg14[%c0_49, %c0_50] : memref<32x1xf32, #tpu.memory_space<vmem>>, vector<32x1xf32>
    %218 = vector.broadcast %217 : vector<32x1xf32> to vector<32x512xf32>
    %219 = arith.addf %216, %218 : vector<32x512xf32>
    %220 = arith.negf %219 : vector<32x512xf32>
    %221 = math.exp %220 : vector<32x512xf32>
    %cst_51 = arith.constant 1.000000e+00 : f32
    %222 = vector.broadcast %cst_51 : f32 to vector<32x512xf32>
    %223 = arith.addf %222, %221 : vector<32x512xf32>
    %224 = arith.divf %222, %223 : vector<32x512xf32>
    %225 = arith.mulf %219, %224 : vector<32x512xf32>
    %c17_i32_52 = arith.constant 17 : i32
    %226 = tpu.dynamic_rotate %225 by %c17_i32_52 dim 1 : vector<32x512xf32>, i32 -> vector<32x512xf32>
    %227 = vector.shape_cast %3 : vector<512xf32> to vector<1x512xf32>
    %228 = vector.broadcast %227 : vector<1x512xf32> to vector<32x512xf32>
    %229 = arith.mulf %226, %228 : vector<32x512xf32>
    %230 = arith.truncf %229 : vector<32x512xf32> to vector<32x512xbf16>
    %c16_i32_53 = arith.constant 16 : i32
    %231 = tpu.dynamic_rotate %225 by %c16_i32_53 dim 1 : vector<32x512xf32>, i32 -> vector<32x512xf32>
    %232 = vector.shape_cast %5 : vector<512xf32> to vector<1x512xf32>
    %233 = vector.broadcast %232 : vector<1x512xf32> to vector<32x512xf32>
    %234 = arith.mulf %231, %233 : vector<32x512xf32>
    %235 = arith.truncf %234 : vector<32x512xf32> to vector<32x512xbf16>
    %c15_i32_54 = arith.constant 15 : i32
    %236 = tpu.dynamic_rotate %225 by %c15_i32_54 dim 1 : vector<32x512xf32>, i32 -> vector<32x512xf32>
    %237 = vector.shape_cast %7 : vector<512xf32> to vector<1x512xf32>
    %238 = vector.broadcast %237 : vector<1x512xf32> to vector<32x512xf32>
    %239 = arith.mulf %236, %238 : vector<32x512xf32>
    %240 = arith.truncf %239 : vector<32x512xf32> to vector<32x512xbf16>
    %c1_i32_55 = arith.constant 1 : i32
    %241 = tpu.dynamic_rotate %225 by %c1_i32_55 dim 1 : vector<32x512xf32>, i32 -> vector<32x512xf32>
    %242 = vector.shape_cast %9 : vector<512xf32> to vector<1x512xf32>
    %243 = vector.broadcast %242 : vector<1x512xf32> to vector<32x512xf32>
    %244 = arith.mulf %241, %243 : vector<32x512xf32>
    %245 = arith.truncf %244 : vector<32x512xf32> to vector<32x512xbf16>
    %246 = arith.truncf %225 : vector<32x512xf32> to vector<32x512xbf16>
    %c511_i32_56 = arith.constant 511 : i32
    %247 = tpu.dynamic_rotate %225 by %c511_i32_56 dim 1 : vector<32x512xf32>, i32 -> vector<32x512xf32>
    %248 = vector.shape_cast %11 : vector<512xf32> to vector<1x512xf32>
    %249 = vector.broadcast %248 : vector<1x512xf32> to vector<32x512xf32>
    %250 = arith.mulf %247, %249 : vector<32x512xf32>
    %251 = arith.truncf %250 : vector<32x512xf32> to vector<32x512xbf16>
    %c497_i32_57 = arith.constant 497 : i32
    %252 = tpu.dynamic_rotate %225 by %c497_i32_57 dim 1 : vector<32x512xf32>, i32 -> vector<32x512xf32>
    %253 = vector.shape_cast %13 : vector<512xf32> to vector<1x512xf32>
    %254 = vector.broadcast %253 : vector<1x512xf32> to vector<32x512xf32>
    %255 = arith.mulf %252, %254 : vector<32x512xf32>
    %256 = arith.truncf %255 : vector<32x512xf32> to vector<32x512xbf16>
    %c496_i32_58 = arith.constant 496 : i32
    %257 = tpu.dynamic_rotate %225 by %c496_i32_58 dim 1 : vector<32x512xf32>, i32 -> vector<32x512xf32>
    %258 = vector.shape_cast %15 : vector<512xf32> to vector<1x512xf32>
    %259 = vector.broadcast %258 : vector<1x512xf32> to vector<32x512xf32>
    %260 = arith.mulf %257, %259 : vector<32x512xf32>
    %261 = arith.truncf %260 : vector<32x512xf32> to vector<32x512xbf16>
    %c495_i32_59 = arith.constant 495 : i32
    %262 = tpu.dynamic_rotate %225 by %c495_i32_59 dim 1 : vector<32x512xf32>, i32 -> vector<32x512xf32>
    %263 = vector.shape_cast %17 : vector<512xf32> to vector<1x512xf32>
    %264 = vector.broadcast %263 : vector<1x512xf32> to vector<32x512xf32>
    %265 = arith.mulf %262, %264 : vector<32x512xf32>
    %266 = arith.truncf %265 : vector<32x512xf32> to vector<32x512xbf16>
    %267 = tpu.concatenate %230, %235, %240, %245, %246, %251, %256, %261, %266 in 0 : vector<32x512xbf16>, vector<32x512xbf16>, vector<32x512xbf16>, vector<32x512xbf16>, vector<32x512xbf16>, vector<32x512xbf16>, vector<32x512xbf16>, vector<32x512xbf16>, vector<32x512xbf16> -> vector<288x512xbf16>
    %c0_60 = arith.constant 0 : index
    %c0_61 = arith.constant 0 : index
    %268 = vector.load %arg15[%c0_60, %c0_61] : memref<32x288xbf16, #tpu.memory_space<vmem>>, vector<32x288xbf16>
    %cst_62 = arith.constant dense<0.000000e+00> : vector<32x512xf32>
    %269 = tpu.matmul %268, %267, %cst_62 {dimension_numbers = #tpu.dot_dimension_numbers<[1], [0], [0], [1], [0, 0, 1, 1], [], []>} : vector<32x288xbf16>, vector<288x512xbf16>, vector<32x512xf32> -> vector<32x512xf32>
    %c0_63 = arith.constant 0 : index
    %c0_64 = arith.constant 0 : index
    %270 = vector.load %arg16[%c0_63, %c0_64] : memref<32x1xf32, #tpu.memory_space<vmem>>, vector<32x1xf32>
    %271 = vector.broadcast %270 : vector<32x1xf32> to vector<32x512xf32>
    %272 = arith.addf %269, %271 : vector<32x512xf32>
    %273 = arith.addf %66, %272 : vector<32x512xf32>
    %c0_65 = arith.constant 0 : index
    %c0_66 = arith.constant 0 : index
    %274 = vector.load %arg17[%c0_65, %c0_66] : memref<32x32xbf16, #tpu.memory_space<vmem>>, vector<32x32xbf16>
    %275 = arith.truncf %273 : vector<32x512xf32> to vector<32x512xbf16>
    %cst_67 = arith.constant dense<0.000000e+00> : vector<32x512xf32>
    %276 = tpu.matmul %274, %275, %cst_67 {dimension_numbers = #tpu.dot_dimension_numbers<[1], [0], [0], [1], [0, 0, 1, 1], [], []>} : vector<32x32xbf16>, vector<32x512xbf16>, vector<32x512xf32> -> vector<32x512xf32>
    %c0_68 = arith.constant 0 : index
    %c0_69 = arith.constant 0 : index
    %c0_70 = arith.constant 0 : index
    %277 = vector.load %arg3[%c0_68, %c0_69, %c0_70] : memref<2x8x32xf32, #tpu.memory_space<vmem>>, vector<1x8x32xf32>
    %278 = vector.shape_cast %277 : vector<1x8x32xf32> to vector<8x32xf32>
    %279 = arith.truncf %278 : vector<8x32xf32> to vector<8x32xbf16>
    %c0_71 = arith.constant 0 : index
    %c0_72 = arith.constant 0 : index
    %280 = vector.load %arg18[%c0_71, %c0_72] : memref<32x32xbf16, #tpu.memory_space<vmem>>, vector<32x32xbf16>
    %cst_73 = arith.constant dense<0.000000e+00> : vector<8x32xf32>
    %281 = tpu.matmul %279, %280, %cst_73 {dimension_numbers = #tpu.dot_dimension_numbers<[1], [0], [0], [1], [0, 0, 1, 1], [], []>} : vector<8x32xbf16>, vector<32x32xbf16>, vector<8x32xf32> -> vector<8x32xf32>
    %c0_74 = arith.constant 0 : index
    %c0_75 = arith.constant 0 : index
    %282 = vector.load %arg19[%c0_74, %c0_75] : memref<32x32xbf16, #tpu.memory_space<vmem>>, vector<32x32xbf16>
    %c0_76 = arith.constant 0 : index
    %c0_77 = arith.constant 0 : index
    %c0_78 = arith.constant 0 : index
    %283 = vector.load %arg4[%c0_76, %c0_77, %c0_78] : memref<2x32x8xf32, #tpu.memory_space<vmem>>, vector<1x32x8xf32>
    %284 = vector.shape_cast %283 : vector<1x32x8xf32> to vector<32x8xf32>
    %285 = arith.truncf %284 : vector<32x8xf32> to vector<32x8xbf16>
    %cst_79 = arith.constant dense<0.000000e+00> : vector<32x8xf32>
    %286 = tpu.matmul %282, %285, %cst_79 {dimension_numbers = #tpu.dot_dimension_numbers<[1], [0], [0], [1], [0, 0, 1, 1], [], []>} : vector<32x32xbf16>, vector<32x8xbf16>, vector<32x8xf32> -> vector<32x8xf32>
    %287 = arith.truncf %281 : vector<8x32xf32> to vector<8x32xbf16>
    %288 = vector.extract_strided_slice %276 {offsets = [0, 0], sizes = [32, 256], strides = [1, 1]} : vector<32x512xf32> to vector<32x256xf32>
    %289 = arith.truncf %288 : vector<32x256xf32> to vector<32x256xbf16>
    %cst_80 = arith.constant dense<0.000000e+00> : vector<8x256xf32>
    %290 = tpu.matmul %287, %289, %cst_80 {dimension_numbers = #tpu.dot_dimension_numbers<[1], [0], [0], [1], [0, 0, 1, 1], [], []>} : vector<8x32xbf16>, vector<32x256xbf16>, vector<8x256xf32> -> vector<8x256xf32>
    %cst_81 = arith.constant 0.176776692 : f32
    %291 = vector.broadcast %cst_81 : f32 to vector<8x256xf32>
    %292 = arith.mulf %290, %291 : vector<8x256xf32>
    %cst_82 = arith.constant dense<0xFF800000> : vector<256xf32>
    %293 = vector.multi_reduction <maximumf>, %292, %cst_82 [0] : vector<8x256xf32> to vector<256xf32>
    %294 = vector.shape_cast %293 : vector<256xf32> to vector<1x256xf32>
    %295 = vector.broadcast %294 : vector<1x256xf32> to vector<8x256xf32>
    %296 = arith.subf %292, %295 : vector<8x256xf32>
    %297 = math.exp %296 : vector<8x256xf32>
    %cst_83 = arith.constant dense<0.000000e+00> : vector<256xf32>
    %298 = vector.multi_reduction <add>, %297, %cst_83 [0] : vector<8x256xf32> to vector<256xf32>
    %299 = vector.shape_cast %298 : vector<256xf32> to vector<1x256xf32>
    %300 = tpu.reciprocal %299 {approx = true} : vector<1x256xf32> -> vector<1x256xf32>
    %301 = vector.broadcast %300 : vector<1x256xf32> to vector<8x256xf32>
    %302 = arith.mulf %297, %301 : vector<8x256xf32>
    %303 = arith.truncf %286 : vector<32x8xf32> to vector<32x8xbf16>
    %304 = arith.truncf %302 : vector<8x256xf32> to vector<8x256xbf16>
    %cst_84 = arith.constant dense<0.000000e+00> : vector<32x256xf32>
    %305 = tpu.matmul %303, %304, %cst_84 {dimension_numbers = #tpu.dot_dimension_numbers<[1], [0], [0], [1], [0, 0, 1, 1], [], []>} : vector<32x8xbf16>, vector<8x256xbf16>, vector<32x256xf32> -> vector<32x256xf32>
    %c1_85 = arith.constant 1 : index
    %c0_86 = arith.constant 0 : index
    %c0_87 = arith.constant 0 : index
    %306 = vector.load %arg3[%c1_85, %c0_86, %c0_87] : memref<2x8x32xf32, #tpu.memory_space<vmem>>, vector<1x8x32xf32>
    %307 = vector.shape_cast %306 : vector<1x8x32xf32> to vector<8x32xf32>
    %308 = arith.truncf %307 : vector<8x32xf32> to vector<8x32xbf16>
    %c0_88 = arith.constant 0 : index
    %c0_89 = arith.constant 0 : index
    %309 = vector.load %arg18[%c0_88, %c0_89] : memref<32x32xbf16, #tpu.memory_space<vmem>>, vector<32x32xbf16>
    %cst_90 = arith.constant dense<0.000000e+00> : vector<8x32xf32>
    %310 = tpu.matmul %308, %309, %cst_90 {dimension_numbers = #tpu.dot_dimension_numbers<[1], [0], [0], [1], [0, 0, 1, 1], [], []>} : vector<8x32xbf16>, vector<32x32xbf16>, vector<8x32xf32> -> vector<8x32xf32>
    %c0_91 = arith.constant 0 : index
    %c0_92 = arith.constant 0 : index
    %311 = vector.load %arg19[%c0_91, %c0_92] : memref<32x32xbf16, #tpu.memory_space<vmem>>, vector<32x32xbf16>
    %c1_93 = arith.constant 1 : index
    %c0_94 = arith.constant 0 : index
    %c0_95 = arith.constant 0 : index
    %312 = vector.load %arg4[%c1_93, %c0_94, %c0_95] : memref<2x32x8xf32, #tpu.memory_space<vmem>>, vector<1x32x8xf32>
    %313 = vector.shape_cast %312 : vector<1x32x8xf32> to vector<32x8xf32>
    %314 = arith.truncf %313 : vector<32x8xf32> to vector<32x8xbf16>
    %cst_96 = arith.constant dense<0.000000e+00> : vector<32x8xf32>
    %315 = tpu.matmul %311, %314, %cst_96 {dimension_numbers = #tpu.dot_dimension_numbers<[1], [0], [0], [1], [0, 0, 1, 1], [], []>} : vector<32x32xbf16>, vector<32x8xbf16>, vector<32x8xf32> -> vector<32x8xf32>
    %316 = arith.truncf %310 : vector<8x32xf32> to vector<8x32xbf16>
    %317 = vector.extract_strided_slice %276 {offsets = [0, 256], sizes = [32, 256], strides = [1, 1]} : vector<32x512xf32> to vector<32x256xf32>
    %318 = arith.truncf %317 : vector<32x256xf32> to vector<32x256xbf16>
    %cst_97 = arith.constant dense<0.000000e+00> : vector<8x256xf32>
    %319 = tpu.matmul %316, %318, %cst_97 {dimension_numbers = #tpu.dot_dimension_numbers<[1], [0], [0], [1], [0, 0, 1, 1], [], []>} : vector<8x32xbf16>, vector<32x256xbf16>, vector<8x256xf32> -> vector<8x256xf32>
    %cst_98 = arith.constant 0.176776692 : f32
    %320 = vector.broadcast %cst_98 : f32 to vector<8x256xf32>
    %321 = arith.mulf %319, %320 : vector<8x256xf32>
    %cst_99 = arith.constant dense<0xFF800000> : vector<256xf32>
    %322 = vector.multi_reduction <maximumf>, %321, %cst_99 [0] : vector<8x256xf32> to vector<256xf32>
    %323 = vector.shape_cast %322 : vector<256xf32> to vector<1x256xf32>
    %324 = vector.broadcast %323 : vector<1x256xf32> to vector<8x256xf32>
    %325 = arith.subf %321, %324 : vector<8x256xf32>
    %326 = math.exp %325 : vector<8x256xf32>
    %cst_100 = arith.constant dense<0.000000e+00> : vector<256xf32>
    %327 = vector.multi_reduction <add>, %326, %cst_100 [0] : vector<8x256xf32> to vector<256xf32>
    %328 = vector.shape_cast %327 : vector<256xf32> to vector<1x256xf32>
    %329 = tpu.reciprocal %328 {approx = true} : vector<1x256xf32> -> vector<1x256xf32>
    %330 = vector.broadcast %329 : vector<1x256xf32> to vector<8x256xf32>
    %331 = arith.mulf %326, %330 : vector<8x256xf32>
    %332 = arith.truncf %315 : vector<32x8xf32> to vector<32x8xbf16>
    %333 = arith.truncf %331 : vector<8x256xf32> to vector<8x256xbf16>
    %cst_101 = arith.constant dense<0.000000e+00> : vector<32x256xf32>
    %334 = tpu.matmul %332, %333, %cst_101 {dimension_numbers = #tpu.dot_dimension_numbers<[1], [0], [0], [1], [0, 0, 1, 1], [], []>} : vector<32x8xbf16>, vector<8x256xbf16>, vector<32x256xf32> -> vector<32x256xf32>
    %335 = tpu.concatenate %305, %334 in 1 : vector<32x256xf32>, vector<32x256xf32> -> vector<32x512xf32>
    %c0_102 = arith.constant 0 : index
    %c0_103 = arith.constant 0 : index
    %336 = vector.load %arg20[%c0_102, %c0_103] : memref<32x32xbf16, #tpu.memory_space<vmem>>, vector<32x32xbf16>
    %337 = arith.truncf %335 : vector<32x512xf32> to vector<32x512xbf16>
    %cst_104 = arith.constant dense<0.000000e+00> : vector<32x512xf32>
    %338 = tpu.matmul %336, %337, %cst_104 {dimension_numbers = #tpu.dot_dimension_numbers<[1], [0], [0], [1], [0, 0, 1, 1], [], []>} : vector<32x32xbf16>, vector<32x512xbf16>, vector<32x512xf32> -> vector<32x512xf32>
    %339 = arith.addf %273, %338 : vector<32x512xf32>
    %340 = vector.extract_strided_slice %339 {offsets = [0, 0], sizes = [32, 256], strides = [1, 1]} : vector<32x512xf32> to vector<32x256xf32>
    %cst_105 = arith.constant dense<0.000000e+00> : vector<32xf32>
    %341 = vector.multi_reduction <add>, %340, %cst_105 [1] : vector<32x256xf32> to vector<32xf32>
    %342 = vector.shape_cast %341 : vector<32xf32> to vector<32x1xf32>
    %343 = arith.mulf %340, %340 : vector<32x256xf32>
    %cst_106 = arith.constant dense<0.000000e+00> : vector<32xf32>
    %344 = vector.multi_reduction <add>, %343, %cst_106 [1] : vector<32x256xf32> to vector<32xf32>
    %345 = vector.shape_cast %344 : vector<32xf32> to vector<32x1xf32>
    %346 = vector.extract_strided_slice %339 {offsets = [0, 256], sizes = [32, 256], strides = [1, 1]} : vector<32x512xf32> to vector<32x256xf32>
    %cst_107 = arith.constant dense<0.000000e+00> : vector<32xf32>
    %347 = vector.multi_reduction <add>, %346, %cst_107 [1] : vector<32x256xf32> to vector<32xf32>
    %348 = vector.shape_cast %347 : vector<32xf32> to vector<32x1xf32>
    %349 = arith.mulf %346, %346 : vector<32x256xf32>
    %cst_108 = arith.constant dense<0.000000e+00> : vector<32xf32>
    %350 = vector.multi_reduction <add>, %349, %cst_108 [1] : vector<32x256xf32> to vector<32xf32>
    %351 = vector.shape_cast %350 : vector<32xf32> to vector<32x1xf32>
    %352 = tpu.concatenate %342, %345, %348, %351 in 1 : vector<32x1xf32>, vector<32x1xf32>, vector<32x1xf32>, vector<32x1xf32> -> vector<32x4xf32>
    %cst_109 = arith.constant dense<0.000000e+00> : vector<32x4xf32>
    %353 = tpu.matmul %1, %352, %cst_109 {dimension_numbers = #tpu.dot_dimension_numbers<[1], [0], [0], [1], [0, 0, 1, 1], [], []>} : vector<32x32xf32>, vector<32x4xf32>, vector<32x4xf32> -> vector<32x4xf32>
    %354 = vector.extract_strided_slice %353 {offsets = [0, 0], sizes = [32, 1], strides = [1, 1]} : vector<32x4xf32> to vector<32x1xf32>
    %355 = vector.extract_strided_slice %353 {offsets = [0, 1], sizes = [32, 1], strides = [1, 1]} : vector<32x4xf32> to vector<32x1xf32>
    %356 = arith.mulf %354, %354 : vector<32x1xf32>
    %357 = arith.subf %355, %356 : vector<32x1xf32>
    %358 = vector.extract_strided_slice %339 {offsets = [0, 0], sizes = [32, 256], strides = [1, 1]} : vector<32x512xf32> to vector<32x256xf32>
    %359 = vector.broadcast %354 : vector<32x1xf32> to vector<32x256xf32>
    %360 = arith.subf %358, %359 : vector<32x256xf32>
    %cst_110 = arith.constant 9.99999974E-6 : f32
    %361 = vector.broadcast %cst_110 : f32 to vector<32x1xf32>
    %362 = arith.addf %357, %361 : vector<32x1xf32>
    %363 = math.rsqrt %362 : vector<32x1xf32>
    %364 = vector.broadcast %363 : vector<32x1xf32> to vector<32x256xf32>
    %365 = arith.mulf %360, %364 : vector<32x256xf32>
    %366 = vector.extract_strided_slice %353 {offsets = [0, 2], sizes = [32, 1], strides = [1, 1]} : vector<32x4xf32> to vector<32x1xf32>
    %367 = vector.extract_strided_slice %353 {offsets = [0, 3], sizes = [32, 1], strides = [1, 1]} : vector<32x4xf32> to vector<32x1xf32>
    %368 = arith.mulf %366, %366 : vector<32x1xf32>
    %369 = arith.subf %367, %368 : vector<32x1xf32>
    %370 = vector.extract_strided_slice %339 {offsets = [0, 256], sizes = [32, 256], strides = [1, 1]} : vector<32x512xf32> to vector<32x256xf32>
    %371 = vector.broadcast %366 : vector<32x1xf32> to vector<32x256xf32>
    %372 = arith.subf %370, %371 : vector<32x256xf32>
    %cst_111 = arith.constant 9.99999974E-6 : f32
    %373 = vector.broadcast %cst_111 : f32 to vector<32x1xf32>
    %374 = arith.addf %369, %373 : vector<32x1xf32>
    %375 = math.rsqrt %374 : vector<32x1xf32>
    %376 = vector.broadcast %375 : vector<32x1xf32> to vector<32x256xf32>
    %377 = arith.mulf %372, %376 : vector<32x256xf32>
    %378 = tpu.concatenate %365, %377 in 1 : vector<32x256xf32>, vector<32x256xf32> -> vector<32x512xf32>
    %c0_112 = arith.constant 0 : index
    %c0_113 = arith.constant 0 : index
    %379 = vector.load %arg21[%c0_112, %c0_113] : memref<32x1xf32, #tpu.memory_space<vmem>>, vector<32x1xf32>
    %380 = vector.broadcast %379 : vector<32x1xf32> to vector<32x512xf32>
    %381 = arith.mulf %378, %380 : vector<32x512xf32>
    %c0_114 = arith.constant 0 : index
    %c0_115 = arith.constant 0 : index
    %382 = vector.load %arg22[%c0_114, %c0_115] : memref<32x1xf32, #tpu.memory_space<vmem>>, vector<32x1xf32>
    %383 = vector.broadcast %382 : vector<32x1xf32> to vector<32x512xf32>
    %384 = arith.addf %381, %383 : vector<32x512xf32>
    %385 = arith.negf %384 : vector<32x512xf32>
    %386 = math.exp %385 : vector<32x512xf32>
    %cst_116 = arith.constant 1.000000e+00 : f32
    %387 = vector.broadcast %cst_116 : f32 to vector<32x512xf32>
    %388 = arith.addf %387, %386 : vector<32x512xf32>
    %389 = arith.divf %387, %388 : vector<32x512xf32>
    %390 = arith.mulf %384, %389 : vector<32x512xf32>
    %c17_i32_117 = arith.constant 17 : i32
    %391 = tpu.dynamic_rotate %390 by %c17_i32_117 dim 1 : vector<32x512xf32>, i32 -> vector<32x512xf32>
    %392 = vector.shape_cast %3 : vector<512xf32> to vector<1x512xf32>
    %393 = vector.broadcast %392 : vector<1x512xf32> to vector<32x512xf32>
    %394 = arith.mulf %391, %393 : vector<32x512xf32>
    %395 = arith.truncf %394 : vector<32x512xf32> to vector<32x512xbf16>
    %c16_i32_118 = arith.constant 16 : i32
    %396 = tpu.dynamic_rotate %390 by %c16_i32_118 dim 1 : vector<32x512xf32>, i32 -> vector<32x512xf32>
    %397 = vector.shape_cast %5 : vector<512xf32> to vector<1x512xf32>
    %398 = vector.broadcast %397 : vector<1x512xf32> to vector<32x512xf32>
    %399 = arith.mulf %396, %398 : vector<32x512xf32>
    %400 = arith.truncf %399 : vector<32x512xf32> to vector<32x512xbf16>
    %c15_i32_119 = arith.constant 15 : i32
    %401 = tpu.dynamic_rotate %390 by %c15_i32_119 dim 1 : vector<32x512xf32>, i32 -> vector<32x512xf32>
    %402 = vector.shape_cast %7 : vector<512xf32> to vector<1x512xf32>
    %403 = vector.broadcast %402 : vector<1x512xf32> to vector<32x512xf32>
    %404 = arith.mulf %401, %403 : vector<32x512xf32>
    %405 = arith.truncf %404 : vector<32x512xf32> to vector<32x512xbf16>
    %c1_i32_120 = arith.constant 1 : i32
    %406 = tpu.dynamic_rotate %390 by %c1_i32_120 dim 1 : vector<32x512xf32>, i32 -> vector<32x512xf32>
    %407 = vector.shape_cast %9 : vector<512xf32> to vector<1x512xf32>
    %408 = vector.broadcast %407 : vector<1x512xf32> to vector<32x512xf32>
    %409 = arith.mulf %406, %408 : vector<32x512xf32>
    %410 = arith.truncf %409 : vector<32x512xf32> to vector<32x512xbf16>
    %411 = arith.truncf %390 : vector<32x512xf32> to vector<32x512xbf16>
    %c511_i32_121 = arith.constant 511 : i32
    %412 = tpu.dynamic_rotate %390 by %c511_i32_121 dim 1 : vector<32x512xf32>, i32 -> vector<32x512xf32>
    %413 = vector.shape_cast %11 : vector<512xf32> to vector<1x512xf32>
    %414 = vector.broadcast %413 : vector<1x512xf32> to vector<32x512xf32>
    %415 = arith.mulf %412, %414 : vector<32x512xf32>
    %416 = arith.truncf %415 : vector<32x512xf32> to vector<32x512xbf16>
    %c497_i32_122 = arith.constant 497 : i32
    %417 = tpu.dynamic_rotate %390 by %c497_i32_122 dim 1 : vector<32x512xf32>, i32 -> vector<32x512xf32>
    %418 = vector.shape_cast %13 : vector<512xf32> to vector<1x512xf32>
    %419 = vector.broadcast %418 : vector<1x512xf32> to vector<32x512xf32>
    %420 = arith.mulf %417, %419 : vector<32x512xf32>
    %421 = arith.truncf %420 : vector<32x512xf32> to vector<32x512xbf16>
    %c496_i32_123 = arith.constant 496 : i32
    %422 = tpu.dynamic_rotate %390 by %c496_i32_123 dim 1 : vector<32x512xf32>, i32 -> vector<32x512xf32>
    %423 = vector.shape_cast %15 : vector<512xf32> to vector<1x512xf32>
    %424 = vector.broadcast %423 : vector<1x512xf32> to vector<32x512xf32>
    %425 = arith.mulf %422, %424 : vector<32x512xf32>
    %426 = arith.truncf %425 : vector<32x512xf32> to vector<32x512xbf16>
    %c495_i32_124 = arith.constant 495 : i32
    %427 = tpu.dynamic_rotate %390 by %c495_i32_124 dim 1 : vector<32x512xf32>, i32 -> vector<32x512xf32>
    %428 = vector.shape_cast %17 : vector<512xf32> to vector<1x512xf32>
    %429 = vector.broadcast %428 : vector<1x512xf32> to vector<32x512xf32>
    %430 = arith.mulf %427, %429 : vector<32x512xf32>
    %431 = arith.truncf %430 : vector<32x512xf32> to vector<32x512xbf16>
    %432 = tpu.concatenate %395, %400, %405, %410, %411, %416, %421, %426, %431 in 0 : vector<32x512xbf16>, vector<32x512xbf16>, vector<32x512xbf16>, vector<32x512xbf16>, vector<32x512xbf16>, vector<32x512xbf16>, vector<32x512xbf16>, vector<32x512xbf16>, vector<32x512xbf16> -> vector<288x512xbf16>
    %c0_125 = arith.constant 0 : index
    %c0_126 = arith.constant 0 : index
    %433 = vector.load %arg23[%c0_125, %c0_126] : memref<8x288xbf16, #tpu.memory_space<vmem>>, vector<8x288xbf16>
    %cst_127 = arith.constant dense<0.000000e+00> : vector<8x512xf32>
    %434 = tpu.matmul %433, %432, %cst_127 {dimension_numbers = #tpu.dot_dimension_numbers<[1], [0], [0], [1], [0, 0, 1, 1], [], []>} : vector<8x288xbf16>, vector<288x512xbf16>, vector<8x512xf32> -> vector<8x512xf32>
    %c0_128 = arith.constant 0 : index
    %c0_129 = arith.constant 0 : index
    %435 = vector.load %arg24[%c0_128, %c0_129] : memref<8x1xf32, #tpu.memory_space<vmem>>, vector<8x1xf32>
    %436 = vector.broadcast %435 : vector<8x1xf32> to vector<8x512xf32>
    %437 = arith.addf %434, %436 : vector<8x512xf32>
    %c0_130 = arith.constant 0 : index
    %c0_131 = arith.constant 0 : index
    %c0_132 = arith.constant 0 : index
    %438 = vector.load %arg25[%c0_130, %c0_131, %c0_132] : memref<1x8x512xf32, #tpu.memory_space<vmem>>, vector<1x8x512xf32>
    %439 = vector.shape_cast %438 : vector<1x8x512xf32> to vector<8x512xf32>
    %440 = vector.shape_cast %437 : vector<8x512xf32> to vector<1x8x512xf32>
    tpu.vector_store %arg25[%c0_130, %c0_131, %c0_132], %440 {strides = array<i32>} : memref<1x8x512xf32, #tpu.memory_space<vmem>>, vector<1x8x512xf32>,
    return
  }
  func.func @transform_0(%arg0: i32) -> (i32, i32, i32) {
    %c0_i32 = arith.constant 0 : i32
    %c0_i32_0 = arith.constant 0 : i32
    %c0_i32_1 = arith.constant 0 : i32
    return %arg0, %c0_i32, %c0_i32_0 : i32, i32, i32
  }
  func.func @transform_1(%arg0: i32) -> (i32, i32, i32) {
    %c0_i32 = arith.constant 0 : i32
    %c0_i32_0 = arith.constant 0 : i32
    %c0_i32_1 = arith.constant 0 : i32
    return %arg0, %c0_i32, %c0_i32_0 : i32, i32, i32
  }
  func.func @transform_2(%arg0: i32) -> (i32, i32, i32) {
    %c0_i32 = arith.constant 0 : i32
    %c0_i32_0 = arith.constant 0 : i32
    %c0_i32_1 = arith.constant 0 : i32
    return %arg0, %c0_i32, %c0_i32_0 : i32, i32, i32
  }
  func.func @transform_3(%arg0: i32) -> (i32, i32, i32) {
    %c0_i32 = arith.constant 0 : i32
    %c0_i32_0 = arith.constant 0 : i32
    %c0_i32_1 = arith.constant 0 : i32
    return %arg0, %c0_i32, %c0_i32_0 : i32, i32, i32
  }
  func.func @transform_4(%arg0: i32) -> (i32, i32) {
    %c0_i32 = arith.constant 0 : i32
    %c0_i32_0 = arith.constant 0 : i32
    %c0_i32_1 = arith.constant 0 : i32
    return %c0_i32, %c0_i32_0 : i32, i32
  }
  func.func @transform_5(%arg0: i32) -> (i32, i32) {
    %c0_i32 = arith.constant 0 : i32
    %c0_i32_0 = arith.constant 0 : i32
    %c0_i32_1 = arith.constant 0 : i32
    return %c0_i32, %c0_i32_0 : i32, i32
  }
  func.func @transform_6(%arg0: i32) -> (i32, i32) {
    %c0_i32 = arith.constant 0 : i32
    %c0_i32_0 = arith.constant 0 : i32
    %c0_i32_1 = arith.constant 0 : i32
    return %c0_i32, %c0_i32_0 : i32, i32
  }
  func.func @transform_7(%arg0: i32) -> (i32, i32) {
    %c0_i32 = arith.constant 0 : i32
    %c0_i32_0 = arith.constant 0 : i32
    %c0_i32_1 = arith.constant 0 : i32
    return %c0_i32, %c0_i32_0 : i32, i32
  }
  func.func @transform_8(%arg0: i32) -> (i32, i32) {
    %c0_i32 = arith.constant 0 : i32
    %c0_i32_0 = arith.constant 0 : i32
    %c0_i32_1 = arith.constant 0 : i32
    return %c0_i32, %c0_i32_0 : i32, i32
  }
  func.func @transform_9(%arg0: i32) -> (i32, i32) {
    %c0_i32 = arith.constant 0 : i32
    %c0_i32_0 = arith.constant 0 : i32
    %c0_i32_1 = arith.constant 0 : i32
    return %c0_i32, %c0_i32_0 : i32, i32
  }
  func.func @transform_10(%arg0: i32) -> (i32, i32) {
    %c0_i32 = arith.constant 0 : i32
    %c0_i32_0 = arith.constant 0 : i32
    %c0_i32_1 = arith.constant 0 : i32
    return %c0_i32, %c0_i32_0 : i32, i32
  }
  func.func @transform_11(%arg0: i32) -> (i32, i32) {
    %c0_i32 = arith.constant 0 : i32
    %c0_i32_0 = arith.constant 0 : i32
    %c0_i32_1 = arith.constant 0 : i32
    return %c0_i32, %c0_i32_0 : i32, i32
  }
  func.func @transform_12(%arg0: i32) -> (i32, i32) {
    %c0_i32 = arith.constant 0 : i32
    %c0_i32_0 = arith.constant 0 : i32
    %c0_i32_1 = arith.constant 0 : i32
    return %c0_i32, %c0_i32_0 : i32, i32
  }
  func.func @transform_13(%arg0: i32) -> (i32, i32) {
    %c0_i32 = arith.constant 0 : i32
    %c0_i32_0 = arith.constant 0 : i32
    %c0_i32_1 = arith.constant 0 : i32
    return %c0_i32, %c0_i32_0 : i32, i32
  }
  func.func @transform_14(%arg0: i32) -> (i32, i32) {
    %c0_i32 = arith.constant 0 : i32
    %c0_i32_0 = arith.constant 0 : i32
    %c0_i32_1 = arith.constant 0 : i32
    return %c0_i32, %c0_i32_0 : i32, i32
  }
  func.func @transform_15(%arg0: i32) -> (i32, i32) {
    %c0_i32 = arith.constant 0 : i32
    %c0_i32_0 = arith.constant 0 : i32
    %c0_i32_1 = arith.constant 0 : i32
    return %c0_i32, %c0_i32_0 : i32, i32
  }
  func.func @transform_16(%arg0: i32) -> (i32, i32) {
    %c0_i32 = arith.constant 0 : i32
    %c0_i32_0 = arith.constant 0 : i32
    %c0_i32_1 = arith.constant 0 : i32
    return %c0_i32, %c0_i32_0 : i32, i32
  }
  func.func @transform_17(%arg0: i32) -> (i32, i32) {
    %c0_i32 = arith.constant 0 : i32
    %c0_i32_0 = arith.constant 0 : i32
    %c0_i32_1 = arith.constant 0 : i32
    return %c0_i32, %c0_i32_0 : i32, i32
  }
  func.func @transform_18(%arg0: i32) -> (i32, i32) {
    %c0_i32 = arith.constant 0 : i32
    %c0_i32_0 = arith.constant 0 : i32
    %c0_i32_1 = arith.constant 0 : i32
    return %c0_i32, %c0_i32_0 : i32, i32
  }
  func.func @transform_19(%arg0: i32) -> (i32, i32) {
    %c0_i32 = arith.constant 0 : i32
    %c0_i32_0 = arith.constant 0 : i32
    %c0_i32_1 = arith.constant 0 : i32
    return %c0_i32, %c0_i32_0 : i32, i32
  }
  func.func @transform_20(%arg0: i32) -> (i32, i32) {
    %c0_i32 = arith.constant 0 : i32
    %c0_i32_0 = arith.constant 0 : i32
    %c0_i32_1 = arith.constant 0 : i32
    return %c0_i32, %c0_i32_0 : i32, i32
  }
  func.func @transform_21(%arg0: i32) -> (i32, i32) {
    %c0_i32 = arith.constant 0 : i32
    %c0_i32_0 = arith.constant 0 : i32
    %c0_i32_1 = arith.constant 0 : i32
    return %c0_i32, %c0_i32_0 : i32, i32
  }
  func.func @transform_22(%arg0: i32) -> (i32, i32) {
    %c0_i32 = arith.constant 0 : i32
    %c0_i32_0 = arith.constant 0 : i32
    %c0_i32_1 = arith.constant 0 : i32
    return %c0_i32, %c0_i32_0 : i32, i32
  }
  func.func @transform_23(%arg0: i32) -> (i32, i32) {
    %c0_i32 = arith.constant 0 : i32
    %c0_i32_0 = arith.constant 0 : i32
    %c0_i32_1 = arith.constant 0 : i32
    return %c0_i32, %c0_i32_0 : i32, i32
  }
  func.func @transform_24(%arg0: i32) -> (i32, i32, i32) {
    %c0_i32 = arith.constant 0 : i32
    %c0_i32_0 = arith.constant 0 : i32
    %c0_i32_1 = arith.constant 0 : i32
    return %arg0, %c0_i32, %c0_i32_0 : i32, i32, i32
  }
}

</mosaic_0001>

<llo_original>
// kernel: tpu_custom_call.1
$region0: #{tpu_custom_call.1}
  #allocation0 [shape = 'u32[]', space=smem, size = 0x4, offset = 0x4, fixed_abs, tag = 'smem constant byte address 0x4 - core index']
  #allocation1 [shape = 'u32[72,128]{1,0:T(1,128)}', space=vmem, size = 0x9000, scoped, tag = 'internal scratch']
  %s0 = inlined_call_operand.vmem [shape: f32[1,8,512], index: 0, kind: input, shape index: {}]
  %s1 = inlined_call_operand.vmem [shape: f32[2,32,1], index: 1, kind: input, shape index: {}]
  %s2 = inlined_call_operand.vmem [shape: f32[2,8,32], index: 2, kind: input, shape index: {}]
  %s3 = inlined_call_operand.vmem [shape: f32[2,32,8], index: 3, kind: input, shape index: {}]
  %s4 = inlined_call_operand.vmem [shape: f32[8,512], index: 4, kind: input, shape index: {}]
  %s5 = inlined_call_operand.vmem [shape: f32[32,32], index: 5, kind: input, shape index: {}]
  %s6 = inlined_call_operand.vmem [shape: bf16[32,72], index: 6, kind: input, shape index: {}]
  %s7 = inlined_call_operand.vmem [shape: f32[32,1], index: 7, kind: input, shape index: {}]
  %s8 = inlined_call_operand.vmem [shape: f32[32,1], index: 8, kind: input, shape index: {}]
  %s9 = inlined_call_operand.vmem [shape: f32[32,1], index: 9, kind: input, shape index: {}]
  %s10 = inlined_call_operand.vmem [shape: bf16[32,288], index: 10, kind: input, shape index: {}]
  %s11 = inlined_call_operand.vmem [shape: f32[32,1], index: 11, kind: input, shape index: {}]
  %s12 = inlined_call_operand.vmem [shape: f32[32,1], index: 12, kind: input, shape index: {}]
  %s13 = inlined_call_operand.vmem [shape: f32[32,1], index: 13, kind: input, shape index: {}]
  %s14 = inlined_call_operand.vmem [shape: bf16[32,288], index: 14, kind: input, shape index: {}]
  %s15 = inlined_call_operand.vmem [shape: f32[32,1], index: 15, kind: input, shape index: {}]
  %s16 = inlined_call_operand.vmem [shape: bf16[32,32], index: 16, kind: input, shape index: {}]
  %s17 = inlined_call_operand.vmem [shape: bf16[32,32], index: 17, kind: input, shape index: {}]
  %s18 = inlined_call_operand.vmem [shape: bf16[32,32], index: 18, kind: input, shape index: {}]
  %s19 = inlined_call_operand.vmem [shape: bf16[32,32], index: 19, kind: input, shape index: {}]
  %s20 = inlined_call_operand.vmem [shape: f32[32,1], index: 20, kind: input, shape index: {}]
  %s21 = inlined_call_operand.vmem [shape: f32[32,1], index: 21, kind: input, shape index: {}]
  %s22 = inlined_call_operand.vmem [shape: bf16[8,288], index: 22, kind: input, shape index: {}]
  %s23 = inlined_call_operand.vmem [shape: f32[8,1], index: 23, kind: input, shape index: {}]
  %s24 = inlined_call_operand.hbm [shape: f32[1,8,512], index: 24, kind: output, shape index: {}]
  %s25 = sld [smem:[#allocation0]]
  $region106: #{tpu_custom_call.1} parent=0
    _
  %s27 = ssub.s32 1, %s25
  %s28 = scalar_select 0, %s27, %s25
  $region1: #{tpu_custom_call.1} parent=0
    #allocation2 [shape = 'u8[16384]{0}', space=vmem, size = 0x4000, scoped, tag = 'output window, operand 0, single buffered']
    #allocation3 [shape = 's32[1]{0}', space=sflag, size = 0x4, scoped, tag = 'scoped memory for tpu_custom_call.1']
    %29 = vsyncpa [#allocation3], 0
    // Predicated region
    $region2: #{tpu_custom_call.1} parent=1 // pred_check
      _
    $region3: #{tpu_custom_call.1} parent=1 // pred_check_branch
      %31 = sbr.rel (0) target = $region5
    $region4: #{tpu_custom_call.1} parent=1 // pred_region
      _
    $region5: #{tpu_custom_call.1} parent=1 // pred_fallthru
      _
    // Predicated region
    $region6: #{tpu_custom_call.1} parent=1 // pred_check
      _
    $region7: #{tpu_custom_call.1} parent=1 // pred_check_branch
      %33 = sbr.rel (0) target = $region9
    $region8: #{tpu_custom_call.1} parent=1 // pred_region
      _
    $region9: #{tpu_custom_call.1} parent=1 // pred_fallthru
      _
    // Predicated region
    $region10: #{tpu_custom_call.1} parent=1 // pred_check
      _
    $region11: #{tpu_custom_call.1} parent=1 // pred_check_branch
      %35 = sbr.rel (0) target = $region13
    $region12: #{tpu_custom_call.1} parent=1 // pred_region
      _
    $region13: #{tpu_custom_call.1} parent=1 // pred_fallthru
      _
    // Predicated region
    $region14: #{tpu_custom_call.1} parent=1 // pred_check
      _
    $region15: #{tpu_custom_call.1} parent=1 // pred_check_branch
      %37 = sbr.rel (0) target = $region17
    $region16: #{tpu_custom_call.1} parent=1 // pred_region
      _
    $region17: #{tpu_custom_call.1} parent=1 // pred_fallthru
      _
    // Predicated region
    $region18: #{tpu_custom_call.1} parent=1 // pred_check
      _
    $region19: #{tpu_custom_call.1} parent=1 // pred_check_branch
      %39 = sbr.rel (0) target = $region21
    $region20: #{tpu_custom_call.1} parent=1 // pred_region
      _
    $region21: #{tpu_custom_call.1} parent=1 // pred_fallthru
      _
    // Predicated region
    $region22: #{tpu_custom_call.1} parent=1 // pred_check
      _
    $region23: #{tpu_custom_call.1} parent=1 // pred_check_branch
      %41 = sbr.rel (0) target = $region25
    $region24: #{tpu_custom_call.1} parent=1 // pred_region
      _
    $region25: #{tpu_custom_call.1} parent=1 // pred_fallthru
      _
    // Predicated region
    $region26: #{tpu_custom_call.1} parent=1 // pred_check
      _
    $region27: #{tpu_custom_call.1} parent=1 // pred_check_branch
      %43 = sbr.rel (0) target = $region29
    $region28: #{tpu_custom_call.1} parent=1 // pred_region
      _
    $region29: #{tpu_custom_call.1} parent=1 // pred_fallthru
      _
    // Predicated region
    $region30: #{tpu_custom_call.1} parent=1 // pred_check
      _
    $region31: #{tpu_custom_call.1} parent=1 // pred_check_branch
      %45 = sbr.rel (0) target = $region33
    $region32: #{tpu_custom_call.1} parent=1 // pred_region
      _
    $region33: #{tpu_custom_call.1} parent=1 // pred_fallthru
      _
    // Predicated region
    $region34: #{tpu_custom_call.1} parent=1 // pred_check
      _
    $region35: #{tpu_custom_call.1} parent=1 // pred_check_branch
      %47 = sbr.rel (0) target = $region37
    $region36: #{tpu_custom_call.1} parent=1 // pred_region
      _
    $region37: #{tpu_custom_call.1} parent=1 // pred_fallthru
      _
    // Predicated region
    $region38: #{tpu_custom_call.1} parent=1 // pred_check
      _
    $region39: #{tpu_custom_call.1} parent=1 // pred_check_branch
      %49 = sbr.rel (0) target = $region41
    $region40: #{tpu_custom_call.1} parent=1 // pred_region
      _
    $region41: #{tpu_custom_call.1} parent=1 // pred_fallthru
      _
    // Predicated region
    $region42: #{tpu_custom_call.1} parent=1 // pred_check
      _
    $region43: #{tpu_custom_call.1} parent=1 // pred_check_branch
      %51 = sbr.rel (0) target = $region45
    $region44: #{tpu_custom_call.1} parent=1 // pred_region
      _
    $region45: #{tpu_custom_call.1} parent=1 // pred_fallthru
      _
    // Predicated region
    $region46: #{tpu_custom_call.1} parent=1 // pred_check
      _
    $region47: #{tpu_custom_call.1} parent=1 // pred_check_branch
      %53 = sbr.rel (0) target = $region49
    $region48: #{tpu_custom_call.1} parent=1 // pred_region
      _
    $region49: #{tpu_custom_call.1} parent=1 // pred_fallthru
      _
    // Predicated region
    $region50: #{tpu_custom_call.1} parent=1 // pred_check
      _
    $region51: #{tpu_custom_call.1} parent=1 // pred_check_branch
      %55 = sbr.rel (0) target = $region53
    $region52: #{tpu_custom_call.1} parent=1 // pred_region
      _
    $region53: #{tpu_custom_call.1} parent=1 // pred_fallthru
      _
    // Predicated region
    $region54: #{tpu_custom_call.1} parent=1 // pred_check
      _
    $region55: #{tpu_custom_call.1} parent=1 // pred_check_branch
      %57 = sbr.rel (0) target = $region57
    $region56: #{tpu_custom_call.1} parent=1 // pred_region
      _
    $region57: #{tpu_custom_call.1} parent=1 // pred_fallthru
      _
    // Predicated region
    $region58: #{tpu_custom_call.1} parent=1 // pred_check
      _
    $region59: #{tpu_custom_call.1} parent=1 // pred_check_branch
      %59 = sbr.rel (0) target = $region61
    $region60: #{tpu_custom_call.1} parent=1 // pred_region
      _
    $region61: #{tpu_custom_call.1} parent=1 // pred_fallthru
      _
    // Predicated region
    $region62: #{tpu_custom_call.1} parent=1 // pred_check
      _
    $region63: #{tpu_custom_call.1} parent=1 // pred_check_branch
      %61 = sbr.rel (0) target = $region65
    $region64: #{tpu_custom_call.1} parent=1 // pred_region
      _
    $region65: #{tpu_custom_call.1} parent=1 // pred_fallthru
      _
    // Predicated region
    $region66: #{tpu_custom_call.1} parent=1 // pred_check
      _
    $region67: #{tpu_custom_call.1} parent=1 // pred_check_branch
      %63 = sbr.rel (0) target = $region69
    $region68: #{tpu_custom_call.1} parent=1 // pred_region
      _
    $region69: #{tpu_custom_call.1} parent=1 // pred_fallthru
      _
    // Predicated region
    $region70: #{tpu_custom_call.1} parent=1 // pred_check
      _
    $region71: #{tpu_custom_call.1} parent=1 // pred_check_branch
      %65 = sbr.rel (0) target = $region73
    $region72: #{tpu_custom_call.1} parent=1 // pred_region
      _
    $region73: #{tpu_custom_call.1} parent=1 // pred_fallthru
      _
    // Predicated region
    $region74: #{tpu_custom_call.1} parent=1 // pred_check
      _
    $region75: #{tpu_custom_call.1} parent=1 // pred_check_branch
      %67 = sbr.rel (0) target = $region77
    $region76: #{tpu_custom_call.1} parent=1 // pred_region
      _
    $region77: #{tpu_custom_call.1} parent=1 // pred_fallthru
      _
    // Predicated region
    $region78: #{tpu_custom_call.1} parent=1 // pred_check
      _
    $region79: #{tpu_custom_call.1} parent=1 // pred_check_branch
      %69 = sbr.rel (0) target = $region81
    $region80: #{tpu_custom_call.1} parent=1 // pred_region
      _
    $region81: #{tpu_custom_call.1} parent=1 // pred_fallthru
      _
    // Predicated region
    $region82: #{tpu_custom_call.1} parent=1 // pred_check
      _
    $region83: #{tpu_custom_call.1} parent=1 // pred_check_branch
      %71 = sbr.rel (0) target = $region85
    $region84: #{tpu_custom_call.1} parent=1 // pred_region
      _
    $region85: #{tpu_custom_call.1} parent=1 // pred_fallthru
      _
    // Predicated region
    $region86: #{tpu_custom_call.1} parent=1 // pred_check
      _
    $region87: #{tpu_custom_call.1} parent=1 // pred_check_branch
      %73 = sbr.rel (0) target = $region89
    $region88: #{tpu_custom_call.1} parent=1 // pred_region
      _
    $region89: #{tpu_custom_call.1} parent=1 // pred_fallthru
      _
    // Predicated region
    $region90: #{tpu_custom_call.1} parent=1 // pred_check
      _
    $region91: #{tpu_custom_call.1} parent=1 // pred_check_branch
      %75 = sbr.rel (0) target = $region93
    $region92: #{tpu_custom_call.1} parent=1 // pred_region
      _
    $region93: #{tpu_custom_call.1} parent=1 // pred_fallthru
      _
    // Predicated region
    $region94: #{tpu_custom_call.1} parent=1 // pred_check
      _
    $region95: #{tpu_custom_call.1} parent=1 // pred_check_branch
      %77 = sbr.rel (0) target = $region97
    $region96: #{tpu_custom_call.1} parent=1 // pred_region
      _
    $region97: #{tpu_custom_call.1} parent=1 // pred_fallthru
      _
    %v79 = vld [vmem:[%s4] sm:$0xff]
    %v80 = vld [vmem:[%s4 + $0x8] sm:$0xff]
    %v81 = vld [vmem:[%s4 + $0x10] sm:$0xff]
    %v82 = vld [vmem:[%s4 + $0x18] sm:$0xff]
    %v83 = vld [vmem:[%s5] sm:$0xff]
    %v84 = vld [vmem:[%s5 + $0x8] sm:$0xff]
    %v85 = vld [vmem:[%s5 + $0x10] sm:$0xff]
    %v86 = vld [vmem:[%s5 + $0x18] sm:$0xff]
    %v87 = vld [vmem:[%s0] sm:$0xff]
    %v88 = vld [vmem:[%s0 + $0x8] sm:$0xff]
    %v89 = vld [vmem:[%s0 + $0x10] sm:$0xff]
    %v90 = vld [vmem:[%s0 + $0x18] sm:$0xff]
    %91 = vrot.lane.b32.xlu0 %v87, 17
    %v92 = vpop.permute.xlu0 %91
    %93 = vrot.lane.b32.xlu0 %v88, 17
    %v94 = vpop.permute.xlu0 %93
    %95 = vrot.lane.b32.xlu0 %v89, 17
    %v96 = vpop.permute.xlu0 %95
    %97 = vrot.lane.b32.xlu0 %v90, 17
    %v98 = vpop.permute.xlu0 %97
    %v99 = vlaneseq
    %v100 = vand.u32 %v99, 127
    %vm101 = vcmp.lt.s32.totalorder %v100, 17
    %v102 = vsel %vm101, %v96, %v98
    %v103 = vsel %vm101, %v94, %v96
    %v104 = vsel %vm101, %v92, %v94
    %v105 = vsel %vm101, %v98, %v92
    %v106 = vperm.slane %v79, 0
    %v107 = vperm.slane %v80, 0
    %v108 = vperm.slane %v81, 0
    %v109 = vperm.slane %v82, 0
    %v110 = vmul.f32 %v105, %v106
    %v111 = vmul.f32 %v104, %v107
    %v112 = vmul.f32 %v103, %v108
    %v113 = vmul.f32 %v102, %v109
    %v114 = vpack.c.bf16 %v111, %v110
    %v115 = vpack.c.bf16 %v113, %v112
    %116 = vrot.lane.b32.xlu0 %v87, 16
    %v117 = vpop.permute.xlu0 %116
    %118 = vrot.lane.b32.xlu0 %v88, 16
    %v119 = vpop.permute.xlu0 %118
    %120 = vrot.lane.b32.xlu0 %v89, 16
    %v121 = vpop.permute.xlu0 %120
    %122 = vrot.lane.b32.xlu0 %v90, 16
    %v123 = vpop.permute.xlu0 %122
    %vm124 = vcmp.lt.s32.totalorder %v100, 16
    %v125 = vsel %vm124, %v121, %v123
    %v126 = vsel %vm124, %v119, %v121
    %v127 = vsel %vm124, %v117, %v119
    %v128 = vsel %vm124, %v123, %v117
    %v129 = vperm.slane %v79, 1
    %v130 = vperm.slane %v80, 1
    %v131 = vperm.slane %v81, 1
    %v132 = vperm.slane %v82, 1
    %v133 = vmul.f32 %v128, %v129
    %v134 = vmul.f32 %v127, %v130
    %v135 = vmul.f32 %v126, %v131
    %v136 = vmul.f32 %v125, %v132
    %v137 = vpack.c.bf16 %v134, %v133
    %v138 = vpack.c.bf16 %v136, %v135
    %139 = vrot.lane.b32.xlu0 %v87, 15
    %v140 = vpop.permute.xlu0 %139
    %141 = vrot.lane.b32.xlu0 %v88, 15
    %v142 = vpop.permute.xlu0 %141
    %143 = vrot.lane.b32.xlu0 %v89, 15
    %v144 = vpop.permute.xlu0 %143
    %145 = vrot.lane.b32.xlu0 %v90, 15
    %v146 = vpop.permute.xlu0 %145
    %vm147 = vcmp.lt.s32.totalorder %v100, 15
    %v148 = vsel %vm147, %v144, %v146
    %v149 = vsel %vm147, %v142, %v144
    %v150 = vsel %vm147, %v140, %v142
    %v151 = vsel %vm147, %v146, %v140
    %v152 = vperm.slane %v79, 2
    %v153 = vperm.slane %v80, 2
    %v154 = vperm.slane %v81, 2
    %v155 = vperm.slane %v82, 2
    %v156 = vmul.f32 %v151, %v152
    %v157 = vmul.f32 %v150, %v153
    %v158 = vmul.f32 %v149, %v154
    %v159 = vmul.f32 %v148, %v155
    %v160 = vpack.c.bf16 %v157, %v156
    %v161 = vpack.c.bf16 %v159, %v158
    %162 = vrot.lane.b32.xlu0 %v87, 1
    %v163 = vpop.permute.xlu0 %162
    %164 = vrot.lane.b32.xlu0 %v88, 1
    %v165 = vpop.permute.xlu0 %164
    %166 = vrot.lane.b32.xlu0 %v89, 1
    %v167 = vpop.permute.xlu0 %166
    %168 = vrot.lane.b32.xlu0 %v90, 1
    %v169 = vpop.permute.xlu0 %168
    %vm170 = vcmp.lt.s32.totalorder %v100, 1
    %v171 = vsel %vm170, %v167, %v169
    %v172 = vsel %vm170, %v165, %v167
    %v173 = vsel %vm170, %v163, %v165
    %v174 = vsel %vm170, %v169, %v163
    %v175 = vperm.slane %v79, 3
    %v176 = vperm.slane %v80, 3
    %v177 = vperm.slane %v81, 3
    %v178 = vperm.slane %v82, 3
    %v179 = vmul.f32 %v174, %v175
    %v180 = vmul.f32 %v173, %v176
    %v181 = vmul.f32 %v172, %v177
    %v182 = vmul.f32 %v171, %v178
    %v183 = vpack.c.bf16 %v180, %v179
    %v184 = vpack.c.bf16 %v182, %v181
    %v185 = vpack.c.bf16 %v88, %v87
    %v186 = vpack.c.bf16 %v90, %v89
    %187 = vrot.lane.b32.xlu0 %v87, 127
    %v188 = vpop.permute.xlu0 %187
    %189 = vrot.lane.b32.xlu0 %v88, 127
    %v190 = vpop.permute.xlu0 %189
    %191 = vrot.lane.b32.xlu0 %v89, 127
    %v192 = vpop.permute.xlu0 %191
    %193 = vrot.lane.b32.xlu0 %v90, 127
    %v194 = vpop.permute.xlu0 %193
    %vm195 = vcmp.lt.s32.totalorder %v100, 127
    %v196 = vsel %vm195, %v192, %v194
    %v197 = vsel %vm195, %v190, %v192
    %v198 = vsel %vm195, %v188, %v190
    %v199 = vsel %vm195, %v194, %v188
    %v200 = vperm.slane %v79, 4
    %v201 = vperm.slane %v80, 4
    %v202 = vperm.slane %v81, 4
    %v203 = vperm.slane %v82, 4
    %v204 = vmul.f32 %v198, %v200
    %v205 = vmul.f32 %v197, %v201
    %v206 = vmul.f32 %v196, %v202
    %v207 = vmul.f32 %v199, %v203
    %v208 = vpack.c.bf16 %v205, %v204
    %v209 = vpack.c.bf16 %v207, %v206
    %210 = vrot.lane.b32.xlu0 %v87, 113
    %v211 = vpop.permute.xlu0 %210
    %212 = vrot.lane.b32.xlu0 %v88, 113
    %v213 = vpop.permute.xlu0 %212
    %214 = vrot.lane.b32.xlu0 %v89, 113
    %v215 = vpop.permute.xlu0 %214
    %216 = vrot.lane.b32.xlu0 %v90, 113
    %v217 = vpop.permute.xlu0 %216
    %vm218 = vcmp.lt.s32.totalorder %v100, 113
    %v219 = vsel %vm218, %v215, %v217
    %v220 = vsel %vm218, %v213, %v215
    %v221 = vsel %vm218, %v211, %v213
    %v222 = vsel %vm218, %v217, %v211
    %v223 = vperm.slane %v79, 5
    %v224 = vperm.slane %v80, 5
    %v225 = vperm.slane %v81, 5
    %v226 = vperm.slane %v82, 5
    %v227 = vmul.f32 %v221, %v223
    %v228 = vmul.f32 %v220, %v224
    %v229 = vmul.f32 %v219, %v225
    %v230 = vmul.f32 %v222, %v226
    %v231 = vpack.c.bf16 %v228, %v227
    %v232 = vpack.c.bf16 %v230, %v229
    %233 = vrot.lane.b32.xlu0 %v87, 112
    %v234 = vpop.permute.xlu0 %233
    %235 = vrot.lane.b32.xlu0 %v88, 112
    %v236 = vpop.permute.xlu0 %235
    %237 = vrot.lane.b32.xlu0 %v89, 112
    %v238 = vpop.permute.xlu0 %237
    %239 = vrot.lane.b32.xlu0 %v90, 112
    %v240 = vpop.permute.xlu0 %239
    %vm241 = vcmp.lt.s32.totalorder %v100, 112
    %v242 = vsel %vm241, %v238, %v240
    %v243 = vsel %vm241, %v236, %v238
    %v244 = vsel %vm241, %v234, %v236
    %v245 = vsel %vm241, %v240, %v234
    %v246 = vperm.slane %v79, 6
    %v247 = vperm.slane %v80, 6
    %v248 = vperm.slane %v81, 6
    %v249 = vperm.slane %v82, 6
    %v250 = vmul.f32 %v244, %v246
    %v251 = vmul.f32 %v243, %v247
    %v252 = vmul.f32 %v242, %v248
    %v253 = vmul.f32 %v245, %v249
    %v254 = vpack.c.bf16 %v251, %v250
    %v255 = vpack.c.bf16 %v253, %v252
    %256 = vrot.lane.b32.xlu0 %v87, 111
    %v257 = vpop.permute.xlu0 %256
    %258 = vrot.lane.b32.xlu0 %v88, 111
    %v259 = vpop.permute.xlu0 %258
    %260 = vrot.lane.b32.xlu0 %v89, 111
    %v261 = vpop.permute.xlu0 %260
    %262 = vrot.lane.b32.xlu0 %v90, 111
    %v263 = vpop.permute.xlu0 %262
    %vm264 = vcmp.lt.s32.totalorder %v100, 111
    %v265 = vsel %vm264, %v261, %v263
    %v266 = vsel %vm264, %v259, %v261
    %v267 = vsel %vm264, %v257, %v259
    %v268 = vsel %vm264, %v263, %v257
    %v269 = vperm.slane %v79, 7
    %v270 = vperm.slane %v80, 7
    %v271 = vperm.slane %v81, 7
    %v272 = vperm.slane %v82, 7
    %v273 = vmul.f32 %v267, %v269
    %v274 = vmul.f32 %v266, %v270
    %v275 = vmul.f32 %v265, %v271
    %v276 = vmul.f32 %v268, %v272
    %v277 = vpack.c.bf16 %v274, %v273
    %v278 = vpack.c.bf16 %v276, %v275
    %v281 = vunpack.c.l.b16 %v114
    %v282 = vunpack.c.h.b16 %v114
    %v283 = vunpack.c.l.b16 %v115
    %v284 = vunpack.c.h.b16 %v115
    %v285 = vpack.c.b16 %v281, %v281
    %v286 = vpack.c.b16 %v282, %v282
    %v287 = vpack.c.b16 %v283, %v283
    %v288 = vpack.c.b16 %v284, %v284
    %v291 = vunpack.c.l.b16 %v137
    %v292 = vunpack.c.h.b16 %v137
    %v293 = vunpack.c.l.b16 %v138
    %v294 = vunpack.c.h.b16 %v138
    %v295 = vpack.c.b16 %v291, %v291
    %v296 = vpack.c.b16 %v292, %v292
    %v297 = vpack.c.b16 %v293, %v293
    %v298 = vpack.c.b16 %v294, %v294
    %v301 = vunpack.c.l.b16 %v160
    %v302 = vunpack.c.h.b16 %v160
    %v303 = vunpack.c.l.b16 %v161
    %v304 = vunpack.c.h.b16 %v161
    %v305 = vpack.c.b16 %v301, %v301
    %v306 = vpack.c.b16 %v302, %v302
    %v307 = vpack.c.b16 %v303, %v303
    %v308 = vpack.c.b16 %v304, %v304
    %v311 = vunpack.c.l.b16 %v183
    %v312 = vunpack.c.h.b16 %v183
    %v313 = vunpack.c.l.b16 %v184
    %v314 = vunpack.c.h.b16 %v184
    %v315 = vpack.c.b16 %v311, %v311
    %v316 = vpack.c.b16 %v312, %v312
    %v317 = vpack.c.b16 %v313, %v313
    %v318 = vpack.c.b16 %v314, %v314
    %v321 = vunpack.c.l.b16 %v185
    %v322 = vunpack.c.h.b16 %v185
    %v323 = vunpack.c.l.b16 %v186
    %v324 = vunpack.c.h.b16 %v186
    %v325 = vpack.c.b16 %v321, %v321
    %v326 = vpack.c.b16 %v322, %v322
    %v327 = vpack.c.b16 %v323, %v323
    %v328 = vpack.c.b16 %v324, %v324
    %v331 = vunpack.c.l.b16 %v208
    %v332 = vunpack.c.h.b16 %v208
    %v333 = vunpack.c.l.b16 %v209
    %v334 = vunpack.c.h.b16 %v209
    %v335 = vpack.c.b16 %v331, %v331
    %v336 = vpack.c.b16 %v332, %v332
    %v337 = vpack.c.b16 %v333, %v333
    %v338 = vpack.c.b16 %v334, %v334
    %v341 = vunpack.c.l.b16 %v231
    %v342 = vunpack.c.h.b16 %v231
    %v343 = vunpack.c.l.b16 %v232
    %v344 = vunpack.c.h.b16 %v232
    %v345 = vpack.c.b16 %v341, %v341
    %v346 = vpack.c.b16 %v342, %v342
    %v347 = vpack.c.b16 %v343, %v343
    %v348 = vpack.c.b16 %v344, %v344
    %v351 = vunpack.c.l.b16 %v254
    %v352 = vunpack.c.h.b16 %v254
    %v353 = vunpack.c.l.b16 %v255
    %v354 = vunpack.c.h.b16 %v255
    %v355 = vpack.c.b16 %v351, %v351
    %v356 = vpack.c.b16 %v352, %v352
    %v357 = vpack.c.b16 %v353, %v353
    %v358 = vpack.c.b16 %v354, %v354
    %v361 = vunpack.c.l.b16 %v277
    %v362 = vunpack.c.h.b16 %v277
    %v363 = vunpack.c.l.b16 %v278
    %v364 = vunpack.c.h.b16 %v278
    %v365 = vpack.c.b16 %v361, %v361
    %v366 = vpack.c.b16 %v362, %v362
    %v367 = vpack.c.b16 %v363, %v363
    %v368 = vpack.c.b16 %v364, %v364
    %vm369 = vcmask 1043456
    %v372 = vsel %vm369, %v285, %v295
    %v376 = vsel %vm369, %v286, %v296
    %v380 = vsel %vm369, %v287, %v297
    %v384 = vsel %vm369, %v288, %v298
    %v388 = vsel %vm369, %v305, %v315
    %v392 = vsel %vm369, %v306, %v316
    %v396 = vsel %vm369, %v307, %v317
    %v400 = vsel %vm369, %v308, %v318
    %v404 = vsel %vm369, %v325, %v335
    %v408 = vsel %vm369, %v326, %v336
    %v412 = vsel %vm369, %v327, %v337
    %v416 = vsel %vm369, %v328, %v338
    %v420 = vsel %vm369, %v345, %v355
    %v424 = vsel %vm369, %v346, %v356
    %v428 = vsel %vm369, %v347, %v357
    %v432 = vsel %vm369, %v348, %v358
    %v434 = vld [vmem:[%s6] sm:$0xf]
    %v435 = vld [vmem:[%s6 + $0x4] sm:$0xf]
    %v436 = vld [vmem:[%s6 + $0x8] sm:$0xf]
    %v437 = vld [vmem:[%s6 + $0xc] sm:$0xf]
    %v438 = vld [vmem:[%s7] sm:$0xff]
    %v439 = vld [vmem:[%s7 + $0x8] sm:$0xff]
    %v440 = vld [vmem:[%s7 + $0x10] sm:$0xff]
    %v441 = vld [vmem:[%s7 + $0x18] sm:$0xff]
    %443 = vset.pattern.permute.xlu0 0
    %444 = vperm.xlu0 %443, %v438
    %v445 = vpop.permute.xlu0 %444
    %448 = vset.pattern.permute.xlu0 0
    %449 = vperm.xlu0 %448, %v439
    %v450 = vpop.permute.xlu0 %449
    %453 = vset.pattern.permute.xlu0 0
    %454 = vperm.xlu0 %453, %v440
    %v455 = vpop.permute.xlu0 %454
    %458 = vset.pattern.permute.xlu0 0
    %459 = vperm.xlu0 %458, %v441
    %v460 = vpop.permute.xlu0 %459
    %v466 = vunpack.c.l.b16 %v434
    %v467 = vunpack.c.l.b16 %v435
    %v468 = vunpack.c.l.b16 %v436
    %v469 = vunpack.c.l.b16 %v437
    %v470 = vpack.c.b16 %v467, %v466
    %v471 = vpack.c.b16 %v469, %v468
    %vm472 = vcmask 588800
    %v474 = vsel %vm472, %v470, 0
    %v477 = vsel %vm472, %v471, 0
    %v480 = vsel %vm369, %v365, 0
    %v483 = vsel %vm369, %v366, 0
    %v486 = vsel %vm369, %v367, 0
    %v489 = vsel %vm369, %v368, 0
    %491 = vmatpush.bf16.msra.mxu0 0
    %492 = vmatpush.bf16.msra.mxu0 0
    %493 = vmatpush.bf16.msra.mxu0 0
    %494 = vmatpush.bf16.msra.mxu0 %v480
    %495 = vmatpush.bf16.msra.mxu0 %v420
    %496 = vmatpush.bf16.msra.mxu0 %v404
    %497 = vmatpush.bf16.msra.mxu0 %v388
    %498 = vmatpush.bf16.msra.mxu0 %v372
    %499 = vmatmul.bf16.gmra.mxu0 %v474
    %v500 = vpop.f32.mrf.mxu0
    %v501 = vadd.f32 %v445, %v500
    %v502 = vpop.f32.mrf.mxu0
    %v503 = vadd.f32 %v450, %v502
    %504 = vmatmul.bf16.gmra.mxu0 %v477
    %v505 = vpop.f32.mrf.mxu0
    %v506 = vadd.f32 %v455, %v505
    %v507 = vpop.f32.mrf.mxu0
    %v508 = vadd.f32 %v460, %v507
    %509 = vdwg.mxu0
    %510 = vmatpush.bf16.msra.mxu0 0
    %511 = vmatpush.bf16.msra.mxu0 0
    %512 = vmatpush.bf16.msra.mxu0 0
    %513 = vmatpush.bf16.msra.mxu0 %v483
    %514 = vmatpush.bf16.msra.mxu0 %v424
    %515 = vmatpush.bf16.msra.mxu0 %v408
    %516 = vmatpush.bf16.msra.mxu0 %v392
    %517 = vmatpush.bf16.msra.mxu0 %v376
    %518 = vmatmul.bf16.gmra.mxu0 %v474
    %v519 = vpop.f32.mrf.mxu0
    %v520 = vadd.f32 %v445, %v519
    %v521 = vpop.f32.mrf.mxu0
    %v522 = vadd.f32 %v450, %v521
    %523 = vmatmul.bf16.gmra.mxu0 %v477
    %v524 = vpop.f32.mrf.mxu0
    %v525 = vadd.f32 %v455, %v524
    %v526 = vpop.f32.mrf.mxu0
    %v527 = vadd.f32 %v460, %v526
    %528 = vdwg.mxu0
    %529 = vmatpush.bf16.msra.mxu0 0
    %530 = vmatpush.bf16.msra.mxu0 0
    %531 = vmatpush.bf16.msra.mxu0 0
    %532 = vmatpush.bf16.msra.mxu0 %v486
    %533 = vmatpush.bf16.msra.mxu0 %v428
    %534 = vmatpush.bf16.msra.mxu0 %v412
    %535 = vmatpush.bf16.msra.mxu0 %v396
    %536 = vmatpush.bf16.msra.mxu0 %v380
    %537 = vmatmul.bf16.gmra.mxu0 %v474
    %v538 = vpop.f32.mrf.mxu0
    %v539 = vadd.f32 %v445, %v538
    %v540 = vpop.f32.mrf.mxu0
    %v541 = vadd.f32 %v450, %v540
    %542 = vmatmul.bf16.gmra.mxu0 %v477
    %v543 = vpop.f32.mrf.mxu0
    %v544 = vadd.f32 %v455, %v543
    %v545 = vpop.f32.mrf.mxu0
    %v546 = vadd.f32 %v460, %v545
    %547 = vdwg.mxu0
    %548 = vmatpush.bf16.msra.mxu0 0
    %549 = vmatpush.bf16.msra.mxu0 0
    %550 = vmatpush.bf16.msra.mxu0 0
    %551 = vmatpush.bf16.msra.mxu0 %v489
    %552 = vmatpush.bf16.msra.mxu0 %v432
    %553 = vmatpush.bf16.msra.mxu0 %v416
    %554 = vmatpush.bf16.msra.mxu0 %v400
    %555 = vmatpush.bf16.msra.mxu0 %v384
    %556 = vmatmul.bf16.gmra.mxu0 %v474
    %v557 = vpop.f32.mrf.mxu0
    %v558 = vadd.f32 %v445, %v557
    %v559 = vpop.f32.mrf.mxu0
    %v560 = vadd.f32 %v450, %v559
    %561 = vmatmul.bf16.gmra.mxu0 %v477
    %v562 = vpop.f32.mrf.mxu0
    %v563 = vadd.f32 %v455, %v562
    %v564 = vpop.f32.mrf.mxu0
    %v565 = vadd.f32 %v460, %v564
    %566 = vdwg.mxu0
    %v567 = vadd.f32 %v501, %v520
    %568 = vadd.xlane.f32.xlu0 %v567
    %v569 = vpop.xlane.xlu0 %568
    %v570 = vadd.f32 %v503, %v522
    %571 = vadd.xlane.f32.xlu0 %v570
    %v572 = vpop.xlane.xlu0 %571
    %v573 = vadd.f32 %v506, %v525
    %574 = vadd.xlane.f32.xlu0 %v573
    %v575 = vpop.xlane.xlu0 %574
    %v576 = vadd.f32 %v508, %v527
    %577 = vadd.xlane.f32.xlu0 %v576
    %v578 = vpop.xlane.xlu0 %577
    %v579 = vmul.f32 %v501, %v501
    %v580 = vmul.f32 %v520, %v520
    %v581 = vmul.f32 %v503, %v503
    %v582 = vmul.f32 %v522, %v522
    %v583 = vmul.f32 %v506, %v506
    %v584 = vmul.f32 %v525, %v525
    %v585 = vmul.f32 %v508, %v508
    %v586 = vmul.f32 %v527, %v527
    %v587 = vadd.f32 %v579, %v580
    %588 = vadd.xlane.f32.xlu0 %v587
    %v589 = vpop.xlane.xlu0 %588
    %v590 = vadd.f32 %v581, %v582
    %591 = vadd.xlane.f32.xlu0 %v590
    %v592 = vpop.xlane.xlu0 %591
    %v593 = vadd.f32 %v583, %v584
    %594 = vadd.xlane.f32.xlu0 %v593
    %v595 = vpop.xlane.xlu0 %594
    %v596 = vadd.f32 %v585, %v586
    %597 = vadd.xlane.f32.xlu0 %v596
    %v598 = vpop.xlane.xlu0 %597
    %v599 = vadd.f32 %v539, %v558
    %600 = vadd.xlane.f32.xlu0 %v599
    %v601 = vpop.xlane.xlu0 %600
    %v602 = vadd.f32 %v541, %v560
    %603 = vadd.xlane.f32.xlu0 %v602
    %v604 = vpop.xlane.xlu0 %603
    %v605 = vadd.f32 %v544, %v563
    %606 = vadd.xlane.f32.xlu0 %v605
    %v607 = vpop.xlane.xlu0 %606
    %v608 = vadd.f32 %v546, %v565
    %609 = vadd.xlane.f32.xlu0 %v608
    %v610 = vpop.xlane.xlu0 %609
    %v611 = vmul.f32 %v539, %v539
    %v612 = vmul.f32 %v558, %v558
    %v613 = vmul.f32 %v541, %v541
    %v614 = vmul.f32 %v560, %v560
    %v615 = vmul.f32 %v544, %v544
    %v616 = vmul.f32 %v563, %v563
    %v617 = vmul.f32 %v546, %v546
    %v618 = vmul.f32 %v565, %v565
    %v619 = vadd.f32 %v611, %v612
    %620 = vadd.xlane.f32.xlu0 %v619
    %v621 = vpop.xlane.xlu0 %620
    %v622 = vadd.f32 %v613, %v614
    %623 = vadd.xlane.f32.xlu0 %v622
    %v624 = vpop.xlane.xlu0 %623
    %v625 = vadd.f32 %v615, %v616
    %626 = vadd.xlane.f32.xlu0 %v625
    %v627 = vpop.xlane.xlu0 %626
    %v628 = vadd.f32 %v617, %v618
    %629 = vadd.xlane.f32.xlu0 %v628
    %v630 = vpop.xlane.xlu0 %629
    %vm631 = vcmask 7168
    %v632 = vsel %vm631, %v569, %v589
    %v633 = vsel %vm631, %v572, %v592
    %v634 = vsel %vm631, %v575, %v595
    %v635 = vsel %vm631, %v578, %v598
    %vm636 = vcmask 15360
    %v637 = vsel %vm636, %v632, %v601
    %v638 = vsel %vm636, %v633, %v604
    %v639 = vsel %vm636, %v634, %v607
    %v640 = vsel %vm636, %v635, %v610
    %vm641 = vcmask 23552
    %v642 = vsel %vm641, %v637, %v621
    %v643 = vsel %vm641, %v638, %v624
    %v644 = vsel %vm641, %v639, %v627
    %v645 = vsel %vm641, %v640, %v630
    %vm646 = vcmask 261120
    %v648 = vsel %vm646, %v83, 0
    %v651 = vsel %vm646, %v84, 0
    %v654 = vsel %vm646, %v85, 0
    %v657 = vsel %vm646, %v86, 0
    %659 = vmatpush.msra.mxu0 0.0
    %660 = vmatpush.msra.mxu0 0.0
    %661 = vmatpush.msra.mxu0 0.0
    %662 = vmatpush.msra.mxu0 0.0
    %663 = vmatpush.msra.mxu0 0.0
    %664 = vmatpush.msra.mxu0 0.0
    %665 = vmatpush.msra.mxu0 0.0
    %666 = vmatpush.msra.mxu0 0.0
    %667 = vmatpush.msra.mxu0 0.0
    %668 = vmatpush.msra.mxu0 0.0
    %669 = vmatpush.msra.mxu0 0.0
    %670 = vmatpush.msra.mxu0 0.0
    %671 = vmatpush.msra.mxu0 %v645
    %672 = vmatpush.msra.mxu0 %v644
    %673 = vmatpush.msra.mxu0 %v643
    %674 = vmatpush.msra.mxu0 %v642
    %675 = vmatmul.f32.gmra.mxu0 %v648
    %v676 = vpop.f32.mrf.mxu0
    %v677 = vadd.f32 0.0, %v676
    %678 = vmatmul.f32.gmra.mxu0 %v651
    %v679 = vpop.f32.mrf.mxu0
    %v680 = vadd.f32 0.0, %v679
    %681 = vmatmul.f32.gmra.mxu0 %v654
    %v682 = vpop.f32.mrf.mxu0
    %v683 = vadd.f32 0.0, %v682
    %684 = vmatmul.f32.gmra.mxu0 %v657
    %v685 = vpop.f32.mrf.mxu0
    %v686 = vadd.f32 0.0, %v685
    %687 = vdwg.mxu0
    %v688 = vmul.f32 %v677, %v677
    %v689 = vmul.f32 %v680, %v680
    %v690 = vmul.f32 %v683, %v683
    %v691 = vmul.f32 %v686, %v686
    %696 = vrot.lane.b32.xlu0 %v688, 1
    %v697 = vpop.permute.xlu0 %696
    %698 = vrot.lane.b32.xlu0 %v689, 1
    %v699 = vpop.permute.xlu0 %698
    %700 = vrot.lane.b32.xlu0 %v690, 1
    %v701 = vpop.permute.xlu0 %700
    %702 = vrot.lane.b32.xlu0 %v691, 1
    %v703 = vpop.permute.xlu0 %702
    %v708 = vsub.f32 %v677, %v697
    %v709 = vsub.f32 %v680, %v699
    %v710 = vsub.f32 %v683, %v701
    %v711 = vsub.f32 %v686, %v703
    %713 = vset.pattern.permute.xlu0 0
    %714 = vperm.xlu0 %713, %v677
    %v715 = vpop.permute.xlu0 %714
    %718 = vset.pattern.permute.xlu0 0
    %719 = vperm.xlu0 %718, %v680
    %v720 = vpop.permute.xlu0 %719
    %723 = vset.pattern.permute.xlu0 0
    %724 = vperm.xlu0 %723, %v683
    %v725 = vpop.permute.xlu0 %724
    %728 = vset.pattern.permute.xlu0 0
    %729 = vperm.xlu0 %728, %v686
    %v730 = vpop.permute.xlu0 %729
    %v732 = vsub.f32 %v501, %v715
    %v733 = vsub.f32 %v520, %v715
    %v734 = vsub.f32 %v503, %v720
    %v735 = vsub.f32 %v522, %v720
    %v736 = vsub.f32 %v506, %v725
    %v737 = vsub.f32 %v525, %v725
    %v738 = vsub.f32 %v508, %v730
    %v739 = vsub.f32 %v527, %v730
    %v740 = vadd.f32 %v708, 1e-05
    %v741 = vadd.f32 %v709, 1e-05
    %v742 = vadd.f32 %v710, 1e-05
    %v743 = vadd.f32 %v711, 1e-05
    %v744 = vrsqrt.pop %v740
    %v745 = vmul.f32 %v744, %v740
    %v746 = vmul.f32 %v745, %v744
    %v747 = vmul.f32 0.5, %v746
    %v748 = vsub.f32 1.5, %v747
    %v749 = vmul.f32 %v744, %v748
    %vm750 = vweird.f32 %v740
    %vm751 = vweird.f32 %v744
    %vm752 = vmor %vm750, %vm751
    %v753 = vsel %vm752, %v744, %v749
    %v754 = vrsqrt.pop %v741
    %v755 = vmul.f32 %v754, %v741
    %v756 = vmul.f32 %v755, %v754
    %v757 = vmul.f32 0.5, %v756
    %v758 = vsub.f32 1.5, %v757
    %v759 = vmul.f32 %v754, %v758
    %vm760 = vweird.f32 %v741
    %vm761 = vweird.f32 %v754
    %vm762 = vmor %vm760, %vm761
    %v763 = vsel %vm762, %v754, %v759
    %v764 = vrsqrt.pop %v742
    %v765 = vmul.f32 %v764, %v742
    %v766 = vmul.f32 %v765, %v764
    %v767 = vmul.f32 0.5, %v766
    %v768 = vsub.f32 1.5, %v767
    %v769 = vmul.f32 %v764, %v768
    %vm770 = vweird.f32 %v742
    %vm771 = vweird.f32 %v764
    %vm772 = vmor %vm770, %vm771
    %v773 = vsel %vm772, %v764, %v769
    %v774 = vrsqrt.pop %v743
    %v775 = vmul.f32 %v774, %v743
    %v776 = vmul.f32 %v775, %v774
    %v777 = vmul.f32 0.5, %v776
    %v778 = vsub.f32 1.5, %v777
    %v779 = vmul.f32 %v774, %v778
    %vm780 = vweird.f32 %v743
    %vm781 = vweird.f32 %v774
    %vm782 = vmor %vm780, %vm781
    %v783 = vsel %vm782, %v774, %v779
    %785 = vset.pattern.permute.xlu0 1
    %786 = vperm.xlu0 %785, %v753
    %v787 = vpop.permute.xlu0 %786
    %790 = vset.pattern.permute.xlu0 1
    %791 = vperm.xlu0 %790, %v763
    %v792 = vpop.permute.xlu0 %791
    %795 = vset.pattern.permute.xlu0 1
    %796 = vperm.xlu0 %795, %v773
    %v797 = vpop.permute.xlu0 %796
    %800 = vset.pattern.permute.xlu0 1
    %801 = vperm.xlu0 %800, %v783
    %v802 = vpop.permute.xlu0 %801
    %v804 = vmul.f32 %v732, %v787
    %v805 = vmul.f32 %v733, %v787
    %v806 = vmul.f32 %v734, %v792
    %v807 = vmul.f32 %v735, %v792
    %v808 = vmul.f32 %v736, %v797
    %v809 = vmul.f32 %v737, %v797
    %v810 = vmul.f32 %v738, %v802
    %v811 = vmul.f32 %v739, %v802
    %812 = vset.pattern.permute.xlu0 2
    %813 = vperm.xlu0 %812, %v677
    %v814 = vpop.permute.xlu0 %813
    %816 = vset.pattern.permute.xlu0 2
    %817 = vperm.xlu0 %816, %v680
    %v818 = vpop.permute.xlu0 %817
    %820 = vset.pattern.permute.xlu0 2
    %821 = vperm.xlu0 %820, %v683
    %v822 = vpop.permute.xlu0 %821
    %824 = vset.pattern.permute.xlu0 2
    %825 = vperm.xlu0 %824, %v686
    %v826 = vpop.permute.xlu0 %825
    %v828 = vsub.f32 %v539, %v814
    %v829 = vsub.f32 %v558, %v814
    %v830 = vsub.f32 %v541, %v818
    %v831 = vsub.f32 %v560, %v818
    %v832 = vsub.f32 %v544, %v822
    %v833 = vsub.f32 %v563, %v822
    %v834 = vsub.f32 %v546, %v826
    %v835 = vsub.f32 %v565, %v826
    %836 = vset.pattern.permute.xlu0 3
    %837 = vperm.xlu0 %836, %v753
    %v838 = vpop.permute.xlu0 %837
    %840 = vset.pattern.permute.xlu0 3
    %841 = vperm.xlu0 %840, %v763
    %v842 = vpop.permute.xlu0 %841
    %844 = vset.pattern.permute.xlu0 3
    %845 = vperm.xlu0 %844, %v773
    %v846 = vpop.permute.xlu0 %845
    %848 = vset.pattern.permute.xlu0 3
    %849 = vperm.xlu0 %848, %v783
    %v850 = vpop.permute.xlu0 %849
    %v852 = vmul.f32 %v828, %v838
    %v853 = vmul.f32 %v829, %v838
    %v854 = vmul.f32 %v830, %v842
    %v855 = vmul.f32 %v831, %v842
    %v856 = vmul.f32 %v832, %v846
    %v857 = vmul.f32 %v833, %v846
    %v858 = vmul.f32 %v834, %v850
    %v859 = vmul.f32 %v835, %v850
    %v860 = vld [vmem:[%s8] sm:$0xff]
    %v861 = vld [vmem:[%s8 + $0x8] sm:$0xff]
    %v862 = vld [vmem:[%s8 + $0x10] sm:$0xff]
    %v863 = vld [vmem:[%s8 + $0x18] sm:$0xff]
    %865 = vset.pattern.permute.xlu0 0
    %866 = vperm.xlu0 %865, %v860
    %v867 = vpop.permute.xlu0 %866
    %870 = vset.pattern.permute.xlu0 0
    %871 = vperm.xlu0 %870, %v861
    %v872 = vpop.permute.xlu0 %871
    %875 = vset.pattern.permute.xlu0 0
    %876 = vperm.xlu0 %875, %v862
    %v877 = vpop.permute.xlu0 %876
    %880 = vset.pattern.permute.xlu0 0
    %881 = vperm.xlu0 %880, %v863
    %v882 = vpop.permute.xlu0 %881
    %v884 = vmul.f32 %v804, %v867
    %v885 = vmul.f32 %v805, %v867
    %v886 = vmul.f32 %v852, %v867
    %v887 = vmul.f32 %v853, %v867
    %v888 = vmul.f32 %v806, %v872
    %v889 = vmul.f32 %v807, %v872
    %v890 = vmul.f32 %v854, %v872
    %v891 = vmul.f32 %v855, %v872
    %v892 = vmul.f32 %v808, %v877
    %v893 = vmul.f32 %v809, %v877
    %v894 = vmul.f32 %v856, %v877
    %v895 = vmul.f32 %v857, %v877
    %v896 = vmul.f32 %v810, %v882
    %v897 = vmul.f32 %v811, %v882
    %v898 = vmul.f32 %v858, %v882
    %v899 = vmul.f32 %v859, %v882
    %v900 = vld [vmem:[%s9] sm:$0xff]
    %v901 = vld [vmem:[%s9 + $0x8] sm:$0xff]
    %v902 = vld [vmem:[%s9 + $0x10] sm:$0xff]
    %v903 = vld [vmem:[%s9 + $0x18] sm:$0xff]
    %905 = vset.pattern.permute.xlu0 0
    %906 = vperm.xlu0 %905, %v900
    %v907 = vpop.permute.xlu0 %906
    %910 = vset.pattern.permute.xlu0 0
    %911 = vperm.xlu0 %910, %v901
    %v912 = vpop.permute.xlu0 %911
    %915 = vset.pattern.permute.xlu0 0
    %916 = vperm.xlu0 %915, %v902
    %v917 = vpop.permute.xlu0 %916
    %920 = vset.pattern.permute.xlu0 0
    %921 = vperm.xlu0 %920, %v903
    %v922 = vpop.permute.xlu0 %921
    %v924 = vadd.f32 %v884, %v907
    %v925 = vadd.f32 %v885, %v907
    %v926 = vadd.f32 %v886, %v907
    %v927 = vadd.f32 %v887, %v907
    %v928 = vadd.f32 %v888, %v912
    %v929 = vadd.f32 %v889, %v912
    %v930 = vadd.f32 %v890, %v912
    %v931 = vadd.f32 %v891, %v912
    %v932 = vadd.f32 %v892, %v917
    %v933 = vadd.f32 %v893, %v917
    %v934 = vadd.f32 %v894, %v917
    %v935 = vadd.f32 %v895, %v917
    %v936 = vadd.f32 %v896, %v922
    %v937 = vadd.f32 %v897, %v922
    %v938 = vadd.f32 %v898, %v922
    %v939 = vadd.f32 %v899, %v922
    %v940 = vxor.u32 %v924, 2147483648
    %v941 = vxor.u32 %v925, 2147483648
    %v942 = vxor.u32 %v926, 2147483648
    %v943 = vxor.u32 %v927, 2147483648
    %v944 = vxor.u32 %v928, 2147483648
    %v945 = vxor.u32 %v929, 2147483648
    %v946 = vxor.u32 %v930, 2147483648
    %v947 = vxor.u32 %v931, 2147483648
    %v948 = vxor.u32 %v932, 2147483648
    %v949 = vxor.u32 %v933, 2147483648
    %v950 = vxor.u32 %v934, 2147483648
    %v951 = vxor.u32 %v935, 2147483648
    %v952 = vxor.u32 %v936, 2147483648
    %v953 = vxor.u32 %v937, 2147483648
    %v954 = vxor.u32 %v938, 2147483648
    %v955 = vxor.u32 %v939, 2147483648
    %v956 = vmul.f32 %v940, 1.442695
    %v957 = vpow.pop %v956
    %v958 = vmul.f32 %v941, 1.442695
    %v959 = vpow.pop %v958
    %v960 = vmul.f32 %v942, 1.442695
    %v961 = vpow.pop %v960
    %v962 = vmul.f32 %v943, 1.442695
    %v963 = vpow.pop %v962
    %v964 = vmul.f32 %v944, 1.442695
    %v965 = vpow.pop %v964
    %v966 = vmul.f32 %v945, 1.442695
    %v967 = vpow.pop %v966
    %v968 = vmul.f32 %v946, 1.442695
    %v969 = vpow.pop %v968
    %v970 = vmul.f32 %v947, 1.442695
    %v971 = vpow.pop %v970
    %v972 = vmul.f32 %v948, 1.442695
    %v973 = vpow.pop %v972
    %v974 = vmul.f32 %v949, 1.442695
    %v975 = vpow.pop %v974
    %v976 = vmul.f32 %v950, 1.442695
    %v977 = vpow.pop %v976
    %v978 = vmul.f32 %v951, 1.442695
    %v979 = vpow.pop %v978
    %v980 = vmul.f32 %v952, 1.442695
    %v981 = vpow.pop %v980
    %v982 = vmul.f32 %v953, 1.442695
    %v983 = vpow.pop %v982
    %v984 = vmul.f32 %v954, 1.442695
    %v985 = vpow.pop %v984
    %v986 = vmul.f32 %v955, 1.442695
    %v987 = vpow.pop %v986
    %v988 = vadd.f32 %v957, 1.0
    %v989 = vadd.f32 %v959, 1.0
    %v990 = vadd.f32 %v961, 1.0
    %v991 = vadd.f32 %v963, 1.0
    %v992 = vadd.f32 %v965, 1.0
    %v993 = vadd.f32 %v967, 1.0
    %v994 = vadd.f32 %v969, 1.0
    %v995 = vadd.f32 %v971, 1.0
    %v996 = vadd.f32 %v973, 1.0
    %v997 = vadd.f32 %v975, 1.0
    %v998 = vadd.f32 %v977, 1.0
    %v999 = vadd.f32 %v979, 1.0
    %v1000 = vadd.f32 %v981, 1.0
    %v1001 = vadd.f32 %v983, 1.0
    %v1002 = vadd.f32 %v985, 1.0
    %v1003 = vadd.f32 %v987, 1.0
    %v1004 = vrcp.pop %v988
    %v1005 = vmul.f32 %v988, %v1004
    %v1006 = vsub.f32 1.0, %v1005
    %v1007 = vmul.f32 %v1004, %v1006
    %v1008 = vadd.f32 %v1004, %v1007
    %vm1009 = vweird.f32 %v988
    %vm1010 = vweird.f32 %v1004
    %vm1011 = vmor %vm1009, %vm1010
    %v1012 = vsel %vm1011, %v1004, %v1008
    %v1013 = vand.u32 2147483647, %v988
    %vm1014 = vcmp.eq.f32.partialorder %v1013, 8.507059e+37
    %v1015 = vand.u32 %v988, 2147483648
    %v1016 = vor.u32 1.1754944e-38, %v1015
    %v1017 = vsel %vm1014, %v1016, %v1012
    %v1018 = vmul.f32 1.0, %v1017
    %v1019 = vrcp.pop %v989
    %v1020 = vmul.f32 %v989, %v1019
    %v1021 = vsub.f32 1.0, %v1020
    %v1022 = vmul.f32 %v1019, %v1021
    %v1023 = vadd.f32 %v1019, %v1022
    %vm1024 = vweird.f32 %v989
    %vm1025 = vweird.f32 %v1019
    %vm1026 = vmor %vm1024, %vm1025
    %v1027 = vsel %vm1026, %v1019, %v1023
    %v1028 = vand.u32 2147483647, %v989
    %vm1029 = vcmp.eq.f32.partialorder %v1028, 8.507059e+37
    %v1030 = vand.u32 %v989, 2147483648
    %v1031 = vor.u32 1.1754944e-38, %v1030
    %v1032 = vsel %vm1029, %v1031, %v1027
    %v1033 = vmul.f32 1.0, %v1032
    %v1034 = vrcp.pop %v990
    %v1035 = vmul.f32 %v990, %v1034
    %v1036 = vsub.f32 1.0, %v1035
    %v1037 = vmul.f32 %v1034, %v1036
    %v1038 = vadd.f32 %v1034, %v1037
    %vm1039 = vweird.f32 %v990
    %vm1040 = vweird.f32 %v1034
    %vm1041 = vmor %vm1039, %vm1040
    %v1042 = vsel %vm1041, %v1034, %v1038
    %v1043 = vand.u32 2147483647, %v990
    %vm1044 = vcmp.eq.f32.partialorder %v1043, 8.507059e+37
    %v1045 = vand.u32 %v990, 2147483648
    %v1046 = vor.u32 1.1754944e-38, %v1045
    %v1047 = vsel %vm1044, %v1046, %v1042
    %v1048 = vmul.f32 1.0, %v1047
    %v1049 = vrcp.pop %v991
    %v1050 = vmul.f32 %v991, %v1049
    %v1051 = vsub.f32 1.0, %v1050
    %v1052 = vmul.f32 %v1049, %v1051
    %v1053 = vadd.f32 %v1049, %v1052
    %vm1054 = vweird.f32 %v991
    %vm1055 = vweird.f32 %v1049
    %vm1056 = vmor %vm1054, %vm1055
    %v1057 = vsel %vm1056, %v1049, %v1053
    %v1058 = vand.u32 2147483647, %v991
    %vm1059 = vcmp.eq.f32.partialorder %v1058, 8.507059e+37
    %v1060 = vand.u32 %v991, 2147483648
    %v1061 = vor.u32 1.1754944e-38, %v1060
    %v1062 = vsel %vm1059, %v1061, %v1057
    %v1063 = vmul.f32 1.0, %v1062
    %v1064 = vrcp.pop %v992
    %v1065 = vmul.f32 %v992, %v1064
    %v1066 = vsub.f32 1.0, %v1065
    %v1067 = vmul.f32 %v1064, %v1066
    %v1068 = vadd.f32 %v1064, %v1067
    %vm1069 = vweird.f32 %v992
    %vm1070 = vweird.f32 %v1064
    %vm1071 = vmor %vm1069, %vm1070
    %v1072 = vsel %vm1071, %v1064, %v1068
    %v1073 = vand.u32 2147483647, %v992
    %vm1074 = vcmp.eq.f32.partialorder %v1073, 8.507059e+37
    %v1075 = vand.u32 %v992, 2147483648
    %v1076 = vor.u32 1.1754944e-38, %v1075
    %v1077 = vsel %vm1074, %v1076, %v1072
    %v1078 = vmul.f32 1.0, %v1077
    %v1079 = vrcp.pop %v993
    %v1080 = vmul.f32 %v993, %v1079
    %v1081 = vsub.f32 1.0, %v1080
    %v1082 = vmul.f32 %v1079, %v1081
    %v1083 = vadd.f32 %v1079, %v1082
    %vm1084 = vweird.f32 %v993
    %vm1085 = vweird.f32 %v1079
    %vm1086 = vmor %vm1084, %vm1085
    %v1087 = vsel %vm1086, %v1079, %v1083
    %v1088 = vand.u32 2147483647, %v993
    %vm1089 = vcmp.eq.f32.partialorder %v1088, 8.507059e+37
    %v1090 = vand.u32 %v993, 2147483648
    %v1091 = vor.u32 1.1754944e-38, %v1090
    %v1092 = vsel %vm1089, %v1091, %v1087
    %v1093 = vmul.f32 1.0, %v1092
    %v1094 = vrcp.pop %v994
    %v1095 = vmul.f32 %v994, %v1094
    %v1096 = vsub.f32 1.0, %v1095
    %v1097 = vmul.f32 %v1094, %v1096
    %v1098 = vadd.f32 %v1094, %v1097
    %vm1099 = vweird.f32 %v994
    %vm1100 = vweird.f32 %v1094
    %vm1101 = vmor %vm1099, %vm1100
    %v1102 = vsel %vm1101, %v1094, %v1098
    %v1103 = vand.u32 2147483647, %v994
    %vm1104 = vcmp.eq.f32.partialorder %v1103, 8.507059e+37
    %v1105 = vand.u32 %v994, 2147483648
    %v1106 = vor.u32 1.1754944e-38, %v1105
    %v1107 = vsel %vm1104, %v1106, %v1102
    %v1108 = vmul.f32 1.0, %v1107
    %v1109 = vrcp.pop %v995
    %v1110 = vmul.f32 %v995, %v1109
    %v1111 = vsub.f32 1.0, %v1110
    %v1112 = vmul.f32 %v1109, %v1111
    %v1113 = vadd.f32 %v1109, %v1112
    %vm1114 = vweird.f32 %v995
    %vm1115 = vweird.f32 %v1109
    %vm1116 = vmor %vm1114, %vm1115
    %v1117 = vsel %vm1116, %v1109, %v1113
    %v1118 = vand.u32 2147483647, %v995
    %vm1119 = vcmp.eq.f32.partialorder %v1118, 8.507059e+37
    %v1120 = vand.u32 %v995, 2147483648
    %v1121 = vor.u32 1.1754944e-38, %v1120
    %v1122 = vsel %vm1119, %v1121, %v1117
    %v1123 = vmul.f32 1.0, %v1122
    %v1124 = vrcp.pop %v996
    %v1125 = vmul.f32 %v996, %v1124
    %v1126 = vsub.f32 1.0, %v1125
    %v1127 = vmul.f32 %v1124, %v1126
    %v1128 = vadd.f32 %v1124, %v1127
    %vm1129 = vweird.f32 %v996
    %vm1130 = vweird.f32 %v1124
    %vm1131 = vmor %vm1129, %vm1130
    %v1132 = vsel %vm1131, %v1124, %v1128
    %v1133 = vand.u32 2147483647, %v996
    %vm1134 = vcmp.eq.f32.partialorder %v1133, 8.507059e+37
    %v1135 = vand.u32 %v996, 2147483648
    %v1136 = vor.u32 1.1754944e-38, %v1135
    %v1137 = vsel %vm1134, %v1136, %v1132
    %v1138 = vmul.f32 1.0, %v1137
    %v1139 = vrcp.pop %v997
    %v1140 = vmul.f32 %v997, %v1139
    %v1141 = vsub.f32 1.0, %v1140
    %v1142 = vmul.f32 %v1139, %v1141
    %v1143 = vadd.f32 %v1139, %v1142
    %vm1144 = vweird.f32 %v997
    %vm1145 = vweird.f32 %v1139
    %vm1146 = vmor %vm1144, %vm1145
    %v1147 = vsel %vm1146, %v1139, %v1143
    %v1148 = vand.u32 2147483647, %v997
    %vm1149 = vcmp.eq.f32.partialorder %v1148, 8.507059e+37
    %v1150 = vand.u32 %v997, 2147483648
    %v1151 = vor.u32 1.1754944e-38, %v1150
    %v1152 = vsel %vm1149, %v1151, %v1147
    %v1153 = vmul.f32 1.0, %v1152
    %v1154 = vrcp.pop %v998
    %v1155 = vmul.f32 %v998, %v1154
    %v1156 = vsub.f32 1.0, %v1155
    %v1157 = vmul.f32 %v1154, %v1156
    %v1158 = vadd.f32 %v1154, %v1157
    %vm1159 = vweird.f32 %v998
    %vm1160 = vweird.f32 %v1154
    %vm1161 = vmor %vm1159, %vm1160
    %v1162 = vsel %vm1161, %v1154, %v1158
    %v1163 = vand.u32 2147483647, %v998
    %vm1164 = vcmp.eq.f32.partialorder %v1163, 8.507059e+37
    %v1165 = vand.u32 %v998, 2147483648
    %v1166 = vor.u32 1.1754944e-38, %v1165
    %v1167 = vsel %vm1164, %v1166, %v1162
    %v1168 = vmul.f32 1.0, %v1167
    %v1169 = vrcp.pop %v999
    %v1170 = vmul.f32 %v999, %v1169
    %v1171 = vsub.f32 1.0, %v1170
    %v1172 = vmul.f32 %v1169, %v1171
    %v1173 = vadd.f32 %v1169, %v1172
    %vm1174 = vweird.f32 %v999
    %vm1175 = vweird.f32 %v1169
    %vm1176 = vmor %vm1174, %vm1175
    %v1177 = vsel %vm1176, %v1169, %v1173
    %v1178 = vand.u32 2147483647, %v999
    %vm1179 = vcmp.eq.f32.partialorder %v1178, 8.507059e+37
    %v1180 = vand.u32 %v999, 2147483648
    %v1181 = vor.u32 1.1754944e-38, %v1180
    %v1182 = vsel %vm1179, %v1181, %v1177
    %v1183 = vmul.f32 1.0, %v1182
    %v1184 = vrcp.pop %v1000
    %v1185 = vmul.f32 %v1000, %v1184
    %v1186 = vsub.f32 1.0, %v1185
    %v1187 = vmul.f32 %v1184, %v1186
    %v1188 = vadd.f32 %v1184, %v1187
    %vm1189 = vweird.f32 %v1000
    %vm1190 = vweird.f32 %v1184
    %vm1191 = vmor %vm1189, %vm1190
    %v1192 = vsel %vm1191, %v1184, %v1188
    %v1193 = vand.u32 2147483647, %v1000
    %vm1194 = vcmp.eq.f32.partialorder %v1193, 8.507059e+37
    %v1195 = vand.u32 %v1000, 2147483648
    %v1196 = vor.u32 1.1754944e-38, %v1195
    %v1197 = vsel %vm1194, %v1196, %v1192
    %v1198 = vmul.f32 1.0, %v1197
    %v1199 = vrcp.pop %v1001
    %v1200 = vmul.f32 %v1001, %v1199
    %v1201 = vsub.f32 1.0, %v1200
    %v1202 = vmul.f32 %v1199, %v1201
    %v1203 = vadd.f32 %v1199, %v1202
    %vm1204 = vweird.f32 %v1001
    %vm1205 = vweird.f32 %v1199
    %vm1206 = vmor %vm1204, %vm1205
    %v1207 = vsel %vm1206, %v1199, %v1203
    %v1208 = vand.u32 2147483647, %v1001
    %vm1209 = vcmp.eq.f32.partialorder %v1208, 8.507059e+37
    %v1210 = vand.u32 %v1001, 2147483648
    %v1211 = vor.u32 1.1754944e-38, %v1210
    %v1212 = vsel %vm1209, %v1211, %v1207
    %v1213 = vmul.f32 1.0, %v1212
    %v1214 = vrcp.pop %v1002
    %v1215 = vmul.f32 %v1002, %v1214
    %v1216 = vsub.f32 1.0, %v1215
    %v1217 = vmul.f32 %v1214, %v1216
    %v1218 = vadd.f32 %v1214, %v1217
    %vm1219 = vweird.f32 %v1002
    %vm1220 = vweird.f32 %v1214
    %vm1221 = vmor %vm1219, %vm1220
    %v1222 = vsel %vm1221, %v1214, %v1218
    %v1223 = vand.u32 2147483647, %v1002
    %vm1224 = vcmp.eq.f32.partialorder %v1223, 8.507059e+37
    %v1225 = vand.u32 %v1002, 2147483648
    %v1226 = vor.u32 1.1754944e-38, %v1225
    %v1227 = vsel %vm1224, %v1226, %v1222
    %v1228 = vmul.f32 1.0, %v1227
    %v1229 = vrcp.pop %v1003
    %v1230 = vmul.f32 %v1003, %v1229
    %v1231 = vsub.f32 1.0, %v1230
    %v1232 = vmul.f32 %v1229, %v1231
    %v1233 = vadd.f32 %v1229, %v1232
    %vm1234 = vweird.f32 %v1003
    %vm1235 = vweird.f32 %v1229
    %vm1236 = vmor %vm1234, %vm1235
    %v1237 = vsel %vm1236, %v1229, %v1233
    %v1238 = vand.u32 2147483647, %v1003
    %vm1239 = vcmp.eq.f32.partialorder %v1238, 8.507059e+37
    %v1240 = vand.u32 %v1003, 2147483648
    %v1241 = vor.u32 1.1754944e-38, %v1240
    %v1242 = vsel %vm1239, %v1241, %v1237
    %v1243 = vmul.f32 1.0, %v1242
    %v1244 = vmul.f32 %v924, %v1018
    %v1245 = vmul.f32 %v925, %v1033
    %v1246 = vmul.f32 %v926, %v1048
    %v1247 = vmul.f32 %v927, %v1063
    %v1248 = vmul.f32 %v928, %v1078
    %v1249 = vmul.f32 %v929, %v1093
    %v1250 = vmul.f32 %v930, %v1108
    %v1251 = vmul.f32 %v931, %v1123
    %v1252 = vmul.f32 %v932, %v1138
    %v1253 = vmul.f32 %v933, %v1153
    %v1254 = vmul.f32 %v934, %v1168
    %v1255 = vmul.f32 %v935, %v1183
    %v1256 = vmul.f32 %v936, %v1198
    %v1257 = vmul.f32 %v937, %v1213
    %v1258 = vmul.f32 %v938, %v1228
    %v1259 = vmul.f32 %v939, %v1243
    %1260 = vrot.lane.b32.xlu0 %v1244, 17
    %v1261 = vpop.permute.xlu0 %1260
    %1262 = vrot.lane.b32.xlu0 %v1248, 17
    %v1263 = vpop.permute.xlu0 %1262
    %1264 = vrot.lane.b32.xlu0 %v1252, 17
    %v1265 = vpop.permute.xlu0 %1264
    %1266 = vrot.lane.b32.xlu0 %v1256, 17
    %v1267 = vpop.permute.xlu0 %1266
    %1268 = vrot.lane.b32.xlu0 %v1245, 17
    %v1269 = vpop.permute.xlu0 %1268
    %1270 = vrot.lane.b32.xlu0 %v1249, 17
    %v1271 = vpop.permute.xlu0 %1270
    %1272 = vrot.lane.b32.xlu0 %v1253, 17
    %v1273 = vpop.permute.xlu0 %1272
    %1274 = vrot.lane.b32.xlu0 %v1257, 17
    %v1275 = vpop.permute.xlu0 %1274
    %1276 = vrot.lane.b32.xlu0 %v1246, 17
    %v1277 = vpop.permute.xlu0 %1276
    %1278 = vrot.lane.b32.xlu0 %v1250, 17
    %v1279 = vpop.permute.xlu0 %1278
    %1280 = vrot.lane.b32.xlu0 %v1254, 17
    %v1281 = vpop.permute.xlu0 %1280
    %1282 = vrot.lane.b32.xlu0 %v1258, 17
    %v1283 = vpop.permute.xlu0 %1282
    %1284 = vrot.lane.b32.xlu0 %v1247, 17
    %v1285 = vpop.permute.xlu0 %1284
    %1286 = vrot.lane.b32.xlu0 %v1251, 17
    %v1287 = vpop.permute.xlu0 %1286
    %1288 = vrot.lane.b32.xlu0 %v1255, 17
    %v1289 = vpop.permute.xlu0 %1288
    %1290 = vrot.lane.b32.xlu0 %v1259, 17
    %v1291 = vpop.permute.xlu0 %1290
    %v1292 = vsel %vm101, %v1277, %v1285
    %v1293 = vsel %vm101, %v1279, %v1287
    %v1294 = vsel %vm101, %v1281, %v1289
    %v1295 = vsel %vm101, %v1283, %v1291
    %v1296 = vsel %vm101, %v1269, %v1277
    %v1297 = vsel %vm101, %v1271, %v1279
    %v1298 = vsel %vm101, %v1273, %v1281
    %v1299 = vsel %vm101, %v1275, %v1283
    %v1300 = vsel %vm101, %v1261, %v1269
    %v1301 = vsel %vm101, %v1263, %v1271
    %v1302 = vsel %vm101, %v1265, %v1273
    %v1303 = vsel %vm101, %v1267, %v1275
    %v1304 = vsel %vm101, %v1285, %v1261
    %v1305 = vsel %vm101, %v1287, %v1263
    %v1306 = vsel %vm101, %v1289, %v1265
    %v1307 = vsel %vm101, %v1291, %v1267
    %v1308 = vmul.f32 %v1304, %v106
    %v1309 = vmul.f32 %v1300, %v107
    %v1310 = vmul.f32 %v1296, %v108
    %v1311 = vmul.f32 %v1292, %v109
    %v1312 = vmul.f32 %v1305, %v106
    %v1313 = vmul.f32 %v1301, %v107
    %v1314 = vmul.f32 %v1297, %v108
    %v1315 = vmul.f32 %v1293, %v109
    %v1316 = vmul.f32 %v1306, %v106
    %v1317 = vmul.f32 %v1302, %v107
    %v1318 = vmul.f32 %v1298, %v108
    %v1319 = vmul.f32 %v1294, %v109
    %v1320 = vmul.f32 %v1307, %v106
    %v1321 = vmul.f32 %v1303, %v107
    %v1322 = vmul.f32 %v1299, %v108
    %v1323 = vmul.f32 %v1295, %v109
    %v1324 = vpack.c.bf16 %v1309, %v1308
    %v1325 = vpack.c.bf16 %v1311, %v1310
    %v1326 = vpack.c.bf16 %v1313, %v1312
    %v1327 = vpack.c.bf16 %v1315, %v1314
    %v1328 = vpack.c.bf16 %v1317, %v1316
    %v1329 = vpack.c.bf16 %v1319, %v1318
    %v1330 = vpack.c.bf16 %v1321, %v1320
    %v1331 = vpack.c.bf16 %v1323, %v1322
    %1332 = vrot.lane.b32.xlu0 %v1244, 16
    %v1333 = vpop.permute.xlu0 %1332
    %1334 = vrot.lane.b32.xlu0 %v1248, 16
    %v1335 = vpop.permute.xlu0 %1334
    %1336 = vrot.lane.b32.xlu0 %v1252, 16
    %v1337 = vpop.permute.xlu0 %1336
    %1338 = vrot.lane.b32.xlu0 %v1256, 16
    %v1339 = vpop.permute.xlu0 %1338
    %1340 = vrot.lane.b32.xlu0 %v1245, 16
    %v1341 = vpop.permute.xlu0 %1340
    %1342 = vrot.lane.b32.xlu0 %v1249, 16
    %v1343 = vpop.permute.xlu0 %1342
    %1344 = vrot.lane.b32.xlu0 %v1253, 16
    %v1345 = vpop.permute.xlu0 %1344
    %1346 = vrot.lane.b32.xlu0 %v1257, 16
    %v1347 = vpop.permute.xlu0 %1346
    %1348 = vrot.lane.b32.xlu0 %v1246, 16
    %v1349 = vpop.permute.xlu0 %1348
    %1350 = vrot.lane.b32.xlu0 %v1250, 16
    %v1351 = vpop.permute.xlu0 %1350
    %1352 = vrot.lane.b32.xlu0 %v1254, 16
    %v1353 = vpop.permute.xlu0 %1352
    %1354 = vrot.lane.b32.xlu0 %v1258, 16
    %v1355 = vpop.permute.xlu0 %1354
    %1356 = vrot.lane.b32.xlu0 %v1247, 16
    %v1357 = vpop.permute.xlu0 %1356
    %1358 = vrot.lane.b32.xlu0 %v1251, 16
    %v1359 = vpop.permute.xlu0 %1358
    %1360 = vrot.lane.b32.xlu0 %v1255, 16
    %v1361 = vpop.permute.xlu0 %1360
    %1362 = vrot.lane.b32.xlu0 %v1259, 16
    %v1363 = vpop.permute.xlu0 %1362
    %v1364 = vsel %vm124, %v1349, %v1357
    %v1365 = vsel %vm124, %v1351, %v1359
    %v1366 = vsel %vm124, %v1353, %v1361
    %v1367 = vsel %vm124, %v1355, %v1363
    %v1368 = vsel %vm124, %v1341, %v1349
    %v1369 = vsel %vm124, %v1343, %v1351
    %v1370 = vsel %vm124, %v1345, %v1353
    %v1371 = vsel %vm124, %v1347, %v1355
    %v1372 = vsel %vm124, %v1333, %v1341
    %v1373 = vsel %vm124, %v1335, %v1343
    %v1374 = vsel %vm124, %v1337, %v1345
    %v1375 = vsel %vm124, %v1339, %v1347
    %v1376 = vsel %vm124, %v1357, %v1333
    %v1377 = vsel %vm124, %v1359, %v1335
    %v1378 = vsel %vm124, %v1361, %v1337
    %v1379 = vsel %vm124, %v1363, %v1339
    %v1380 = vmul.f32 %v1376, %v129
    %v1381 = vmul.f32 %v1372, %v130
    %v1382 = vmul.f32 %v1368, %v131
    %v1383 = vmul.f32 %v1364, %v132
    %v1384 = vmul.f32 %v1377, %v129
    %v1385 = vmul.f32 %v1373, %v130
    %v1386 = vmul.f32 %v1369, %v131
    %v1387 = vmul.f32 %v1365, %v132
    %v1388 = vmul.f32 %v1378, %v129
    %v1389 = vmul.f32 %v1374, %v130
    %v1390 = vmul.f32 %v1370, %v131
    %v1391 = vmul.f32 %v1366, %v132
    %v1392 = vmul.f32 %v1379, %v129
    %v1393 = vmul.f32 %v1375, %v130
    %v1394 = vmul.f32 %v1371, %v131
    %v1395 = vmul.f32 %v1367, %v132
    %v1396 = vpack.c.bf16 %v1381, %v1380
    %v1397 = vpack.c.bf16 %v1383, %v1382
    %v1398 = vpack.c.bf16 %v1385, %v1384
    %v1399 = vpack.c.bf16 %v1387, %v1386
    %v1400 = vpack.c.bf16 %v1389, %v1388
    %v1401 = vpack.c.bf16 %v1391, %v1390
    %v1402 = vpack.c.bf16 %v1393, %v1392
    %v1403 = vpack.c.bf16 %v1395, %v1394
    %1404 = vrot.lane.b32.xlu0 %v1244, 15
    %v1405 = vpop.permute.xlu0 %1404
    %1406 = vrot.lane.b32.xlu0 %v1248, 15
    %v1407 = vpop.permute.xlu0 %1406
    %1408 = vrot.lane.b32.xlu0 %v1252, 15
    %v1409 = vpop.permute.xlu0 %1408
    %1410 = vrot.lane.b32.xlu0 %v1256, 15
    %v1411 = vpop.permute.xlu0 %1410
    %1412 = vrot.lane.b32.xlu0 %v1245, 15
    %v1413 = vpop.permute.xlu0 %1412
    %1414 = vrot.lane.b32.xlu0 %v1249, 15
    %v1415 = vpop.permute.xlu0 %1414
    %1416 = vrot.lane.b32.xlu0 %v1253, 15
    %v1417 = vpop.permute.xlu0 %1416
    %1418 = vrot.lane.b32.xlu0 %v1257, 15
    %v1419 = vpop.permute.xlu0 %1418
    %1420 = vrot.lane.b32.xlu0 %v1246, 15
    %v1421 = vpop.permute.xlu0 %1420
    %1422 = vrot.lane.b32.xlu0 %v1250, 15
    %v1423 = vpop.permute.xlu0 %1422
    %1424 = vrot.lane.b32.xlu0 %v1254, 15
    %v1425 = vpop.permute.xlu0 %1424
    %1426 = vrot.lane.b32.xlu0 %v1258, 15
    %v1427 = vpop.permute.xlu0 %1426
    %1428 = vrot.lane.b32.xlu0 %v1247, 15
    %v1429 = vpop.permute.xlu0 %1428
    %1430 = vrot.lane.b32.xlu0 %v1251, 15
    %v1431 = vpop.permute.xlu0 %1430
    %1432 = vrot.lane.b32.xlu0 %v1255, 15
    %v1433 = vpop.permute.xlu0 %1432
    %1434 = vrot.lane.b32.xlu0 %v1259, 15
    %v1435 = vpop.permute.xlu0 %1434
    %v1436 = vsel %vm147, %v1421, %v1429
    %v1437 = vsel %vm147, %v1423, %v1431
    %v1438 = vsel %vm147, %v1425, %v1433
    %v1439 = vsel %vm147, %v1427, %v1435
    %v1440 = vsel %vm147, %v1413, %v1421
    %v1441 = vsel %vm147, %v1415, %v1423
    %v1442 = vsel %vm147, %v1417, %v1425
    %v1443 = vsel %vm147, %v1419, %v1427
    %v1444 = vsel %vm147, %v1405, %v1413
    %v1445 = vsel %vm147, %v1407, %v1415
    %v1446 = vsel %vm147, %v1409, %v1417
    %v1447 = vsel %vm147, %v1411, %v1419
    %v1448 = vsel %vm147, %v1429, %v1405
    %v1449 = vsel %vm147, %v1431, %v1407
    %v1450 = vsel %vm147, %v1433, %v1409
    %v1451 = vsel %vm147, %v1435, %v1411
    %v1452 = vmul.f32 %v1448, %v152
    %v1453 = vmul.f32 %v1444, %v153
    %v1454 = vmul.f32 %v1440, %v154
    %v1455 = vmul.f32 %v1436, %v155
    %v1456 = vmul.f32 %v1449, %v152
    %v1457 = vmul.f32 %v1445, %v153
    %v1458 = vmul.f32 %v1441, %v154
    %v1459 = vmul.f32 %v1437, %v155
    %v1460 = vmul.f32 %v1450, %v152
    %v1461 = vmul.f32 %v1446, %v153
    %v1462 = vmul.f32 %v1442, %v154
    %v1463 = vmul.f32 %v1438, %v155
    %v1464 = vmul.f32 %v1451, %v152
    %v1465 = vmul.f32 %v1447, %v153
    %v1466 = vmul.f32 %v1443, %v154
    %v1467 = vmul.f32 %v1439, %v155
    %v1468 = vpack.c.bf16 %v1453, %v1452
    %v1469 = vpack.c.bf16 %v1455, %v1454
    %v1470 = vpack.c.bf16 %v1457, %v1456
    %v1471 = vpack.c.bf16 %v1459, %v1458
    %v1472 = vpack.c.bf16 %v1461, %v1460
    %v1473 = vpack.c.bf16 %v1463, %v1462
    %v1474 = vpack.c.bf16 %v1465, %v1464
    %v1475 = vpack.c.bf16 %v1467, %v1466
    %1476 = vrot.lane.b32.xlu0 %v1244, 1
    %v1477 = vpop.permute.xlu0 %1476
    %1478 = vrot.lane.b32.xlu0 %v1248, 1
    %v1479 = vpop.permute.xlu0 %1478
    %1480 = vrot.lane.b32.xlu0 %v1252, 1
    %v1481 = vpop.permute.xlu0 %1480
    %1482 = vrot.lane.b32.xlu0 %v1256, 1
    %v1483 = vpop.permute.xlu0 %1482
    %1484 = vrot.lane.b32.xlu0 %v1245, 1
    %v1485 = vpop.permute.xlu0 %1484
    %1486 = vrot.lane.b32.xlu0 %v1249, 1
    %v1487 = vpop.permute.xlu0 %1486
    %1488 = vrot.lane.b32.xlu0 %v1253, 1
    %v1489 = vpop.permute.xlu0 %1488
    %1490 = vrot.lane.b32.xlu0 %v1257, 1
    %v1491 = vpop.permute.xlu0 %1490
    %1492 = vrot.lane.b32.xlu0 %v1246, 1
    %v1493 = vpop.permute.xlu0 %1492
    %1494 = vrot.lane.b32.xlu0 %v1250, 1
    %v1495 = vpop.permute.xlu0 %1494
    %1496 = vrot.lane.b32.xlu0 %v1254, 1
    %v1497 = vpop.permute.xlu0 %1496
    %1498 = vrot.lane.b32.xlu0 %v1258, 1
    %v1499 = vpop.permute.xlu0 %1498
    %1500 = vrot.lane.b32.xlu0 %v1247, 1
    %v1501 = vpop.permute.xlu0 %1500
    %1502 = vrot.lane.b32.xlu0 %v1251, 1
    %v1503 = vpop.permute.xlu0 %1502
    %1504 = vrot.lane.b32.xlu0 %v1255, 1
    %v1505 = vpop.permute.xlu0 %1504
    %1506 = vrot.lane.b32.xlu0 %v1259, 1
    %v1507 = vpop.permute.xlu0 %1506
    %v1508 = vsel %vm170, %v1493, %v1501
    %v1509 = vsel %vm170, %v1495, %v1503
    %v1510 = vsel %vm170, %v1497, %v1505
    %v1511 = vsel %vm170, %v1499, %v1507
    %v1512 = vsel %vm170, %v1485, %v1493
    %v1513 = vsel %vm170, %v1487, %v1495
    %v1514 = vsel %vm170, %v1489, %v1497
    %v1515 = vsel %vm170, %v1491, %v1499
    %v1516 = vsel %vm170, %v1477, %v1485
    %v1517 = vsel %vm170, %v1479, %v1487
    %v1518 = vsel %vm170, %v1481, %v1489
    %v1519 = vsel %vm170, %v1483, %v1491
    %v1520 = vsel %vm170, %v1501, %v1477
    %v1521 = vsel %vm170, %v1503, %v1479
    %v1522 = vsel %vm170, %v1505, %v1481
    %v1523 = vsel %vm170, %v1507, %v1483
    %v1524 = vmul.f32 %v1520, %v175
    %v1525 = vmul.f32 %v1516, %v176
    %v1526 = vmul.f32 %v1512, %v177
    %v1527 = vmul.f32 %v1508, %v178
    %v1528 = vmul.f32 %v1521, %v175
    %v1529 = vmul.f32 %v1517, %v176
    %v1530 = vmul.f32 %v1513, %v177
    %v1531 = vmul.f32 %v1509, %v178
    %v1532 = vmul.f32 %v1522, %v175
    %v1533 = vmul.f32 %v1518, %v176
    %v1534 = vmul.f32 %v1514, %v177
    %v1535 = vmul.f32 %v1510, %v178
    %v1536 = vmul.f32 %v1523, %v175
    %v1537 = vmul.f32 %v1519, %v176
    %v1538 = vmul.f32 %v1515, %v177
    %v1539 = vmul.f32 %v1511, %v178
    %v1540 = vpack.c.bf16 %v1525, %v1524
    %v1541 = vpack.c.bf16 %v1527, %v1526
    %v1542 = vpack.c.bf16 %v1529, %v1528
    %v1543 = vpack.c.bf16 %v1531, %v1530
    %v1544 = vpack.c.bf16 %v1533, %v1532
    %v1545 = vpack.c.bf16 %v1535, %v1534
    %v1546 = vpack.c.bf16 %v1537, %v1536
    %v1547 = vpack.c.bf16 %v1539, %v1538
    %v1548 = vpack.c.bf16 %v1245, %v1244
    %v1549 = vpack.c.bf16 %v1247, %v1246
    %v1550 = vpack.c.bf16 %v1249, %v1248
    %v1551 = vpack.c.bf16 %v1251, %v1250
    %v1552 = vpack.c.bf16 %v1253, %v1252
    %v1553 = vpack.c.bf16 %v1255, %v1254
    %v1554 = vpack.c.bf16 %v1257, %v1256
    %v1555 = vpack.c.bf16 %v1259, %v1258
    %1556 = vrot.lane.b32.xlu0 %v1244, 127
    %v1557 = vpop.permute.xlu0 %1556
    %1558 = vrot.lane.b32.xlu0 %v1248, 127
    %v1559 = vpop.permute.xlu0 %1558
    %1560 = vrot.lane.b32.xlu0 %v1252, 127
    %v1561 = vpop.permute.xlu0 %1560
    %1562 = vrot.lane.b32.xlu0 %v1256, 127
    %v1563 = vpop.permute.xlu0 %1562
    %1564 = vrot.lane.b32.xlu0 %v1245, 127
    %v1565 = vpop.permute.xlu0 %1564
    %1566 = vrot.lane.b32.xlu0 %v1249, 127
    %v1567 = vpop.permute.xlu0 %1566
    %1568 = vrot.lane.b32.xlu0 %v1253, 127
    %v1569 = vpop.permute.xlu0 %1568
    %1570 = vrot.lane.b32.xlu0 %v1257, 127
    %v1571 = vpop.permute.xlu0 %1570
    %1572 = vrot.lane.b32.xlu0 %v1246, 127
    %v1573 = vpop.permute.xlu0 %1572
    %1574 = vrot.lane.b32.xlu0 %v1250, 127
    %v1575 = vpop.permute.xlu0 %1574
    %1576 = vrot.lane.b32.xlu0 %v1254, 127
    %v1577 = vpop.permute.xlu0 %1576
    %1578 = vrot.lane.b32.xlu0 %v1258, 127
    %v1579 = vpop.permute.xlu0 %1578
    %1580 = vrot.lane.b32.xlu0 %v1247, 127
    %v1581 = vpop.permute.xlu0 %1580
    %1582 = vrot.lane.b32.xlu0 %v1251, 127
    %v1583 = vpop.permute.xlu0 %1582
    %1584 = vrot.lane.b32.xlu0 %v1255, 127
    %v1585 = vpop.permute.xlu0 %1584
    %1586 = vrot.lane.b32.xlu0 %v1259, 127
    %v1587 = vpop.permute.xlu0 %1586
    %v1588 = vsel %vm195, %v1573, %v1581
    %v1589 = vsel %vm195, %v1575, %v1583
    %v1590 = vsel %vm195, %v1577, %v1585
    %v1591 = vsel %vm195, %v1579, %v1587
    %v1592 = vsel %vm195, %v1565, %v1573
    %v1593 = vsel %vm195, %v1567, %v1575
    %v1594 = vsel %vm195, %v1569, %v1577
    %v1595 = vsel %vm195, %v1571, %v1579
    %v1596 = vsel %vm195, %v1557, %v1565
    %v1597 = vsel %vm195, %v1559, %v1567
    %v1598 = vsel %vm195, %v1561, %v1569
    %v1599 = vsel %vm195, %v1563, %v1571
    %v1600 = vsel %vm195, %v1581, %v1557
    %v1601 = vsel %vm195, %v1583, %v1559
    %v1602 = vsel %vm195, %v1585, %v1561
    %v1603 = vsel %vm195, %v1587, %v1563
    %v1604 = vmul.f32 %v1596, %v200
    %v1605 = vmul.f32 %v1592, %v201
    %v1606 = vmul.f32 %v1588, %v202
    %v1607 = vmul.f32 %v1600, %v203
    %v1608 = vmul.f32 %v1597, %v200
    %v1609 = vmul.f32 %v1593, %v201
    %v1610 = vmul.f32 %v1589, %v202
    %v1611 = vmul.f32 %v1601, %v203
    %v1612 = vmul.f32 %v1598, %v200
    %v1613 = vmul.f32 %v1594, %v201
    %v1614 = vmul.f32 %v1590, %v202
    %v1615 = vmul.f32 %v1602, %v203
    %v1616 = vmul.f32 %v1599, %v200
    %v1617 = vmul.f32 %v1595, %v201
    %v1618 = vmul.f32 %v1591, %v202
    %v1619 = vmul.f32 %v1603, %v203
    %v1620 = vpack.c.bf16 %v1605, %v1604
    %v1621 = vpack.c.bf16 %v1607, %v1606
    %v1622 = vpack.c.bf16 %v1609, %v1608
    %v1623 = vpack.c.bf16 %v1611, %v1610
    %v1624 = vpack.c.bf16 %v1613, %v1612
    %v1625 = vpack.c.bf16 %v1615, %v1614
    %v1626 = vpack.c.bf16 %v1617, %v1616
    %v1627 = vpack.c.bf16 %v1619, %v1618
    %1628 = vrot.lane.b32.xlu0 %v1244, 113
    %v1629 = vpop.permute.xlu0 %1628
    %1630 = vrot.lane.b32.xlu0 %v1248, 113
    %v1631 = vpop.permute.xlu0 %1630
    %1632 = vrot.lane.b32.xlu0 %v1252, 113
    %v1633 = vpop.permute.xlu0 %1632
    %1634 = vrot.lane.b32.xlu0 %v1256, 113
    %v1635 = vpop.permute.xlu0 %1634
    %1636 = vrot.lane.b32.xlu0 %v1245, 113
    %v1637 = vpop.permute.xlu0 %1636
    %1638 = vrot.lane.b32.xlu0 %v1249, 113
    %v1639 = vpop.permute.xlu0 %1638
    %1640 = vrot.lane.b32.xlu0 %v1253, 113
    %v1641 = vpop.permute.xlu0 %1640
    %1642 = vrot.lane.b32.xlu0 %v1257, 113
    %v1643 = vpop.permute.xlu0 %1642
    %1644 = vrot.lane.b32.xlu0 %v1246, 113
    %v1645 = vpop.permute.xlu0 %1644
    %1646 = vrot.lane.b32.xlu0 %v1250, 113
    %v1647 = vpop.permute.xlu0 %1646
    %1648 = vrot.lane.b32.xlu0 %v1254, 113
    %v1649 = vpop.permute.xlu0 %1648
    %1650 = vrot.lane.b32.xlu0 %v1258, 113
    %v1651 = vpop.permute.xlu0 %1650
    %1652 = vrot.lane.b32.xlu0 %v1247, 113
    %v1653 = vpop.permute.xlu0 %1652
    %1654 = vrot.lane.b32.xlu0 %v1251, 113
    %v1655 = vpop.permute.xlu0 %1654
    %1656 = vrot.lane.b32.xlu0 %v1255, 113
    %v1657 = vpop.permute.xlu0 %1656
    %1658 = vrot.lane.b32.xlu0 %v1259, 113
    %v1659 = vpop.permute.xlu0 %1658
    %v1660 = vsel %vm218, %v1645, %v1653
    %v1661 = vsel %vm218, %v1647, %v1655
    %v1662 = vsel %vm218, %v1649, %v1657
    %v1663 = vsel %vm218, %v1651, %v1659
    %v1664 = vsel %vm218, %v1637, %v1645
    %v1665 = vsel %vm218, %v1639, %v1647
    %v1666 = vsel %vm218, %v1641, %v1649
    %v1667 = vsel %vm218, %v1643, %v1651
    %v1668 = vsel %vm218, %v1629, %v1637
    %v1669 = vsel %vm218, %v1631, %v1639
    %v1670 = vsel %vm218, %v1633, %v1641
    %v1671 = vsel %vm218, %v1635, %v1643
    %v1672 = vsel %vm218, %v1653, %v1629
    %v1673 = vsel %vm218, %v1655, %v1631
    %v1674 = vsel %vm218, %v1657, %v1633
    %v1675 = vsel %vm218, %v1659, %v1635
    %v1676 = vmul.f32 %v1668, %v223
    %v1677 = vmul.f32 %v1664, %v224
    %v1678 = vmul.f32 %v1660, %v225
    %v1679 = vmul.f32 %v1672, %v226
    %v1680 = vmul.f32 %v1669, %v223
    %v1681 = vmul.f32 %v1665, %v224
    %v1682 = vmul.f32 %v1661, %v225
    %v1683 = vmul.f32 %v1673, %v226
    %v1684 = vmul.f32 %v1670, %v223
    %v1685 = vmul.f32 %v1666, %v224
    %v1686 = vmul.f32 %v1662, %v225
    %v1687 = vmul.f32 %v1674, %v226
    %v1688 = vmul.f32 %v1671, %v223
    %v1689 = vmul.f32 %v1667, %v224
    %v1690 = vmul.f32 %v1663, %v225
    %v1691 = vmul.f32 %v1675, %v226
    %v1692 = vpack.c.bf16 %v1677, %v1676
    %v1693 = vpack.c.bf16 %v1679, %v1678
    %v1694 = vpack.c.bf16 %v1681, %v1680
    %v1695 = vpack.c.bf16 %v1683, %v1682
    %v1696 = vpack.c.bf16 %v1685, %v1684
    %v1697 = vpack.c.bf16 %v1687, %v1686
    %v1698 = vpack.c.bf16 %v1689, %v1688
    %v1699 = vpack.c.bf16 %v1691, %v1690
    %1700 = vrot.lane.b32.xlu0 %v1244, 112
    %v1701 = vpop.permute.xlu0 %1700
    %1702 = vrot.lane.b32.xlu0 %v1248, 112
    %v1703 = vpop.permute.xlu0 %1702
    %1704 = vrot.lane.b32.xlu0 %v1252, 112
    %v1705 = vpop.permute.xlu0 %1704
    %1706 = vrot.lane.b32.xlu0 %v1256, 112
    %v1707 = vpop.permute.xlu0 %1706
    %1708 = vrot.lane.b32.xlu0 %v1245, 112
    %v1709 = vpop.permute.xlu0 %1708
    %1710 = vrot.lane.b32.xlu0 %v1249, 112
    %v1711 = vpop.permute.xlu0 %1710
    %1712 = vrot.lane.b32.xlu0 %v1253, 112
    %v1713 = vpop.permute.xlu0 %1712
    %1714 = vrot.lane.b32.xlu0 %v1257, 112
    %v1715 = vpop.permute.xlu0 %1714
    %1716 = vrot.lane.b32.xlu0 %v1246, 112
    %v1717 = vpop.permute.xlu0 %1716
    %1718 = vrot.lane.b32.xlu0 %v1250, 112
    %v1719 = vpop.permute.xlu0 %1718
    %1720 = vrot.lane.b32.xlu0 %v1254, 112
    %v1721 = vpop.permute.xlu0 %1720
    %1722 = vrot.lane.b32.xlu0 %v1258, 112
    %v1723 = vpop.permute.xlu0 %1722
    %1724 = vrot.lane.b32.xlu0 %v1247, 112
    %v1725 = vpop.permute.xlu0 %1724
    %1726 = vrot.lane.b32.xlu0 %v1251, 112
    %v1727 = vpop.permute.xlu0 %1726
    %1728 = vrot.lane.b32.xlu0 %v1255, 112
    %v1729 = vpop.permute.xlu0 %1728
    %1730 = vrot.lane.b32.xlu0 %v1259, 112
    %v1731 = vpop.permute.xlu0 %1730
    %v1732 = vsel %vm241, %v1717, %v1725
    %v1733 = vsel %vm241, %v1719, %v1727
    %v1734 = vsel %vm241, %v1721, %v1729
    %v1735 = vsel %vm241, %v1723, %v1731
    %v1736 = vsel %vm241, %v1709, %v1717
    %v1737 = vsel %vm241, %v1711, %v1719
    %v1738 = vsel %vm241, %v1713, %v1721
    %v1739 = vsel %vm241, %v1715, %v1723
    %v1740 = vsel %vm241, %v1701, %v1709
    %v1741 = vsel %vm241, %v1703, %v1711
    %v1742 = vsel %vm241, %v1705, %v1713
    %v1743 = vsel %vm241, %v1707, %v1715
    %v1744 = vsel %vm241, %v1725, %v1701
    %v1745 = vsel %vm241, %v1727, %v1703
    %v1746 = vsel %vm241, %v1729, %v1705
    %v1747 = vsel %vm241, %v1731, %v1707
    %v1748 = vmul.f32 %v1740, %v246
    %v1749 = vmul.f32 %v1736, %v247
    %v1750 = vmul.f32 %v1732, %v248
    %v1751 = vmul.f32 %v1744, %v249
    %v1752 = vmul.f32 %v1741, %v246
    %v1753 = vmul.f32 %v1737, %v247
    %v1754 = vmul.f32 %v1733, %v248
    %v1755 = vmul.f32 %v1745, %v249
    %v1756 = vmul.f32 %v1742, %v246
    %v1757 = vmul.f32 %v1738, %v247
    %v1758 = vmul.f32 %v1734, %v248
    %v1759 = vmul.f32 %v1746, %v249
    %v1760 = vmul.f32 %v1743, %v246
    %v1761 = vmul.f32 %v1739, %v247
    %v1762 = vmul.f32 %v1735, %v248
    %v1763 = vmul.f32 %v1747, %v249
    %v1764 = vpack.c.bf16 %v1749, %v1748
    %v1765 = vpack.c.bf16 %v1751, %v1750
    %v1766 = vpack.c.bf16 %v1753, %v1752
    %v1767 = vpack.c.bf16 %v1755, %v1754
    %v1768 = vpack.c.bf16 %v1757, %v1756
    %v1769 = vpack.c.bf16 %v1759, %v1758
    %v1770 = vpack.c.bf16 %v1761, %v1760
    %v1771 = vpack.c.bf16 %v1763, %v1762
    %1772 = vrot.lane.b32.xlu0 %v1244, 111
    %v1773 = vpop.permute.xlu0 %1772
    %1774 = vrot.lane.b32.xlu0 %v1248, 111
    %v1775 = vpop.permute.xlu0 %1774
    %1776 = vrot.lane.b32.xlu0 %v1252, 111
    %v1777 = vpop.permute.xlu0 %1776
    %1778 = vrot.lane.b32.xlu0 %v1256, 111
    %v1779 = vpop.permute.xlu0 %1778
    %1780 = vrot.lane.b32.xlu0 %v1245, 111
    %v1781 = vpop.permute.xlu0 %1780
    %1782 = vrot.lane.b32.xlu0 %v1249, 111
    %v1783 = vpop.permute.xlu0 %1782
    %1784 = vrot.lane.b32.xlu0 %v1253, 111
    %v1785 = vpop.permute.xlu0 %1784
    %1786 = vrot.lane.b32.xlu0 %v1257, 111
    %v1787 = vpop.permute.xlu0 %1786
    %1788 = vrot.lane.b32.xlu0 %v1246, 111
    %v1789 = vpop.permute.xlu0 %1788
    %1790 = vrot.lane.b32.xlu0 %v1250, 111
    %v1791 = vpop.permute.xlu0 %1790
    %1792 = vrot.lane.b32.xlu0 %v1254, 111
    %v1793 = vpop.permute.xlu0 %1792
    %1794 = vrot.lane.b32.xlu0 %v1258, 111
    %v1795 = vpop.permute.xlu0 %1794
    %1796 = vrot.lane.b32.xlu0 %v1247, 111
    %v1797 = vpop.permute.xlu0 %1796
    %1798 = vrot.lane.b32.xlu0 %v1251, 111
    %v1799 = vpop.permute.xlu0 %1798
    %1800 = vrot.lane.b32.xlu0 %v1255, 111
    %v1801 = vpop.permute.xlu0 %1800
    %1802 = vrot.lane.b32.xlu0 %v1259, 111
    %v1803 = vpop.permute.xlu0 %1802
    %v1804 = vsel %vm264, %v1789, %v1797
    %v1805 = vsel %vm264, %v1791, %v1799
    %v1806 = vsel %vm264, %v1793, %v1801
    %v1807 = vsel %vm264, %v1795, %v1803
    %v1808 = vsel %vm264, %v1781, %v1789
    %v1809 = vsel %vm264, %v1783, %v1791
    %v1810 = vsel %vm264, %v1785, %v1793
    %v1811 = vsel %vm264, %v1787, %v1795
    %v1812 = vsel %vm264, %v1773, %v1781
    %v1813 = vsel %vm264, %v1775, %v1783
    %v1814 = vsel %vm264, %v1777, %v1785
    %v1815 = vsel %vm264, %v1779, %v1787
    %v1816 = vsel %vm264, %v1797, %v1773
    %v1817 = vsel %vm264, %v1799, %v1775
    %v1818 = vsel %vm264, %v1801, %v1777
    %v1819 = vsel %vm264, %v1803, %v1779
    %v1820 = vmul.f32 %v1812, %v269
    %v1821 = vmul.f32 %v1808, %v270
    %v1822 = vmul.f32 %v1804, %v271
    %v1823 = vmul.f32 %v1816, %v272
    %v1824 = vmul.f32 %v1813, %v269
    %v1825 = vmul.f32 %v1809, %v270
    %v1826 = vmul.f32 %v1805, %v271
    %v1827 = vmul.f32 %v1817, %v272
    %v1828 = vmul.f32 %v1814, %v269
    %v1829 = vmul.f32 %v1810, %v270
    %v1830 = vmul.f32 %v1806, %v271
    %v1831 = vmul.f32 %v1818, %v272
    %v1832 = vmul.f32 %v1815, %v269
    %v1833 = vmul.f32 %v1811, %v270
    %v1834 = vmul.f32 %v1807, %v271
    %v1835 = vmul.f32 %v1819, %v272
    %v1836 = vpack.c.bf16 %v1821, %v1820
    %v1837 = vpack.c.bf16 %v1823, %v1822
    %v1838 = vpack.c.bf16 %v1825, %v1824
    %v1839 = vpack.c.bf16 %v1827, %v1826
    %v1840 = vpack.c.bf16 %v1829, %v1828
    %v1841 = vpack.c.bf16 %v1831, %v1830
    %v1842 = vpack.c.bf16 %v1833, %v1832
    %v1843 = vpack.c.bf16 %v1835, %v1834
    %v1852 = vunpack.c.l.b16 %v1324
    %v1853 = vunpack.c.h.b16 %v1324
    %v1854 = vunpack.c.l.b16 %v1325
    %v1855 = vunpack.c.h.b16 %v1325
    %v1856 = vunpack.c.l.b16 %v1326
    %v1857 = vunpack.c.h.b16 %v1326
    %v1858 = vunpack.c.l.b16 %v1327
    %v1859 = vunpack.c.h.b16 %v1327
    %v1860 = vunpack.c.l.b16 %v1328
    %v1861 = vunpack.c.h.b16 %v1328
    %v1862 = vunpack.c.l.b16 %v1329
    %v1863 = vunpack.c.h.b16 %v1329
    %v1864 = vunpack.c.l.b16 %v1330
    %v1865 = vunpack.c.h.b16 %v1330
    %v1866 = vunpack.c.l.b16 %v1331
    %v1867 = vunpack.c.h.b16 %v1331
    %v1868 = vpack.c.b16 %v1856, %v1852
    %v1869 = vpack.c.b16 %v1857, %v1853
    %v1870 = vpack.c.b16 %v1858, %v1854
    %v1871 = vpack.c.b16 %v1859, %v1855
    %v1872 = vpack.c.b16 %v1864, %v1860
    %v1873 = vpack.c.b16 %v1865, %v1861
    %v1874 = vpack.c.b16 %v1866, %v1862
    %v1875 = vpack.c.b16 %v1867, %v1863
    %v1892 = vunpack.c.l.b16 %v1396
    %v1893 = vunpack.c.h.b16 %v1396
    %v1894 = vunpack.c.l.b16 %v1397
    %v1895 = vunpack.c.h.b16 %v1397
    %v1896 = vunpack.c.l.b16 %v1398
    %v1897 = vunpack.c.h.b16 %v1398
    %v1898 = vunpack.c.l.b16 %v1399
    %v1899 = vunpack.c.h.b16 %v1399
    %v1900 = vunpack.c.l.b16 %v1400
    %v1901 = vunpack.c.h.b16 %v1400
    %v1902 = vunpack.c.l.b16 %v1401
    %v1903 = vunpack.c.h.b16 %v1401
    %v1904 = vunpack.c.l.b16 %v1402
    %v1905 = vunpack.c.h.b16 %v1402
    %v1906 = vunpack.c.l.b16 %v1403
    %v1907 = vunpack.c.h.b16 %v1403
    %v1908 = vpack.c.b16 %v1896, %v1892
    %v1909 = vpack.c.b16 %v1897, %v1893
    %v1910 = vpack.c.b16 %v1898, %v1894
    %v1911 = vpack.c.b16 %v1899, %v1895
    %v1912 = vpack.c.b16 %v1904, %v1900
    %v1913 = vpack.c.b16 %v1905, %v1901
    %v1914 = vpack.c.b16 %v1906, %v1902
    %v1915 = vpack.c.b16 %v1907, %v1903
    %v1932 = vunpack.c.l.b16 %v1468
    %v1933 = vunpack.c.h.b16 %v1468
    %v1934 = vunpack.c.l.b16 %v1469
    %v1935 = vunpack.c.h.b16 %v1469
    %v1936 = vunpack.c.l.b16 %v1470
    %v1937 = vunpack.c.h.b16 %v1470
    %v1938 = vunpack.c.l.b16 %v1471
    %v1939 = vunpack.c.h.b16 %v1471
    %v1940 = vunpack.c.l.b16 %v1472
    %v1941 = vunpack.c.h.b16 %v1472
    %v1942 = vunpack.c.l.b16 %v1473
    %v1943 = vunpack.c.h.b16 %v1473
    %v1944 = vunpack.c.l.b16 %v1474
    %v1945 = vunpack.c.h.b16 %v1474
    %v1946 = vunpack.c.l.b16 %v1475
    %v1947 = vunpack.c.h.b16 %v1475
    %v1948 = vpack.c.b16 %v1936, %v1932
    %v1949 = vpack.c.b16 %v1937, %v1933
    %v1950 = vpack.c.b16 %v1938, %v1934
    %v1951 = vpack.c.b16 %v1939, %v1935
    %v1952 = vpack.c.b16 %v1944, %v1940
    %v1953 = vpack.c.b16 %v1945, %v1941
    %v1954 = vpack.c.b16 %v1946, %v1942
    %v1955 = vpack.c.b16 %v1947, %v1943
    %v1972 = vunpack.c.l.b16 %v1540
    %v1973 = vunpack.c.h.b16 %v1540
    %v1974 = vunpack.c.l.b16 %v1541
    %v1975 = vunpack.c.h.b16 %v1541
    %v1976 = vunpack.c.l.b16 %v1542
    %v1977 = vunpack.c.h.b16 %v1542
    %v1978 = vunpack.c.l.b16 %v1543
    %v1979 = vunpack.c.h.b16 %v1543
    %v1980 = vunpack.c.l.b16 %v1544
    %v1981 = vunpack.c.h.b16 %v1544
    %v1982 = vunpack.c.l.b16 %v1545
    %v1983 = vunpack.c.h.b16 %v1545
    %v1984 = vunpack.c.l.b16 %v1546
    %v1985 = vunpack.c.h.b16 %v1546
    %v1986 = vunpack.c.l.b16 %v1547
    %v1987 = vunpack.c.h.b16 %v1547
    %v1988 = vpack.c.b16 %v1976, %v1972
    %v1989 = vpack.c.b16 %v1977, %v1973
    %v1990 = vpack.c.b16 %v1978, %v1974
    %v1991 = vpack.c.b16 %v1979, %v1975
    %v1992 = vpack.c.b16 %v1984, %v1980
    %v1993 = vpack.c.b16 %v1985, %v1981
    %v1994 = vpack.c.b16 %v1986, %v1982
    %v1995 = vpack.c.b16 %v1987, %v1983
    %v2012 = vunpack.c.l.b16 %v1548
    %v2013 = vunpack.c.h.b16 %v1548
    %v2014 = vunpack.c.l.b16 %v1549
    %v2015 = vunpack.c.h.b16 %v1549
    %v2016 = vunpack.c.l.b16 %v1550
    %v2017 = vunpack.c.h.b16 %v1550
    %v2018 = vunpack.c.l.b16 %v1551
    %v2019 = vunpack.c.h.b16 %v1551
    %v2020 = vunpack.c.l.b16 %v1552
    %v2021 = vunpack.c.h.b16 %v1552
    %v2022 = vunpack.c.l.b16 %v1553
    %v2023 = vunpack.c.h.b16 %v1553
    %v2024 = vunpack.c.l.b16 %v1554
    %v2025 = vunpack.c.h.b16 %v1554
    %v2026 = vunpack.c.l.b16 %v1555
    %v2027 = vunpack.c.h.b16 %v1555
    %v2028 = vpack.c.b16 %v2016, %v2012
    %v2029 = vpack.c.b16 %v2017, %v2013
    %v2030 = vpack.c.b16 %v2018, %v2014
    %v2031 = vpack.c.b16 %v2019, %v2015
    %v2032 = vpack.c.b16 %v2024, %v2020
    %v2033 = vpack.c.b16 %v2025, %v2021
    %v2034 = vpack.c.b16 %v2026, %v2022
    %v2035 = vpack.c.b16 %v2027, %v2023
    %v2052 = vunpack.c.l.b16 %v1620
    %v2053 = vunpack.c.h.b16 %v1620
    %v2054 = vunpack.c.l.b16 %v1621
    %v2055 = vunpack.c.h.b16 %v1621
    %v2056 = vunpack.c.l.b16 %v1622
    %v2057 = vunpack.c.h.b16 %v1622
    %v2058 = vunpack.c.l.b16 %v1623
    %v2059 = vunpack.c.h.b16 %v1623
    %v2060 = vunpack.c.l.b16 %v1624
    %v2061 = vunpack.c.h.b16 %v1624
    %v2062 = vunpack.c.l.b16 %v1625
    %v2063 = vunpack.c.h.b16 %v1625
    %v2064 = vunpack.c.l.b16 %v1626
    %v2065 = vunpack.c.h.b16 %v1626
    %v2066 = vunpack.c.l.b16 %v1627
    %v2067 = vunpack.c.h.b16 %v1627
    %v2068 = vpack.c.b16 %v2056, %v2052
    %v2069 = vpack.c.b16 %v2057, %v2053
    %v2070 = vpack.c.b16 %v2058, %v2054
    %v2071 = vpack.c.b16 %v2059, %v2055
    %v2072 = vpack.c.b16 %v2064, %v2060
    %v2073 = vpack.c.b16 %v2065, %v2061
    %v2074 = vpack.c.b16 %v2066, %v2062
    %v2075 = vpack.c.b16 %v2067, %v2063
    %v2092 = vunpack.c.l.b16 %v1692
    %v2093 = vunpack.c.h.b16 %v1692
    %v2094 = vunpack.c.l.b16 %v1693
    %v2095 = vunpack.c.h.b16 %v1693
    %v2096 = vunpack.c.l.b16 %v1694
    %v2097 = vunpack.c.h.b16 %v1694
    %v2098 = vunpack.c.l.b16 %v1695
    %v2099 = vunpack.c.h.b16 %v1695
    %v2100 = vunpack.c.l.b16 %v1696
    %v2101 = vunpack.c.h.b16 %v1696
    %v2102 = vunpack.c.l.b16 %v1697
    %v2103 = vunpack.c.h.b16 %v1697
    %v2104 = vunpack.c.l.b16 %v1698
    %v2105 = vunpack.c.h.b16 %v1698
    %v2106 = vunpack.c.l.b16 %v1699
    %v2107 = vunpack.c.h.b16 %v1699
    %v2108 = vpack.c.b16 %v2096, %v2092
    %v2109 = vpack.c.b16 %v2097, %v2093
    %v2110 = vpack.c.b16 %v2098, %v2094
    %v2111 = vpack.c.b16 %v2099, %v2095
    %v2112 = vpack.c.b16 %v2104, %v2100
    %v2113 = vpack.c.b16 %v2105, %v2101
    %v2114 = vpack.c.b16 %v2106, %v2102
    %v2115 = vpack.c.b16 %v2107, %v2103
    %v2132 = vunpack.c.l.b16 %v1764
    %v2133 = vunpack.c.h.b16 %v1764
    %v2134 = vunpack.c.l.b16 %v1765
    %v2135 = vunpack.c.h.b16 %v1765
    %v2136 = vunpack.c.l.b16 %v1766
    %v2137 = vunpack.c.h.b16 %v1766
    %v2138 = vunpack.c.l.b16 %v1767
    %v2139 = vunpack.c.h.b16 %v1767
    %v2140 = vunpack.c.l.b16 %v1768
    %v2141 = vunpack.c.h.b16 %v1768
    %v2142 = vunpack.c.l.b16 %v1769
    %v2143 = vunpack.c.h.b16 %v1769
    %v2144 = vunpack.c.l.b16 %v1770
    %v2145 = vunpack.c.h.b16 %v1770
    %v2146 = vunpack.c.l.b16 %v1771
    %v2147 = vunpack.c.h.b16 %v1771
    %v2148 = vpack.c.b16 %v2136, %v2132
    %v2149 = vpack.c.b16 %v2137, %v2133
    %v2150 = vpack.c.b16 %v2138, %v2134
    %v2151 = vpack.c.b16 %v2139, %v2135
    %v2152 = vpack.c.b16 %v2144, %v2140
    %v2153 = vpack.c.b16 %v2145, %v2141
    %v2154 = vpack.c.b16 %v2146, %v2142
    %v2155 = vpack.c.b16 %v2147, %v2143
    %v2172 = vunpack.c.l.b16 %v1836
    %v2173 = vunpack.c.h.b16 %v1836
    %v2174 = vunpack.c.l.b16 %v1837
    %v2175 = vunpack.c.h.b16 %v1837
    %v2176 = vunpack.c.l.b16 %v1838
    %v2177 = vunpack.c.h.b16 %v1838
    %v2178 = vunpack.c.l.b16 %v1839
    %v2179 = vunpack.c.h.b16 %v1839
    %v2180 = vunpack.c.l.b16 %v1840
    %v2181 = vunpack.c.h.b16 %v1840
    %v2182 = vunpack.c.l.b16 %v1841
    %v2183 = vunpack.c.h.b16 %v1841
    %v2184 = vunpack.c.l.b16 %v1842
    %v2185 = vunpack.c.h.b16 %v1842
    %v2186 = vunpack.c.l.b16 %v1843
    %v2187 = vunpack.c.h.b16 %v1843
    %v2188 = vpack.c.b16 %v2176, %v2172
    %v2189 = vpack.c.b16 %v2177, %v2173
    %v2190 = vpack.c.b16 %v2178, %v2174
    %v2191 = vpack.c.b16 %v2179, %v2175
    %v2192 = vpack.c.b16 %v2184, %v2180
    %v2193 = vpack.c.b16 %v2185, %v2181
    %v2194 = vpack.c.b16 %v2186, %v2182
    %v2195 = vpack.c.b16 %v2187, %v2183
    %v2204 = vld [vmem:[%s10] sm:$0xff]
    %v2205 = vld [vmem:[%s10 + $0x8] sm:$0xf]
    %v2206 = vld [vmem:[%s10 + $0xc] sm:$0xff]
    %v2207 = vld [vmem:[%s10 + $0x14] sm:$0xf]
    %v2208 = vld [vmem:[%s10 + $0x18] sm:$0xff]
    %v2209 = vld [vmem:[%s10 + $0x20] sm:$0xf]
    %v2210 = vld [vmem:[%s10 + $0x24] sm:$0xff]
    %v2211 = vld [vmem:[%s10 + $0x2c] sm:$0xf]
    %v2212 = vld [vmem:[%s11] sm:$0xff]
    %v2213 = vld [vmem:[%s11 + $0x8] sm:$0xff]
    %v2214 = vld [vmem:[%s11 + $0x10] sm:$0xff]
    %v2215 = vld [vmem:[%s11 + $0x18] sm:$0xff]
    %2217 = vset.pattern.permute.xlu0 0
    %2218 = vperm.xlu0 %2217, %v2212
    %v2219 = vpop.permute.xlu0 %2218
    %2222 = vset.pattern.permute.xlu0 0
    %2223 = vperm.xlu0 %2222, %v2213
    %v2224 = vpop.permute.xlu0 %2223
    %2227 = vset.pattern.permute.xlu0 0
    %2228 = vperm.xlu0 %2227, %v2214
    %v2229 = vpop.permute.xlu0 %2228
    %2232 = vset.pattern.permute.xlu0 0
    %2233 = vperm.xlu0 %2232, %v2215
    %v2234 = vpop.permute.xlu0 %2233
    %v2244 = vunpack.c.l.b16 %v2204
    %v2245 = vunpack.c.h.b16 %v2204
    %v2246 = vunpack.c.l.b16 %v2205
    %v2247 = vunpack.c.l.b16 %v2206
    %v2248 = vunpack.c.h.b16 %v2206
    %v2249 = vunpack.c.l.b16 %v2207
    %v2250 = vunpack.c.l.b16 %v2208
    %v2251 = vunpack.c.h.b16 %v2208
    %v2252 = vunpack.c.l.b16 %v2209
    %v2253 = vunpack.c.l.b16 %v2210
    %v2254 = vunpack.c.h.b16 %v2210
    %v2255 = vunpack.c.l.b16 %v2211
    %v2256 = vpack.c.b16 %v2247, %v2244
    %v2257 = vpack.c.b16 %v2248, %v2245
    %v2258 = vpack.c.b16 %v2249, %v2246
    %v2259 = vpack.c.b16 %v2253, %v2250
    %v2260 = vpack.c.b16 %v2254, %v2251
    %v2261 = vpack.c.b16 %v2255, %v2252
    %v2267 = vsel %vm646, %v2258, 0
    %v2270 = vsel %vm646, %v2261, 0
    %2272 = vmatpush.bf16.msra.mxu0 %v1992
    %2273 = vmatpush.bf16.msra.mxu0 %v1988
    %2274 = vmatpush.bf16.msra.mxu0 %v1952
    %2275 = vmatpush.bf16.msra.mxu0 %v1948
    %2276 = vmatpush.bf16.msra.mxu0 %v1912
    %2277 = vmatpush.bf16.msra.mxu0 %v1908
    %2278 = vmatpush.bf16.msra.mxu0 %v1872
    %2279 = vmatpush.bf16.msra.mxu0 %v1868
    %2280 = vmatmul.bf16.gmra.mxu0 %v2256
    %v2281 = vpop.f32.mrf.mxu0
    %v2282 = vadd.f32 %v2219, %v2281
    %v2283 = vpop.f32.mrf.mxu0
    %v2284 = vadd.f32 %v2224, %v2283
    %2285 = vmatmul.bf16.gmra.mxu0 %v2259
    %v2286 = vpop.f32.mrf.mxu0
    %v2287 = vadd.f32 %v2229, %v2286
    %v2288 = vpop.f32.mrf.mxu0
    %v2289 = vadd.f32 %v2234, %v2288
    %2290 = vdwg.mxu0
    %2291 = vmatpush.bf16.msra.mxu0 %v2152
    %2292 = vmatpush.bf16.msra.mxu0 %v2148
    %2293 = vmatpush.bf16.msra.mxu0 %v2112
    %2294 = vmatpush.bf16.msra.mxu0 %v2108
    %2295 = vmatpush.bf16.msra.mxu0 %v2072
    %2296 = vmatpush.bf16.msra.mxu0 %v2068
    %2297 = vmatpush.bf16.msra.mxu0 %v2032
    %2298 = vmatpush.bf16.msra.mxu0 %v2028
    %2299 = vmatmul.bf16.gmra.mxu0 %v2257
    %v2300 = vpop.f32.mrf.mxu0
    %v2301 = vadd.f32 %v2282, %v2300
    %v2302 = vpop.f32.mrf.mxu0
    %v2303 = vadd.f32 %v2284, %v2302
    %2304 = vmatmul.bf16.gmra.mxu0 %v2260
    %v2305 = vpop.f32.mrf.mxu0
    %v2306 = vadd.f32 %v2287, %v2305
    %v2307 = vpop.f32.mrf.mxu0
    %v2308 = vadd.f32 %v2289, %v2307
    %2309 = vdwg.mxu0
    %2310 = vmatpush.bf16.msra.mxu0 0
    %2311 = vmatpush.bf16.msra.mxu0 0
    %2312 = vmatpush.bf16.msra.mxu0 0
    %2313 = vmatpush.bf16.msra.mxu0 0
    %2314 = vmatpush.bf16.msra.mxu0 0
    %2315 = vmatpush.bf16.msra.mxu0 0
    %2316 = vmatpush.bf16.msra.mxu0 %v2192
    %2317 = vmatpush.bf16.msra.mxu0 %v2188
    %2318 = vmatmul.bf16.gmra.mxu0 %v2267
    %v2319 = vpop.f32.mrf.mxu0
    %v2320 = vadd.f32 %v2301, %v2319
    %v2321 = vpop.f32.mrf.mxu0
    %v2322 = vadd.f32 %v2303, %v2321
    %2323 = vmatmul.bf16.gmra.mxu0 %v2270
    %v2324 = vpop.f32.mrf.mxu0
    %v2325 = vadd.f32 %v2306, %v2324
    %v2326 = vpop.f32.mrf.mxu0
    %v2327 = vadd.f32 %v2308, %v2326
    %2328 = vdwg.mxu0
    %2329 = vmatpush.bf16.msra.mxu0 %v1993
    %2330 = vmatpush.bf16.msra.mxu0 %v1989
    %2331 = vmatpush.bf16.msra.mxu0 %v1953
    %2332 = vmatpush.bf16.msra.mxu0 %v1949
    %2333 = vmatpush.bf16.msra.mxu0 %v1913
    %2334 = vmatpush.bf16.msra.mxu0 %v1909
    %2335 = vmatpush.bf16.msra.mxu0 %v1873
    %2336 = vmatpush.bf16.msra.mxu0 %v1869
    %2337 = vmatmul.bf16.gmra.mxu0 %v2256
    %v2338 = vpop.f32.mrf.mxu0
    %v2339 = vadd.f32 %v2219, %v2338
    %v2340 = vpop.f32.mrf.mxu0
    %v2341 = vadd.f32 %v2224, %v2340
    %2342 = vmatmul.bf16.gmra.mxu0 %v2259
    %v2343 = vpop.f32.mrf.mxu0
    %v2344 = vadd.f32 %v2229, %v2343
    %v2345 = vpop.f32.mrf.mxu0
    %v2346 = vadd.f32 %v2234, %v2345
    %2347 = vdwg.mxu0
    %2348 = vmatpush.bf16.msra.mxu0 %v2153
    %2349 = vmatpush.bf16.msra.mxu0 %v2149
    %2350 = vmatpush.bf16.msra.mxu0 %v2113
    %2351 = vmatpush.bf16.msra.mxu0 %v2109
    %2352 = vmatpush.bf16.msra.mxu0 %v2073
    %2353 = vmatpush.bf16.msra.mxu0 %v2069
    %2354 = vmatpush.bf16.msra.mxu0 %v2033
    %2355 = vmatpush.bf16.msra.mxu0 %v2029
    %2356 = vmatmul.bf16.gmra.mxu0 %v2257
    %v2357 = vpop.f32.mrf.mxu0
    %v2358 = vadd.f32 %v2339, %v2357
    %v2359 = vpop.f32.mrf.mxu0
    %v2360 = vadd.f32 %v2341, %v2359
    %2361 = vmatmul.bf16.gmra.mxu0 %v2260
    %v2362 = vpop.f32.mrf.mxu0
    %v2363 = vadd.f32 %v2344, %v2362
    %v2364 = vpop.f32.mrf.mxu0
    %v2365 = vadd.f32 %v2346, %v2364
    %2366 = vdwg.mxu0
    %2367 = vmatpush.bf16.msra.mxu0 0
    %2368 = vmatpush.bf16.msra.mxu0 0
    %2369 = vmatpush.bf16.msra.mxu0 0
    %2370 = vmatpush.bf16.msra.mxu0 0
    %2371 = vmatpush.bf16.msra.mxu0 0
    %2372 = vmatpush.bf16.msra.mxu0 0
    %2373 = vmatpush.bf16.msra.mxu0 %v2193
    %2374 = vmatpush.bf16.msra.mxu0 %v2189
    %2375 = vmatmul.bf16.gmra.mxu0 %v2267
    %v2376 = vpop.f32.mrf.mxu0
    %v2377 = vadd.f32 %v2358, %v2376
    %v2378 = vpop.f32.mrf.mxu0
    %v2379 = vadd.f32 %v2360, %v2378
    %2380 = vmatmul.bf16.gmra.mxu0 %v2270
    %v2381 = vpop.f32.mrf.mxu0
    %v2382 = vadd.f32 %v2363, %v2381
    %v2383 = vpop.f32.mrf.mxu0
    %v2384 = vadd.f32 %v2365, %v2383
    %2385 = vdwg.mxu0
    %2386 = vmatpush.bf16.msra.mxu0 %v1994
    %2387 = vmatpush.bf16.msra.mxu0 %v1990
    %2388 = vmatpush.bf16.msra.mxu0 %v1954
    %2389 = vmatpush.bf16.msra.mxu0 %v1950
    %2390 = vmatpush.bf16.msra.mxu0 %v1914
    %2391 = vmatpush.bf16.msra.mxu0 %v1910
    %2392 = vmatpush.bf16.msra.mxu0 %v1874
    %2393 = vmatpush.bf16.msra.mxu0 %v1870
    %2394 = vmatmul.bf16.gmra.mxu0 %v2256
    %v2395 = vpop.f32.mrf.mxu0
    %v2396 = vadd.f32 %v2219, %v2395
    %v2397 = vpop.f32.mrf.mxu0
    %v2398 = vadd.f32 %v2224, %v2397
    %2399 = vmatmul.bf16.gmra.mxu0 %v2259
    %v2400 = vpop.f32.mrf.mxu0
    %v2401 = vadd.f32 %v2229, %v2400
    %v2402 = vpop.f32.mrf.mxu0
    %v2403 = vadd.f32 %v2234, %v2402
    %2404 = vdwg.mxu0
    %2405 = vmatpush.bf16.msra.mxu0 %v2154
    %2406 = vmatpush.bf16.msra.mxu0 %v2150
    %2407 = vmatpush.bf16.msra.mxu0 %v2114
    %2408 = vmatpush.bf16.msra.mxu0 %v2110
    %2409 = vmatpush.bf16.msra.mxu0 %v2074
    %2410 = vmatpush.bf16.msra.mxu0 %v2070
    %2411 = vmatpush.bf16.msra.mxu0 %v2034
    %2412 = vmatpush.bf16.msra.mxu0 %v2030
    %2413 = vmatmul.bf16.gmra.mxu0 %v2257
    %v2414 = vpop.f32.mrf.mxu0
    %v2415 = vadd.f32 %v2396, %v2414
    %v2416 = vpop.f32.mrf.mxu0
    %v2417 = vadd.f32 %v2398, %v2416
    %2418 = vmatmul.bf16.gmra.mxu0 %v2260
    %v2419 = vpop.f32.mrf.mxu0
    %v2420 = vadd.f32 %v2401, %v2419
    %v2421 = vpop.f32.mrf.mxu0
    %v2422 = vadd.f32 %v2403, %v2421
    %2423 = vdwg.mxu0
    %2424 = vmatpush.bf16.msra.mxu0 0
    %2425 = vmatpush.bf16.msra.mxu0 0
    %2426 = vmatpush.bf16.msra.mxu0 0
    %2427 = vmatpush.bf16.msra.mxu0 0
    %2428 = vmatpush.bf16.msra.mxu0 0
    %2429 = vmatpush.bf16.msra.mxu0 0
    %2430 = vmatpush.bf16.msra.mxu0 %v2194
    %2431 = vmatpush.bf16.msra.mxu0 %v2190
    %2432 = vmatmul.bf16.gmra.mxu0 %v2267
    %v2433 = vpop.f32.mrf.mxu0
    %v2434 = vadd.f32 %v2415, %v2433
    %v2435 = vpop.f32.mrf.mxu0
    %v2436 = vadd.f32 %v2417, %v2435
    %2437 = vmatmul.bf16.gmra.mxu0 %v2270
    %v2438 = vpop.f32.mrf.mxu0
    %v2439 = vadd.f32 %v2420, %v2438
    %v2440 = vpop.f32.mrf.mxu0
    %v2441 = vadd.f32 %v2422, %v2440
    %2442 = vdwg.mxu0
    %2443 = vmatpush.bf16.msra.mxu0 %v1995
    %2444 = vmatpush.bf16.msra.mxu0 %v1991
    %2445 = vmatpush.bf16.msra.mxu0 %v1955
    %2446 = vmatpush.bf16.msra.mxu0 %v1951
    %2447 = vmatpush.bf16.msra.mxu0 %v1915
    %2448 = vmatpush.bf16.msra.mxu0 %v1911
    %2449 = vmatpush.bf16.msra.mxu0 %v1875
    %2450 = vmatpush.bf16.msra.mxu0 %v1871
    %2451 = vmatmul.bf16.gmra.mxu0 %v2256
    %v2452 = vpop.f32.mrf.mxu0
    %v2453 = vadd.f32 %v2219, %v2452
    %v2454 = vpop.f32.mrf.mxu0
    %v2455 = vadd.f32 %v2224, %v2454
    %2456 = vmatmul.bf16.gmra.mxu0 %v2259
    %v2457 = vpop.f32.mrf.mxu0
    %v2458 = vadd.f32 %v2229, %v2457
    %v2459 = vpop.f32.mrf.mxu0
    %v2460 = vadd.f32 %v2234, %v2459
    %2461 = vdwg.mxu0
    %2462 = vmatpush.bf16.msra.mxu0 %v2155
    %2463 = vmatpush.bf16.msra.mxu0 %v2151
    %2464 = vmatpush.bf16.msra.mxu0 %v2115
    %2465 = vmatpush.bf16.msra.mxu0 %v2111
    %2466 = vmatpush.bf16.msra.mxu0 %v2075
    %2467 = vmatpush.bf16.msra.mxu0 %v2071
    %2468 = vmatpush.bf16.msra.mxu0 %v2035
    %2469 = vmatpush.bf16.msra.mxu0 %v2031
    %2470 = vmatmul.bf16.gmra.mxu0 %v2257
    %v2471 = vpop.f32.mrf.mxu0
    %v2472 = vadd.f32 %v2453, %v2471
    %v2473 = vpop.f32.mrf.mxu0
    %v2474 = vadd.f32 %v2455, %v2473
    %2475 = vmatmul.bf16.gmra.mxu0 %v2260
    %v2476 = vpop.f32.mrf.mxu0
    %v2477 = vadd.f32 %v2458, %v2476
    %v2478 = vpop.f32.mrf.mxu0
    %v2479 = vadd.f32 %v2460, %v2478
    %2480 = vdwg.mxu0
    %2481 = vmatpush.bf16.msra.mxu0 0
    %2482 = vmatpush.bf16.msra.mxu0 0
    %2483 = vmatpush.bf16.msra.mxu0 0
    %2484 = vmatpush.bf16.msra.mxu0 0
    %2485 = vmatpush.bf16.msra.mxu0 0
    %2486 = vmatpush.bf16.msra.mxu0 0
    %2487 = vmatpush.bf16.msra.mxu0 %v2195
    %2488 = vmatpush.bf16.msra.mxu0 %v2191
    %2489 = vmatmul.bf16.gmra.mxu0 %v2267
    %v2490 = vpop.f32.mrf.mxu0
    %v2491 = vadd.f32 %v2472, %v2490
    %v2492 = vpop.f32.mrf.mxu0
    %v2493 = vadd.f32 %v2474, %v2492
    %2494 = vmatmul.bf16.gmra.mxu0 %v2270
    %v2495 = vpop.f32.mrf.mxu0
    %v2496 = vadd.f32 %v2477, %v2495
    %v2497 = vpop.f32.mrf.mxu0
    %v2498 = vadd.f32 %v2479, %v2497
    %2499 = vdwg.mxu0
    %v2500 = vld [vmem:[%s1] sm:$0xff]
    %v2501 = vld [vmem:[%s1 + $0x8] sm:$0xff]
    %v2502 = vld [vmem:[%s1 + $0x10] sm:$0xff]
    %v2503 = vld [vmem:[%s1 + $0x18] sm:$0xff]
    %2505 = vset.pattern.permute.xlu0 0
    %2506 = vperm.xlu0 %2505, %v2500
    %v2507 = vpop.permute.xlu0 %2506
    %2510 = vset.pattern.permute.xlu0 0
    %2511 = vperm.xlu0 %2510, %v2501
    %v2512 = vpop.permute.xlu0 %2511
    %2515 = vset.pattern.permute.xlu0 0
    %2516 = vperm.xlu0 %2515, %v2502
    %v2517 = vpop.permute.xlu0 %2516
    %2520 = vset.pattern.permute.xlu0 0
    %2521 = vperm.xlu0 %2520, %v2503
    %v2522 = vpop.permute.xlu0 %2521
    %s2524 = scalar_lea.vmem %s1, 32
    %v2525 = vld [vmem:[%s2524] sm:$0xff]
    %v2526 = vld [vmem:[%s2524 + $0x8] sm:$0xff]
    %v2527 = vld [vmem:[%s2524 + $0x10] sm:$0xff]
    %v2528 = vld [vmem:[%s2524 + $0x18] sm:$0xff]
    %2530 = vset.pattern.permute.xlu0 0
    %2531 = vperm.xlu0 %2530, %v2525
    %v2532 = vpop.permute.xlu0 %2531
    %2535 = vset.pattern.permute.xlu0 0
    %2536 = vperm.xlu0 %2535, %v2526
    %v2537 = vpop.permute.xlu0 %2536
    %2540 = vset.pattern.permute.xlu0 0
    %2541 = vperm.xlu0 %2540, %v2527
    %v2542 = vpop.permute.xlu0 %2541
    %2545 = vset.pattern.permute.xlu0 0
    %2546 = vperm.xlu0 %2545, %v2528
    %v2547 = vpop.permute.xlu0 %2546
    %v2549 = vadd.f32 %v2320, %v2507
    %v2550 = vadd.f32 %v2377, %v2507
    %v2551 = vadd.f32 %v2434, %v2532
    %v2552 = vadd.f32 %v2491, %v2532
    %v2553 = vadd.f32 %v2322, %v2512
    %v2554 = vadd.f32 %v2379, %v2512
    %v2555 = vadd.f32 %v2436, %v2537
    %v2556 = vadd.f32 %v2493, %v2537
    %v2557 = vadd.f32 %v2325, %v2517
    %v2558 = vadd.f32 %v2382, %v2517
    %v2559 = vadd.f32 %v2439, %v2542
    %v2560 = vadd.f32 %v2496, %v2542
    %v2561 = vadd.f32 %v2327, %v2522
    %v2562 = vadd.f32 %v2384, %v2522
    %v2563 = vadd.f32 %v2441, %v2547
    %v2564 = vadd.f32 %v2498, %v2547
    %v2565 = vadd.f32 %v2549, %v2550
    %2566 = vadd.xlane.f32.xlu0 %v2565
    %v2567 = vpop.xlane.xlu0 %2566
    %v2568 = vadd.f32 %v2553, %v2554
    %2569 = vadd.xlane.f32.xlu0 %v2568
    %v2570 = vpop.xlane.xlu0 %2569
    %v2571 = vadd.f32 %v2557, %v2558
    %2572 = vadd.xlane.f32.xlu0 %v2571
    %v2573 = vpop.xlane.xlu0 %2572
    %v2574 = vadd.f32 %v2561, %v2562
    %2575 = vadd.xlane.f32.xlu0 %v2574
    %v2576 = vpop.xlane.xlu0 %2575
    %v2577 = vmul.f32 %v2549, %v2549
    %v2578 = vmul.f32 %v2550, %v2550
    %v2579 = vmul.f32 %v2553, %v2553
    %v2580 = vmul.f32 %v2554, %v2554
    %v2581 = vmul.f32 %v2557, %v2557
    %v2582 = vmul.f32 %v2558, %v2558
    %v2583 = vmul.f32 %v2561, %v2561
    %v2584 = vmul.f32 %v2562, %v2562
    %v2585 = vadd.f32 %v2577, %v2578
    %2586 = vadd.xlane.f32.xlu0 %v2585
    %v2587 = vpop.xlane.xlu0 %2586
    %v2588 = vadd.f32 %v2579, %v2580
    %2589 = vadd.xlane.f32.xlu0 %v2588
    %v2590 = vpop.xlane.xlu0 %2589
    %v2591 = vadd.f32 %v2581, %v2582
    %2592 = vadd.xlane.f32.xlu0 %v2591
    %v2593 = vpop.xlane.xlu0 %2592
    %v2594 = vadd.f32 %v2583, %v2584
    %2595 = vadd.xlane.f32.xlu0 %v2594
    %v2596 = vpop.xlane.xlu0 %2595
    %v2597 = vadd.f32 %v2551, %v2552
    %2598 = vadd.xlane.f32.xlu0 %v2597
    %v2599 = vpop.xlane.xlu0 %2598
    %v2600 = vadd.f32 %v2555, %v2556
    %2601 = vadd.xlane.f32.xlu0 %v2600
    %v2602 = vpop.xlane.xlu0 %2601
    %v2603 = vadd.f32 %v2559, %v2560
    %2604 = vadd.xlane.f32.xlu0 %v2603
    %v2605 = vpop.xlane.xlu0 %2604
    %v2606 = vadd.f32 %v2563, %v2564
    %2607 = vadd.xlane.f32.xlu0 %v2606
    %v2608 = vpop.xlane.xlu0 %2607
    %v2609 = vmul.f32 %v2551, %v2551
    %v2610 = vmul.f32 %v2552, %v2552
    %v2611 = vmul.f32 %v2555, %v2555
    %v2612 = vmul.f32 %v2556, %v2556
    %v2613 = vmul.f32 %v2559, %v2559
    %v2614 = vmul.f32 %v2560, %v2560
    %v2615 = vmul.f32 %v2563, %v2563
    %v2616 = vmul.f32 %v2564, %v2564
    %v2617 = vadd.f32 %v2609, %v2610
    %2618 = vadd.xlane.f32.xlu0 %v2617
    %v2619 = vpop.xlane.xlu0 %2618
    %v2620 = vadd.f32 %v2611, %v2612
    %2621 = vadd.xlane.f32.xlu0 %v2620
    %v2622 = vpop.xlane.xlu0 %2621
    %v2623 = vadd.f32 %v2613, %v2614
    %2624 = vadd.xlane.f32.xlu0 %v2623
    %v2625 = vpop.xlane.xlu0 %2624
    %v2626 = vadd.f32 %v2615, %v2616
    %2627 = vadd.xlane.f32.xlu0 %v2626
    %v2628 = vpop.xlane.xlu0 %2627
    %v2629 = vsel %vm631, %v2567, %v2587
    %v2630 = vsel %vm631, %v2570, %v2590
    %v2631 = vsel %vm631, %v2573, %v2593
    %v2632 = vsel %vm631, %v2576, %v2596
    %v2633 = vsel %vm636, %v2629, %v2599
    %v2634 = vsel %vm636, %v2630, %v2602
    %v2635 = vsel %vm636, %v2631, %v2605
    %v2636 = vsel %vm636, %v2632, %v2608
    %v2637 = vsel %vm641, %v2633, %v2619
    %v2638 = vsel %vm641, %v2634, %v2622
    %v2639 = vsel %vm641, %v2635, %v2625
    %v2640 = vsel %vm641, %v2636, %v2628
    %2641 = vmatpush.msra.mxu0 0.0
    %2642 = vmatpush.msra.mxu0 0.0
    %2643 = vmatpush.msra.mxu0 0.0
    %2644 = vmatpush.msra.mxu0 0.0
    %2645 = vmatpush.msra.mxu0 0.0
    %2646 = vmatpush.msra.mxu0 0.0
    %2647 = vmatpush.msra.mxu0 0.0
    %2648 = vmatpush.msra.mxu0 0.0
    %2649 = vmatpush.msra.mxu0 0.0
    %2650 = vmatpush.msra.mxu0 0.0
    %2651 = vmatpush.msra.mxu0 0.0
    %2652 = vmatpush.msra.mxu0 0.0
    %2653 = vmatpush.msra.mxu0 %v2640
    %2654 = vmatpush.msra.mxu0 %v2639
    %2655 = vmatpush.msra.mxu0 %v2638
    %2656 = vmatpush.msra.mxu0 %v2637
    %2657 = vmatmul.f32.gmra.mxu0 %v648
    %v2658 = vpop.f32.mrf.mxu0
    %v2659 = vadd.f32 0.0, %v2658
    %2660 = vmatmul.f32.gmra.mxu0 %v651
    %v2661 = vpop.f32.mrf.mxu0
    %v2662 = vadd.f32 0.0, %v2661
    %2663 = vmatmul.f32.gmra.mxu0 %v654
    %v2664 = vpop.f32.mrf.mxu0
    %v2665 = vadd.f32 0.0, %v2664
    %2666 = vmatmul.f32.gmra.mxu0 %v657
    %v2667 = vpop.f32.mrf.mxu0
    %v2668 = vadd.f32 0.0, %v2667
    %2669 = vdwg.mxu0
    %v2670 = vmul.f32 %v2659, %v2659
    %v2671 = vmul.f32 %v2662, %v2662
    %v2672 = vmul.f32 %v2665, %v2665
    %v2673 = vmul.f32 %v2668, %v2668
    %2678 = vrot.lane.b32.xlu0 %v2670, 1
    %v2679 = vpop.permute.xlu0 %2678
    %2680 = vrot.lane.b32.xlu0 %v2671, 1
    %v2681 = vpop.permute.xlu0 %2680
    %2682 = vrot.lane.b32.xlu0 %v2672, 1
    %v2683 = vpop.permute.xlu0 %2682
    %2684 = vrot.lane.b32.xlu0 %v2673, 1
    %v2685 = vpop.permute.xlu0 %2684
    %v2690 = vsub.f32 %v2659, %v2679
    %v2691 = vsub.f32 %v2662, %v2681
    %v2692 = vsub.f32 %v2665, %v2683
    %v2693 = vsub.f32 %v2668, %v2685
    %2695 = vset.pattern.permute.xlu0 0
    %2696 = vperm.xlu0 %2695, %v2659
    %v2697 = vpop.permute.xlu0 %2696
    %2700 = vset.pattern.permute.xlu0 0
    %2701 = vperm.xlu0 %2700, %v2662
    %v2702 = vpop.permute.xlu0 %2701
    %2705 = vset.pattern.permute.xlu0 0
    %2706 = vperm.xlu0 %2705, %v2665
    %v2707 = vpop.permute.xlu0 %2706
    %2710 = vset.pattern.permute.xlu0 0
    %2711 = vperm.xlu0 %2710, %v2668
    %v2712 = vpop.permute.xlu0 %2711
    %v2714 = vsub.f32 %v2549, %v2697
    %v2715 = vsub.f32 %v2550, %v2697
    %v2716 = vsub.f32 %v2553, %v2702
    %v2717 = vsub.f32 %v2554, %v2702
    %v2718 = vsub.f32 %v2557, %v2707
    %v2719 = vsub.f32 %v2558, %v2707
    %v2720 = vsub.f32 %v2561, %v2712
    %v2721 = vsub.f32 %v2562, %v2712
    %v2722 = vadd.f32 %v2690, 1e-05
    %v2723 = vadd.f32 %v2691, 1e-05
    %v2724 = vadd.f32 %v2692, 1e-05
    %v2725 = vadd.f32 %v2693, 1e-05
    %v2726 = vrsqrt.pop %v2722
    %v2727 = vmul.f32 %v2726, %v2722
    %v2728 = vmul.f32 %v2727, %v2726
    %v2729 = vmul.f32 0.5, %v2728
    %v2730 = vsub.f32 1.5, %v2729
    %v2731 = vmul.f32 %v2726, %v2730
    %vm2732 = vweird.f32 %v2722
    %vm2733 = vweird.f32 %v2726
    %vm2734 = vmor %vm2732, %vm2733
    %v2735 = vsel %vm2734, %v2726, %v2731
    %v2736 = vrsqrt.pop %v2723
    %v2737 = vmul.f32 %v2736, %v2723
    %v2738 = vmul.f32 %v2737, %v2736
    %v2739 = vmul.f32 0.5, %v2738
    %v2740 = vsub.f32 1.5, %v2739
    %v2741 = vmul.f32 %v2736, %v2740
    %vm2742 = vweird.f32 %v2723
    %vm2743 = vweird.f32 %v2736
    %vm2744 = vmor %vm2742, %vm2743
    %v2745 = vsel %vm2744, %v2736, %v2741
    %v2746 = vrsqrt.pop %v2724
    %v2747 = vmul.f32 %v2746, %v2724
    %v2748 = vmul.f32 %v2747, %v2746
    %v2749 = vmul.f32 0.5, %v2748
    %v2750 = vsub.f32 1.5, %v2749
    %v2751 = vmul.f32 %v2746, %v2750
    %vm2752 = vweird.f32 %v2724
    %vm2753 = vweird.f32 %v2746
    %vm2754 = vmor %vm2752, %vm2753
    %v2755 = vsel %vm2754, %v2746, %v2751
    %v2756 = vrsqrt.pop %v2725
    %v2757 = vmul.f32 %v2756, %v2725
    %v2758 = vmul.f32 %v2757, %v2756
    %v2759 = vmul.f32 0.5, %v2758
    %v2760 = vsub.f32 1.5, %v2759
    %v2761 = vmul.f32 %v2756, %v2760
    %vm2762 = vweird.f32 %v2725
    %vm2763 = vweird.f32 %v2756
    %vm2764 = vmor %vm2762, %vm2763
    %v2765 = vsel %vm2764, %v2756, %v2761
    %2767 = vset.pattern.permute.xlu0 1
    %2768 = vperm.xlu0 %2767, %v2735
    %v2769 = vpop.permute.xlu0 %2768
    %2772 = vset.pattern.permute.xlu0 1
    %2773 = vperm.xlu0 %2772, %v2745
    %v2774 = vpop.permute.xlu0 %2773
    %2777 = vset.pattern.permute.xlu0 1
    %2778 = vperm.xlu0 %2777, %v2755
    %v2779 = vpop.permute.xlu0 %2778
    %2782 = vset.pattern.permute.xlu0 1
    %2783 = vperm.xlu0 %2782, %v2765
    %v2784 = vpop.permute.xlu0 %2783
    %v2786 = vmul.f32 %v2714, %v2769
    %v2787 = vmul.f32 %v2715, %v2769
    %v2788 = vmul.f32 %v2716, %v2774
    %v2789 = vmul.f32 %v2717, %v2774
    %v2790 = vmul.f32 %v2718, %v2779
    %v2791 = vmul.f32 %v2719, %v2779
    %v2792 = vmul.f32 %v2720, %v2784
    %v2793 = vmul.f32 %v2721, %v2784
    %2794 = vset.pattern.permute.xlu0 2
    %2795 = vperm.xlu0 %2794, %v2659
    %v2796 = vpop.permute.xlu0 %2795
    %2798 = vset.pattern.permute.xlu0 2
    %2799 = vperm.xlu0 %2798, %v2662
    %v2800 = vpop.permute.xlu0 %2799
    %2802 = vset.pattern.permute.xlu0 2
    %2803 = vperm.xlu0 %2802, %v2665
    %v2804 = vpop.permute.xlu0 %2803
    %2806 = vset.pattern.permute.xlu0 2
    %2807 = vperm.xlu0 %2806, %v2668
    %v2808 = vpop.permute.xlu0 %2807
    %v2810 = vsub.f32 %v2551, %v2796
    %v2811 = vsub.f32 %v2552, %v2796
    %v2812 = vsub.f32 %v2555, %v2800
    %v2813 = vsub.f32 %v2556, %v2800
    %v2814 = vsub.f32 %v2559, %v2804
    %v2815 = vsub.f32 %v2560, %v2804
    %v2816 = vsub.f32 %v2563, %v2808
    %v2817 = vsub.f32 %v2564, %v2808
    %2818 = vset.pattern.permute.xlu0 3
    %2819 = vperm.xlu0 %2818, %v2735
    %v2820 = vpop.permute.xlu0 %2819
    %2822 = vset.pattern.permute.xlu0 3
    %2823 = vperm.xlu0 %2822, %v2745
    %v2824 = vpop.permute.xlu0 %2823
    %2826 = vset.pattern.permute.xlu0 3
    %2827 = vperm.xlu0 %2826, %v2755
    %v2828 = vpop.permute.xlu0 %2827
    %2830 = vset.pattern.permute.xlu0 3
    %2831 = vperm.xlu0 %2830, %v2765
    %v2832 = vpop.permute.xlu0 %2831
    %v2834 = vmul.f32 %v2810, %v2820
    %v2835 = vmul.f32 %v2811, %v2820
    %v2836 = vmul.f32 %v2812, %v2824
    %v2837 = vmul.f32 %v2813, %v2824
    %v2838 = vmul.f32 %v2814, %v2828
    %v2839 = vmul.f32 %v2815, %v2828
    %v2840 = vmul.f32 %v2816, %v2832
    %v2841 = vmul.f32 %v2817, %v2832
    %v2842 = vld [vmem:[%s12] sm:$0xff]
    %v2843 = vld [vmem:[%s12 + $0x8] sm:$0xff]
    %v2844 = vld [vmem:[%s12 + $0x10] sm:$0xff]
    %v2845 = vld [vmem:[%s12 + $0x18] sm:$0xff]
    %2847 = vset.pattern.permute.xlu0 0
    %2848 = vperm.xlu0 %2847, %v2842
    %v2849 = vpop.permute.xlu0 %2848
    %2852 = vset.pattern.permute.xlu0 0
    %2853 = vperm.xlu0 %2852, %v2843
    %v2854 = vpop.permute.xlu0 %2853
    %2857 = vset.pattern.permute.xlu0 0
    %2858 = vperm.xlu0 %2857, %v2844
    %v2859 = vpop.permute.xlu0 %2858
    %2862 = vset.pattern.permute.xlu0 0
    %2863 = vperm.xlu0 %2862, %v2845
    %v2864 = vpop.permute.xlu0 %2863
    %v2866 = vmul.f32 %v2786, %v2849
    %v2867 = vmul.f32 %v2787, %v2849
    %v2868 = vmul.f32 %v2834, %v2849
    %v2869 = vmul.f32 %v2835, %v2849
    %v2870 = vmul.f32 %v2788, %v2854
    %v2871 = vmul.f32 %v2789, %v2854
    %v2872 = vmul.f32 %v2836, %v2854
    %v2873 = vmul.f32 %v2837, %v2854
    %v2874 = vmul.f32 %v2790, %v2859
    %v2875 = vmul.f32 %v2791, %v2859
    %v2876 = vmul.f32 %v2838, %v2859
    %v2877 = vmul.f32 %v2839, %v2859
    %v2878 = vmul.f32 %v2792, %v2864
    %v2879 = vmul.f32 %v2793, %v2864
    %v2880 = vmul.f32 %v2840, %v2864
    %v2881 = vmul.f32 %v2841, %v2864
    %v2882 = vld [vmem:[%s13] sm:$0xff]
    %v2883 = vld [vmem:[%s13 + $0x8] sm:$0xff]
    %v2884 = vld [vmem:[%s13 + $0x10] sm:$0xff]
    %v2885 = vld [vmem:[%s13 + $0x18] sm:$0xff]
    %2887 = vset.pattern.permute.xlu0 0
    %2888 = vperm.xlu0 %2887, %v2882
    %v2889 = vpop.permute.xlu0 %2888
    %2892 = vset.pattern.permute.xlu0 0
    %2893 = vperm.xlu0 %2892, %v2883
    %v2894 = vpop.permute.xlu0 %2893
    %2897 = vset.pattern.permute.xlu0 0
    %2898 = vperm.xlu0 %2897, %v2884
    %v2899 = vpop.permute.xlu0 %2898
    %2902 = vset.pattern.permute.xlu0 0
    %2903 = vperm.xlu0 %2902, %v2885
    %v2904 = vpop.permute.xlu0 %2903
    %v2906 = vadd.f32 %v2866, %v2889
    %v2907 = vadd.f32 %v2867, %v2889
    %v2908 = vadd.f32 %v2868, %v2889
    %v2909 = vadd.f32 %v2869, %v2889
    %v2910 = vadd.f32 %v2870, %v2894
    %v2911 = vadd.f32 %v2871, %v2894
    %v2912 = vadd.f32 %v2872, %v2894
    %v2913 = vadd.f32 %v2873, %v2894
    %v2914 = vadd.f32 %v2874, %v2899
    %v2915 = vadd.f32 %v2875, %v2899
    %v2916 = vadd.f32 %v2876, %v2899
    %v2917 = vadd.f32 %v2877, %v2899
    %v2918 = vadd.f32 %v2878, %v2904
    %v2919 = vadd.f32 %v2879, %v2904
    %v2920 = vadd.f32 %v2880, %v2904
    %v2921 = vadd.f32 %v2881, %v2904
    %v2922 = vxor.u32 %v2906, 2147483648
    %v2923 = vxor.u32 %v2907, 2147483648
    %v2924 = vxor.u32 %v2908, 2147483648
    %v2925 = vxor.u32 %v2909, 2147483648
    %v2926 = vxor.u32 %v2910, 2147483648
    %v2927 = vxor.u32 %v2911, 2147483648
    %v2928 = vxor.u32 %v2912, 2147483648
    %v2929 = vxor.u32 %v2913, 2147483648
    %v2930 = vxor.u32 %v2914, 2147483648
    %v2931 = vxor.u32 %v2915, 2147483648
    %v2932 = vxor.u32 %v2916, 2147483648
    %v2933 = vxor.u32 %v2917, 2147483648
    %v2934 = vxor.u32 %v2918, 2147483648
    %v2935 = vxor.u32 %v2919, 2147483648
    %v2936 = vxor.u32 %v2920, 2147483648
    %v2937 = vxor.u32 %v2921, 2147483648
    %v2938 = vmul.f32 %v2922, 1.442695
    %v2939 = vpow.pop %v2938
    %v2940 = vmul.f32 %v2923, 1.442695
    %v2941 = vpow.pop %v2940
    %v2942 = vmul.f32 %v2924, 1.442695
    %v2943 = vpow.pop %v2942
    %v2944 = vmul.f32 %v2925, 1.442695
    %v2945 = vpow.pop %v2944
    %v2946 = vmul.f32 %v2926, 1.442695
    %v2947 = vpow.pop %v2946
    %v2948 = vmul.f32 %v2927, 1.442695
    %v2949 = vpow.pop %v2948
    %v2950 = vmul.f32 %v2928, 1.442695
    %v2951 = vpow.pop %v2950
    %v2952 = vmul.f32 %v2929, 1.442695
    %v2953 = vpow.pop %v2952
    %v2954 = vmul.f32 %v2930, 1.442695
    %v2955 = vpow.pop %v2954
    %v2956 = vmul.f32 %v2931, 1.442695
    %v2957 = vpow.pop %v2956
    %v2958 = vmul.f32 %v2932, 1.442695
    %v2959 = vpow.pop %v2958
    %v2960 = vmul.f32 %v2933, 1.442695
    %v2961 = vpow.pop %v2960
    %v2962 = vmul.f32 %v2934, 1.442695
    %v2963 = vpow.pop %v2962
    %v2964 = vmul.f32 %v2935, 1.442695
    %v2965 = vpow.pop %v2964
    %v2966 = vmul.f32 %v2936, 1.442695
    %v2967 = vpow.pop %v2966
    %v2968 = vmul.f32 %v2937, 1.442695
    %v2969 = vpow.pop %v2968
    %v2970 = vadd.f32 %v2939, 1.0
    %v2971 = vadd.f32 %v2941, 1.0
    %v2972 = vadd.f32 %v2943, 1.0
    %v2973 = vadd.f32 %v2945, 1.0
    %v2974 = vadd.f32 %v2947, 1.0
    %v2975 = vadd.f32 %v2949, 1.0
    %v2976 = vadd.f32 %v2951, 1.0
    %v2977 = vadd.f32 %v2953, 1.0
    %v2978 = vadd.f32 %v2955, 1.0
    %v2979 = vadd.f32 %v2957, 1.0
    %v2980 = vadd.f32 %v2959, 1.0
    %v2981 = vadd.f32 %v2961, 1.0
    %v2982 = vadd.f32 %v2963, 1.0
    %v2983 = vadd.f32 %v2965, 1.0
    %v2984 = vadd.f32 %v2967, 1.0
    %v2985 = vadd.f32 %v2969, 1.0
    %v2986 = vrcp.pop %v2970
    %v2987 = vmul.f32 %v2970, %v2986
    %v2988 = vsub.f32 1.0, %v2987
    %v2989 = vmul.f32 %v2986, %v2988
    %v2990 = vadd.f32 %v2986, %v2989
    %vm2991 = vweird.f32 %v2970
    %vm2992 = vweird.f32 %v2986
    %vm2993 = vmor %vm2991, %vm2992
    %v2994 = vsel %vm2993, %v2986, %v2990
    %v2995 = vand.u32 2147483647, %v2970
    %vm2996 = vcmp.eq.f32.partialorder %v2995, 8.507059e+37
    %v2997 = vand.u32 %v2970, 2147483648
    %v2998 = vor.u32 1.1754944e-38, %v2997
    %v2999 = vsel %vm2996, %v2998, %v2994
    %v3000 = vmul.f32 1.0, %v2999
    %v3001 = vrcp.pop %v2971
    %v3002 = vmul.f32 %v2971, %v3001
    %v3003 = vsub.f32 1.0, %v3002
    %v3004 = vmul.f32 %v3001, %v3003
    %v3005 = vadd.f32 %v3001, %v3004
    %vm3006 = vweird.f32 %v2971
    %vm3007 = vweird.f32 %v3001
    %vm3008 = vmor %vm3006, %vm3007
    %v3009 = vsel %vm3008, %v3001, %v3005
    %v3010 = vand.u32 2147483647, %v2971
    %vm3011 = vcmp.eq.f32.partialorder %v3010, 8.507059e+37
    %v3012 = vand.u32 %v2971, 2147483648
    %v3013 = vor.u32 1.1754944e-38, %v3012
    %v3014 = vsel %vm3011, %v3013, %v3009
    %v3015 = vmul.f32 1.0, %v3014
    %v3016 = vrcp.pop %v2972
    %v3017 = vmul.f32 %v2972, %v3016
    %v3018 = vsub.f32 1.0, %v3017
    %v3019 = vmul.f32 %v3016, %v3018
    %v3020 = vadd.f32 %v3016, %v3019
    %vm3021 = vweird.f32 %v2972
    %vm3022 = vweird.f32 %v3016
    %vm3023 = vmor %vm3021, %vm3022
    %v3024 = vsel %vm3023, %v3016, %v3020
    %v3025 = vand.u32 2147483647, %v2972
    %vm3026 = vcmp.eq.f32.partialorder %v3025, 8.507059e+37
    %v3027 = vand.u32 %v2972, 2147483648
    %v3028 = vor.u32 1.1754944e-38, %v3027
    %v3029 = vsel %vm3026, %v3028, %v3024
    %v3030 = vmul.f32 1.0, %v3029
    %v3031 = vrcp.pop %v2973
    %v3032 = vmul.f32 %v2973, %v3031
    %v3033 = vsub.f32 1.0, %v3032
    %v3034 = vmul.f32 %v3031, %v3033
    %v3035 = vadd.f32 %v3031, %v3034
    %vm3036 = vweird.f32 %v2973
    %vm3037 = vweird.f32 %v3031
    %vm3038 = vmor %vm3036, %vm3037
    %v3039 = vsel %vm3038, %v3031, %v3035
    %v3040 = vand.u32 2147483647, %v2973
    %vm3041 = vcmp.eq.f32.partialorder %v3040, 8.507059e+37
    %v3042 = vand.u32 %v2973, 2147483648
    %v3043 = vor.u32 1.1754944e-38, %v3042
    %v3044 = vsel %vm3041, %v3043, %v3039
    %v3045 = vmul.f32 1.0, %v3044
    %v3046 = vrcp.pop %v2974
    %v3047 = vmul.f32 %v2974, %v3046
    %v3048 = vsub.f32 1.0, %v3047
    %v3049 = vmul.f32 %v3046, %v3048
    %v3050 = vadd.f32 %v3046, %v3049
    %vm3051 = vweird.f32 %v2974
    %vm3052 = vweird.f32 %v3046
    %vm3053 = vmor %vm3051, %vm3052
    %v3054 = vsel %vm3053, %v3046, %v3050
    %v3055 = vand.u32 2147483647, %v2974
    %vm3056 = vcmp.eq.f32.partialorder %v3055, 8.507059e+37
    %v3057 = vand.u32 %v2974, 2147483648
    %v3058 = vor.u32 1.1754944e-38, %v3057
    %v3059 = vsel %vm3056, %v3058, %v3054
    %v3060 = vmul.f32 1.0, %v3059
    %v3061 = vrcp.pop %v2975
    %v3062 = vmul.f32 %v2975, %v3061
    %v3063 = vsub.f32 1.0, %v3062
    %v3064 = vmul.f32 %v3061, %v3063
    %v3065 = vadd.f32 %v3061, %v3064
    %vm3066 = vweird.f32 %v2975
    %vm3067 = vweird.f32 %v3061
    %vm3068 = vmor %vm3066, %vm3067
    %v3069 = vsel %vm3068, %v3061, %v3065
    %v3070 = vand.u32 2147483647, %v2975
    %vm3071 = vcmp.eq.f32.partialorder %v3070, 8.507059e+37
    %v3072 = vand.u32 %v2975, 2147483648
    %v3073 = vor.u32 1.1754944e-38, %v3072
    %v3074 = vsel %vm3071, %v3073, %v3069
    %v3075 = vmul.f32 1.0, %v3074
    %v3076 = vrcp.pop %v2976
    %v3077 = vmul.f32 %v2976, %v3076
    %v3078 = vsub.f32 1.0, %v3077
    %v3079 = vmul.f32 %v3076, %v3078
    %v3080 = vadd.f32 %v3076, %v3079
    %vm3081 = vweird.f32 %v2976
    %vm3082 = vweird.f32 %v3076
    %vm3083 = vmor %vm3081, %vm3082
    %v3084 = vsel %vm3083, %v3076, %v3080
    %v3085 = vand.u32 2147483647, %v2976
    %vm3086 = vcmp.eq.f32.partialorder %v3085, 8.507059e+37
    %v3087 = vand.u32 %v2976, 2147483648
    %v3088 = vor.u32 1.1754944e-38, %v3087
    %v3089 = vsel %vm3086, %v3088, %v3084
    %v3090 = vmul.f32 1.0, %v3089
    %v3091 = vrcp.pop %v2977
    %v3092 = vmul.f32 %v2977, %v3091
    %v3093 = vsub.f32 1.0, %v3092
    %v3094 = vmul.f32 %v3091, %v3093
    %v3095 = vadd.f32 %v3091, %v3094
    %vm3096 = vweird.f32 %v2977
    %vm3097 = vweird.f32 %v3091
    %vm3098 = vmor %vm3096, %vm3097
    %v3099 = vsel %vm3098, %v3091, %v3095
    %v3100 = vand.u32 2147483647, %v2977
    %vm3101 = vcmp.eq.f32.partialorder %v3100, 8.507059e+37
    %v3102 = vand.u32 %v2977, 2147483648
    %v3103 = vor.u32 1.1754944e-38, %v3102
    %v3104 = vsel %vm3101, %v3103, %v3099
    %v3105 = vmul.f32 1.0, %v3104
    %v3106 = vrcp.pop %v2978
    %v3107 = vmul.f32 %v2978, %v3106
    %v3108 = vsub.f32 1.0, %v3107
    %v3109 = vmul.f32 %v3106, %v3108
    %v3110 = vadd.f32 %v3106, %v3109
    %vm3111 = vweird.f32 %v2978
    %vm3112 = vweird.f32 %v3106
    %vm3113 = vmor %vm3111, %vm3112
    %v3114 = vsel %vm3113, %v3106, %v3110
    %v3115 = vand.u32 2147483647, %v2978
    %vm3116 = vcmp.eq.f32.partialorder %v3115, 8.507059e+37
    %v3117 = vand.u32 %v2978, 2147483648
    %v3118 = vor.u32 1.1754944e-38, %v3117
    %v3119 = vsel %vm3116, %v3118, %v3114
    %v3120 = vmul.f32 1.0, %v3119
    %v3121 = vrcp.pop %v2979
    %v3122 = vmul.f32 %v2979, %v3121
    %v3123 = vsub.f32 1.0, %v3122
    %v3124 = vmul.f32 %v3121, %v3123
    %v3125 = vadd.f32 %v3121, %v3124
    %vm3126 = vweird.f32 %v2979
    %vm3127 = vweird.f32 %v3121
    %vm3128 = vmor %vm3126, %vm3127
    %v3129 = vsel %vm3128, %v3121, %v3125
    %v3130 = vand.u32 2147483647, %v2979
    %vm3131 = vcmp.eq.f32.partialorder %v3130, 8.507059e+37
    %v3132 = vand.u32 %v2979, 2147483648
    %v3133 = vor.u32 1.1754944e-38, %v3132
    %v3134 = vsel %vm3131, %v3133, %v3129
    %v3135 = vmul.f32 1.0, %v3134
    %v3136 = vrcp.pop %v2980
    %v3137 = vmul.f32 %v2980, %v3136
    %v3138 = vsub.f32 1.0, %v3137
    %v3139 = vmul.f32 %v3136, %v3138
    %v3140 = vadd.f32 %v3136, %v3139
    %vm3141 = vweird.f32 %v2980
    %vm3142 = vweird.f32 %v3136
    %vm3143 = vmor %vm3141, %vm3142
    %v3144 = vsel %vm3143, %v3136, %v3140
    %v3145 = vand.u32 2147483647, %v2980
    %vm3146 = vcmp.eq.f32.partialorder %v3145, 8.507059e+37
    %v3147 = vand.u32 %v2980, 2147483648
    %v3148 = vor.u32 1.1754944e-38, %v3147
    %v3149 = vsel %vm3146, %v3148, %v3144
    %v3150 = vmul.f32 1.0, %v3149
    %v3151 = vrcp.pop %v2981
    %v3152 = vmul.f32 %v2981, %v3151
    %v3153 = vsub.f32 1.0, %v3152
    %v3154 = vmul.f32 %v3151, %v3153
    %v3155 = vadd.f32 %v3151, %v3154
    %vm3156 = vweird.f32 %v2981
    %vm3157 = vweird.f32 %v3151
    %vm3158 = vmor %vm3156, %vm3157
    %v3159 = vsel %vm3158, %v3151, %v3155
    %v3160 = vand.u32 2147483647, %v2981
    %vm3161 = vcmp.eq.f32.partialorder %v3160, 8.507059e+37
    %v3162 = vand.u32 %v2981, 2147483648
    %v3163 = vor.u32 1.1754944e-38, %v3162
    %v3164 = vsel %vm3161, %v3163, %v3159
    %v3165 = vmul.f32 1.0, %v3164
    %v3166 = vrcp.pop %v2982
    %v3167 = vmul.f32 %v2982, %v3166
    %v3168 = vsub.f32 1.0, %v3167
    %v3169 = vmul.f32 %v3166, %v3168
    %v3170 = vadd.f32 %v3166, %v3169
    %vm3171 = vweird.f32 %v2982
    %vm3172 = vweird.f32 %v3166
    %vm3173 = vmor %vm3171, %vm3172
    %v3174 = vsel %vm3173, %v3166, %v3170
    %v3175 = vand.u32 2147483647, %v2982
    %vm3176 = vcmp.eq.f32.partialorder %v3175, 8.507059e+37
    %v3177 = vand.u32 %v2982, 2147483648
    %v3178 = vor.u32 1.1754944e-38, %v3177
    %v3179 = vsel %vm3176, %v3178, %v3174
    %v3180 = vmul.f32 1.0, %v3179
    %v3181 = vrcp.pop %v2983
    %v3182 = vmul.f32 %v2983, %v3181
    %v3183 = vsub.f32 1.0, %v3182
    %v3184 = vmul.f32 %v3181, %v3183
    %v3185 = vadd.f32 %v3181, %v3184
    %vm3186 = vweird.f32 %v2983
    %vm3187 = vweird.f32 %v3181
    %vm3188 = vmor %vm3186, %vm3187
    %v3189 = vsel %vm3188, %v3181, %v3185
    %v3190 = vand.u32 2147483647, %v2983
    %vm3191 = vcmp.eq.f32.partialorder %v3190, 8.507059e+37
    %v3192 = vand.u32 %v2983, 2147483648
    %v3193 = vor.u32 1.1754944e-38, %v3192
    %v3194 = vsel %vm3191, %v3193, %v3189
    %v3195 = vmul.f32 1.0, %v3194
    %v3196 = vrcp.pop %v2984
    %v3197 = vmul.f32 %v2984, %v3196
    %v3198 = vsub.f32 1.0, %v3197
    %v3199 = vmul.f32 %v3196, %v3198
    %v3200 = vadd.f32 %v3196, %v3199
    %vm3201 = vweird.f32 %v2984
    %vm3202 = vweird.f32 %v3196
    %vm3203 = vmor %vm3201, %vm3202
    %v3204 = vsel %vm3203, %v3196, %v3200
    %v3205 = vand.u32 2147483647, %v2984
    %vm3206 = vcmp.eq.f32.partialorder %v3205, 8.507059e+37
    %v3207 = vand.u32 %v2984, 2147483648
    %v3208 = vor.u32 1.1754944e-38, %v3207
    %v3209 = vsel %vm3206, %v3208, %v3204
    %v3210 = vmul.f32 1.0, %v3209
    %v3211 = vrcp.pop %v2985
    %v3212 = vmul.f32 %v2985, %v3211
    %v3213 = vsub.f32 1.0, %v3212
    %v3214 = vmul.f32 %v3211, %v3213
    %v3215 = vadd.f32 %v3211, %v3214
    %vm3216 = vweird.f32 %v2985
    %vm3217 = vweird.f32 %v3211
    %vm3218 = vmor %vm3216, %vm3217
    %v3219 = vsel %vm3218, %v3211, %v3215
    %v3220 = vand.u32 2147483647, %v2985
    %vm3221 = vcmp.eq.f32.partialorder %v3220, 8.507059e+37
    %v3222 = vand.u32 %v2985, 2147483648
    %v3223 = vor.u32 1.1754944e-38, %v3222
    %v3224 = vsel %vm3221, %v3223, %v3219
    %v3225 = vmul.f32 1.0, %v3224
    %v3226 = vmul.f32 %v2906, %v3000
    %v3227 = vmul.f32 %v2907, %v3015
    %v3228 = vmul.f32 %v2908, %v3030
    %v3229 = vmul.f32 %v2909, %v3045
    %v3230 = vmul.f32 %v2910, %v3060
    %v3231 = vmul.f32 %v2911, %v3075
    %v3232 = vmul.f32 %v2912, %v3090
    %v3233 = vmul.f32 %v2913, %v3105
    %v3234 = vmul.f32 %v2914, %v3120
    %v3235 = vmul.f32 %v2915, %v3135
    %v3236 = vmul.f32 %v2916, %v3150
    %v3237 = vmul.f32 %v2917, %v3165
    %v3238 = vmul.f32 %v2918, %v3180
    %v3239 = vmul.f32 %v2919, %v3195
    %v3240 = vmul.f32 %v2920, %v3210
    %v3241 = vmul.f32 %v2921, %v3225
    %3242 = vrot.lane.b32.xlu0 %v3226, 17
    %v3243 = vpop.permute.xlu0 %3242
    %3244 = vrot.lane.b32.xlu0 %v3230, 17
    %v3245 = vpop.permute.xlu0 %3244
    %3246 = vrot.lane.b32.xlu0 %v3234, 17
    %v3247 = vpop.permute.xlu0 %3246
    %3248 = vrot.lane.b32.xlu0 %v3238, 17
    %v3249 = vpop.permute.xlu0 %3248
    %3250 = vrot.lane.b32.xlu0 %v3227, 17
    %v3251 = vpop.permute.xlu0 %3250
    %3252 = vrot.lane.b32.xlu0 %v3231, 17
    %v3253 = vpop.permute.xlu0 %3252
    %3254 = vrot.lane.b32.xlu0 %v3235, 17
    %v3255 = vpop.permute.xlu0 %3254
    %3256 = vrot.lane.b32.xlu0 %v3239, 17
    %v3257 = vpop.permute.xlu0 %3256
    %3258 = vrot.lane.b32.xlu0 %v3228, 17
    %v3259 = vpop.permute.xlu0 %3258
    %3260 = vrot.lane.b32.xlu0 %v3232, 17
    %v3261 = vpop.permute.xlu0 %3260
    %3262 = vrot.lane.b32.xlu0 %v3236, 17
    %v3263 = vpop.permute.xlu0 %3262
    %3264 = vrot.lane.b32.xlu0 %v3240, 17
    %v3265 = vpop.permute.xlu0 %3264
    %3266 = vrot.lane.b32.xlu0 %v3229, 17
    %v3267 = vpop.permute.xlu0 %3266
    %3268 = vrot.lane.b32.xlu0 %v3233, 17
    %v3269 = vpop.permute.xlu0 %3268
    %3270 = vrot.lane.b32.xlu0 %v3237, 17
    %v3271 = vpop.permute.xlu0 %3270
    %3272 = vrot.lane.b32.xlu0 %v3241, 17
    %v3273 = vpop.permute.xlu0 %3272
    %v3274 = vsel %vm101, %v3259, %v3267
    %v3275 = vsel %vm101, %v3261, %v3269
    %v3276 = vsel %vm101, %v3263, %v3271
    %v3277 = vsel %vm101, %v3265, %v3273
    %v3278 = vsel %vm101, %v3251, %v3259
    %v3279 = vsel %vm101, %v3253, %v3261
    %v3280 = vsel %vm101, %v3255, %v3263
    %v3281 = vsel %vm101, %v3257, %v3265
    %v3282 = vsel %vm101, %v3243, %v3251
    %v3283 = vsel %vm101, %v3245, %v3253
    %v3284 = vsel %vm101, %v3247, %v3255
    %v3285 = vsel %vm101, %v3249, %v3257
    %v3286 = vsel %vm101, %v3267, %v3243
    %v3287 = vsel %vm101, %v3269, %v3245
    %v3288 = vsel %vm101, %v3271, %v3247
    %v3289 = vsel %vm101, %v3273, %v3249
    %v3290 = vmul.f32 %v3286, %v106
    %v3291 = vmul.f32 %v3282, %v107
    %v3292 = vmul.f32 %v3278, %v108
    %v3293 = vmul.f32 %v3274, %v109
    %v3294 = vmul.f32 %v3287, %v106
    %v3295 = vmul.f32 %v3283, %v107
    %v3296 = vmul.f32 %v3279, %v108
    %v3297 = vmul.f32 %v3275, %v109
    %v3298 = vmul.f32 %v3288, %v106
    %v3299 = vmul.f32 %v3284, %v107
    %v3300 = vmul.f32 %v3280, %v108
    %v3301 = vmul.f32 %v3276, %v109
    %v3302 = vmul.f32 %v3289, %v106
    %v3303 = vmul.f32 %v3285, %v107
    %v3304 = vmul.f32 %v3281, %v108
    %v3305 = vmul.f32 %v3277, %v109
    %v3306 = vpack.c.bf16 %v3291, %v3290
    %v3307 = vpack.c.bf16 %v3293, %v3292
    %v3308 = vpack.c.bf16 %v3295, %v3294
    %v3309 = vpack.c.bf16 %v3297, %v3296
    %v3310 = vpack.c.bf16 %v3299, %v3298
    %v3311 = vpack.c.bf16 %v3301, %v3300
    %v3312 = vpack.c.bf16 %v3303, %v3302
    %v3313 = vpack.c.bf16 %v3305, %v3304
    %3314 = vrot.lane.b32.xlu0 %v3226, 16
    %v3315 = vpop.permute.xlu0 %3314
    %3316 = vrot.lane.b32.xlu0 %v3230, 16
    %v3317 = vpop.permute.xlu0 %3316
    %3318 = vrot.lane.b32.xlu0 %v3234, 16
    %v3319 = vpop.permute.xlu0 %3318
    %3320 = vrot.lane.b32.xlu0 %v3238, 16
    %v3321 = vpop.permute.xlu0 %3320
    %3322 = vrot.lane.b32.xlu0 %v3227, 16
    %v3323 = vpop.permute.xlu0 %3322
    %3324 = vrot.lane.b32.xlu0 %v3231, 16
    %v3325 = vpop.permute.xlu0 %3324
    %3326 = vrot.lane.b32.xlu0 %v3235, 16
    %v3327 = vpop.permute.xlu0 %3326
    %3328 = vrot.lane.b32.xlu0 %v3239, 16
    %v3329 = vpop.permute.xlu0 %3328
    %3330 = vrot.lane.b32.xlu0 %v3228, 16
    %v3331 = vpop.permute.xlu0 %3330
    %3332 = vrot.lane.b32.xlu0 %v3232, 16
    %v3333 = vpop.permute.xlu0 %3332
    %3334 = vrot.lane.b32.xlu0 %v3236, 16
    %v3335 = vpop.permute.xlu0 %3334
    %3336 = vrot.lane.b32.xlu0 %v3240, 16
    %v3337 = vpop.permute.xlu0 %3336
    %3338 = vrot.lane.b32.xlu0 %v3229, 16
    %v3339 = vpop.permute.xlu0 %3338
    %3340 = vrot.lane.b32.xlu0 %v3233, 16
    %v3341 = vpop.permute.xlu0 %3340
    %3342 = vrot.lane.b32.xlu0 %v3237, 16
    %v3343 = vpop.permute.xlu0 %3342
    %3344 = vrot.lane.b32.xlu0 %v3241, 16
    %v3345 = vpop.permute.xlu0 %3344
    %v3346 = vsel %vm124, %v3331, %v3339
    %v3347 = vsel %vm124, %v3333, %v3341
    %v3348 = vsel %vm124, %v3335, %v3343
    %v3349 = vsel %vm124, %v3337, %v3345
    %v3350 = vsel %vm124, %v3323, %v3331
    %v3351 = vsel %vm124, %v3325, %v3333
    %v3352 = vsel %vm124, %v3327, %v3335
    %v3353 = vsel %vm124, %v3329, %v3337
    %v3354 = vsel %vm124, %v3315, %v3323
    %v3355 = vsel %vm124, %v3317, %v3325
    %v3356 = vsel %vm124, %v3319, %v3327
    %v3357 = vsel %vm124, %v3321, %v3329
    %v3358 = vsel %vm124, %v3339, %v3315
    %v3359 = vsel %vm124, %v3341, %v3317
    %v3360 = vsel %vm124, %v3343, %v3319
    %v3361 = vsel %vm124, %v3345, %v3321
    %v3362 = vmul.f32 %v3358, %v129
    %v3363 = vmul.f32 %v3354, %v130
    %v3364 = vmul.f32 %v3350, %v131
    %v3365 = vmul.f32 %v3346, %v132
    %v3366 = vmul.f32 %v3359, %v129
    %v3367 = vmul.f32 %v3355, %v130
    %v3368 = vmul.f32 %v3351, %v131
    %v3369 = vmul.f32 %v3347, %v132
    %v3370 = vmul.f32 %v3360, %v129
    %v3371 = vmul.f32 %v3356, %v130
    %v3372 = vmul.f32 %v3352, %v131
    %v3373 = vmul.f32 %v3348, %v132
    %v3374 = vmul.f32 %v3361, %v129
    %v3375 = vmul.f32 %v3357, %v130
    %v3376 = vmul.f32 %v3353, %v131
    %v3377 = vmul.f32 %v3349, %v132
    %v3378 = vpack.c.bf16 %v3363, %v3362
    %v3379 = vpack.c.bf16 %v3365, %v3364
    %v3380 = vpack.c.bf16 %v3367, %v3366
    %v3381 = vpack.c.bf16 %v3369, %v3368
    %v3382 = vpack.c.bf16 %v3371, %v3370
    %v3383 = vpack.c.bf16 %v3373, %v3372
    %v3384 = vpack.c.bf16 %v3375, %v3374
    %v3385 = vpack.c.bf16 %v3377, %v3376
    %3386 = vrot.lane.b32.xlu0 %v3226, 15
    %v3387 = vpop.permute.xlu0 %3386
    %3388 = vrot.lane.b32.xlu0 %v3230, 15
    %v3389 = vpop.permute.xlu0 %3388
    %3390 = vrot.lane.b32.xlu0 %v3234, 15
    %v3391 = vpop.permute.xlu0 %3390
    %3392 = vrot.lane.b32.xlu0 %v3238, 15
    %v3393 = vpop.permute.xlu0 %3392
    %3394 = vrot.lane.b32.xlu0 %v3227, 15
    %v3395 = vpop.permute.xlu0 %3394
    %3396 = vrot.lane.b32.xlu0 %v3231, 15
    %v3397 = vpop.permute.xlu0 %3396
    %3398 = vrot.lane.b32.xlu0 %v3235, 15
    %v3399 = vpop.permute.xlu0 %3398
    %3400 = vrot.lane.b32.xlu0 %v3239, 15
    %v3401 = vpop.permute.xlu0 %3400
    %3402 = vrot.lane.b32.xlu0 %v3228, 15
    %v3403 = vpop.permute.xlu0 %3402
    %3404 = vrot.lane.b32.xlu0 %v3232, 15
    %v3405 = vpop.permute.xlu0 %3404
    %3406 = vrot.lane.b32.xlu0 %v3236, 15
    %v3407 = vpop.permute.xlu0 %3406
    %3408 = vrot.lane.b32.xlu0 %v3240, 15
    %v3409 = vpop.permute.xlu0 %3408
    %3410 = vrot.lane.b32.xlu0 %v3229, 15
    %v3411 = vpop.permute.xlu0 %3410
    %3412 = vrot.lane.b32.xlu0 %v3233, 15
    %v3413 = vpop.permute.xlu0 %3412
    %3414 = vrot.lane.b32.xlu0 %v3237, 15
    %v3415 = vpop.permute.xlu0 %3414
    %3416 = vrot.lane.b32.xlu0 %v3241, 15
    %v3417 = vpop.permute.xlu0 %3416
    %v3418 = vsel %vm147, %v3403, %v3411
    %v3419 = vsel %vm147, %v3405, %v3413
    %v3420 = vsel %vm147, %v3407, %v3415
    %v3421 = vsel %vm147, %v3409, %v3417
    %v3422 = vsel %vm147, %v3395, %v3403
    %v3423 = vsel %vm147, %v3397, %v3405
    %v3424 = vsel %vm147, %v3399, %v3407
    %v3425 = vsel %vm147, %v3401, %v3409
    %v3426 = vsel %vm147, %v3387, %v3395
    %v3427 = vsel %vm147, %v3389, %v3397
    %v3428 = vsel %vm147, %v3391, %v3399
    %v3429 = vsel %vm147, %v3393, %v3401
    %v3430 = vsel %vm147, %v3411, %v3387
    %v3431 = vsel %vm147, %v3413, %v3389
    %v3432 = vsel %vm147, %v3415, %v3391
    %v3433 = vsel %vm147, %v3417, %v3393
    %v3434 = vmul.f32 %v3430, %v152
    %v3435 = vmul.f32 %v3426, %v153
    %v3436 = vmul.f32 %v3422, %v154
    %v3437 = vmul.f32 %v3418, %v155
    %v3438 = vmul.f32 %v3431, %v152
    %v3439 = vmul.f32 %v3427, %v153
    %v3440 = vmul.f32 %v3423, %v154
    %v3441 = vmul.f32 %v3419, %v155
    %v3442 = vmul.f32 %v3432, %v152
    %v3443 = vmul.f32 %v3428, %v153
    %v3444 = vmul.f32 %v3424, %v154
    %v3445 = vmul.f32 %v3420, %v155
    %v3446 = vmul.f32 %v3433, %v152
    %v3447 = vmul.f32 %v3429, %v153
    %v3448 = vmul.f32 %v3425, %v154
    %v3449 = vmul.f32 %v3421, %v155
    %v3450 = vpack.c.bf16 %v3435, %v3434
    %v3451 = vpack.c.bf16 %v3437, %v3436
    %v3452 = vpack.c.bf16 %v3439, %v3438
    %v3453 = vpack.c.bf16 %v3441, %v3440
    %v3454 = vpack.c.bf16 %v3443, %v3442
    %v3455 = vpack.c.bf16 %v3445, %v3444
    %v3456 = vpack.c.bf16 %v3447, %v3446
    %v3457 = vpack.c.bf16 %v3449, %v3448
    %3458 = vrot.lane.b32.xlu0 %v3226, 1
    %v3459 = vpop.permute.xlu0 %3458
    %3460 = vrot.lane.b32.xlu0 %v3230, 1
    %v3461 = vpop.permute.xlu0 %3460
    %3462 = vrot.lane.b32.xlu0 %v3234, 1
    %v3463 = vpop.permute.xlu0 %3462
    %3464 = vrot.lane.b32.xlu0 %v3238, 1
    %v3465 = vpop.permute.xlu0 %3464
    %3466 = vrot.lane.b32.xlu0 %v3227, 1
    %v3467 = vpop.permute.xlu0 %3466
    %3468 = vrot.lane.b32.xlu0 %v3231, 1
    %v3469 = vpop.permute.xlu0 %3468
    %3470 = vrot.lane.b32.xlu0 %v3235, 1
    %v3471 = vpop.permute.xlu0 %3470
    %3472 = vrot.lane.b32.xlu0 %v3239, 1
    %v3473 = vpop.permute.xlu0 %3472
    %3474 = vrot.lane.b32.xlu0 %v3228, 1
    %v3475 = vpop.permute.xlu0 %3474
    %3476 = vrot.lane.b32.xlu0 %v3232, 1
    %v3477 = vpop.permute.xlu0 %3476
    %3478 = vrot.lane.b32.xlu0 %v3236, 1
    %v3479 = vpop.permute.xlu0 %3478
    %3480 = vrot.lane.b32.xlu0 %v3240, 1
    %v3481 = vpop.permute.xlu0 %3480
    %3482 = vrot.lane.b32.xlu0 %v3229, 1
    %v3483 = vpop.permute.xlu0 %3482
    %3484 = vrot.lane.b32.xlu0 %v3233, 1
    %v3485 = vpop.permute.xlu0 %3484
    %3486 = vrot.lane.b32.xlu0 %v3237, 1
    %v3487 = vpop.permute.xlu0 %3486
    %3488 = vrot.lane.b32.xlu0 %v3241, 1
    %v3489 = vpop.permute.xlu0 %3488
    %v3490 = vsel %vm170, %v3475, %v3483
    %v3491 = vsel %vm170, %v3477, %v3485
    %v3492 = vsel %vm170, %v3479, %v3487
    %v3493 = vsel %vm170, %v3481, %v3489
    %v3494 = vsel %vm170, %v3467, %v3475
    %v3495 = vsel %vm170, %v3469, %v3477
    %v3496 = vsel %vm170, %v3471, %v3479
    %v3497 = vsel %vm170, %v3473, %v3481
    %v3498 = vsel %vm170, %v3459, %v3467
    %v3499 = vsel %vm170, %v3461, %v3469
    %v3500 = vsel %vm170, %v3463, %v3471
    %v3501 = vsel %vm170, %v3465, %v3473
    %v3502 = vsel %vm170, %v3483, %v3459
    %v3503 = vsel %vm170, %v3485, %v3461
    %v3504 = vsel %vm170, %v3487, %v3463
    %v3505 = vsel %vm170, %v3489, %v3465
    %v3506 = vmul.f32 %v3502, %v175
    %v3507 = vmul.f32 %v3498, %v176
    %v3508 = vmul.f32 %v3494, %v177
    %v3509 = vmul.f32 %v3490, %v178
    %v3510 = vmul.f32 %v3503, %v175
    %v3511 = vmul.f32 %v3499, %v176
    %v3512 = vmul.f32 %v3495, %v177
    %v3513 = vmul.f32 %v3491, %v178
    %v3514 = vmul.f32 %v3504, %v175
    %v3515 = vmul.f32 %v3500, %v176
    %v3516 = vmul.f32 %v3496, %v177
    %v3517 = vmul.f32 %v3492, %v178
    %v3518 = vmul.f32 %v3505, %v175
    %v3519 = vmul.f32 %v3501, %v176
    %v3520 = vmul.f32 %v3497, %v177
    %v3521 = vmul.f32 %v3493, %v178
    %v3522 = vpack.c.bf16 %v3507, %v3506
    %v3523 = vpack.c.bf16 %v3509, %v3508
    %v3524 = vpack.c.bf16 %v3511, %v3510
    %v3525 = vpack.c.bf16 %v3513, %v3512
    %v3526 = vpack.c.bf16 %v3515, %v3514
    %v3527 = vpack.c.bf16 %v3517, %v3516
    %v3528 = vpack.c.bf16 %v3519, %v3518
    %v3529 = vpack.c.bf16 %v3521, %v3520
    %v3530 = vpack.c.bf16 %v3227, %v3226
    %v3531 = vpack.c.bf16 %v3229, %v3228
    %v3532 = vpack.c.bf16 %v3231, %v3230
    %v3533 = vpack.c.bf16 %v3233, %v3232
    %v3534 = vpack.c.bf16 %v3235, %v3234
    %v3535 = vpack.c.bf16 %v3237, %v3236
    %v3536 = vpack.c.bf16 %v3239, %v3238
    %v3537 = vpack.c.bf16 %v3241, %v3240
    %3538 = vrot.lane.b32.xlu0 %v3226, 127
    %v3539 = vpop.permute.xlu0 %3538
    %3540 = vrot.lane.b32.xlu0 %v3230, 127
    %v3541 = vpop.permute.xlu0 %3540
    %3542 = vrot.lane.b32.xlu0 %v3234, 127
    %v3543 = vpop.permute.xlu0 %3542
    %3544 = vrot.lane.b32.xlu0 %v3238, 127
    %v3545 = vpop.permute.xlu0 %3544
    %3546 = vrot.lane.b32.xlu0 %v3227, 127
    %v3547 = vpop.permute.xlu0 %3546
    %3548 = vrot.lane.b32.xlu0 %v3231, 127
    %v3549 = vpop.permute.xlu0 %3548
    %3550 = vrot.lane.b32.xlu0 %v3235, 127
    %v3551 = vpop.permute.xlu0 %3550
    %3552 = vrot.lane.b32.xlu0 %v3239, 127
    %v3553 = vpop.permute.xlu0 %3552
    %3554 = vrot.lane.b32.xlu0 %v3228, 127
    %v3555 = vpop.permute.xlu0 %3554
    %3556 = vrot.lane.b32.xlu0 %v3232, 127
    %v3557 = vpop.permute.xlu0 %3556
    %3558 = vrot.lane.b32.xlu0 %v3236, 127
    %v3559 = vpop.permute.xlu0 %3558
    %3560 = vrot.lane.b32.xlu0 %v3240, 127
    %v3561 = vpop.permute.xlu0 %3560
    %3562 = vrot.lane.b32.xlu0 %v3229, 127
    %v3563 = vpop.permute.xlu0 %3562
    %3564 = vrot.lane.b32.xlu0 %v3233, 127
    %v3565 = vpop.permute.xlu0 %3564
    %3566 = vrot.lane.b32.xlu0 %v3237, 127
    %v3567 = vpop.permute.xlu0 %3566
    %3568 = vrot.lane.b32.xlu0 %v3241, 127
    %v3569 = vpop.permute.xlu0 %3568
    %v3570 = vsel %vm195, %v3555, %v3563
    %v3571 = vsel %vm195, %v3557, %v3565
    %v3572 = vsel %vm195, %v3559, %v3567
    %v3573 = vsel %vm195, %v3561, %v3569
    %v3574 = vsel %vm195, %v3547, %v3555
    %v3575 = vsel %vm195, %v3549, %v3557
    %v3576 = vsel %vm195, %v3551, %v3559
    %v3577 = vsel %vm195, %v3553, %v3561
    %v3578 = vsel %vm195, %v3539, %v3547
    %v3579 = vsel %vm195, %v3541, %v3549
    %v3580 = vsel %vm195, %v3543, %v3551
    %v3581 = vsel %vm195, %v3545, %v3553
    %v3582 = vsel %vm195, %v3563, %v3539
    %v3583 = vsel %vm195, %v3565, %v3541
    %v3584 = vsel %vm195, %v3567, %v3543
    %v3585 = vsel %vm195, %v3569, %v3545
    %v3586 = vmul.f32 %v3578, %v200
    %v3587 = vmul.f32 %v3574, %v201
    %v3588 = vmul.f32 %v3570, %v202
    %v3589 = vmul.f32 %v3582, %v203
    %v3590 = vmul.f32 %v3579, %v200
    %v3591 = vmul.f32 %v3575, %v201
    %v3592 = vmul.f32 %v3571, %v202
    %v3593 = vmul.f32 %v3583, %v203
    %v3594 = vmul.f32 %v3580, %v200
    %v3595 = vmul.f32 %v3576, %v201
    %v3596 = vmul.f32 %v3572, %v202
    %v3597 = vmul.f32 %v3584, %v203
    %v3598 = vmul.f32 %v3581, %v200
    %v3599 = vmul.f32 %v3577, %v201
    %v3600 = vmul.f32 %v3573, %v202
    %v3601 = vmul.f32 %v3585, %v203
    %v3602 = vpack.c.bf16 %v3587, %v3586
    %v3603 = vpack.c.bf16 %v3589, %v3588
    %v3604 = vpack.c.bf16 %v3591, %v3590
    %v3605 = vpack.c.bf16 %v3593, %v3592
    %v3606 = vpack.c.bf16 %v3595, %v3594
    %v3607 = vpack.c.bf16 %v3597, %v3596
    %v3608 = vpack.c.bf16 %v3599, %v3598
    %v3609 = vpack.c.bf16 %v3601, %v3600
    %3610 = vrot.lane.b32.xlu0 %v3226, 113
    %v3611 = vpop.permute.xlu0 %3610
    %3612 = vrot.lane.b32.xlu0 %v3230, 113
    %v3613 = vpop.permute.xlu0 %3612
    %3614 = vrot.lane.b32.xlu0 %v3234, 113
    %v3615 = vpop.permute.xlu0 %3614
    %3616 = vrot.lane.b32.xlu0 %v3238, 113
    %v3617 = vpop.permute.xlu0 %3616
    %3618 = vrot.lane.b32.xlu0 %v3227, 113
    %v3619 = vpop.permute.xlu0 %3618
    %3620 = vrot.lane.b32.xlu0 %v3231, 113
    %v3621 = vpop.permute.xlu0 %3620
    %3622 = vrot.lane.b32.xlu0 %v3235, 113
    %v3623 = vpop.permute.xlu0 %3622
    %3624 = vrot.lane.b32.xlu0 %v3239, 113
    %v3625 = vpop.permute.xlu0 %3624
    %3626 = vrot.lane.b32.xlu0 %v3228, 113
    %v3627 = vpop.permute.xlu0 %3626
    %3628 = vrot.lane.b32.xlu0 %v3232, 113
    %v3629 = vpop.permute.xlu0 %3628
    %3630 = vrot.lane.b32.xlu0 %v3236, 113
    %v3631 = vpop.permute.xlu0 %3630
    %3632 = vrot.lane.b32.xlu0 %v3240, 113
    %v3633 = vpop.permute.xlu0 %3632
    %3634 = vrot.lane.b32.xlu0 %v3229, 113
    %v3635 = vpop.permute.xlu0 %3634
    %3636 = vrot.lane.b32.xlu0 %v3233, 113
    %v3637 = vpop.permute.xlu0 %3636
    %3638 = vrot.lane.b32.xlu0 %v3237, 113
    %v3639 = vpop.permute.xlu0 %3638
    %3640 = vrot.lane.b32.xlu0 %v3241, 113
    %v3641 = vpop.permute.xlu0 %3640
    %v3642 = vsel %vm218, %v3627, %v3635
    %v3643 = vsel %vm218, %v3629, %v3637
    %v3644 = vsel %vm218, %v3631, %v3639
    %v3645 = vsel %vm218, %v3633, %v3641
    %v3646 = vsel %vm218, %v3619, %v3627
    %v3647 = vsel %vm218, %v3621, %v3629
    %v3648 = vsel %vm218, %v3623, %v3631
    %v3649 = vsel %vm218, %v3625, %v3633
    %v3650 = vsel %vm218, %v3611, %v3619
    %v3651 = vsel %vm218, %v3613, %v3621
    %v3652 = vsel %vm218, %v3615, %v3623
    %v3653 = vsel %vm218, %v3617, %v3625
    %v3654 = vsel %vm218, %v3635, %v3611
    %v3655 = vsel %vm218, %v3637, %v3613
    %v3656 = vsel %vm218, %v3639, %v3615
    %v3657 = vsel %vm218, %v3641, %v3617
    %v3658 = vmul.f32 %v3650, %v223
    %v3659 = vmul.f32 %v3646, %v224
    %v3660 = vmul.f32 %v3642, %v225
    %v3661 = vmul.f32 %v3654, %v226
    %v3662 = vmul.f32 %v3651, %v223
    %v3663 = vmul.f32 %v3647, %v224
    %v3664 = vmul.f32 %v3643, %v225
    %v3665 = vmul.f32 %v3655, %v226
    %v3666 = vmul.f32 %v3652, %v223
    %v3667 = vmul.f32 %v3648, %v224
    %v3668 = vmul.f32 %v3644, %v225
    %v3669 = vmul.f32 %v3656, %v226
    %v3670 = vmul.f32 %v3653, %v223
    %v3671 = vmul.f32 %v3649, %v224
    %v3672 = vmul.f32 %v3645, %v225
    %v3673 = vmul.f32 %v3657, %v226
    %v3674 = vpack.c.bf16 %v3659, %v3658
    %v3675 = vpack.c.bf16 %v3661, %v3660
    %v3676 = vpack.c.bf16 %v3663, %v3662
    %v3677 = vpack.c.bf16 %v3665, %v3664
    %v3678 = vpack.c.bf16 %v3667, %v3666
    %v3679 = vpack.c.bf16 %v3669, %v3668
    %v3680 = vpack.c.bf16 %v3671, %v3670
    %v3681 = vpack.c.bf16 %v3673, %v3672
    %3682 = vrot.lane.b32.xlu0 %v3226, 112
    %v3683 = vpop.permute.xlu0 %3682
    %3684 = vrot.lane.b32.xlu0 %v3230, 112
    %v3685 = vpop.permute.xlu0 %3684
    %3686 = vrot.lane.b32.xlu0 %v3234, 112
    %v3687 = vpop.permute.xlu0 %3686
    %3688 = vrot.lane.b32.xlu0 %v3238, 112
    %v3689 = vpop.permute.xlu0 %3688
    %3690 = vrot.lane.b32.xlu0 %v3227, 112
    %v3691 = vpop.permute.xlu0 %3690
    %3692 = vrot.lane.b32.xlu0 %v3231, 112
    %v3693 = vpop.permute.xlu0 %3692
    %3694 = vrot.lane.b32.xlu0 %v3235, 112
    %v3695 = vpop.permute.xlu0 %3694
    %3696 = vrot.lane.b32.xlu0 %v3239, 112
    %v3697 = vpop.permute.xlu0 %3696
    %3698 = vrot.lane.b32.xlu0 %v3228, 112
    %v3699 = vpop.permute.xlu0 %3698
    %3700 = vrot.lane.b32.xlu0 %v3232, 112
    %v3701 = vpop.permute.xlu0 %3700
    %3702 = vrot.lane.b32.xlu0 %v3236, 112
    %v3703 = vpop.permute.xlu0 %3702
    %3704 = vrot.lane.b32.xlu0 %v3240, 112
    %v3705 = vpop.permute.xlu0 %3704
    %3706 = vrot.lane.b32.xlu0 %v3229, 112
    %v3707 = vpop.permute.xlu0 %3706
    %3708 = vrot.lane.b32.xlu0 %v3233, 112
    %v3709 = vpop.permute.xlu0 %3708
    %3710 = vrot.lane.b32.xlu0 %v3237, 112
    %v3711 = vpop.permute.xlu0 %3710
    %3712 = vrot.lane.b32.xlu0 %v3241, 112
    %v3713 = vpop.permute.xlu0 %3712
    %v3714 = vsel %vm241, %v3699, %v3707
    %v3715 = vsel %vm241, %v3701, %v3709
    %v3716 = vsel %vm241, %v3703, %v3711
    %v3717 = vsel %vm241, %v3705, %v3713
    %v3718 = vsel %vm241, %v3691, %v3699
    %v3719 = vsel %vm241, %v3693, %v3701
    %v3720 = vsel %vm241, %v3695, %v3703
    %v3721 = vsel %vm241, %v3697, %v3705
    %v3722 = vsel %vm241, %v3683, %v3691
    %v3723 = vsel %vm241, %v3685, %v3693
    %v3724 = vsel %vm241, %v3687, %v3695
    %v3725 = vsel %vm241, %v3689, %v3697
    %v3726 = vsel %vm241, %v3707, %v3683
    %v3727 = vsel %vm241, %v3709, %v3685
    %v3728 = vsel %vm241, %v3711, %v3687
    %v3729 = vsel %vm241, %v3713, %v3689
    %v3730 = vmul.f32 %v3722, %v246
    %v3731 = vmul.f32 %v3718, %v247
    %v3732 = vmul.f32 %v3714, %v248
    %v3733 = vmul.f32 %v3726, %v249
    %v3734 = vmul.f32 %v3723, %v246
    %v3735 = vmul.f32 %v3719, %v247
    %v3736 = vmul.f32 %v3715, %v248
    %v3737 = vmul.f32 %v3727, %v249
    %v3738 = vmul.f32 %v3724, %v246
    %v3739 = vmul.f32 %v3720, %v247
    %v3740 = vmul.f32 %v3716, %v248
    %v3741 = vmul.f32 %v3728, %v249
    %v3742 = vmul.f32 %v3725, %v246
    %v3743 = vmul.f32 %v3721, %v247
    %v3744 = vmul.f32 %v3717, %v248
    %v3745 = vmul.f32 %v3729, %v249
    %v3746 = vpack.c.bf16 %v3731, %v3730
    %v3747 = vpack.c.bf16 %v3733, %v3732
    %v3748 = vpack.c.bf16 %v3735, %v3734
    %v3749 = vpack.c.bf16 %v3737, %v3736
    %v3750 = vpack.c.bf16 %v3739, %v3738
    %v3751 = vpack.c.bf16 %v3741, %v3740
    %v3752 = vpack.c.bf16 %v3743, %v3742
    %v3753 = vpack.c.bf16 %v3745, %v3744
    %3754 = vrot.lane.b32.xlu0 %v3226, 111
    %v3755 = vpop.permute.xlu0 %3754
    %3756 = vrot.lane.b32.xlu0 %v3230, 111
    %v3757 = vpop.permute.xlu0 %3756
    %3758 = vrot.lane.b32.xlu0 %v3234, 111
    %v3759 = vpop.permute.xlu0 %3758
    %3760 = vrot.lane.b32.xlu0 %v3238, 111
    %v3761 = vpop.permute.xlu0 %3760
    %3762 = vrot.lane.b32.xlu0 %v3227, 111
    %v3763 = vpop.permute.xlu0 %3762
    %3764 = vrot.lane.b32.xlu0 %v3231, 111
    %v3765 = vpop.permute.xlu0 %3764
    %3766 = vrot.lane.b32.xlu0 %v3235, 111
    %v3767 = vpop.permute.xlu0 %3766
    %3768 = vrot.lane.b32.xlu0 %v3239, 111
    %v3769 = vpop.permute.xlu0 %3768
    %3770 = vrot.lane.b32.xlu0 %v3228, 111
    %v3771 = vpop.permute.xlu0 %3770
    %3772 = vrot.lane.b32.xlu0 %v3232, 111
    %v3773 = vpop.permute.xlu0 %3772
    %3774 = vrot.lane.b32.xlu0 %v3236, 111
    %v3775 = vpop.permute.xlu0 %3774
    %3776 = vrot.lane.b32.xlu0 %v3240, 111
    %v3777 = vpop.permute.xlu0 %3776
    %3778 = vrot.lane.b32.xlu0 %v3229, 111
    %v3779 = vpop.permute.xlu0 %3778
    %3780 = vrot.lane.b32.xlu0 %v3233, 111
    %v3781 = vpop.permute.xlu0 %3780
    %3782 = vrot.lane.b32.xlu0 %v3237, 111
    %v3783 = vpop.permute.xlu0 %3782
    %3784 = vrot.lane.b32.xlu0 %v3241, 111
    %v3785 = vpop.permute.xlu0 %3784
    %v3786 = vsel %vm264, %v3771, %v3779
    %v3787 = vsel %vm264, %v3773, %v3781
    %v3788 = vsel %vm264, %v3775, %v3783
    %v3789 = vsel %vm264, %v3777, %v3785
    %v3790 = vsel %vm264, %v3763, %v3771
    %v3791 = vsel %vm264, %v3765, %v3773
    %v3792 = vsel %vm264, %v3767, %v3775
    %v3793 = vsel %vm264, %v3769, %v3777
    %v3794 = vsel %vm264, %v3755, %v3763
    %v3795 = vsel %vm264, %v3757, %v3765
    %v3796 = vsel %vm264, %v3759, %v3767
    %v3797 = vsel %vm264, %v3761, %v3769
    %v3798 = vsel %vm264, %v3779, %v3755
    %v3799 = vsel %vm264, %v3781, %v3757
    %v3800 = vsel %vm264, %v3783, %v3759
    %v3801 = vsel %vm264, %v3785, %v3761
    %v3802 = vmul.f32 %v3794, %v269
    %v3803 = vmul.f32 %v3790, %v270
    %v3804 = vmul.f32 %v3786, %v271
    %v3805 = vmul.f32 %v3798, %v272
    %v3806 = vmul.f32 %v3795, %v269
    %v3807 = vmul.f32 %v3791, %v270
    %v3808 = vmul.f32 %v3787, %v271
    %v3809 = vmul.f32 %v3799, %v272
    %v3810 = vmul.f32 %v3796, %v269
    %v3811 = vmul.f32 %v3792, %v270
    %v3812 = vmul.f32 %v3788, %v271
    %v3813 = vmul.f32 %v3800, %v272
    %v3814 = vmul.f32 %v3797, %v269
    %v3815 = vmul.f32 %v3793, %v270
    %v3816 = vmul.f32 %v3789, %v271
    %v3817 = vmul.f32 %v3801, %v272
    %v3818 = vpack.c.bf16 %v3803, %v3802
    %v3819 = vpack.c.bf16 %v3805, %v3804
    %v3820 = vpack.c.bf16 %v3807, %v3806
    %v3821 = vpack.c.bf16 %v3809, %v3808
    %v3822 = vpack.c.bf16 %v3811, %v3810
    %v3823 = vpack.c.bf16 %v3813, %v3812
    %v3824 = vpack.c.bf16 %v3815, %v3814
    %v3825 = vpack.c.bf16 %v3817, %v3816
    %v3834 = vunpack.c.l.b16 %v3306
    %v3835 = vunpack.c.h.b16 %v3306
    %v3836 = vunpack.c.l.b16 %v3307
    %v3837 = vunpack.c.h.b16 %v3307
    %v3838 = vunpack.c.l.b16 %v3308
    %v3839 = vunpack.c.h.b16 %v3308
    %v3840 = vunpack.c.l.b16 %v3309
    %v3841 = vunpack.c.h.b16 %v3309
    %v3842 = vunpack.c.l.b16 %v3310
    %v3843 = vunpack.c.h.b16 %v3310
    %v3844 = vunpack.c.l.b16 %v3311
    %v3845 = vunpack.c.h.b16 %v3311
    %v3846 = vunpack.c.l.b16 %v3312
    %v3847 = vunpack.c.h.b16 %v3312
    %v3848 = vunpack.c.l.b16 %v3313
    %v3849 = vunpack.c.h.b16 %v3313
    %v3850 = vpack.c.b16 %v3838, %v3834
    %v3851 = vpack.c.b16 %v3839, %v3835
    %v3852 = vpack.c.b16 %v3840, %v3836
    %v3853 = vpack.c.b16 %v3841, %v3837
    %v3854 = vpack.c.b16 %v3846, %v3842
    %v3855 = vpack.c.b16 %v3847, %v3843
    %v3856 = vpack.c.b16 %v3848, %v3844
    %v3857 = vpack.c.b16 %v3849, %v3845
    %v3874 = vunpack.c.l.b16 %v3378
    %v3875 = vunpack.c.h.b16 %v3378
    %v3876 = vunpack.c.l.b16 %v3379
    %v3877 = vunpack.c.h.b16 %v3379
    %v3878 = vunpack.c.l.b16 %v3380
    %v3879 = vunpack.c.h.b16 %v3380
    %v3880 = vunpack.c.l.b16 %v3381
    %v3881 = vunpack.c.h.b16 %v3381
    %v3882 = vunpack.c.l.b16 %v3382
    %v3883 = vunpack.c.h.b16 %v3382
    %v3884 = vunpack.c.l.b16 %v3383
    %v3885 = vunpack.c.h.b16 %v3383
    %v3886 = vunpack.c.l.b16 %v3384
    %v3887 = vunpack.c.h.b16 %v3384
    %v3888 = vunpack.c.l.b16 %v3385
    %v3889 = vunpack.c.h.b16 %v3385
    %v3890 = vpack.c.b16 %v3878, %v3874
    %v3891 = vpack.c.b16 %v3879, %v3875
    %v3892 = vpack.c.b16 %v3880, %v3876
    %v3893 = vpack.c.b16 %v3881, %v3877
    %v3894 = vpack.c.b16 %v3886, %v3882
    %v3895 = vpack.c.b16 %v3887, %v3883
    %v3896 = vpack.c.b16 %v3888, %v3884
    %v3897 = vpack.c.b16 %v3889, %v3885
    %v3914 = vunpack.c.l.b16 %v3450
    %v3915 = vunpack.c.h.b16 %v3450
    %v3916 = vunpack.c.l.b16 %v3451
    %v3917 = vunpack.c.h.b16 %v3451
    %v3918 = vunpack.c.l.b16 %v3452
    %v3919 = vunpack.c.h.b16 %v3452
    %v3920 = vunpack.c.l.b16 %v3453
    %v3921 = vunpack.c.h.b16 %v3453
    %v3922 = vunpack.c.l.b16 %v3454
    %v3923 = vunpack.c.h.b16 %v3454
    %v3924 = vunpack.c.l.b16 %v3455
    %v3925 = vunpack.c.h.b16 %v3455
    %v3926 = vunpack.c.l.b16 %v3456
    %v3927 = vunpack.c.h.b16 %v3456
    %v3928 = vunpack.c.l.b16 %v3457
    %v3929 = vunpack.c.h.b16 %v3457
    %v3930 = vpack.c.b16 %v3918, %v3914
    %v3931 = vpack.c.b16 %v3919, %v3915
    %v3932 = vpack.c.b16 %v3920, %v3916
    %v3933 = vpack.c.b16 %v3921, %v3917
    %v3934 = vpack.c.b16 %v3926, %v3922
    %v3935 = vpack.c.b16 %v3927, %v3923
    %v3936 = vpack.c.b16 %v3928, %v3924
    %v3937 = vpack.c.b16 %v3929, %v3925
    %v3954 = vunpack.c.l.b16 %v3522
    %v3955 = vunpack.c.h.b16 %v3522
    %v3956 = vunpack.c.l.b16 %v3523
    %v3957 = vunpack.c.h.b16 %v3523
    %v3958 = vunpack.c.l.b16 %v3524
    %v3959 = vunpack.c.h.b16 %v3524
    %v3960 = vunpack.c.l.b16 %v3525
    %v3961 = vunpack.c.h.b16 %v3525
    %v3962 = vunpack.c.l.b16 %v3526
    %v3963 = vunpack.c.h.b16 %v3526
    %v3964 = vunpack.c.l.b16 %v3527
    %v3965 = vunpack.c.h.b16 %v3527
    %v3966 = vunpack.c.l.b16 %v3528
    %v3967 = vunpack.c.h.b16 %v3528
    %v3968 = vunpack.c.l.b16 %v3529
    %v3969 = vunpack.c.h.b16 %v3529
    %v3970 = vpack.c.b16 %v3958, %v3954
    %v3971 = vpack.c.b16 %v3959, %v3955
    %v3972 = vpack.c.b16 %v3960, %v3956
    %v3973 = vpack.c.b16 %v3961, %v3957
    %v3974 = vpack.c.b16 %v3966, %v3962
    %v3975 = vpack.c.b16 %v3967, %v3963
    %v3976 = vpack.c.b16 %v3968, %v3964
    %v3977 = vpack.c.b16 %v3969, %v3965
    %v3994 = vunpack.c.l.b16 %v3530
    %v3995 = vunpack.c.h.b16 %v3530
    %v3996 = vunpack.c.l.b16 %v3531
    %v3997 = vunpack.c.h.b16 %v3531
    %v3998 = vunpack.c.l.b16 %v3532
    %v3999 = vunpack.c.h.b16 %v3532
    %v4000 = vunpack.c.l.b16 %v3533
    %v4001 = vunpack.c.h.b16 %v3533
    %v4002 = vunpack.c.l.b16 %v3534
    %v4003 = vunpack.c.h.b16 %v3534
    %v4004 = vunpack.c.l.b16 %v3535
    %v4005 = vunpack.c.h.b16 %v3535
    %v4006 = vunpack.c.l.b16 %v3536
    %v4007 = vunpack.c.h.b16 %v3536
    %v4008 = vunpack.c.l.b16 %v3537
    %v4009 = vunpack.c.h.b16 %v3537
    %v4010 = vpack.c.b16 %v3998, %v3994
    %v4011 = vpack.c.b16 %v3999, %v3995
    %v4012 = vpack.c.b16 %v4000, %v3996
    %v4013 = vpack.c.b16 %v4001, %v3997
    %v4014 = vpack.c.b16 %v4006, %v4002
    %v4015 = vpack.c.b16 %v4007, %v4003
    %v4016 = vpack.c.b16 %v4008, %v4004
    %v4017 = vpack.c.b16 %v4009, %v4005
    %v4034 = vunpack.c.l.b16 %v3602
    %v4035 = vunpack.c.h.b16 %v3602
    %v4036 = vunpack.c.l.b16 %v3603
    %v4037 = vunpack.c.h.b16 %v3603
    %v4038 = vunpack.c.l.b16 %v3604
    %v4039 = vunpack.c.h.b16 %v3604
    %v4040 = vunpack.c.l.b16 %v3605
    %v4041 = vunpack.c.h.b16 %v3605
    %v4042 = vunpack.c.l.b16 %v3606
    %v4043 = vunpack.c.h.b16 %v3606
    %v4044 = vunpack.c.l.b16 %v3607
    %v4045 = vunpack.c.h.b16 %v3607
    %v4046 = vunpack.c.l.b16 %v3608
    %v4047 = vunpack.c.h.b16 %v3608
    %v4048 = vunpack.c.l.b16 %v3609
    %v4049 = vunpack.c.h.b16 %v3609
    %v4050 = vpack.c.b16 %v4038, %v4034
    %v4051 = vpack.c.b16 %v4039, %v4035
    %v4052 = vpack.c.b16 %v4040, %v4036
    %v4053 = vpack.c.b16 %v4041, %v4037
    %v4054 = vpack.c.b16 %v4046, %v4042
    %v4055 = vpack.c.b16 %v4047, %v4043
    %v4056 = vpack.c.b16 %v4048, %v4044
    %v4057 = vpack.c.b16 %v4049, %v4045
    %v4074 = vunpack.c.l.b16 %v3674
    %v4075 = vunpack.c.h.b16 %v3674
    %v4076 = vunpack.c.l.b16 %v3675
    %v4077 = vunpack.c.h.b16 %v3675
    %v4078 = vunpack.c.l.b16 %v3676
    %v4079 = vunpack.c.h.b16 %v3676
    %v4080 = vunpack.c.l.b16 %v3677
    %v4081 = vunpack.c.h.b16 %v3677
    %v4082 = vunpack.c.l.b16 %v3678
    %v4083 = vunpack.c.h.b16 %v3678
    %v4084 = vunpack.c.l.b16 %v3679
    %v4085 = vunpack.c.h.b16 %v3679
    %v4086 = vunpack.c.l.b16 %v3680
    %v4087 = vunpack.c.h.b16 %v3680
    %v4088 = vunpack.c.l.b16 %v3681
    %v4089 = vunpack.c.h.b16 %v3681
    %v4090 = vpack.c.b16 %v4078, %v4074
    %v4091 = vpack.c.b16 %v4079, %v4075
    %v4092 = vpack.c.b16 %v4080, %v4076
    %v4093 = vpack.c.b16 %v4081, %v4077
    %v4094 = vpack.c.b16 %v4086, %v4082
    %v4095 = vpack.c.b16 %v4087, %v4083
    %v4096 = vpack.c.b16 %v4088, %v4084
    %v4097 = vpack.c.b16 %v4089, %v4085
    %v4114 = vunpack.c.l.b16 %v3746
    %v4115 = vunpack.c.h.b16 %v3746
    %v4116 = vunpack.c.l.b16 %v3747
    %v4117 = vunpack.c.h.b16 %v3747
    %v4118 = vunpack.c.l.b16 %v3748
    %v4119 = vunpack.c.h.b16 %v3748
    %v4120 = vunpack.c.l.b16 %v3749
    %v4121 = vunpack.c.h.b16 %v3749
    %v4122 = vunpack.c.l.b16 %v3750
    %v4123 = vunpack.c.h.b16 %v3750
    %v4124 = vunpack.c.l.b16 %v3751
    %v4125 = vunpack.c.h.b16 %v3751
    %v4126 = vunpack.c.l.b16 %v3752
    %v4127 = vunpack.c.h.b16 %v3752
    %v4128 = vunpack.c.l.b16 %v3753
    %v4129 = vunpack.c.h.b16 %v3753
    %v4130 = vpack.c.b16 %v4118, %v4114
    %v4131 = vpack.c.b16 %v4119, %v4115
    %v4132 = vpack.c.b16 %v4120, %v4116
    %v4133 = vpack.c.b16 %v4121, %v4117
    %v4134 = vpack.c.b16 %v4126, %v4122
    %v4135 = vpack.c.b16 %v4127, %v4123
    %v4136 = vpack.c.b16 %v4128, %v4124
    %v4137 = vpack.c.b16 %v4129, %v4125
    %v4154 = vunpack.c.l.b16 %v3818
    %v4155 = vunpack.c.h.b16 %v3818
    %v4156 = vunpack.c.l.b16 %v3819
    %v4157 = vunpack.c.h.b16 %v3819
    %v4158 = vunpack.c.l.b16 %v3820
    %v4159 = vunpack.c.h.b16 %v3820
    %v4160 = vunpack.c.l.b16 %v3821
    %v4161 = vunpack.c.h.b16 %v3821
    %v4162 = vunpack.c.l.b16 %v3822
    %v4163 = vunpack.c.h.b16 %v3822
    %v4164 = vunpack.c.l.b16 %v3823
    %v4165 = vunpack.c.h.b16 %v3823
    %v4166 = vunpack.c.l.b16 %v3824
    %v4167 = vunpack.c.h.b16 %v3824
    %v4168 = vunpack.c.l.b16 %v3825
    %v4169 = vunpack.c.h.b16 %v3825
    %v4170 = vpack.c.b16 %v4158, %v4154
    %v4171 = vpack.c.b16 %v4159, %v4155
    %v4172 = vpack.c.b16 %v4160, %v4156
    %v4173 = vpack.c.b16 %v4161, %v4157
    %v4174 = vpack.c.b16 %v4166, %v4162
    %v4175 = vpack.c.b16 %v4167, %v4163
    %v4176 = vpack.c.b16 %v4168, %v4164
    %v4177 = vpack.c.b16 %v4169, %v4165
    %v4186 = vld [vmem:[%s14] sm:$0xff]
    %v4187 = vld [vmem:[%s14 + $0x8] sm:$0xf]
    %v4188 = vld [vmem:[%s14 + $0xc] sm:$0xff]
    %v4189 = vld [vmem:[%s14 + $0x14] sm:$0xf]
    %v4190 = vld [vmem:[%s14 + $0x18] sm:$0xff]
    %v4191 = vld [vmem:[%s14 + $0x20] sm:$0xf]
    %v4192 = vld [vmem:[%s14 + $0x24] sm:$0xff]
    %v4193 = vld [vmem:[%s14 + $0x2c] sm:$0xf]
    %v4194 = vld [vmem:[%s15] sm:$0xff]
    %v4195 = vld [vmem:[%s15 + $0x8] sm:$0xff]
    %v4196 = vld [vmem:[%s15 + $0x10] sm:$0xff]
    %v4197 = vld [vmem:[%s15 + $0x18] sm:$0xff]
    %4199 = vset.pattern.permute.xlu0 0
    %4200 = vperm.xlu0 %4199, %v4194
    %v4201 = vpop.permute.xlu0 %4200
    %4204 = vset.pattern.permute.xlu0 0
    %4205 = vperm.xlu0 %4204, %v4195
    %v4206 = vpop.permute.xlu0 %4205
    %4209 = vset.pattern.permute.xlu0 0
    %4210 = vperm.xlu0 %4209, %v4196
    %v4211 = vpop.permute.xlu0 %4210
    %4214 = vset.pattern.permute.xlu0 0
    %4215 = vperm.xlu0 %4214, %v4197
    %v4216 = vpop.permute.xlu0 %4215
    %v4226 = vunpack.c.l.b16 %v4186
    %v4227 = vunpack.c.h.b16 %v4186
    %v4228 = vunpack.c.l.b16 %v4187
    %v4229 = vunpack.c.l.b16 %v4188
    %v4230 = vunpack.c.h.b16 %v4188
    %v4231 = vunpack.c.l.b16 %v4189
    %v4232 = vunpack.c.l.b16 %v4190
    %v4233 = vunpack.c.h.b16 %v4190
    %v4234 = vunpack.c.l.b16 %v4191
    %v4235 = vunpack.c.l.b16 %v4192
    %v4236 = vunpack.c.h.b16 %v4192
    %v4237 = vunpack.c.l.b16 %v4193
    %v4238 = vpack.c.b16 %v4229, %v4226
    %v4239 = vpack.c.b16 %v4230, %v4227
    %v4240 = vpack.c.b16 %v4231, %v4228
    %v4241 = vpack.c.b16 %v4235, %v4232
    %v4242 = vpack.c.b16 %v4236, %v4233
    %v4243 = vpack.c.b16 %v4237, %v4234
    %v4249 = vsel %vm646, %v4240, 0
    %v4252 = vsel %vm646, %v4243, 0
    %4254 = vmatpush.bf16.msra.mxu0 %v3974
    %4255 = vmatpush.bf16.msra.mxu0 %v3970
    %4256 = vmatpush.bf16.msra.mxu0 %v3934
    %4257 = vmatpush.bf16.msra.mxu0 %v3930
    %4258 = vmatpush.bf16.msra.mxu0 %v3894
    %4259 = vmatpush.bf16.msra.mxu0 %v3890
    %4260 = vmatpush.bf16.msra.mxu0 %v3854
    %4261 = vmatpush.bf16.msra.mxu0 %v3850
    %4262 = vmatmul.bf16.gmra.mxu0 %v4238
    %v4263 = vpop.f32.mrf.mxu0
    %v4264 = vadd.f32 %v4201, %v4263
    %v4265 = vpop.f32.mrf.mxu0
    %v4266 = vadd.f32 %v4206, %v4265
    %4267 = vmatmul.bf16.gmra.mxu0 %v4241
    %v4268 = vpop.f32.mrf.mxu0
    %v4269 = vadd.f32 %v4211, %v4268
    %v4270 = vpop.f32.mrf.mxu0
    %v4271 = vadd.f32 %v4216, %v4270
    %4272 = vdwg.mxu0
    %4273 = vmatpush.bf16.msra.mxu0 %v4134
    %4274 = vmatpush.bf16.msra.mxu0 %v4130
    %4275 = vmatpush.bf16.msra.mxu0 %v4094
    %4276 = vmatpush.bf16.msra.mxu0 %v4090
    %4277 = vmatpush.bf16.msra.mxu0 %v4054
    %4278 = vmatpush.bf16.msra.mxu0 %v4050
    %4279 = vmatpush.bf16.msra.mxu0 %v4014
    %4280 = vmatpush.bf16.msra.mxu0 %v4010
    %4281 = vmatmul.bf16.gmra.mxu0 %v4239
    %v4282 = vpop.f32.mrf.mxu0
    %v4283 = vadd.f32 %v4264, %v4282
    %v4284 = vpop.f32.mrf.mxu0
    %v4285 = vadd.f32 %v4266, %v4284
    %4286 = vmatmul.bf16.gmra.mxu0 %v4242
    %v4287 = vpop.f32.mrf.mxu0
    %v4288 = vadd.f32 %v4269, %v4287
    %v4289 = vpop.f32.mrf.mxu0
    %v4290 = vadd.f32 %v4271, %v4289
    %4291 = vdwg.mxu0
    %4292 = vmatpush.bf16.msra.mxu0 0
    %4293 = vmatpush.bf16.msra.mxu0 0
    %4294 = vmatpush.bf16.msra.mxu0 0
    %4295 = vmatpush.bf16.msra.mxu0 0
    %4296 = vmatpush.bf16.msra.mxu0 0
    %4297 = vmatpush.bf16.msra.mxu0 0
    %4298 = vmatpush.bf16.msra.mxu0 %v4174
    %4299 = vmatpush.bf16.msra.mxu0 %v4170
    %4300 = vmatmul.bf16.gmra.mxu0 %v4249
    %v4301 = vpop.f32.mrf.mxu0
    %v4302 = vadd.f32 %v4283, %v4301
    %v4303 = vpop.f32.mrf.mxu0
    %v4304 = vadd.f32 %v4285, %v4303
    %4305 = vmatmul.bf16.gmra.mxu0 %v4252
    %v4306 = vpop.f32.mrf.mxu0
    %v4307 = vadd.f32 %v4288, %v4306
    %v4308 = vpop.f32.mrf.mxu0
    %v4309 = vadd.f32 %v4290, %v4308
    %4310 = vdwg.mxu0
    %4311 = vmatpush.bf16.msra.mxu0 %v3975
    %4312 = vmatpush.bf16.msra.mxu0 %v3971
    %4313 = vmatpush.bf16.msra.mxu0 %v3935
    %4314 = vmatpush.bf16.msra.mxu0 %v3931
    %4315 = vmatpush.bf16.msra.mxu0 %v3895
    %4316 = vmatpush.bf16.msra.mxu0 %v3891
    %4317 = vmatpush.bf16.msra.mxu0 %v3855
    %4318 = vmatpush.bf16.msra.mxu0 %v3851
    %4319 = vmatmul.bf16.gmra.mxu0 %v4238
    %v4320 = vpop.f32.mrf.mxu0
    %v4321 = vadd.f32 %v4201, %v4320
    %v4322 = vpop.f32.mrf.mxu0
    %v4323 = vadd.f32 %v4206, %v4322
    %4324 = vmatmul.bf16.gmra.mxu0 %v4241
    %v4325 = vpop.f32.mrf.mxu0
    %v4326 = vadd.f32 %v4211, %v4325
    %v4327 = vpop.f32.mrf.mxu0
    %v4328 = vadd.f32 %v4216, %v4327
    %4329 = vdwg.mxu0
    %4330 = vmatpush.bf16.msra.mxu0 %v4135
    %4331 = vmatpush.bf16.msra.mxu0 %v4131
    %4332 = vmatpush.bf16.msra.mxu0 %v4095
    %4333 = vmatpush.bf16.msra.mxu0 %v4091
    %4334 = vmatpush.bf16.msra.mxu0 %v4055
    %4335 = vmatpush.bf16.msra.mxu0 %v4051
    %4336 = vmatpush.bf16.msra.mxu0 %v4015
    %4337 = vmatpush.bf16.msra.mxu0 %v4011
    %4338 = vmatmul.bf16.gmra.mxu0 %v4239
    %v4339 = vpop.f32.mrf.mxu0
    %v4340 = vadd.f32 %v4321, %v4339
    %v4341 = vpop.f32.mrf.mxu0
    %v4342 = vadd.f32 %v4323, %v4341
    %4343 = vmatmul.bf16.gmra.mxu0 %v4242
    %v4344 = vpop.f32.mrf.mxu0
    %v4345 = vadd.f32 %v4326, %v4344
    %v4346 = vpop.f32.mrf.mxu0
    %v4347 = vadd.f32 %v4328, %v4346
    %4348 = vdwg.mxu0
    %4349 = vmatpush.bf16.msra.mxu0 0
    %4350 = vmatpush.bf16.msra.mxu0 0
    %4351 = vmatpush.bf16.msra.mxu0 0
    %4352 = vmatpush.bf16.msra.mxu0 0
    %4353 = vmatpush.bf16.msra.mxu0 0
    %4354 = vmatpush.bf16.msra.mxu0 0
    %4355 = vmatpush.bf16.msra.mxu0 %v4175
    %4356 = vmatpush.bf16.msra.mxu0 %v4171
    %4357 = vmatmul.bf16.gmra.mxu0 %v4249
    %v4358 = vpop.f32.mrf.mxu0
    %v4359 = vadd.f32 %v4340, %v4358
    %v4360 = vpop.f32.mrf.mxu0
    %v4361 = vadd.f32 %v4342, %v4360
    %4362 = vmatmul.bf16.gmra.mxu0 %v4252
    %v4363 = vpop.f32.mrf.mxu0
    %v4364 = vadd.f32 %v4345, %v4363
    %v4365 = vpop.f32.mrf.mxu0
    %v4366 = vadd.f32 %v4347, %v4365
    %4367 = vdwg.mxu0
    %4368 = vmatpush.bf16.msra.mxu0 %v3976
    %4369 = vmatpush.bf16.msra.mxu0 %v3972
    %4370 = vmatpush.bf16.msra.mxu0 %v3936
    %4371 = vmatpush.bf16.msra.mxu0 %v3932
    %4372 = vmatpush.bf16.msra.mxu0 %v3896
    %4373 = vmatpush.bf16.msra.mxu0 %v3892
    %4374 = vmatpush.bf16.msra.mxu0 %v3856
    %4375 = vmatpush.bf16.msra.mxu0 %v3852
    %4376 = vmatmul.bf16.gmra.mxu0 %v4238
    %v4377 = vpop.f32.mrf.mxu0
    %v4378 = vadd.f32 %v4201, %v4377
    %v4379 = vpop.f32.mrf.mxu0
    %v4380 = vadd.f32 %v4206, %v4379
    %4381 = vmatmul.bf16.gmra.mxu0 %v4241
    %v4382 = vpop.f32.mrf.mxu0
    %v4383 = vadd.f32 %v4211, %v4382
    %v4384 = vpop.f32.mrf.mxu0
    %v4385 = vadd.f32 %v4216, %v4384
    %4386 = vdwg.mxu0
    %4387 = vmatpush.bf16.msra.mxu0 %v4136
    %4388 = vmatpush.bf16.msra.mxu0 %v4132
    %4389 = vmatpush.bf16.msra.mxu0 %v4096
    %4390 = vmatpush.bf16.msra.mxu0 %v4092
    %4391 = vmatpush.bf16.msra.mxu0 %v4056
    %4392 = vmatpush.bf16.msra.mxu0 %v4052
    %4393 = vmatpush.bf16.msra.mxu0 %v4016
    %4394 = vmatpush.bf16.msra.mxu0 %v4012
    %4395 = vmatmul.bf16.gmra.mxu0 %v4239
    %v4396 = vpop.f32.mrf.mxu0
    %v4397 = vadd.f32 %v4378, %v4396
    %v4398 = vpop.f32.mrf.mxu0
    %v4399 = vadd.f32 %v4380, %v4398
    %4400 = vmatmul.bf16.gmra.mxu0 %v4242
    %v4401 = vpop.f32.mrf.mxu0
    %v4402 = vadd.f32 %v4383, %v4401
    %v4403 = vpop.f32.mrf.mxu0
    %v4404 = vadd.f32 %v4385, %v4403
    %4405 = vdwg.mxu0
    %4406 = vmatpush.bf16.msra.mxu0 0
    %4407 = vmatpush.bf16.msra.mxu0 0
    %4408 = vmatpush.bf16.msra.mxu0 0
    %4409 = vmatpush.bf16.msra.mxu0 0
    %4410 = vmatpush.bf16.msra.mxu0 0
    %4411 = vmatpush.bf16.msra.mxu0 0
    %4412 = vmatpush.bf16.msra.mxu0 %v4176
    %4413 = vmatpush.bf16.msra.mxu0 %v4172
    %4414 = vmatmul.bf16.gmra.mxu0 %v4249
    %v4415 = vpop.f32.mrf.mxu0
    %v4416 = vadd.f32 %v4397, %v4415
    %v4417 = vpop.f32.mrf.mxu0
    %v4418 = vadd.f32 %v4399, %v4417
    %4419 = vmatmul.bf16.gmra.mxu0 %v4252
    %v4420 = vpop.f32.mrf.mxu0
    %v4421 = vadd.f32 %v4402, %v4420
    %v4422 = vpop.f32.mrf.mxu0
    %v4423 = vadd.f32 %v4404, %v4422
    %4424 = vdwg.mxu0
    %4425 = vmatpush.bf16.msra.mxu0 %v3977
    %4426 = vmatpush.bf16.msra.mxu0 %v3973
    %4427 = vmatpush.bf16.msra.mxu0 %v3937
    %4428 = vmatpush.bf16.msra.mxu0 %v3933
    %4429 = vmatpush.bf16.msra.mxu0 %v3897
    %4430 = vmatpush.bf16.msra.mxu0 %v3893
    %4431 = vmatpush.bf16.msra.mxu0 %v3857
    %4432 = vmatpush.bf16.msra.mxu0 %v3853
    %4433 = vmatmul.bf16.gmra.mxu0 %v4238
    %v4434 = vpop.f32.mrf.mxu0
    %v4435 = vadd.f32 %v4201, %v4434
    %v4436 = vpop.f32.mrf.mxu0
    %v4437 = vadd.f32 %v4206, %v4436
    %4438 = vmatmul.bf16.gmra.mxu0 %v4241
    %v4439 = vpop.f32.mrf.mxu0
    %v4440 = vadd.f32 %v4211, %v4439
    %v4441 = vpop.f32.mrf.mxu0
    %v4442 = vadd.f32 %v4216, %v4441
    %4443 = vdwg.mxu0
    %4444 = vmatpush.bf16.msra.mxu0 %v4137
    %4445 = vmatpush.bf16.msra.mxu0 %v4133
    %4446 = vmatpush.bf16.msra.mxu0 %v4097
    %4447 = vmatpush.bf16.msra.mxu0 %v4093
    %4448 = vmatpush.bf16.msra.mxu0 %v4057
    %4449 = vmatpush.bf16.msra.mxu0 %v4053
    %4450 = vmatpush.bf16.msra.mxu0 %v4017
    %4451 = vmatpush.bf16.msra.mxu0 %v4013
    %4452 = vmatmul.bf16.gmra.mxu0 %v4239
    %v4453 = vpop.f32.mrf.mxu0
    %v4454 = vadd.f32 %v4435, %v4453
    %v4455 = vpop.f32.mrf.mxu0
    %v4456 = vadd.f32 %v4437, %v4455
    %4457 = vmatmul.bf16.gmra.mxu0 %v4242
    %v4458 = vpop.f32.mrf.mxu0
    %v4459 = vadd.f32 %v4440, %v4458
    %v4460 = vpop.f32.mrf.mxu0
    %v4461 = vadd.f32 %v4442, %v4460
    %4462 = vdwg.mxu0
    %4463 = vmatpush.bf16.msra.mxu0 0
    %4464 = vmatpush.bf16.msra.mxu0 0
    %4465 = vmatpush.bf16.msra.mxu0 0
    %4466 = vmatpush.bf16.msra.mxu0 0
    %4467 = vmatpush.bf16.msra.mxu0 0
    %4468 = vmatpush.bf16.msra.mxu0 0
    %4469 = vmatpush.bf16.msra.mxu0 %v4177
    %4470 = vmatpush.bf16.msra.mxu0 %v4173
    %4471 = vmatmul.bf16.gmra.mxu0 %v4249
    %v4472 = vpop.f32.mrf.mxu0
    %v4473 = vadd.f32 %v4454, %v4472
    %v4474 = vpop.f32.mrf.mxu0
    %v4475 = vadd.f32 %v4456, %v4474
    %4476 = vmatmul.bf16.gmra.mxu0 %v4252
    %v4477 = vpop.f32.mrf.mxu0
    %v4478 = vadd.f32 %v4459, %v4477
    %v4479 = vpop.f32.mrf.mxu0
    %v4480 = vadd.f32 %v4461, %v4479
    %4481 = vdwg.mxu0
    %v4482 = vadd.f32 %v501, %v4302
    %v4483 = vadd.f32 %v520, %v4359
    %v4484 = vadd.f32 %v539, %v4416
    %v4485 = vadd.f32 %v558, %v4473
    %v4486 = vadd.f32 %v503, %v4304
    %v4487 = vadd.f32 %v522, %v4361
    %v4488 = vadd.f32 %v541, %v4418
    %v4489 = vadd.f32 %v560, %v4475
    %v4490 = vadd.f32 %v506, %v4307
    %v4491 = vadd.f32 %v525, %v4364
    %v4492 = vadd.f32 %v544, %v4421
    %v4493 = vadd.f32 %v563, %v4478
    %v4494 = vadd.f32 %v508, %v4309
    %v4495 = vadd.f32 %v527, %v4366
    %v4496 = vadd.f32 %v546, %v4423
    %v4497 = vadd.f32 %v565, %v4480
    %v4498 = vld [vmem:[%s16] sm:$0xf]
    %v4499 = vld [vmem:[%s16 + $0x4] sm:$0xf]
    %v4500 = vld [vmem:[%s16 + $0x8] sm:$0xf]
    %v4501 = vld [vmem:[%s16 + $0xc] sm:$0xf]
    %v4502 = vpack.c.bf16 %v4486, %v4482
    %v4503 = vpack.c.bf16 %v4487, %v4483
    %v4504 = vpack.c.bf16 %v4488, %v4484
    %v4505 = vpack.c.bf16 %v4489, %v4485
    %v4506 = vpack.c.bf16 %v4494, %v4490
    %v4507 = vpack.c.bf16 %v4495, %v4491
    %v4508 = vpack.c.bf16 %v4496, %v4492
    %v4509 = vpack.c.bf16 %v4497, %v4493
    %v4514 = vunpack.c.l.b16 %v4498
    %v4515 = vunpack.c.l.b16 %v4499
    %v4516 = vunpack.c.l.b16 %v4500
    %v4517 = vunpack.c.l.b16 %v4501
    %v4518 = vpack.c.b16 %v4515, %v4514
    %v4519 = vpack.c.b16 %v4517, %v4516
    %v4521 = vsel %vm646, %v4518, 0
    %v4524 = vsel %vm646, %v4519, 0
    %4526 = vmatpush.bf16.msra.mxu0 0
    %4527 = vmatpush.bf16.msra.mxu0 0
    %4528 = vmatpush.bf16.msra.mxu0 0
    %4529 = vmatpush.bf16.msra.mxu0 0
    %4530 = vmatpush.bf16.msra.mxu0 0
    %4531 = vmatpush.bf16.msra.mxu0 0
    %4532 = vmatpush.bf16.msra.mxu0 %v4506
    %4533 = vmatpush.bf16.msra.mxu0 %v4502
    %4534 = vmatmul.bf16.gmra.mxu0 %v4521
    %v4535 = vpop.f32.mrf.mxu0
    %v4536 = vadd.f32 0.0, %v4535
    %v4537 = vpop.f32.mrf.mxu0
    %v4538 = vadd.f32 0.0, %v4537
    %4539 = vmatmul.bf16.gmra.mxu0 %v4524
    %v4540 = vpop.f32.mrf.mxu0
    %v4541 = vadd.f32 0.0, %v4540
    %v4542 = vpop.f32.mrf.mxu0
    %v4543 = vadd.f32 0.0, %v4542
    %4544 = vdwg.mxu0
    %4545 = vmatpush.bf16.msra.mxu0 0
    %4546 = vmatpush.bf16.msra.mxu0 0
    %4547 = vmatpush.bf16.msra.mxu0 0
    %4548 = vmatpush.bf16.msra.mxu0 0
    %4549 = vmatpush.bf16.msra.mxu0 0
    %4550 = vmatpush.bf16.msra.mxu0 0
    %4551 = vmatpush.bf16.msra.mxu0 %v4507
    %4552 = vmatpush.bf16.msra.mxu0 %v4503
    %4553 = vmatmul.bf16.gmra.mxu0 %v4521
    %v4554 = vpop.f32.mrf.mxu0
    %v4555 = vadd.f32 0.0, %v4554
    %v4556 = vpop.f32.mrf.mxu0
    %v4557 = vadd.f32 0.0, %v4556
    %4558 = vmatmul.bf16.gmra.mxu0 %v4524
    %v4559 = vpop.f32.mrf.mxu0
    %v4560 = vadd.f32 0.0, %v4559
    %v4561 = vpop.f32.mrf.mxu0
    %v4562 = vadd.f32 0.0, %v4561
    %4563 = vdwg.mxu0
    %4564 = vmatpush.bf16.msra.mxu0 0
    %4565 = vmatpush.bf16.msra.mxu0 0
    %4566 = vmatpush.bf16.msra.mxu0 0
    %4567 = vmatpush.bf16.msra.mxu0 0
    %4568 = vmatpush.bf16.msra.mxu0 0
    %4569 = vmatpush.bf16.msra.mxu0 0
    %4570 = vmatpush.bf16.msra.mxu0 %v4508
    %4571 = vmatpush.bf16.msra.mxu0 %v4504
    %4572 = vmatmul.bf16.gmra.mxu0 %v4521
    %v4573 = vpop.f32.mrf.mxu0
    %v4574 = vadd.f32 0.0, %v4573
    %v4575 = vpop.f32.mrf.mxu0
    %v4576 = vadd.f32 0.0, %v4575
    %4577 = vmatmul.bf16.gmra.mxu0 %v4524
    %v4578 = vpop.f32.mrf.mxu0
    %v4579 = vadd.f32 0.0, %v4578
    %v4580 = vpop.f32.mrf.mxu0
    %v4581 = vadd.f32 0.0, %v4580
    %4582 = vdwg.mxu0
    %4583 = vmatpush.bf16.msra.mxu0 0
    %4584 = vmatpush.bf16.msra.mxu0 0
    %4585 = vmatpush.bf16.msra.mxu0 0
    %4586 = vmatpush.bf16.msra.mxu0 0
    %4587 = vmatpush.bf16.msra.mxu0 0
    %4588 = vmatpush.bf16.msra.mxu0 0
    %4589 = vmatpush.bf16.msra.mxu0 %v4509
    %4590 = vmatpush.bf16.msra.mxu0 %v4505
    %4591 = vmatmul.bf16.gmra.mxu0 %v4521
    %v4592 = vpop.f32.mrf.mxu0
    %v4593 = vadd.f32 0.0, %v4592
    %v4594 = vpop.f32.mrf.mxu0
    %v4595 = vadd.f32 0.0, %v4594
    %4596 = vmatmul.bf16.gmra.mxu0 %v4524
    %v4597 = vpop.f32.mrf.mxu0
    %v4598 = vadd.f32 0.0, %v4597
    %v4599 = vpop.f32.mrf.mxu0
    %v4600 = vadd.f32 0.0, %v4599
    %4601 = vdwg.mxu0
    %v4602 = vld [vmem:[%s2] sm:$0xff]
    %v4603 = vpack.c.bf16 %v4602, %v4602
    %v4604 = vld [vmem:[%s17] sm:$0xf]
    %v4605 = vld [vmem:[%s17 + $0x4] sm:$0xf]
    %v4606 = vld [vmem:[%s17 + $0x8] sm:$0xf]
    %v4607 = vld [vmem:[%s17 + $0xc] sm:$0xf]
    %v4612 = vunpack.c.l.b16 %v4604
    %v4613 = vunpack.c.l.b16 %v4605
    %v4614 = vunpack.c.l.b16 %v4606
    %v4615 = vunpack.c.l.b16 %v4607
    %v4616 = vpack.c.b16 %v4613, %v4612
    %v4617 = vpack.c.b16 %v4615, %v4614
    %v4621 = vsel %vm646, %v4603, 0
    %4623 = vmatpush.bf16.msra.mxu0 0
    %4624 = vmatpush.bf16.msra.mxu0 0
    %4625 = vmatpush.bf16.msra.mxu0 0
    %4626 = vmatpush.bf16.msra.mxu0 0
    %4627 = vmatpush.bf16.msra.mxu0 0
    %4628 = vmatpush.bf16.msra.mxu0 0
    %4629 = vmatpush.bf16.msra.mxu0 %v4617
    %4630 = vmatpush.bf16.msra.mxu0 %v4616
    %4631 = vmatmul.bf16.gmra.mxu0 %v4621
    %v4632 = vpop.f32.mrf.mxu0
    %v4633 = vadd.f32 0.0, %v4632
    %v4634 = vpop.f32.mrf.mxu0
    %4635 = vdwg.mxu0
    %v4636 = vld [vmem:[%s18] sm:$0xf]
    %v4637 = vld [vmem:[%s18 + $0x4] sm:$0xf]
    %v4638 = vld [vmem:[%s18 + $0x8] sm:$0xf]
    %v4639 = vld [vmem:[%s18 + $0xc] sm:$0xf]
    %v4640 = vld [vmem:[%s3] sm:$0xff]
    %v4641 = vld [vmem:[%s3 + $0x8] sm:$0xff]
    %v4642 = vld [vmem:[%s3 + $0x10] sm:$0xff]
    %v4643 = vld [vmem:[%s3 + $0x18] sm:$0xff]
    %v4644 = vpack.c.bf16 %v4641, %v4640
    %v4645 = vpack.c.bf16 %v4643, %v4642
    %v4650 = vunpack.c.l.b16 %v4636
    %v4651 = vunpack.c.l.b16 %v4637
    %v4652 = vunpack.c.l.b16 %v4638
    %v4653 = vunpack.c.l.b16 %v4639
    %v4654 = vpack.c.b16 %v4651, %v4650
    %v4655 = vpack.c.b16 %v4653, %v4652
    %v4657 = vsel %vm646, %v4654, 0
    %v4660 = vsel %vm646, %v4655, 0
    %4662 = vmatpush.bf16.msra.mxu0 0
    %4663 = vmatpush.bf16.msra.mxu0 0
    %4664 = vmatpush.bf16.msra.mxu0 0
    %4665 = vmatpush.bf16.msra.mxu0 0
    %4666 = vmatpush.bf16.msra.mxu0 0
    %4667 = vmatpush.bf16.msra.mxu0 0
    %4668 = vmatpush.bf16.msra.mxu0 %v4645
    %4669 = vmatpush.bf16.msra.mxu0 %v4644
    %4670 = vmatmul.bf16.gmra.mxu0 %v4657
    %v4671 = vpop.f32.mrf.mxu0
    %v4672 = vadd.f32 0.0, %v4671
    %v4673 = vpop.f32.mrf.mxu0
    %v4674 = vadd.f32 0.0, %v4673
    %4675 = vmatmul.bf16.gmra.mxu0 %v4660
    %v4676 = vpop.f32.mrf.mxu0
    %v4677 = vadd.f32 0.0, %v4676
    %v4678 = vpop.f32.mrf.mxu0
    %v4679 = vadd.f32 0.0, %v4678
    %4680 = vdwg.mxu0
    %v4681 = vpack.c.bf16 %v4633, %v4633
    %v4682 = vpack.c.bf16 %v4538, %v4536
    %v4683 = vpack.c.bf16 %v4557, %v4555
    %v4684 = vpack.c.bf16 %v4543, %v4541
    %v4685 = vpack.c.bf16 %v4562, %v4560
    %v4687 = vsel %vm646, %v4681, 0
    %4689 = vmatpush.bf16.msra.mxu0 0
    %4690 = vmatpush.bf16.msra.mxu0 0
    %4691 = vmatpush.bf16.msra.mxu0 0
    %4692 = vmatpush.bf16.msra.mxu0 0
    %4693 = vmatpush.bf16.msra.mxu0 0
    %4694 = vmatpush.bf16.msra.mxu0 0
    %4695 = vmatpush.bf16.msra.mxu0 %v4684
    %4696 = vmatpush.bf16.msra.mxu0 %v4682
    %4697 = vmatmul.bf16.gmra.mxu0 %v4687
    %v4698 = vpop.f32.mrf.mxu0
    %v4699 = vadd.f32 0.0, %v4698
    %v4700 = vpop.f32.mrf.mxu0
    %4701 = vdwg.mxu0
    %4702 = vmatpush.bf16.msra.mxu0 0
    %4703 = vmatpush.bf16.msra.mxu0 0
    %4704 = vmatpush.bf16.msra.mxu0 0
    %4705 = vmatpush.bf16.msra.mxu0 0
    %4706 = vmatpush.bf16.msra.mxu0 0
    %4707 = vmatpush.bf16.msra.mxu0 0
    %4708 = vmatpush.bf16.msra.mxu0 %v4685
    %4709 = vmatpush.bf16.msra.mxu0 %v4683
    %4710 = vmatmul.bf16.gmra.mxu0 %v4687
    %v4711 = vpop.f32.mrf.mxu0
    %v4712 = vadd.f32 0.0, %v4711
    %v4713 = vpop.f32.mrf.mxu0
    %4714 = vdwg.mxu0
    %v4715 = vmul.f32 %v4699, 0.17677669
    %v4716 = vmul.f32 %v4712, 0.17677669
    %v4717 = vrot.slane %v4715, 4
    %v4718 = vmax.f32 %v4715, %v4717
    %v4719 = vrot.slane %v4718, 2
    %v4720 = vmax.f32 %v4718, %v4719
    %v4721 = vrot.slane %v4720, 1
    %v4722 = vmax.f32 %v4720, %v4721
    %v4723 = vrot.slane %v4716, 4
    %v4724 = vmax.f32 %v4716, %v4723
    %v4725 = vrot.slane %v4724, 2
    %v4726 = vmax.f32 %v4724, %v4725
    %v4727 = vrot.slane %v4726, 1
    %v4728 = vmax.f32 %v4726, %v4727
    %v4729 = vsub.f32 %v4715, %v4722
    %v4730 = vsub.f32 %v4716, %v4728
    %v4731 = vmul.f32 %v4729, 1.442695
    %v4732 = vpow.pop %v4731
    %v4733 = vmul.f32 %v4730, 1.442695
    %v4734 = vpow.pop %v4733
    %v4735 = vrot.slane %v4732, 4
    %v4736 = vadd.f32 %v4732, %v4735
    %v4737 = vrot.slane %v4736, 2
    %v4738 = vadd.f32 %v4736, %v4737
    %v4739 = vrot.slane %v4738, 1
    %v4740 = vadd.f32 %v4738, %v4739
    %v4741 = vrot.slane %v4734, 4
    %v4742 = vadd.f32 %v4734, %v4741
    %v4743 = vrot.slane %v4742, 2
    %v4744 = vadd.f32 %v4742, %v4743
    %v4745 = vrot.slane %v4744, 1
    %v4746 = vadd.f32 %v4744, %v4745
    %v4747 = vrcp.pop %v4740
    %v4748 = vrcp.pop %v4746
    %v4749 = vmul.f32 %v4732, %v4747
    %v4750 = vmul.f32 %v4734, %v4748
    %v4751 = vpack.c.bf16 %v4674, %v4672
    %v4752 = vpack.c.bf16 %v4679, %v4677
    %v4753 = vpack.c.bf16 %v4749, %v4749
    %v4754 = vpack.c.bf16 %v4750, %v4750
    %vm4755 = vcmask 64512
    %v4757 = vsel %vm4755, %v4751, 0
    %v4760 = vsel %vm4755, %v4752, 0
    %v4763 = vsel %vm369, %v4753, 0
    %v4766 = vsel %vm369, %v4754, 0
    %4768 = vmatpush.bf16.msra.mxu0 0
    %4769 = vmatpush.bf16.msra.mxu0 0
    %4770 = vmatpush.bf16.msra.mxu0 0
    %4771 = vmatpush.bf16.msra.mxu0 0
    %4772 = vmatpush.bf16.msra.mxu0 0
    %4773 = vmatpush.bf16.msra.mxu0 0
    %4774 = vmatpush.bf16.msra.mxu0 0
    %4775 = vmatpush.bf16.msra.mxu0 %v4763
    %4776 = vmatmul.bf16.gmra.mxu0 %v4757
    %v4777 = vpop.f32.mrf.mxu0
    %v4778 = vadd.f32 0.0, %v4777
    %v4779 = vpop.f32.mrf.mxu0
    %v4780 = vadd.f32 0.0, %v4779
    %4781 = vmatmul.bf16.gmra.mxu0 %v4760
    %v4782 = vpop.f32.mrf.mxu0
    %v4783 = vadd.f32 0.0, %v4782
    %v4784 = vpop.f32.mrf.mxu0
    %v4785 = vadd.f32 0.0, %v4784
    %4786 = vdwg.mxu0
    %4787 = vmatpush.bf16.msra.mxu0 0
    %4788 = vmatpush.bf16.msra.mxu0 0
    %4789 = vmatpush.bf16.msra.mxu0 0
    %4790 = vmatpush.bf16.msra.mxu0 0
    %4791 = vmatpush.bf16.msra.mxu0 0
    %4792 = vmatpush.bf16.msra.mxu0 0
    %4793 = vmatpush.bf16.msra.mxu0 0
    %4794 = vmatpush.bf16.msra.mxu0 %v4766
    %4795 = vmatmul.bf16.gmra.mxu0 %v4757
    %v4796 = vpop.f32.mrf.mxu0
    %v4797 = vadd.f32 0.0, %v4796
    %v4798 = vpop.f32.mrf.mxu0
    %v4799 = vadd.f32 0.0, %v4798
    %4800 = vmatmul.bf16.gmra.mxu0 %v4760
    %v4801 = vpop.f32.mrf.mxu0
    %v4802 = vadd.f32 0.0, %v4801
    %v4803 = vpop.f32.mrf.mxu0
    %v4804 = vadd.f32 0.0, %v4803
    %4805 = vdwg.mxu0
    %s4806 = scalar_lea.vmem %s2, 8
    %v4807 = vld [vmem:[%s4806] sm:$0xff]
    %v4808 = vpack.c.bf16 %v4807, %v4807
    %v4810 = vsel %vm646, %v4808, 0
    %4812 = vmatpush.bf16.msra.mxu0 0
    %4813 = vmatpush.bf16.msra.mxu0 0
    %4814 = vmatpush.bf16.msra.mxu0 0
    %4815 = vmatpush.bf16.msra.mxu0 0
    %4816 = vmatpush.bf16.msra.mxu0 0
    %4817 = vmatpush.bf16.msra.mxu0 0
    %4818 = vmatpush.bf16.msra.mxu0 %v4617
    %4819 = vmatpush.bf16.msra.mxu0 %v4616
    %4820 = vmatmul.bf16.gmra.mxu0 %v4810
    %v4821 = vpop.f32.mrf.mxu0
    %v4822 = vadd.f32 0.0, %v4821
    %v4823 = vpop.f32.mrf.mxu0
    %4824 = vdwg.mxu0
    %s4825 = scalar_lea.vmem %s3, 32
    %v4826 = vld [vmem:[%s4825] sm:$0xff]
    %v4827 = vld [vmem:[%s4825 + $0x8] sm:$0xff]
    %v4828 = vld [vmem:[%s4825 + $0x10] sm:$0xff]
    %v4829 = vld [vmem:[%s4825 + $0x18] sm:$0xff]
    %v4830 = vpack.c.bf16 %v4827, %v4826
    %v4831 = vpack.c.bf16 %v4829, %v4828
    %4832 = vmatpush.bf16.msra.mxu0 0
    %4833 = vmatpush.bf16.msra.mxu0 0
    %4834 = vmatpush.bf16.msra.mxu0 0
    %4835 = vmatpush.bf16.msra.mxu0 0
    %4836 = vmatpush.bf16.msra.mxu0 0
    %4837 = vmatpush.bf16.msra.mxu0 0
    %4838 = vmatpush.bf16.msra.mxu0 %v4831
    %4839 = vmatpush.bf16.msra.mxu0 %v4830
    %4840 = vmatmul.bf16.gmra.mxu0 %v4657
    %v4841 = vpop.f32.mrf.mxu0
    %v4842 = vadd.f32 0.0, %v4841
    %v4843 = vpop.f32.mrf.mxu0
    %v4844 = vadd.f32 0.0, %v4843
    %4845 = vmatmul.bf16.gmra.mxu0 %v4660
    %v4846 = vpop.f32.mrf.mxu0
    %v4847 = vadd.f32 0.0, %v4846
    %v4848 = vpop.f32.mrf.mxu0
    %v4849 = vadd.f32 0.0, %v4848
    %4850 = vdwg.mxu0
    %v4851 = vpack.c.bf16 %v4822, %v4822
    %v4852 = vpack.c.bf16 %v4576, %v4574
    %v4853 = vpack.c.bf16 %v4595, %v4593
    %v4854 = vpack.c.bf16 %v4581, %v4579
    %v4855 = vpack.c.bf16 %v4600, %v4598
    %v4857 = vsel %vm646, %v4851, 0
    %4859 = vmatpush.bf16.msra.mxu0 0
    %4860 = vmatpush.bf16.msra.mxu0 0
    %4861 = vmatpush.bf16.msra.mxu0 0
    %4862 = vmatpush.bf16.msra.mxu0 0
    %4863 = vmatpush.bf16.msra.mxu0 0
    %4864 = vmatpush.bf16.msra.mxu0 0
    %4865 = vmatpush.bf16.msra.mxu0 %v4854
    %4866 = vmatpush.bf16.msra.mxu0 %v4852
    %4867 = vmatmul.bf16.gmra.mxu0 %v4857
    %v4868 = vpop.f32.mrf.mxu0
    %v4869 = vadd.f32 0.0, %v4868
    %v4870 = vpop.f32.mrf.mxu0
    %4871 = vdwg.mxu0
    %4872 = vmatpush.bf16.msra.mxu0 0
    %4873 = vmatpush.bf16.msra.mxu0 0
    %4874 = vmatpush.bf16.msra.mxu0 0
    %4875 = vmatpush.bf16.msra.mxu0 0
    %4876 = vmatpush.bf16.msra.mxu0 0
    %4877 = vmatpush.bf16.msra.mxu0 0
    %4878 = vmatpush.bf16.msra.mxu0 %v4855
    %4879 = vmatpush.bf16.msra.mxu0 %v4853
    %4880 = vmatmul.bf16.gmra.mxu0 %v4857
    %v4881 = vpop.f32.mrf.mxu0
    %v4882 = vadd.f32 0.0, %v4881
    %v4883 = vpop.f32.mrf.mxu0
    %4884 = vdwg.mxu0
    %v4885 = vmul.f32 %v4869, 0.17677669
    %v4886 = vmul.f32 %v4882, 0.17677669
    %v4887 = vrot.slane %v4885, 4
    %v4888 = vmax.f32 %v4885, %v4887
    %v4889 = vrot.slane %v4888, 2
    %v4890 = vmax.f32 %v4888, %v4889
    %v4891 = vrot.slane %v4890, 1
    %v4892 = vmax.f32 %v4890, %v4891
    %v4893 = vrot.slane %v4886, 4
    %v4894 = vmax.f32 %v4886, %v4893
    %v4895 = vrot.slane %v4894, 2
    %v4896 = vmax.f32 %v4894, %v4895
    %v4897 = vrot.slane %v4896, 1
    %v4898 = vmax.f32 %v4896, %v4897
    %v4899 = vsub.f32 %v4885, %v4892
    %v4900 = vsub.f32 %v4886, %v4898
    %v4901 = vmul.f32 %v4899, 1.442695
    %v4902 = vpow.pop %v4901
    %v4903 = vmul.f32 %v4900, 1.442695
    %v4904 = vpow.pop %v4903
    %v4905 = vrot.slane %v4902, 4
    %v4906 = vadd.f32 %v4902, %v4905
    %v4907 = vrot.slane %v4906, 2
    %v4908 = vadd.f32 %v4906, %v4907
    %v4909 = vrot.slane %v4908, 1
    %v4910 = vadd.f32 %v4908, %v4909
    %v4911 = vrot.slane %v4904, 4
    %v4912 = vadd.f32 %v4904, %v4911
    %v4913 = vrot.slane %v4912, 2
    %v4914 = vadd.f32 %v4912, %v4913
    %v4915 = vrot.slane %v4914, 1
    %v4916 = vadd.f32 %v4914, %v4915
    %v4917 = vrcp.pop %v4910
    %v4918 = vrcp.pop %v4916
    %v4919 = vmul.f32 %v4902, %v4917
    %v4920 = vmul.f32 %v4904, %v4918
    %v4921 = vpack.c.bf16 %v4844, %v4842
    %v4922 = vpack.c.bf16 %v4849, %v4847
    %v4923 = vpack.c.bf16 %v4919, %v4919
    %v4924 = vpack.c.bf16 %v4920, %v4920
    %v4926 = vsel %vm4755, %v4921, 0
    %v4929 = vsel %vm4755, %v4922, 0
    %v4932 = vsel %vm369, %v4923, 0
    %v4935 = vsel %vm369, %v4924, 0
    %4937 = vmatpush.bf16.msra.mxu0 0
    %4938 = vmatpush.bf16.msra.mxu0 0
    %4939 = vmatpush.bf16.msra.mxu0 0
    %4940 = vmatpush.bf16.msra.mxu0 0
    %4941 = vmatpush.bf16.msra.mxu0 0
    %4942 = vmatpush.bf16.msra.mxu0 0
    %4943 = vmatpush.bf16.msra.mxu0 0
    %4944 = vmatpush.bf16.msra.mxu0 %v4932
    %4945 = vmatmul.bf16.gmra.mxu0 %v4926
    %v4946 = vpop.f32.mrf.mxu0
    %v4947 = vadd.f32 0.0, %v4946
    %v4948 = vpop.f32.mrf.mxu0
    %v4949 = vadd.f32 0.0, %v4948
    %4950 = vmatmul.bf16.gmra.mxu0 %v4929
    %v4951 = vpop.f32.mrf.mxu0
    %v4952 = vadd.f32 0.0, %v4951
    %v4953 = vpop.f32.mrf.mxu0
    %v4954 = vadd.f32 0.0, %v4953
    %4955 = vdwg.mxu0
    %4956 = vmatpush.bf16.msra.mxu0 0
    %4957 = vmatpush.bf16.msra.mxu0 0
    %4958 = vmatpush.bf16.msra.mxu0 0
    %4959 = vmatpush.bf16.msra.mxu0 0
    %4960 = vmatpush.bf16.msra.mxu0 0
    %4961 = vmatpush.bf16.msra.mxu0 0
    %4962 = vmatpush.bf16.msra.mxu0 0
    %4963 = vmatpush.bf16.msra.mxu0 %v4935
    %4964 = vmatmul.bf16.gmra.mxu0 %v4926
    %v4965 = vpop.f32.mrf.mxu0
    %v4966 = vadd.f32 0.0, %v4965
    %v4967 = vpop.f32.mrf.mxu0
    %v4968 = vadd.f32 0.0, %v4967
    %4969 = vmatmul.bf16.gmra.mxu0 %v4929
    %v4970 = vpop.f32.mrf.mxu0
    %v4971 = vadd.f32 0.0, %v4970
    %v4972 = vpop.f32.mrf.mxu0
    %v4973 = vadd.f32 0.0, %v4972
    %4974 = vdwg.mxu0
    %v4975 = vld [vmem:[%s19] sm:$0xf]
    %v4976 = vld [vmem:[%s19 + $0x4] sm:$0xf]
    %v4977 = vld [vmem:[%s19 + $0x8] sm:$0xf]
    %v4978 = vld [vmem:[%s19 + $0xc] sm:$0xf]
    %v4979 = vpack.c.bf16 %v4780, %v4778
    %v4980 = vpack.c.bf16 %v4799, %v4797
    %v4981 = vpack.c.bf16 %v4949, %v4947
    %v4982 = vpack.c.bf16 %v4968, %v4966
    %v4983 = vpack.c.bf16 %v4785, %v4783
    %v4984 = vpack.c.bf16 %v4804, %v4802
    %v4985 = vpack.c.bf16 %v4954, %v4952
    %v4986 = vpack.c.bf16 %v4973, %v4971
    %v4991 = vunpack.c.l.b16 %v4975
    %v4992 = vunpack.c.l.b16 %v4976
    %v4993 = vunpack.c.l.b16 %v4977
    %v4994 = vunpack.c.l.b16 %v4978
    %v4995 = vpack.c.b16 %v4992, %v4991
    %v4996 = vpack.c.b16 %v4994, %v4993
    %v4998 = vsel %vm646, %v4995, 0
    %v5001 = vsel %vm646, %v4996, 0
    %5003 = vmatpush.bf16.msra.mxu0 0
    %5004 = vmatpush.bf16.msra.mxu0 0
    %5005 = vmatpush.bf16.msra.mxu0 0
    %5006 = vmatpush.bf16.msra.mxu0 0
    %5007 = vmatpush.bf16.msra.mxu0 0
    %5008 = vmatpush.bf16.msra.mxu0 0
    %5009 = vmatpush.bf16.msra.mxu0 %v4983
    %5010 = vmatpush.bf16.msra.mxu0 %v4979
    %5011 = vmatmul.bf16.gmra.mxu0 %v4998
    %v5012 = vpop.f32.mrf.mxu0
    %v5013 = vadd.f32 0.0, %v5012
    %v5014 = vpop.f32.mrf.mxu0
    %v5015 = vadd.f32 0.0, %v5014
    %5016 = vmatmul.bf16.gmra.mxu0 %v5001
    %v5017 = vpop.f32.mrf.mxu0
    %v5018 = vadd.f32 0.0, %v5017
    %v5019 = vpop.f32.mrf.mxu0
    %v5020 = vadd.f32 0.0, %v5019
    %5021 = vdwg.mxu0
    %5022 = vmatpush.bf16.msra.mxu0 0
    %5023 = vmatpush.bf16.msra.mxu0 0
    %5024 = vmatpush.bf16.msra.mxu0 0
    %5025 = vmatpush.bf16.msra.mxu0 0
    %5026 = vmatpush.bf16.msra.mxu0 0
    %5027 = vmatpush.bf16.msra.mxu0 0
    %5028 = vmatpush.bf16.msra.mxu0 %v4984
    %5029 = vmatpush.bf16.msra.mxu0 %v4980
    %5030 = vmatmul.bf16.gmra.mxu0 %v4998
    %v5031 = vpop.f32.mrf.mxu0
    %v5032 = vadd.f32 0.0, %v5031
    %v5033 = vpop.f32.mrf.mxu0
    %v5034 = vadd.f32 0.0, %v5033
    %5035 = vmatmul.bf16.gmra.mxu0 %v5001
    %v5036 = vpop.f32.mrf.mxu0
    %v5037 = vadd.f32 0.0, %v5036
    %v5038 = vpop.f32.mrf.mxu0
    %v5039 = vadd.f32 0.0, %v5038
    %5040 = vdwg.mxu0
    %5041 = vmatpush.bf16.msra.mxu0 0
    %5042 = vmatpush.bf16.msra.mxu0 0
    %5043 = vmatpush.bf16.msra.mxu0 0
    %5044 = vmatpush.bf16.msra.mxu0 0
    %5045 = vmatpush.bf16.msra.mxu0 0
    %5046 = vmatpush.bf16.msra.mxu0 0
    %5047 = vmatpush.bf16.msra.mxu0 %v4985
    %5048 = vmatpush.bf16.msra.mxu0 %v4981
    %5049 = vmatmul.bf16.gmra.mxu0 %v4998
    %v5050 = vpop.f32.mrf.mxu0
    %v5051 = vadd.f32 0.0, %v5050
    %v5052 = vpop.f32.mrf.mxu0
    %v5053 = vadd.f32 0.0, %v5052
    %5054 = vmatmul.bf16.gmra.mxu0 %v5001
    %v5055 = vpop.f32.mrf.mxu0
    %v5056 = vadd.f32 0.0, %v5055
    %v5057 = vpop.f32.mrf.mxu0
    %v5058 = vadd.f32 0.0, %v5057
    %5059 = vdwg.mxu0
    %5060 = vmatpush.bf16.msra.mxu0 0
    %5061 = vmatpush.bf16.msra.mxu0 0
    %5062 = vmatpush.bf16.msra.mxu0 0
    %5063 = vmatpush.bf16.msra.mxu0 0
    %5064 = vmatpush.bf16.msra.mxu0 0
    %5065 = vmatpush.bf16.msra.mxu0 0
    %5066 = vmatpush.bf16.msra.mxu0 %v4986
    %5067 = vmatpush.bf16.msra.mxu0 %v4982
    %5068 = vmatmul.bf16.gmra.mxu0 %v4998
    %v5069 = vpop.f32.mrf.mxu0
    %v5070 = vadd.f32 0.0, %v5069
    %v5071 = vpop.f32.mrf.mxu0
    %v5072 = vadd.f32 0.0, %v5071
    %5073 = vmatmul.bf16.gmra.mxu0 %v5001
    %v5074 = vpop.f32.mrf.mxu0
    %v5075 = vadd.f32 0.0, %v5074
    %v5076 = vpop.f32.mrf.mxu0
    %v5077 = vadd.f32 0.0, %v5076
    %5078 = vdwg.mxu0
    %v5079 = vadd.f32 %v4482, %v5013
    %v5080 = vadd.f32 %v4483, %v5032
    %v5081 = vadd.f32 %v4484, %v5051
    %v5082 = vadd.f32 %v4485, %v5070
    %v5083 = vadd.f32 %v4486, %v5015
    %v5084 = vadd.f32 %v4487, %v5034
    %v5085 = vadd.f32 %v4488, %v5053
    %v5086 = vadd.f32 %v4489, %v5072
    %v5087 = vadd.f32 %v4490, %v5018
    %v5088 = vadd.f32 %v4491, %v5037
    %v5089 = vadd.f32 %v4492, %v5056
    %v5090 = vadd.f32 %v4493, %v5075
    %v5091 = vadd.f32 %v4494, %v5020
    %v5092 = vadd.f32 %v4495, %v5039
    %v5093 = vadd.f32 %v4496, %v5058
    %v5094 = vadd.f32 %v4497, %v5077
    %v5095 = vadd.f32 %v5079, %v5080
    %5096 = vadd.xlane.f32.xlu0 %v5095
    %v5097 = vpop.xlane.xlu0 %5096
    %v5098 = vadd.f32 %v5083, %v5084
    %5099 = vadd.xlane.f32.xlu0 %v5098
    %v5100 = vpop.xlane.xlu0 %5099
    %v5101 = vadd.f32 %v5087, %v5088
    %5102 = vadd.xlane.f32.xlu0 %v5101
    %v5103 = vpop.xlane.xlu0 %5102
    %v5104 = vadd.f32 %v5091, %v5092
    %5105 = vadd.xlane.f32.xlu0 %v5104
    %v5106 = vpop.xlane.xlu0 %5105
    %v5107 = vmul.f32 %v5079, %v5079
    %v5108 = vmul.f32 %v5080, %v5080
    %v5109 = vmul.f32 %v5083, %v5083
    %v5110 = vmul.f32 %v5084, %v5084
    %v5111 = vmul.f32 %v5087, %v5087
    %v5112 = vmul.f32 %v5088, %v5088
    %v5113 = vmul.f32 %v5091, %v5091
    %v5114 = vmul.f32 %v5092, %v5092
    %v5115 = vadd.f32 %v5107, %v5108
    %5116 = vadd.xlane.f32.xlu0 %v5115
    %v5117 = vpop.xlane.xlu0 %5116
    %v5118 = vadd.f32 %v5109, %v5110
    %5119 = vadd.xlane.f32.xlu0 %v5118
    %v5120 = vpop.xlane.xlu0 %5119
    %v5121 = vadd.f32 %v5111, %v5112
    %5122 = vadd.xlane.f32.xlu0 %v5121
    %v5123 = vpop.xlane.xlu0 %5122
    %v5124 = vadd.f32 %v5113, %v5114
    %5125 = vadd.xlane.f32.xlu0 %v5124
    %v5126 = vpop.xlane.xlu0 %5125
    %v5127 = vadd.f32 %v5081, %v5082
    %5128 = vadd.xlane.f32.xlu0 %v5127
    %v5129 = vpop.xlane.xlu0 %5128
    %v5130 = vadd.f32 %v5085, %v5086
    %5131 = vadd.xlane.f32.xlu0 %v5130
    %v5132 = vpop.xlane.xlu0 %5131
    %v5133 = vadd.f32 %v5089, %v5090
    %5134 = vadd.xlane.f32.xlu0 %v5133
    %v5135 = vpop.xlane.xlu0 %5134
    %v5136 = vadd.f32 %v5093, %v5094
    %5137 = vadd.xlane.f32.xlu0 %v5136
    %v5138 = vpop.xlane.xlu0 %5137
    %v5139 = vmul.f32 %v5081, %v5081
    %v5140 = vmul.f32 %v5082, %v5082
    %v5141 = vmul.f32 %v5085, %v5085
    %v5142 = vmul.f32 %v5086, %v5086
    %v5143 = vmul.f32 %v5089, %v5089
    %v5144 = vmul.f32 %v5090, %v5090
    %v5145 = vmul.f32 %v5093, %v5093
    %v5146 = vmul.f32 %v5094, %v5094
    %v5147 = vadd.f32 %v5139, %v5140
    %5148 = vadd.xlane.f32.xlu0 %v5147
    %v5149 = vpop.xlane.xlu0 %5148
    %v5150 = vadd.f32 %v5141, %v5142
    %5151 = vadd.xlane.f32.xlu0 %v5150
    %v5152 = vpop.xlane.xlu0 %5151
    %v5153 = vadd.f32 %v5143, %v5144
    %5154 = vadd.xlane.f32.xlu0 %v5153
    %v5155 = vpop.xlane.xlu0 %5154
    %v5156 = vadd.f32 %v5145, %v5146
    %5157 = vadd.xlane.f32.xlu0 %v5156
    %v5158 = vpop.xlane.xlu0 %5157
    %v5159 = vsel %vm631, %v5097, %v5117
    %v5160 = vsel %vm631, %v5100, %v5120
    %v5161 = vsel %vm631, %v5103, %v5123
    %v5162 = vsel %vm631, %v5106, %v5126
    %v5163 = vsel %vm636, %v5159, %v5129
    %v5164 = vsel %vm636, %v5160, %v5132
    %v5165 = vsel %vm636, %v5161, %v5135
    %v5166 = vsel %vm636, %v5162, %v5138
    %v5167 = vsel %vm641, %v5163, %v5149
    %v5168 = vsel %vm641, %v5164, %v5152
    %v5169 = vsel %vm641, %v5165, %v5155
    %v5170 = vsel %vm641, %v5166, %v5158
    %5171 = vmatpush.msra.mxu0 0.0
    %5172 = vmatpush.msra.mxu0 0.0
    %5173 = vmatpush.msra.mxu0 0.0
    %5174 = vmatpush.msra.mxu0 0.0
    %5175 = vmatpush.msra.mxu0 0.0
    %5176 = vmatpush.msra.mxu0 0.0
    %5177 = vmatpush.msra.mxu0 0.0
    %5178 = vmatpush.msra.mxu0 0.0
    %5179 = vmatpush.msra.mxu0 0.0
    %5180 = vmatpush.msra.mxu0 0.0
    %5181 = vmatpush.msra.mxu0 0.0
    %5182 = vmatpush.msra.mxu0 0.0
    %5183 = vmatpush.msra.mxu0 %v5170
    %5184 = vmatpush.msra.mxu0 %v5169
    %5185 = vmatpush.msra.mxu0 %v5168
    %5186 = vmatpush.msra.mxu0 %v5167
    %5187 = vmatmul.f32.gmra.mxu0 %v648
    %v5188 = vpop.f32.mrf.mxu0
    %v5189 = vadd.f32 0.0, %v5188
    %5190 = vmatmul.f32.gmra.mxu0 %v651
    %v5191 = vpop.f32.mrf.mxu0
    %v5192 = vadd.f32 0.0, %v5191
    %5193 = vmatmul.f32.gmra.mxu0 %v654
    %v5194 = vpop.f32.mrf.mxu0
    %v5195 = vadd.f32 0.0, %v5194
    %5196 = vmatmul.f32.gmra.mxu0 %v657
    %v5197 = vpop.f32.mrf.mxu0
    %v5198 = vadd.f32 0.0, %v5197
    %5199 = vdwg.mxu0
    %v5200 = vmul.f32 %v5189, %v5189
    %v5201 = vmul.f32 %v5192, %v5192
    %v5202 = vmul.f32 %v5195, %v5195
    %v5203 = vmul.f32 %v5198, %v5198
    %5208 = vrot.lane.b32.xlu0 %v5200, 1
    %v5209 = vpop.permute.xlu0 %5208
    %5210 = vrot.lane.b32.xlu0 %v5201, 1
    %v5211 = vpop.permute.xlu0 %5210
    %5212 = vrot.lane.b32.xlu0 %v5202, 1
    %v5213 = vpop.permute.xlu0 %5212
    %5214 = vrot.lane.b32.xlu0 %v5203, 1
    %v5215 = vpop.permute.xlu0 %5214
    %v5220 = vsub.f32 %v5189, %v5209
    %v5221 = vsub.f32 %v5192, %v5211
    %v5222 = vsub.f32 %v5195, %v5213
    %v5223 = vsub.f32 %v5198, %v5215
    %5225 = vset.pattern.permute.xlu0 0
    %5226 = vperm.xlu0 %5225, %v5189
    %v5227 = vpop.permute.xlu0 %5226
    %5230 = vset.pattern.permute.xlu0 0
    %5231 = vperm.xlu0 %5230, %v5192
    %v5232 = vpop.permute.xlu0 %5231
    %5235 = vset.pattern.permute.xlu0 0
    %5236 = vperm.xlu0 %5235, %v5195
    %v5237 = vpop.permute.xlu0 %5236
    %5240 = vset.pattern.permute.xlu0 0
    %5241 = vperm.xlu0 %5240, %v5198
    %v5242 = vpop.permute.xlu0 %5241
    %v5244 = vsub.f32 %v5079, %v5227
    %v5245 = vsub.f32 %v5080, %v5227
    %v5246 = vsub.f32 %v5083, %v5232
    %v5247 = vsub.f32 %v5084, %v5232
    %v5248 = vsub.f32 %v5087, %v5237
    %v5249 = vsub.f32 %v5088, %v5237
    %v5250 = vsub.f32 %v5091, %v5242
    %v5251 = vsub.f32 %v5092, %v5242
    %v5252 = vadd.f32 %v5220, 1e-05
    %v5253 = vadd.f32 %v5221, 1e-05
    %v5254 = vadd.f32 %v5222, 1e-05
    %v5255 = vadd.f32 %v5223, 1e-05
    %v5256 = vrsqrt.pop %v5252
    %v5257 = vmul.f32 %v5256, %v5252
    %v5258 = vmul.f32 %v5257, %v5256
    %v5259 = vmul.f32 0.5, %v5258
    %v5260 = vsub.f32 1.5, %v5259
    %v5261 = vmul.f32 %v5256, %v5260
    %vm5262 = vweird.f32 %v5252
    %vm5263 = vweird.f32 %v5256
    %vm5264 = vmor %vm5262, %vm5263
    %v5265 = vsel %vm5264, %v5256, %v5261
    %v5266 = vrsqrt.pop %v5253
    %v5267 = vmul.f32 %v5266, %v5253
    %v5268 = vmul.f32 %v5267, %v5266
    %v5269 = vmul.f32 0.5, %v5268
    %v5270 = vsub.f32 1.5, %v5269
    %v5271 = vmul.f32 %v5266, %v5270
    %vm5272 = vweird.f32 %v5253
    %vm5273 = vweird.f32 %v5266
    %vm5274 = vmor %vm5272, %vm5273
    %v5275 = vsel %vm5274, %v5266, %v5271
    %v5276 = vrsqrt.pop %v5254
    %v5277 = vmul.f32 %v5276, %v5254
    %v5278 = vmul.f32 %v5277, %v5276
    %v5279 = vmul.f32 0.5, %v5278
    %v5280 = vsub.f32 1.5, %v5279
    %v5281 = vmul.f32 %v5276, %v5280
    %vm5282 = vweird.f32 %v5254
    %vm5283 = vweird.f32 %v5276
    %vm5284 = vmor %vm5282, %vm5283
    %v5285 = vsel %vm5284, %v5276, %v5281
    %v5286 = vrsqrt.pop %v5255
    %v5287 = vmul.f32 %v5286, %v5255
    %v5288 = vmul.f32 %v5287, %v5286
    %v5289 = vmul.f32 0.5, %v5288
    %v5290 = vsub.f32 1.5, %v5289
    %v5291 = vmul.f32 %v5286, %v5290
    %vm5292 = vweird.f32 %v5255
    %vm5293 = vweird.f32 %v5286
    %vm5294 = vmor %vm5292, %vm5293
    %v5295 = vsel %vm5294, %v5286, %v5291
    %5297 = vset.pattern.permute.xlu0 1
    %5298 = vperm.xlu0 %5297, %v5265
    %v5299 = vpop.permute.xlu0 %5298
    %5302 = vset.pattern.permute.xlu0 1
    %5303 = vperm.xlu0 %5302, %v5275
    %v5304 = vpop.permute.xlu0 %5303
    %5307 = vset.pattern.permute.xlu0 1
    %5308 = vperm.xlu0 %5307, %v5285
    %v5309 = vpop.permute.xlu0 %5308
    %5312 = vset.pattern.permute.xlu0 1
    %5313 = vperm.xlu0 %5312, %v5295
    %v5314 = vpop.permute.xlu0 %5313
    %v5316 = vmul.f32 %v5244, %v5299
    %v5317 = vmul.f32 %v5245, %v5299
    %v5318 = vmul.f32 %v5246, %v5304
    %v5319 = vmul.f32 %v5247, %v5304
    %v5320 = vmul.f32 %v5248, %v5309
    %v5321 = vmul.f32 %v5249, %v5309
    %v5322 = vmul.f32 %v5250, %v5314
    %v5323 = vmul.f32 %v5251, %v5314
    %5324 = vset.pattern.permute.xlu0 2
    %5325 = vperm.xlu0 %5324, %v5189
    %v5326 = vpop.permute.xlu0 %5325
    %5328 = vset.pattern.permute.xlu0 2
    %5329 = vperm.xlu0 %5328, %v5192
    %v5330 = vpop.permute.xlu0 %5329
    %5332 = vset.pattern.permute.xlu0 2
    %5333 = vperm.xlu0 %5332, %v5195
    %v5334 = vpop.permute.xlu0 %5333
    %5336 = vset.pattern.permute.xlu0 2
    %5337 = vperm.xlu0 %5336, %v5198
    %v5338 = vpop.permute.xlu0 %5337
    %v5340 = vsub.f32 %v5081, %v5326
    %v5341 = vsub.f32 %v5082, %v5326
    %v5342 = vsub.f32 %v5085, %v5330
    %v5343 = vsub.f32 %v5086, %v5330
    %v5344 = vsub.f32 %v5089, %v5334
    %v5345 = vsub.f32 %v5090, %v5334
    %v5346 = vsub.f32 %v5093, %v5338
    %v5347 = vsub.f32 %v5094, %v5338
    %5348 = vset.pattern.permute.xlu0 3
    %5349 = vperm.xlu0 %5348, %v5265
    %v5350 = vpop.permute.xlu0 %5349
    %5352 = vset.pattern.permute.xlu0 3
    %5353 = vperm.xlu0 %5352, %v5275
    %v5354 = vpop.permute.xlu0 %5353
    %5356 = vset.pattern.permute.xlu0 3
    %5357 = vperm.xlu0 %5356, %v5285
    %v5358 = vpop.permute.xlu0 %5357
    %5360 = vset.pattern.permute.xlu0 3
    %5361 = vperm.xlu0 %5360, %v5295
    %v5362 = vpop.permute.xlu0 %5361
    %v5364 = vmul.f32 %v5340, %v5350
    %v5365 = vmul.f32 %v5341, %v5350
    %v5366 = vmul.f32 %v5342, %v5354
    %v5367 = vmul.f32 %v5343, %v5354
    %v5368 = vmul.f32 %v5344, %v5358
    %v5369 = vmul.f32 %v5345, %v5358
    %v5370 = vmul.f32 %v5346, %v5362
    %v5371 = vmul.f32 %v5347, %v5362
    %v5372 = vld [vmem:[%s20] sm:$0xff]
    %v5373 = vld [vmem:[%s20 + $0x8] sm:$0xff]
    %v5374 = vld [vmem:[%s20 + $0x10] sm:$0xff]
    %v5375 = vld [vmem:[%s20 + $0x18] sm:$0xff]
    %5377 = vset.pattern.permute.xlu0 0
    %5378 = vperm.xlu0 %5377, %v5372
    %v5379 = vpop.permute.xlu0 %5378
    %5382 = vset.pattern.permute.xlu0 0
    %5383 = vperm.xlu0 %5382, %v5373
    %v5384 = vpop.permute.xlu0 %5383
    %5387 = vset.pattern.permute.xlu0 0
    %5388 = vperm.xlu0 %5387, %v5374
    %v5389 = vpop.permute.xlu0 %5388
    %5392 = vset.pattern.permute.xlu0 0
    %5393 = vperm.xlu0 %5392, %v5375
    %v5394 = vpop.permute.xlu0 %5393
    %v5396 = vmul.f32 %v5316, %v5379
    %v5397 = vmul.f32 %v5317, %v5379
    %v5398 = vmul.f32 %v5364, %v5379
    %v5399 = vmul.f32 %v5365, %v5379
    %v5400 = vmul.f32 %v5318, %v5384
    %v5401 = vmul.f32 %v5319, %v5384
    %v5402 = vmul.f32 %v5366, %v5384
    %v5403 = vmul.f32 %v5367, %v5384
    %v5404 = vmul.f32 %v5320, %v5389
    %v5405 = vmul.f32 %v5321, %v5389
    %v5406 = vmul.f32 %v5368, %v5389
    %v5407 = vmul.f32 %v5369, %v5389
    %v5408 = vmul.f32 %v5322, %v5394
    %v5409 = vmul.f32 %v5323, %v5394
    %v5410 = vmul.f32 %v5370, %v5394
    %v5411 = vmul.f32 %v5371, %v5394
    %v5412 = vld [vmem:[%s21] sm:$0xff]
    %v5413 = vld [vmem:[%s21 + $0x8] sm:$0xff]
    %v5414 = vld [vmem:[%s21 + $0x10] sm:$0xff]
    %v5415 = vld [vmem:[%s21 + $0x18] sm:$0xff]
    %5417 = vset.pattern.permute.xlu0 0
    %5418 = vperm.xlu0 %5417, %v5412
    %v5419 = vpop.permute.xlu0 %5418
    %5422 = vset.pattern.permute.xlu0 0
    %5423 = vperm.xlu0 %5422, %v5413
    %v5424 = vpop.permute.xlu0 %5423
    %5427 = vset.pattern.permute.xlu0 0
    %5428 = vperm.xlu0 %5427, %v5414
    %v5429 = vpop.permute.xlu0 %5428
    %5432 = vset.pattern.permute.xlu0 0
    %5433 = vperm.xlu0 %5432, %v5415
    %v5434 = vpop.permute.xlu0 %5433
    %v5436 = vadd.f32 %v5396, %v5419
    %v5437 = vadd.f32 %v5397, %v5419
    %v5438 = vadd.f32 %v5398, %v5419
    %v5439 = vadd.f32 %v5399, %v5419
    %v5440 = vadd.f32 %v5400, %v5424
    %v5441 = vadd.f32 %v5401, %v5424
    %v5442 = vadd.f32 %v5402, %v5424
    %v5443 = vadd.f32 %v5403, %v5424
    %v5444 = vadd.f32 %v5404, %v5429
    %v5445 = vadd.f32 %v5405, %v5429
    %v5446 = vadd.f32 %v5406, %v5429
    %v5447 = vadd.f32 %v5407, %v5429
    %v5448 = vadd.f32 %v5408, %v5434
    %v5449 = vadd.f32 %v5409, %v5434
    %v5450 = vadd.f32 %v5410, %v5434
    %v5451 = vadd.f32 %v5411, %v5434
    %v5452 = vxor.u32 %v5436, 2147483648
    %v5453 = vxor.u32 %v5437, 2147483648
    %v5454 = vxor.u32 %v5438, 2147483648
    %v5455 = vxor.u32 %v5439, 2147483648
    %v5456 = vxor.u32 %v5440, 2147483648
    %v5457 = vxor.u32 %v5441, 2147483648
    %v5458 = vxor.u32 %v5442, 2147483648
    %v5459 = vxor.u32 %v5443, 2147483648
    %v5460 = vxor.u32 %v5444, 2147483648
    %v5461 = vxor.u32 %v5445, 2147483648
    %v5462 = vxor.u32 %v5446, 2147483648
    %v5463 = vxor.u32 %v5447, 2147483648
    %v5464 = vxor.u32 %v5448, 2147483648
    %v5465 = vxor.u32 %v5449, 2147483648
    %v5466 = vxor.u32 %v5450, 2147483648
    %v5467 = vxor.u32 %v5451, 2147483648
    %v5468 = vmul.f32 %v5452, 1.442695
    %v5469 = vpow.pop %v5468
    %v5470 = vmul.f32 %v5453, 1.442695
    %v5471 = vpow.pop %v5470
    %v5472 = vmul.f32 %v5454, 1.442695
    %v5473 = vpow.pop %v5472
    %v5474 = vmul.f32 %v5455, 1.442695
    %v5475 = vpow.pop %v5474
    %v5476 = vmul.f32 %v5456, 1.442695
    %v5477 = vpow.pop %v5476
    %v5478 = vmul.f32 %v5457, 1.442695
    %v5479 = vpow.pop %v5478
    %v5480 = vmul.f32 %v5458, 1.442695
    %v5481 = vpow.pop %v5480
    %v5482 = vmul.f32 %v5459, 1.442695
    %v5483 = vpow.pop %v5482
    %v5484 = vmul.f32 %v5460, 1.442695
    %v5485 = vpow.pop %v5484
    %v5486 = vmul.f32 %v5461, 1.442695
    %v5487 = vpow.pop %v5486
    %v5488 = vmul.f32 %v5462, 1.442695
    %v5489 = vpow.pop %v5488
    %v5490 = vmul.f32 %v5463, 1.442695
    %v5491 = vpow.pop %v5490
    %v5492 = vmul.f32 %v5464, 1.442695
    %v5493 = vpow.pop %v5492
    %v5494 = vmul.f32 %v5465, 1.442695
    %v5495 = vpow.pop %v5494
    %v5496 = vmul.f32 %v5466, 1.442695
    %v5497 = vpow.pop %v5496
    %v5498 = vmul.f32 %v5467, 1.442695
    %v5499 = vpow.pop %v5498
    %v5500 = vadd.f32 %v5469, 1.0
    %v5501 = vadd.f32 %v5471, 1.0
    %v5502 = vadd.f32 %v5473, 1.0
    %v5503 = vadd.f32 %v5475, 1.0
    %v5504 = vadd.f32 %v5477, 1.0
    %v5505 = vadd.f32 %v5479, 1.0
    %v5506 = vadd.f32 %v5481, 1.0
    %v5507 = vadd.f32 %v5483, 1.0
    %v5508 = vadd.f32 %v5485, 1.0
    %v5509 = vadd.f32 %v5487, 1.0
    %v5510 = vadd.f32 %v5489, 1.0
    %v5511 = vadd.f32 %v5491, 1.0
    %v5512 = vadd.f32 %v5493, 1.0
    %v5513 = vadd.f32 %v5495, 1.0
    %v5514 = vadd.f32 %v5497, 1.0
    %v5515 = vadd.f32 %v5499, 1.0
    %v5516 = vrcp.pop %v5500
    %v5517 = vmul.f32 %v5500, %v5516
    %v5518 = vsub.f32 1.0, %v5517
    %v5519 = vmul.f32 %v5516, %v5518
    %v5520 = vadd.f32 %v5516, %v5519
    %vm5521 = vweird.f32 %v5500
    %vm5522 = vweird.f32 %v5516
    %vm5523 = vmor %vm5521, %vm5522
    %v5524 = vsel %vm5523, %v5516, %v5520
    %v5525 = vand.u32 2147483647, %v5500
    %vm5526 = vcmp.eq.f32.partialorder %v5525, 8.507059e+37
    %v5527 = vand.u32 %v5500, 2147483648
    %v5528 = vor.u32 1.1754944e-38, %v5527
    %v5529 = vsel %vm5526, %v5528, %v5524
    %v5530 = vmul.f32 1.0, %v5529
    %v5531 = vrcp.pop %v5501
    %v5532 = vmul.f32 %v5501, %v5531
    %v5533 = vsub.f32 1.0, %v5532
    %v5534 = vmul.f32 %v5531, %v5533
    %v5535 = vadd.f32 %v5531, %v5534
    %vm5536 = vweird.f32 %v5501
    %vm5537 = vweird.f32 %v5531
    %vm5538 = vmor %vm5536, %vm5537
    %v5539 = vsel %vm5538, %v5531, %v5535
    %v5540 = vand.u32 2147483647, %v5501
    %vm5541 = vcmp.eq.f32.partialorder %v5540, 8.507059e+37
    %v5542 = vand.u32 %v5501, 2147483648
    %v5543 = vor.u32 1.1754944e-38, %v5542
    %v5544 = vsel %vm5541, %v5543, %v5539
    %v5545 = vmul.f32 1.0, %v5544
    %v5546 = vrcp.pop %v5502
    %v5547 = vmul.f32 %v5502, %v5546
    %v5548 = vsub.f32 1.0, %v5547
    %v5549 = vmul.f32 %v5546, %v5548
    %v5550 = vadd.f32 %v5546, %v5549
    %vm5551 = vweird.f32 %v5502
    %vm5552 = vweird.f32 %v5546
    %vm5553 = vmor %vm5551, %vm5552
    %v5554 = vsel %vm5553, %v5546, %v5550
    %v5555 = vand.u32 2147483647, %v5502
    %vm5556 = vcmp.eq.f32.partialorder %v5555, 8.507059e+37
    %v5557 = vand.u32 %v5502, 2147483648
    %v5558 = vor.u32 1.1754944e-38, %v5557
    %v5559 = vsel %vm5556, %v5558, %v5554
    %v5560 = vmul.f32 1.0, %v5559
    %v5561 = vrcp.pop %v5503
    %v5562 = vmul.f32 %v5503, %v5561
    %v5563 = vsub.f32 1.0, %v5562
    %v5564 = vmul.f32 %v5561, %v5563
    %v5565 = vadd.f32 %v5561, %v5564
    %vm5566 = vweird.f32 %v5503
    %vm5567 = vweird.f32 %v5561
    %vm5568 = vmor %vm5566, %vm5567
    %v5569 = vsel %vm5568, %v5561, %v5565
    %v5570 = vand.u32 2147483647, %v5503
    %vm5571 = vcmp.eq.f32.partialorder %v5570, 8.507059e+37
    %v5572 = vand.u32 %v5503, 2147483648
    %v5573 = vor.u32 1.1754944e-38, %v5572
    %v5574 = vsel %vm5571, %v5573, %v5569
    %v5575 = vmul.f32 1.0, %v5574
    %v5576 = vrcp.pop %v5504
    %v5577 = vmul.f32 %v5504, %v5576
    %v5578 = vsub.f32 1.0, %v5577
    %v5579 = vmul.f32 %v5576, %v5578
    %v5580 = vadd.f32 %v5576, %v5579
    %vm5581 = vweird.f32 %v5504
    %vm5582 = vweird.f32 %v5576
    %vm5583 = vmor %vm5581, %vm5582
    %v5584 = vsel %vm5583, %v5576, %v5580
    %v5585 = vand.u32 2147483647, %v5504
    %vm5586 = vcmp.eq.f32.partialorder %v5585, 8.507059e+37
    %v5587 = vand.u32 %v5504, 2147483648
    %v5588 = vor.u32 1.1754944e-38, %v5587
    %v5589 = vsel %vm5586, %v5588, %v5584
    %v5590 = vmul.f32 1.0, %v5589
    %v5591 = vrcp.pop %v5505
    %v5592 = vmul.f32 %v5505, %v5591
    %v5593 = vsub.f32 1.0, %v5592
    %v5594 = vmul.f32 %v5591, %v5593
    %v5595 = vadd.f32 %v5591, %v5594
    %vm5596 = vweird.f32 %v5505
    %vm5597 = vweird.f32 %v5591
    %vm5598 = vmor %vm5596, %vm5597
    %v5599 = vsel %vm5598, %v5591, %v5595
    %v5600 = vand.u32 2147483647, %v5505
    %vm5601 = vcmp.eq.f32.partialorder %v5600, 8.507059e+37
    %v5602 = vand.u32 %v5505, 2147483648
    %v5603 = vor.u32 1.1754944e-38, %v5602
    %v5604 = vsel %vm5601, %v5603, %v5599
    %v5605 = vmul.f32 1.0, %v5604
    %v5606 = vrcp.pop %v5506
    %v5607 = vmul.f32 %v5506, %v5606
    %v5608 = vsub.f32 1.0, %v5607
    %v5609 = vmul.f32 %v5606, %v5608
    %v5610 = vadd.f32 %v5606, %v5609
    %vm5611 = vweird.f32 %v5506
    %vm5612 = vweird.f32 %v5606
    %vm5613 = vmor %vm5611, %vm5612
    %v5614 = vsel %vm5613, %v5606, %v5610
    %v5615 = vand.u32 2147483647, %v5506
    %vm5616 = vcmp.eq.f32.partialorder %v5615, 8.507059e+37
    %v5617 = vand.u32 %v5506, 2147483648
    %v5618 = vor.u32 1.1754944e-38, %v5617
    %v5619 = vsel %vm5616, %v5618, %v5614
    %v5620 = vmul.f32 1.0, %v5619
    %v5621 = vrcp.pop %v5507
    %v5622 = vmul.f32 %v5507, %v5621
    %v5623 = vsub.f32 1.0, %v5622
    %v5624 = vmul.f32 %v5621, %v5623
    %v5625 = vadd.f32 %v5621, %v5624
    %vm5626 = vweird.f32 %v5507
    %vm5627 = vweird.f32 %v5621
    %vm5628 = vmor %vm5626, %vm5627
    %v5629 = vsel %vm5628, %v5621, %v5625
    %v5630 = vand.u32 2147483647, %v5507
    %vm5631 = vcmp.eq.f32.partialorder %v5630, 8.507059e+37
    %v5632 = vand.u32 %v5507, 2147483648
    %v5633 = vor.u32 1.1754944e-38, %v5632
    %v5634 = vsel %vm5631, %v5633, %v5629
    %v5635 = vmul.f32 1.0, %v5634
    %v5636 = vrcp.pop %v5508
    %v5637 = vmul.f32 %v5508, %v5636
    %v5638 = vsub.f32 1.0, %v5637
    %v5639 = vmul.f32 %v5636, %v5638
    %v5640 = vadd.f32 %v5636, %v5639
    %vm5641 = vweird.f32 %v5508
    %vm5642 = vweird.f32 %v5636
    %vm5643 = vmor %vm5641, %vm5642
    %v5644 = vsel %vm5643, %v5636, %v5640
    %v5645 = vand.u32 2147483647, %v5508
    %vm5646 = vcmp.eq.f32.partialorder %v5645, 8.507059e+37
    %v5647 = vand.u32 %v5508, 2147483648
    %v5648 = vor.u32 1.1754944e-38, %v5647
    %v5649 = vsel %vm5646, %v5648, %v5644
    %v5650 = vmul.f32 1.0, %v5649
    %v5651 = vrcp.pop %v5509
    %v5652 = vmul.f32 %v5509, %v5651
    %v5653 = vsub.f32 1.0, %v5652
    %v5654 = vmul.f32 %v5651, %v5653
    %v5655 = vadd.f32 %v5651, %v5654
    %vm5656 = vweird.f32 %v5509
    %vm5657 = vweird.f32 %v5651
    %vm5658 = vmor %vm5656, %vm5657
    %v5659 = vsel %vm5658, %v5651, %v5655
    %v5660 = vand.u32 2147483647, %v5509
    %vm5661 = vcmp.eq.f32.partialorder %v5660, 8.507059e+37
    %v5662 = vand.u32 %v5509, 2147483648
    %v5663 = vor.u32 1.1754944e-38, %v5662
    %v5664 = vsel %vm5661, %v5663, %v5659
    %v5665 = vmul.f32 1.0, %v5664
    %v5666 = vrcp.pop %v5510
    %v5667 = vmul.f32 %v5510, %v5666
    %v5668 = vsub.f32 1.0, %v5667
    %v5669 = vmul.f32 %v5666, %v5668
    %v5670 = vadd.f32 %v5666, %v5669
    %vm5671 = vweird.f32 %v5510
    %vm5672 = vweird.f32 %v5666
    %vm5673 = vmor %vm5671, %vm5672
    %v5674 = vsel %vm5673, %v5666, %v5670
    %v5675 = vand.u32 2147483647, %v5510
    %vm5676 = vcmp.eq.f32.partialorder %v5675, 8.507059e+37
    %v5677 = vand.u32 %v5510, 2147483648
    %v5678 = vor.u32 1.1754944e-38, %v5677
    %v5679 = vsel %vm5676, %v5678, %v5674
    %v5680 = vmul.f32 1.0, %v5679
    %v5681 = vrcp.pop %v5511
    %v5682 = vmul.f32 %v5511, %v5681
    %v5683 = vsub.f32 1.0, %v5682
    %v5684 = vmul.f32 %v5681, %v5683
    %v5685 = vadd.f32 %v5681, %v5684
    %vm5686 = vweird.f32 %v5511
    %vm5687 = vweird.f32 %v5681
    %vm5688 = vmor %vm5686, %vm5687
    %v5689 = vsel %vm5688, %v5681, %v5685
    %v5690 = vand.u32 2147483647, %v5511
    %vm5691 = vcmp.eq.f32.partialorder %v5690, 8.507059e+37
    %v5692 = vand.u32 %v5511, 2147483648
    %v5693 = vor.u32 1.1754944e-38, %v5692
    %v5694 = vsel %vm5691, %v5693, %v5689
    %v5695 = vmul.f32 1.0, %v5694
    %v5696 = vrcp.pop %v5512
    %v5697 = vmul.f32 %v5512, %v5696
    %v5698 = vsub.f32 1.0, %v5697
    %v5699 = vmul.f32 %v5696, %v5698
    %v5700 = vadd.f32 %v5696, %v5699
    %vm5701 = vweird.f32 %v5512
    %vm5702 = vweird.f32 %v5696
    %vm5703 = vmor %vm5701, %vm5702
    %v5704 = vsel %vm5703, %v5696, %v5700
    %v5705 = vand.u32 2147483647, %v5512
    %vm5706 = vcmp.eq.f32.partialorder %v5705, 8.507059e+37
    %v5707 = vand.u32 %v5512, 2147483648
    %v5708 = vor.u32 1.1754944e-38, %v5707
    %v5709 = vsel %vm5706, %v5708, %v5704
    %v5710 = vmul.f32 1.0, %v5709
    %v5711 = vrcp.pop %v5513
    %v5712 = vmul.f32 %v5513, %v5711
    %v5713 = vsub.f32 1.0, %v5712
    %v5714 = vmul.f32 %v5711, %v5713
    %v5715 = vadd.f32 %v5711, %v5714
    %vm5716 = vweird.f32 %v5513
    %vm5717 = vweird.f32 %v5711
    %vm5718 = vmor %vm5716, %vm5717
    %v5719 = vsel %vm5718, %v5711, %v5715
    %v5720 = vand.u32 2147483647, %v5513
    %vm5721 = vcmp.eq.f32.partialorder %v5720, 8.507059e+37
    %v5722 = vand.u32 %v5513, 2147483648
    %v5723 = vor.u32 1.1754944e-38, %v5722
    %v5724 = vsel %vm5721, %v5723, %v5719
    %v5725 = vmul.f32 1.0, %v5724
    %v5726 = vrcp.pop %v5514
    %v5727 = vmul.f32 %v5514, %v5726
    %v5728 = vsub.f32 1.0, %v5727
    %v5729 = vmul.f32 %v5726, %v5728
    %v5730 = vadd.f32 %v5726, %v5729
    %vm5731 = vweird.f32 %v5514
    %vm5732 = vweird.f32 %v5726
    %vm5733 = vmor %vm5731, %vm5732
    %v5734 = vsel %vm5733, %v5726, %v5730
    %v5735 = vand.u32 2147483647, %v5514
    %vm5736 = vcmp.eq.f32.partialorder %v5735, 8.507059e+37
    %v5737 = vand.u32 %v5514, 2147483648
    %v5738 = vor.u32 1.1754944e-38, %v5737
    %v5739 = vsel %vm5736, %v5738, %v5734
    %v5740 = vmul.f32 1.0, %v5739
    %v5741 = vrcp.pop %v5515
    %v5742 = vmul.f32 %v5515, %v5741
    %v5743 = vsub.f32 1.0, %v5742
    %v5744 = vmul.f32 %v5741, %v5743
    %v5745 = vadd.f32 %v5741, %v5744
    %vm5746 = vweird.f32 %v5515
    %vm5747 = vweird.f32 %v5741
    %vm5748 = vmor %vm5746, %vm5747
    %v5749 = vsel %vm5748, %v5741, %v5745
    %v5750 = vand.u32 2147483647, %v5515
    %vm5751 = vcmp.eq.f32.partialorder %v5750, 8.507059e+37
    %v5752 = vand.u32 %v5515, 2147483648
    %v5753 = vor.u32 1.1754944e-38, %v5752
    %v5754 = vsel %vm5751, %v5753, %v5749
    %v5755 = vmul.f32 1.0, %v5754
    %v5756 = vmul.f32 %v5436, %v5530
    %v5757 = vmul.f32 %v5437, %v5545
    %v5758 = vmul.f32 %v5438, %v5560
    %v5759 = vmul.f32 %v5439, %v5575
    %v5760 = vmul.f32 %v5440, %v5590
    %v5761 = vmul.f32 %v5441, %v5605
    %v5762 = vmul.f32 %v5442, %v5620
    %v5763 = vmul.f32 %v5443, %v5635
    %v5764 = vmul.f32 %v5444, %v5650
    %v5765 = vmul.f32 %v5445, %v5665
    %v5766 = vmul.f32 %v5446, %v5680
    %v5767 = vmul.f32 %v5447, %v5695
    %v5768 = vmul.f32 %v5448, %v5710
    %v5769 = vmul.f32 %v5449, %v5725
    %v5770 = vmul.f32 %v5450, %v5740
    %v5771 = vmul.f32 %v5451, %v5755
    %5772 = vrot.lane.b32.xlu0 %v5756, 17
    %v5773 = vpop.permute.xlu0 %5772
    %5774 = vrot.lane.b32.xlu0 %v5760, 17
    %v5775 = vpop.permute.xlu0 %5774
    %5776 = vrot.lane.b32.xlu0 %v5764, 17
    %v5777 = vpop.permute.xlu0 %5776
    %5778 = vrot.lane.b32.xlu0 %v5768, 17
    %v5779 = vpop.permute.xlu0 %5778
    %5780 = vrot.lane.b32.xlu0 %v5757, 17
    %v5781 = vpop.permute.xlu0 %5780
    %5782 = vrot.lane.b32.xlu0 %v5761, 17
    %v5783 = vpop.permute.xlu0 %5782
    %5784 = vrot.lane.b32.xlu0 %v5765, 17
    %v5785 = vpop.permute.xlu0 %5784
    %5786 = vrot.lane.b32.xlu0 %v5769, 17
    %v5787 = vpop.permute.xlu0 %5786
    %5788 = vrot.lane.b32.xlu0 %v5758, 17
    %v5789 = vpop.permute.xlu0 %5788
    %5790 = vrot.lane.b32.xlu0 %v5762, 17
    %v5791 = vpop.permute.xlu0 %5790
    %5792 = vrot.lane.b32.xlu0 %v5766, 17
    %v5793 = vpop.permute.xlu0 %5792
    %5794 = vrot.lane.b32.xlu0 %v5770, 17
    %v5795 = vpop.permute.xlu0 %5794
    %5796 = vrot.lane.b32.xlu0 %v5759, 17
    %v5797 = vpop.permute.xlu0 %5796
    %5798 = vrot.lane.b32.xlu0 %v5763, 17
    %v5799 = vpop.permute.xlu0 %5798
    %5800 = vrot.lane.b32.xlu0 %v5767, 17
    %v5801 = vpop.permute.xlu0 %5800
    %5802 = vrot.lane.b32.xlu0 %v5771, 17
    %v5803 = vpop.permute.xlu0 %5802
    %v5804 = vsel %vm101, %v5789, %v5797
    %v5805 = vsel %vm101, %v5791, %v5799
    %v5806 = vsel %vm101, %v5793, %v5801
    %v5807 = vsel %vm101, %v5795, %v5803
    %v5808 = vsel %vm101, %v5781, %v5789
    %v5809 = vsel %vm101, %v5783, %v5791
    %v5810 = vsel %vm101, %v5785, %v5793
    %v5811 = vsel %vm101, %v5787, %v5795
    %v5812 = vsel %vm101, %v5773, %v5781
    %v5813 = vsel %vm101, %v5775, %v5783
    %v5814 = vsel %vm101, %v5777, %v5785
    %v5815 = vsel %vm101, %v5779, %v5787
    %v5816 = vsel %vm101, %v5797, %v5773
    %v5817 = vsel %vm101, %v5799, %v5775
    %v5818 = vsel %vm101, %v5801, %v5777
    %v5819 = vsel %vm101, %v5803, %v5779
    %v5820 = vmul.f32 %v5816, %v106
    %v5821 = vmul.f32 %v5812, %v107
    %v5822 = vmul.f32 %v5808, %v108
    %v5823 = vmul.f32 %v5804, %v109
    %v5824 = vmul.f32 %v5817, %v106
    %v5825 = vmul.f32 %v5813, %v107
    %v5826 = vmul.f32 %v5809, %v108
    %v5827 = vmul.f32 %v5805, %v109
    %v5828 = vmul.f32 %v5818, %v106
    %v5829 = vmul.f32 %v5814, %v107
    %v5830 = vmul.f32 %v5810, %v108
    %v5831 = vmul.f32 %v5806, %v109
    %v5832 = vmul.f32 %v5819, %v106
    %v5833 = vmul.f32 %v5815, %v107
    %v5834 = vmul.f32 %v5811, %v108
    %v5835 = vmul.f32 %v5807, %v109
    %v5836 = vpack.c.bf16 %v5821, %v5820
    %v5837 = vpack.c.bf16 %v5823, %v5822
    %v5838 = vpack.c.bf16 %v5825, %v5824
    %v5839 = vpack.c.bf16 %v5827, %v5826
    %v5840 = vpack.c.bf16 %v5829, %v5828
    %v5841 = vpack.c.bf16 %v5831, %v5830
    %v5842 = vpack.c.bf16 %v5833, %v5832
    %v5843 = vpack.c.bf16 %v5835, %v5834
    %5844 = vrot.lane.b32.xlu0 %v5756, 16
    %v5845 = vpop.permute.xlu0 %5844
    %5846 = vrot.lane.b32.xlu0 %v5760, 16
    %v5847 = vpop.permute.xlu0 %5846
    %5848 = vrot.lane.b32.xlu0 %v5764, 16
    %v5849 = vpop.permute.xlu0 %5848
    %5850 = vrot.lane.b32.xlu0 %v5768, 16
    %v5851 = vpop.permute.xlu0 %5850
    %5852 = vrot.lane.b32.xlu0 %v5757, 16
    %v5853 = vpop.permute.xlu0 %5852
    %5854 = vrot.lane.b32.xlu0 %v5761, 16
    %v5855 = vpop.permute.xlu0 %5854
    %5856 = vrot.lane.b32.xlu0 %v5765, 16
    %v5857 = vpop.permute.xlu0 %5856
    %5858 = vrot.lane.b32.xlu0 %v5769, 16
    %v5859 = vpop.permute.xlu0 %5858
    %5860 = vrot.lane.b32.xlu0 %v5758, 16
    %v5861 = vpop.permute.xlu0 %5860
    %5862 = vrot.lane.b32.xlu0 %v5762, 16
    %v5863 = vpop.permute.xlu0 %5862
    %5864 = vrot.lane.b32.xlu0 %v5766, 16
    %v5865 = vpop.permute.xlu0 %5864
    %5866 = vrot.lane.b32.xlu0 %v5770, 16
    %v5867 = vpop.permute.xlu0 %5866
    %5868 = vrot.lane.b32.xlu0 %v5759, 16
    %v5869 = vpop.permute.xlu0 %5868
    %5870 = vrot.lane.b32.xlu0 %v5763, 16
    %v5871 = vpop.permute.xlu0 %5870
    %5872 = vrot.lane.b32.xlu0 %v5767, 16
    %v5873 = vpop.permute.xlu0 %5872
    %5874 = vrot.lane.b32.xlu0 %v5771, 16
    %v5875 = vpop.permute.xlu0 %5874
    %v5876 = vsel %vm124, %v5861, %v5869
    %v5877 = vsel %vm124, %v5863, %v5871
    %v5878 = vsel %vm124, %v5865, %v5873
    %v5879 = vsel %vm124, %v5867, %v5875
    %v5880 = vsel %vm124, %v5853, %v5861
    %v5881 = vsel %vm124, %v5855, %v5863
    %v5882 = vsel %vm124, %v5857, %v5865
    %v5883 = vsel %vm124, %v5859, %v5867
    %v5884 = vsel %vm124, %v5845, %v5853
    %v5885 = vsel %vm124, %v5847, %v5855
    %v5886 = vsel %vm124, %v5849, %v5857
    %v5887 = vsel %vm124, %v5851, %v5859
    %v5888 = vsel %vm124, %v5869, %v5845
    %v5889 = vsel %vm124, %v5871, %v5847
    %v5890 = vsel %vm124, %v5873, %v5849
    %v5891 = vsel %vm124, %v5875, %v5851
    %v5892 = vmul.f32 %v5888, %v129
    %v5893 = vmul.f32 %v5884, %v130
    %v5894 = vmul.f32 %v5880, %v131
    %v5895 = vmul.f32 %v5876, %v132
    %v5896 = vmul.f32 %v5889, %v129
    %v5897 = vmul.f32 %v5885, %v130
    %v5898 = vmul.f32 %v5881, %v131
    %v5899 = vmul.f32 %v5877, %v132
    %v5900 = vmul.f32 %v5890, %v129
    %v5901 = vmul.f32 %v5886, %v130
    %v5902 = vmul.f32 %v5882, %v131
    %v5903 = vmul.f32 %v5878, %v132
    %v5904 = vmul.f32 %v5891, %v129
    %v5905 = vmul.f32 %v5887, %v130
    %v5906 = vmul.f32 %v5883, %v131
    %v5907 = vmul.f32 %v5879, %v132
    %v5908 = vpack.c.bf16 %v5893, %v5892
    %v5909 = vpack.c.bf16 %v5895, %v5894
    %v5910 = vpack.c.bf16 %v5897, %v5896
    %v5911 = vpack.c.bf16 %v5899, %v5898
    %v5912 = vpack.c.bf16 %v5901, %v5900
    %v5913 = vpack.c.bf16 %v5903, %v5902
    %v5914 = vpack.c.bf16 %v5905, %v5904
    %v5915 = vpack.c.bf16 %v5907, %v5906
    %5916 = vrot.lane.b32.xlu0 %v5756, 15
    %v5917 = vpop.permute.xlu0 %5916
    %5918 = vrot.lane.b32.xlu0 %v5760, 15
    %v5919 = vpop.permute.xlu0 %5918
    %5920 = vrot.lane.b32.xlu0 %v5764, 15
    %v5921 = vpop.permute.xlu0 %5920
    %5922 = vrot.lane.b32.xlu0 %v5768, 15
    %v5923 = vpop.permute.xlu0 %5922
    %5924 = vrot.lane.b32.xlu0 %v5757, 15
    %v5925 = vpop.permute.xlu0 %5924
    %5926 = vrot.lane.b32.xlu0 %v5761, 15
    %v5927 = vpop.permute.xlu0 %5926
    %5928 = vrot.lane.b32.xlu0 %v5765, 15
    %v5929 = vpop.permute.xlu0 %5928
    %5930 = vrot.lane.b32.xlu0 %v5769, 15
    %v5931 = vpop.permute.xlu0 %5930
    %5932 = vrot.lane.b32.xlu0 %v5758, 15
    %v5933 = vpop.permute.xlu0 %5932
    %5934 = vrot.lane.b32.xlu0 %v5762, 15
    %v5935 = vpop.permute.xlu0 %5934
    %5936 = vrot.lane.b32.xlu0 %v5766, 15
    %v5937 = vpop.permute.xlu0 %5936
    %5938 = vrot.lane.b32.xlu0 %v5770, 15
    %v5939 = vpop.permute.xlu0 %5938
    %5940 = vrot.lane.b32.xlu0 %v5759, 15
    %v5941 = vpop.permute.xlu0 %5940
    %5942 = vrot.lane.b32.xlu0 %v5763, 15
    %v5943 = vpop.permute.xlu0 %5942
    %5944 = vrot.lane.b32.xlu0 %v5767, 15
    %v5945 = vpop.permute.xlu0 %5944
    %5946 = vrot.lane.b32.xlu0 %v5771, 15
    %v5947 = vpop.permute.xlu0 %5946
    %v5948 = vsel %vm147, %v5933, %v5941
    %v5949 = vsel %vm147, %v5935, %v5943
    %v5950 = vsel %vm147, %v5937, %v5945
    %v5951 = vsel %vm147, %v5939, %v5947
    %v5952 = vsel %vm147, %v5925, %v5933
    %v5953 = vsel %vm147, %v5927, %v5935
    %v5954 = vsel %vm147, %v5929, %v5937
    %v5955 = vsel %vm147, %v5931, %v5939
    %v5956 = vsel %vm147, %v5917, %v5925
    %v5957 = vsel %vm147, %v5919, %v5927
    %v5958 = vsel %vm147, %v5921, %v5929
    %v5959 = vsel %vm147, %v5923, %v5931
    %v5960 = vsel %vm147, %v5941, %v5917
    %v5961 = vsel %vm147, %v5943, %v5919
    %v5962 = vsel %vm147, %v5945, %v5921
    %v5963 = vsel %vm147, %v5947, %v5923
    %v5964 = vmul.f32 %v5960, %v152
    %v5965 = vmul.f32 %v5956, %v153
    %v5966 = vmul.f32 %v5952, %v154
    %v5967 = vmul.f32 %v5948, %v155
    %v5968 = vmul.f32 %v5961, %v152
    %v5969 = vmul.f32 %v5957, %v153
    %v5970 = vmul.f32 %v5953, %v154
    %v5971 = vmul.f32 %v5949, %v155
    %v5972 = vmul.f32 %v5962, %v152
    %v5973 = vmul.f32 %v5958, %v153
    %v5974 = vmul.f32 %v5954, %v154
    %v5975 = vmul.f32 %v5950, %v155
    %v5976 = vmul.f32 %v5963, %v152
    %v5977 = vmul.f32 %v5959, %v153
    %v5978 = vmul.f32 %v5955, %v154
    %v5979 = vmul.f32 %v5951, %v155
    %v5980 = vpack.c.bf16 %v5965, %v5964
    %v5981 = vpack.c.bf16 %v5967, %v5966
    %v5982 = vpack.c.bf16 %v5969, %v5968
    %v5983 = vpack.c.bf16 %v5971, %v5970
    %v5984 = vpack.c.bf16 %v5973, %v5972
    %v5985 = vpack.c.bf16 %v5975, %v5974
    %v5986 = vpack.c.bf16 %v5977, %v5976
    %v5987 = vpack.c.bf16 %v5979, %v5978
    %5988 = vrot.lane.b32.xlu0 %v5756, 1
    %v5989 = vpop.permute.xlu0 %5988
    %5990 = vrot.lane.b32.xlu0 %v5760, 1
    %v5991 = vpop.permute.xlu0 %5990
    %5992 = vrot.lane.b32.xlu0 %v5764, 1
    %v5993 = vpop.permute.xlu0 %5992
    %5994 = vrot.lane.b32.xlu0 %v5768, 1
    %v5995 = vpop.permute.xlu0 %5994
    %5996 = vrot.lane.b32.xlu0 %v5757, 1
    %v5997 = vpop.permute.xlu0 %5996
    %5998 = vrot.lane.b32.xlu0 %v5761, 1
    %v5999 = vpop.permute.xlu0 %5998
    %6000 = vrot.lane.b32.xlu0 %v5765, 1
    %v6001 = vpop.permute.xlu0 %6000
    %6002 = vrot.lane.b32.xlu0 %v5769, 1
    %v6003 = vpop.permute.xlu0 %6002
    %6004 = vrot.lane.b32.xlu0 %v5758, 1
    %v6005 = vpop.permute.xlu0 %6004
    %6006 = vrot.lane.b32.xlu0 %v5762, 1
    %v6007 = vpop.permute.xlu0 %6006
    %6008 = vrot.lane.b32.xlu0 %v5766, 1
    %v6009 = vpop.permute.xlu0 %6008
    %6010 = vrot.lane.b32.xlu0 %v5770, 1
    %v6011 = vpop.permute.xlu0 %6010
    %6012 = vrot.lane.b32.xlu0 %v5759, 1
    %v6013 = vpop.permute.xlu0 %6012
    %6014 = vrot.lane.b32.xlu0 %v5763, 1
    %v6015 = vpop.permute.xlu0 %6014
    %6016 = vrot.lane.b32.xlu0 %v5767, 1
    %v6017 = vpop.permute.xlu0 %6016
    %6018 = vrot.lane.b32.xlu0 %v5771, 1
    %v6019 = vpop.permute.xlu0 %6018
    %v6020 = vsel %vm170, %v6005, %v6013
    %v6021 = vsel %vm170, %v6007, %v6015
    %v6022 = vsel %vm170, %v6009, %v6017
    %v6023 = vsel %vm170, %v6011, %v6019
    %v6024 = vsel %vm170, %v5997, %v6005
    %v6025 = vsel %vm170, %v5999, %v6007
    %v6026 = vsel %vm170, %v6001, %v6009
    %v6027 = vsel %vm170, %v6003, %v6011
    %v6028 = vsel %vm170, %v5989, %v5997
    %v6029 = vsel %vm170, %v5991, %v5999
    %v6030 = vsel %vm170, %v5993, %v6001
    %v6031 = vsel %vm170, %v5995, %v6003
    %v6032 = vsel %vm170, %v6013, %v5989
    %v6033 = vsel %vm170, %v6015, %v5991
    %v6034 = vsel %vm170, %v6017, %v5993
    %v6035 = vsel %vm170, %v6019, %v5995
    %v6036 = vmul.f32 %v6032, %v175
    %v6037 = vmul.f32 %v6028, %v176
    %v6038 = vmul.f32 %v6024, %v177
    %v6039 = vmul.f32 %v6020, %v178
    %v6040 = vmul.f32 %v6033, %v175
    %v6041 = vmul.f32 %v6029, %v176
    %v6042 = vmul.f32 %v6025, %v177
    %v6043 = vmul.f32 %v6021, %v178
    %v6044 = vmul.f32 %v6034, %v175
    %v6045 = vmul.f32 %v6030, %v176
    %v6046 = vmul.f32 %v6026, %v177
    %v6047 = vmul.f32 %v6022, %v178
    %v6048 = vmul.f32 %v6035, %v175
    %v6049 = vmul.f32 %v6031, %v176
    %v6050 = vmul.f32 %v6027, %v177
    %v6051 = vmul.f32 %v6023, %v178
    %v6052 = vpack.c.bf16 %v6037, %v6036
    %v6053 = vpack.c.bf16 %v6039, %v6038
    %v6054 = vpack.c.bf16 %v6041, %v6040
    %v6055 = vpack.c.bf16 %v6043, %v6042
    %v6056 = vpack.c.bf16 %v6045, %v6044
    %v6057 = vpack.c.bf16 %v6047, %v6046
    %v6058 = vpack.c.bf16 %v6049, %v6048
    %v6059 = vpack.c.bf16 %v6051, %v6050
    %v6060 = vpack.c.bf16 %v5757, %v5756
    %v6061 = vpack.c.bf16 %v5759, %v5758
    %v6062 = vpack.c.bf16 %v5761, %v5760
    %v6063 = vpack.c.bf16 %v5763, %v5762
    %v6064 = vpack.c.bf16 %v5765, %v5764
    %v6065 = vpack.c.bf16 %v5767, %v5766
    %v6066 = vpack.c.bf16 %v5769, %v5768
    %v6067 = vpack.c.bf16 %v5771, %v5770
    %6068 = vrot.lane.b32.xlu0 %v5756, 127
    %v6069 = vpop.permute.xlu0 %6068
    %6070 = vrot.lane.b32.xlu0 %v5760, 127
    %v6071 = vpop.permute.xlu0 %6070
    %6072 = vrot.lane.b32.xlu0 %v5764, 127
    %v6073 = vpop.permute.xlu0 %6072
    %6074 = vrot.lane.b32.xlu0 %v5768, 127
    %v6075 = vpop.permute.xlu0 %6074
    %6076 = vrot.lane.b32.xlu0 %v5757, 127
    %v6077 = vpop.permute.xlu0 %6076
    %6078 = vrot.lane.b32.xlu0 %v5761, 127
    %v6079 = vpop.permute.xlu0 %6078
    %6080 = vrot.lane.b32.xlu0 %v5765, 127
    %v6081 = vpop.permute.xlu0 %6080
    %6082 = vrot.lane.b32.xlu0 %v5769, 127
    %v6083 = vpop.permute.xlu0 %6082
    %6084 = vrot.lane.b32.xlu0 %v5758, 127
    %v6085 = vpop.permute.xlu0 %6084
    %6086 = vrot.lane.b32.xlu0 %v5762, 127
    %v6087 = vpop.permute.xlu0 %6086
    %6088 = vrot.lane.b32.xlu0 %v5766, 127
    %v6089 = vpop.permute.xlu0 %6088
    %6090 = vrot.lane.b32.xlu0 %v5770, 127
    %v6091 = vpop.permute.xlu0 %6090
    %6092 = vrot.lane.b32.xlu0 %v5759, 127
    %v6093 = vpop.permute.xlu0 %6092
    %6094 = vrot.lane.b32.xlu0 %v5763, 127
    %v6095 = vpop.permute.xlu0 %6094
    %6096 = vrot.lane.b32.xlu0 %v5767, 127
    %v6097 = vpop.permute.xlu0 %6096
    %6098 = vrot.lane.b32.xlu0 %v5771, 127
    %v6099 = vpop.permute.xlu0 %6098
    %v6100 = vsel %vm195, %v6085, %v6093
    %v6101 = vsel %vm195, %v6087, %v6095
    %v6102 = vsel %vm195, %v6089, %v6097
    %v6103 = vsel %vm195, %v6091, %v6099
    %v6104 = vsel %vm195, %v6077, %v6085
    %v6105 = vsel %vm195, %v6079, %v6087
    %v6106 = vsel %vm195, %v6081, %v6089
    %v6107 = vsel %vm195, %v6083, %v6091
    %v6108 = vsel %vm195, %v6069, %v6077
    %v6109 = vsel %vm195, %v6071, %v6079
    %v6110 = vsel %vm195, %v6073, %v6081
    %v6111 = vsel %vm195, %v6075, %v6083
    %v6112 = vsel %vm195, %v6093, %v6069
    %v6113 = vsel %vm195, %v6095, %v6071
    %v6114 = vsel %vm195, %v6097, %v6073
    %v6115 = vsel %vm195, %v6099, %v6075
    %v6116 = vmul.f32 %v6108, %v200
    %v6117 = vmul.f32 %v6104, %v201
    %v6118 = vmul.f32 %v6100, %v202
    %v6119 = vmul.f32 %v6112, %v203
    %v6120 = vmul.f32 %v6109, %v200
    %v6121 = vmul.f32 %v6105, %v201
    %v6122 = vmul.f32 %v6101, %v202
    %v6123 = vmul.f32 %v6113, %v203
    %v6124 = vmul.f32 %v6110, %v200
    %v6125 = vmul.f32 %v6106, %v201
    %v6126 = vmul.f32 %v6102, %v202
    %v6127 = vmul.f32 %v6114, %v203
    %v6128 = vmul.f32 %v6111, %v200
    %v6129 = vmul.f32 %v6107, %v201
    %v6130 = vmul.f32 %v6103, %v202
    %v6131 = vmul.f32 %v6115, %v203
    %v6132 = vpack.c.bf16 %v6117, %v6116
    %v6133 = vpack.c.bf16 %v6119, %v6118
    %v6134 = vpack.c.bf16 %v6121, %v6120
    %v6135 = vpack.c.bf16 %v6123, %v6122
    %v6136 = vpack.c.bf16 %v6125, %v6124
    %v6137 = vpack.c.bf16 %v6127, %v6126
    %v6138 = vpack.c.bf16 %v6129, %v6128
    %v6139 = vpack.c.bf16 %v6131, %v6130
    %6140 = vrot.lane.b32.xlu0 %v5756, 113
    %v6141 = vpop.permute.xlu0 %6140
    %6142 = vrot.lane.b32.xlu0 %v5760, 113
    %v6143 = vpop.permute.xlu0 %6142
    %6144 = vrot.lane.b32.xlu0 %v5764, 113
    %v6145 = vpop.permute.xlu0 %6144
    %6146 = vrot.lane.b32.xlu0 %v5768, 113
    %v6147 = vpop.permute.xlu0 %6146
    %6148 = vrot.lane.b32.xlu0 %v5757, 113
    %v6149 = vpop.permute.xlu0 %6148
    %6150 = vrot.lane.b32.xlu0 %v5761, 113
    %v6151 = vpop.permute.xlu0 %6150
    %6152 = vrot.lane.b32.xlu0 %v5765, 113
    %v6153 = vpop.permute.xlu0 %6152
    %6154 = vrot.lane.b32.xlu0 %v5769, 113
    %v6155 = vpop.permute.xlu0 %6154
    %6156 = vrot.lane.b32.xlu0 %v5758, 113
    %v6157 = vpop.permute.xlu0 %6156
    %6158 = vrot.lane.b32.xlu0 %v5762, 113
    %v6159 = vpop.permute.xlu0 %6158
    %6160 = vrot.lane.b32.xlu0 %v5766, 113
    %v6161 = vpop.permute.xlu0 %6160
    %6162 = vrot.lane.b32.xlu0 %v5770, 113
    %v6163 = vpop.permute.xlu0 %6162
    %6164 = vrot.lane.b32.xlu0 %v5759, 113
    %v6165 = vpop.permute.xlu0 %6164
    %6166 = vrot.lane.b32.xlu0 %v5763, 113
    %v6167 = vpop.permute.xlu0 %6166
    %6168 = vrot.lane.b32.xlu0 %v5767, 113
    %v6169 = vpop.permute.xlu0 %6168
    %6170 = vrot.lane.b32.xlu0 %v5771, 113
    %v6171 = vpop.permute.xlu0 %6170
    %v6172 = vsel %vm218, %v6157, %v6165
    %v6173 = vsel %vm218, %v6159, %v6167
    %v6174 = vsel %vm218, %v6161, %v6169
    %v6175 = vsel %vm218, %v6163, %v6171
    %v6176 = vsel %vm218, %v6149, %v6157
    %v6177 = vsel %vm218, %v6151, %v6159
    %v6178 = vsel %vm218, %v6153, %v6161
    %v6179 = vsel %vm218, %v6155, %v6163
    %v6180 = vsel %vm218, %v6141, %v6149
    %v6181 = vsel %vm218, %v6143, %v6151
    %v6182 = vsel %vm218, %v6145, %v6153
    %v6183 = vsel %vm218, %v6147, %v6155
    %v6184 = vsel %vm218, %v6165, %v6141
    %v6185 = vsel %vm218, %v6167, %v6143
    %v6186 = vsel %vm218, %v6169, %v6145
    %v6187 = vsel %vm218, %v6171, %v6147
    %v6188 = vmul.f32 %v6180, %v223
    %v6189 = vmul.f32 %v6176, %v224
    %v6190 = vmul.f32 %v6172, %v225
    %v6191 = vmul.f32 %v6184, %v226
    %v6192 = vmul.f32 %v6181, %v223
    %v6193 = vmul.f32 %v6177, %v224
    %v6194 = vmul.f32 %v6173, %v225
    %v6195 = vmul.f32 %v6185, %v226
    %v6196 = vmul.f32 %v6182, %v223
    %v6197 = vmul.f32 %v6178, %v224
    %v6198 = vmul.f32 %v6174, %v225
    %v6199 = vmul.f32 %v6186, %v226
    %v6200 = vmul.f32 %v6183, %v223
    %v6201 = vmul.f32 %v6179, %v224
    %v6202 = vmul.f32 %v6175, %v225
    %v6203 = vmul.f32 %v6187, %v226
    %v6204 = vpack.c.bf16 %v6189, %v6188
    %v6205 = vpack.c.bf16 %v6191, %v6190
    %v6206 = vpack.c.bf16 %v6193, %v6192
    %v6207 = vpack.c.bf16 %v6195, %v6194
    %v6208 = vpack.c.bf16 %v6197, %v6196
    %v6209 = vpack.c.bf16 %v6199, %v6198
    %v6210 = vpack.c.bf16 %v6201, %v6200
    %v6211 = vpack.c.bf16 %v6203, %v6202
    %6212 = vrot.lane.b32.xlu0 %v5756, 112
    %v6213 = vpop.permute.xlu0 %6212
    %6214 = vrot.lane.b32.xlu0 %v5760, 112
    %v6215 = vpop.permute.xlu0 %6214
    %6216 = vrot.lane.b32.xlu0 %v5764, 112
    %v6217 = vpop.permute.xlu0 %6216
    %6218 = vrot.lane.b32.xlu0 %v5768, 112
    %v6219 = vpop.permute.xlu0 %6218
    %6220 = vrot.lane.b32.xlu0 %v5757, 112
    %v6221 = vpop.permute.xlu0 %6220
    %6222 = vrot.lane.b32.xlu0 %v5761, 112
    %v6223 = vpop.permute.xlu0 %6222
    %6224 = vrot.lane.b32.xlu0 %v5765, 112
    %v6225 = vpop.permute.xlu0 %6224
    %6226 = vrot.lane.b32.xlu0 %v5769, 112
    %v6227 = vpop.permute.xlu0 %6226
    %6228 = vrot.lane.b32.xlu0 %v5758, 112
    %v6229 = vpop.permute.xlu0 %6228
    %6230 = vrot.lane.b32.xlu0 %v5762, 112
    %v6231 = vpop.permute.xlu0 %6230
    %6232 = vrot.lane.b32.xlu0 %v5766, 112
    %v6233 = vpop.permute.xlu0 %6232
    %6234 = vrot.lane.b32.xlu0 %v5770, 112
    %v6235 = vpop.permute.xlu0 %6234
    %6236 = vrot.lane.b32.xlu0 %v5759, 112
    %v6237 = vpop.permute.xlu0 %6236
    %6238 = vrot.lane.b32.xlu0 %v5763, 112
    %v6239 = vpop.permute.xlu0 %6238
    %6240 = vrot.lane.b32.xlu0 %v5767, 112
    %v6241 = vpop.permute.xlu0 %6240
    %6242 = vrot.lane.b32.xlu0 %v5771, 112
    %v6243 = vpop.permute.xlu0 %6242
    %v6244 = vsel %vm241, %v6229, %v6237
    %v6245 = vsel %vm241, %v6231, %v6239
    %v6246 = vsel %vm241, %v6233, %v6241
    %v6247 = vsel %vm241, %v6235, %v6243
    %v6248 = vsel %vm241, %v6221, %v6229
    %v6249 = vsel %vm241, %v6223, %v6231
    %v6250 = vsel %vm241, %v6225, %v6233
    %v6251 = vsel %vm241, %v6227, %v6235
    %v6252 = vsel %vm241, %v6213, %v6221
    %v6253 = vsel %vm241, %v6215, %v6223
    %v6254 = vsel %vm241, %v6217, %v6225
    %v6255 = vsel %vm241, %v6219, %v6227
    %v6256 = vsel %vm241, %v6237, %v6213
    %v6257 = vsel %vm241, %v6239, %v6215
    %v6258 = vsel %vm241, %v6241, %v6217
    %v6259 = vsel %vm241, %v6243, %v6219
    %v6260 = vmul.f32 %v6252, %v246
    %v6261 = vmul.f32 %v6248, %v247
    %v6262 = vmul.f32 %v6244, %v248
    %v6263 = vmul.f32 %v6256, %v249
    %v6264 = vmul.f32 %v6253, %v246
    %v6265 = vmul.f32 %v6249, %v247
    %v6266 = vmul.f32 %v6245, %v248
    %v6267 = vmul.f32 %v6257, %v249
    %v6268 = vmul.f32 %v6254, %v246
    %v6269 = vmul.f32 %v6250, %v247
    %v6270 = vmul.f32 %v6246, %v248
    %v6271 = vmul.f32 %v6258, %v249
    %v6272 = vmul.f32 %v6255, %v246
    %v6273 = vmul.f32 %v6251, %v247
    %v6274 = vmul.f32 %v6247, %v248
    %v6275 = vmul.f32 %v6259, %v249
    %v6276 = vpack.c.bf16 %v6261, %v6260
    %v6277 = vpack.c.bf16 %v6263, %v6262
    %v6278 = vpack.c.bf16 %v6265, %v6264
    %v6279 = vpack.c.bf16 %v6267, %v6266
    %v6280 = vpack.c.bf16 %v6269, %v6268
    %v6281 = vpack.c.bf16 %v6271, %v6270
    %v6282 = vpack.c.bf16 %v6273, %v6272
    %v6283 = vpack.c.bf16 %v6275, %v6274
    %6284 = vrot.lane.b32.xlu0 %v5756, 111
    %v6285 = vpop.permute.xlu0 %6284
    %6286 = vrot.lane.b32.xlu0 %v5760, 111
    %v6287 = vpop.permute.xlu0 %6286
    %6288 = vrot.lane.b32.xlu0 %v5764, 111
    %v6289 = vpop.permute.xlu0 %6288
    %6290 = vrot.lane.b32.xlu0 %v5768, 111
    %v6291 = vpop.permute.xlu0 %6290
    %6292 = vrot.lane.b32.xlu0 %v5757, 111
    %v6293 = vpop.permute.xlu0 %6292
    %6294 = vrot.lane.b32.xlu0 %v5761, 111
    %v6295 = vpop.permute.xlu0 %6294
    %6296 = vrot.lane.b32.xlu0 %v5765, 111
    %v6297 = vpop.permute.xlu0 %6296
    %6298 = vrot.lane.b32.xlu0 %v5769, 111
    %v6299 = vpop.permute.xlu0 %6298
    %6300 = vrot.lane.b32.xlu0 %v5758, 111
    %v6301 = vpop.permute.xlu0 %6300
    %6302 = vrot.lane.b32.xlu0 %v5762, 111
    %v6303 = vpop.permute.xlu0 %6302
    %6304 = vrot.lane.b32.xlu0 %v5766, 111
    %v6305 = vpop.permute.xlu0 %6304
    %6306 = vrot.lane.b32.xlu0 %v5770, 111
    %v6307 = vpop.permute.xlu0 %6306
    %6308 = vrot.lane.b32.xlu0 %v5759, 111
    %v6309 = vpop.permute.xlu0 %6308
    %6310 = vrot.lane.b32.xlu0 %v5763, 111
    %v6311 = vpop.permute.xlu0 %6310
    %6312 = vrot.lane.b32.xlu0 %v5767, 111
    %v6313 = vpop.permute.xlu0 %6312
    %6314 = vrot.lane.b32.xlu0 %v5771, 111
    %v6315 = vpop.permute.xlu0 %6314
    %v6316 = vsel %vm264, %v6301, %v6309
    %v6317 = vsel %vm264, %v6303, %v6311
    %v6318 = vsel %vm264, %v6305, %v6313
    %v6319 = vsel %vm264, %v6307, %v6315
    %v6320 = vsel %vm264, %v6293, %v6301
    %v6321 = vsel %vm264, %v6295, %v6303
    %v6322 = vsel %vm264, %v6297, %v6305
    %v6323 = vsel %vm264, %v6299, %v6307
    %v6324 = vsel %vm264, %v6285, %v6293
    %v6325 = vsel %vm264, %v6287, %v6295
    %v6326 = vsel %vm264, %v6289, %v6297
    %v6327 = vsel %vm264, %v6291, %v6299
    %v6328 = vsel %vm264, %v6309, %v6285
    %v6329 = vsel %vm264, %v6311, %v6287
    %v6330 = vsel %vm264, %v6313, %v6289
    %v6331 = vsel %vm264, %v6315, %v6291
    %v6332 = vmul.f32 %v6324, %v269
    %v6333 = vmul.f32 %v6320, %v270
    %v6334 = vmul.f32 %v6316, %v271
    %v6335 = vmul.f32 %v6328, %v272
    %v6336 = vmul.f32 %v6325, %v269
    %v6337 = vmul.f32 %v6321, %v270
    %v6338 = vmul.f32 %v6317, %v271
    %v6339 = vmul.f32 %v6329, %v272
    %v6340 = vmul.f32 %v6326, %v269
    %v6341 = vmul.f32 %v6322, %v270
    %v6342 = vmul.f32 %v6318, %v271
    %v6343 = vmul.f32 %v6330, %v272
    %v6344 = vmul.f32 %v6327, %v269
    %v6345 = vmul.f32 %v6323, %v270
    %v6346 = vmul.f32 %v6319, %v271
    %v6347 = vmul.f32 %v6331, %v272
    %v6348 = vpack.c.bf16 %v6333, %v6332
    %v6349 = vpack.c.bf16 %v6335, %v6334
    %v6350 = vpack.c.bf16 %v6337, %v6336
    %v6351 = vpack.c.bf16 %v6339, %v6338
    %v6352 = vpack.c.bf16 %v6341, %v6340
    %v6353 = vpack.c.bf16 %v6343, %v6342
    %v6354 = vpack.c.bf16 %v6345, %v6344
    %v6355 = vpack.c.bf16 %v6347, %v6346
    %v6364 = vunpack.c.l.b16 %v5836
    %v6365 = vunpack.c.h.b16 %v5836
    %v6366 = vunpack.c.l.b16 %v5837
    %v6367 = vunpack.c.h.b16 %v5837
    %v6368 = vunpack.c.l.b16 %v5838
    %v6369 = vunpack.c.h.b16 %v5838
    %v6370 = vunpack.c.l.b16 %v5839
    %v6371 = vunpack.c.h.b16 %v5839
    %v6372 = vunpack.c.l.b16 %v5840
    %v6373 = vunpack.c.h.b16 %v5840
    %v6374 = vunpack.c.l.b16 %v5841
    %v6375 = vunpack.c.h.b16 %v5841
    %v6376 = vunpack.c.l.b16 %v5842
    %v6377 = vunpack.c.h.b16 %v5842
    %v6378 = vunpack.c.l.b16 %v5843
    %v6379 = vunpack.c.h.b16 %v5843
    %v6380 = vpack.c.b16 %v6368, %v6364
    %v6381 = vpack.c.b16 %v6369, %v6365
    %v6382 = vpack.c.b16 %v6370, %v6366
    %v6383 = vpack.c.b16 %v6371, %v6367
    %v6384 = vpack.c.b16 %v6376, %v6372
    %v6385 = vpack.c.b16 %v6377, %v6373
    %v6386 = vpack.c.b16 %v6378, %v6374
    %v6387 = vpack.c.b16 %v6379, %v6375
    %v6404 = vunpack.c.l.b16 %v5908
    %v6405 = vunpack.c.h.b16 %v5908
    %v6406 = vunpack.c.l.b16 %v5909
    %v6407 = vunpack.c.h.b16 %v5909
    %v6408 = vunpack.c.l.b16 %v5910
    %v6409 = vunpack.c.h.b16 %v5910
    %v6410 = vunpack.c.l.b16 %v5911
    %v6411 = vunpack.c.h.b16 %v5911
    %v6412 = vunpack.c.l.b16 %v5912
    %v6413 = vunpack.c.h.b16 %v5912
    %v6414 = vunpack.c.l.b16 %v5913
    %v6415 = vunpack.c.h.b16 %v5913
    %v6416 = vunpack.c.l.b16 %v5914
    %v6417 = vunpack.c.h.b16 %v5914
    %v6418 = vunpack.c.l.b16 %v5915
    %v6419 = vunpack.c.h.b16 %v5915
    %v6420 = vpack.c.b16 %v6408, %v6404
    %v6421 = vpack.c.b16 %v6409, %v6405
    %v6422 = vpack.c.b16 %v6410, %v6406
    %v6423 = vpack.c.b16 %v6411, %v6407
    %v6424 = vpack.c.b16 %v6416, %v6412
    %v6425 = vpack.c.b16 %v6417, %v6413
    %v6426 = vpack.c.b16 %v6418, %v6414
    %v6427 = vpack.c.b16 %v6419, %v6415
    %v6444 = vunpack.c.l.b16 %v5980
    %v6445 = vunpack.c.h.b16 %v5980
    %v6446 = vunpack.c.l.b16 %v5981
    %v6447 = vunpack.c.h.b16 %v5981
    %v6448 = vunpack.c.l.b16 %v5982
    %v6449 = vunpack.c.h.b16 %v5982
    %v6450 = vunpack.c.l.b16 %v5983
    %v6451 = vunpack.c.h.b16 %v5983
    %v6452 = vunpack.c.l.b16 %v5984
    %v6453 = vunpack.c.h.b16 %v5984
    %v6454 = vunpack.c.l.b16 %v5985
    %v6455 = vunpack.c.h.b16 %v5985
    %v6456 = vunpack.c.l.b16 %v5986
    %v6457 = vunpack.c.h.b16 %v5986
    %v6458 = vunpack.c.l.b16 %v5987
    %v6459 = vunpack.c.h.b16 %v5987
    %v6460 = vpack.c.b16 %v6448, %v6444
    %v6461 = vpack.c.b16 %v6449, %v6445
    %v6462 = vpack.c.b16 %v6450, %v6446
    %v6463 = vpack.c.b16 %v6451, %v6447
    %v6464 = vpack.c.b16 %v6456, %v6452
    %v6465 = vpack.c.b16 %v6457, %v6453
    %v6466 = vpack.c.b16 %v6458, %v6454
    %v6467 = vpack.c.b16 %v6459, %v6455
    %v6484 = vunpack.c.l.b16 %v6052
    %v6485 = vunpack.c.h.b16 %v6052
    %v6486 = vunpack.c.l.b16 %v6053
    %v6487 = vunpack.c.h.b16 %v6053
    %v6488 = vunpack.c.l.b16 %v6054
    %v6489 = vunpack.c.h.b16 %v6054
    %v6490 = vunpack.c.l.b16 %v6055
    %v6491 = vunpack.c.h.b16 %v6055
    %v6492 = vunpack.c.l.b16 %v6056
    %v6493 = vunpack.c.h.b16 %v6056
    %v6494 = vunpack.c.l.b16 %v6057
    %v6495 = vunpack.c.h.b16 %v6057
    %v6496 = vunpack.c.l.b16 %v6058
    %v6497 = vunpack.c.h.b16 %v6058
    %v6498 = vunpack.c.l.b16 %v6059
    %v6499 = vunpack.c.h.b16 %v6059
    %v6500 = vpack.c.b16 %v6488, %v6484
    %v6501 = vpack.c.b16 %v6489, %v6485
    %v6502 = vpack.c.b16 %v6490, %v6486
    %v6503 = vpack.c.b16 %v6491, %v6487
    %v6504 = vpack.c.b16 %v6496, %v6492
    %v6505 = vpack.c.b16 %v6497, %v6493
    %v6506 = vpack.c.b16 %v6498, %v6494
    %v6507 = vpack.c.b16 %v6499, %v6495
    %v6524 = vunpack.c.l.b16 %v6060
    %v6525 = vunpack.c.h.b16 %v6060
    %v6526 = vunpack.c.l.b16 %v6061
    %v6527 = vunpack.c.h.b16 %v6061
    %v6528 = vunpack.c.l.b16 %v6062
    %v6529 = vunpack.c.h.b16 %v6062
    %v6530 = vunpack.c.l.b16 %v6063
    %v6531 = vunpack.c.h.b16 %v6063
    %v6532 = vunpack.c.l.b16 %v6064
    %v6533 = vunpack.c.h.b16 %v6064
    %v6534 = vunpack.c.l.b16 %v6065
    %v6535 = vunpack.c.h.b16 %v6065
    %v6536 = vunpack.c.l.b16 %v6066
    %v6537 = vunpack.c.h.b16 %v6066
    %v6538 = vunpack.c.l.b16 %v6067
    %v6539 = vunpack.c.h.b16 %v6067
    %v6540 = vpack.c.b16 %v6528, %v6524
    %v6541 = vpack.c.b16 %v6529, %v6525
    %v6542 = vpack.c.b16 %v6530, %v6526
    %v6543 = vpack.c.b16 %v6531, %v6527
    %v6544 = vpack.c.b16 %v6536, %v6532
    %v6545 = vpack.c.b16 %v6537, %v6533
    %v6546 = vpack.c.b16 %v6538, %v6534
    %v6547 = vpack.c.b16 %v6539, %v6535
    %v6564 = vunpack.c.l.b16 %v6132
    %v6565 = vunpack.c.h.b16 %v6132
    %v6566 = vunpack.c.l.b16 %v6133
    %v6567 = vunpack.c.h.b16 %v6133
    %v6568 = vunpack.c.l.b16 %v6134
    %v6569 = vunpack.c.h.b16 %v6134
    %v6570 = vunpack.c.l.b16 %v6135
    %v6571 = vunpack.c.h.b16 %v6135
    %v6572 = vunpack.c.l.b16 %v6136
    %v6573 = vunpack.c.h.b16 %v6136
    %v6574 = vunpack.c.l.b16 %v6137
    %v6575 = vunpack.c.h.b16 %v6137
    %v6576 = vunpack.c.l.b16 %v6138
    %v6577 = vunpack.c.h.b16 %v6138
    %v6578 = vunpack.c.l.b16 %v6139
    %v6579 = vunpack.c.h.b16 %v6139
    %v6580 = vpack.c.b16 %v6568, %v6564
    %v6581 = vpack.c.b16 %v6569, %v6565
    %v6582 = vpack.c.b16 %v6570, %v6566
    %v6583 = vpack.c.b16 %v6571, %v6567
    %v6584 = vpack.c.b16 %v6576, %v6572
    %v6585 = vpack.c.b16 %v6577, %v6573
    %v6586 = vpack.c.b16 %v6578, %v6574
    %v6587 = vpack.c.b16 %v6579, %v6575
    %v6604 = vunpack.c.l.b16 %v6204
    %v6605 = vunpack.c.h.b16 %v6204
    %v6606 = vunpack.c.l.b16 %v6205
    %v6607 = vunpack.c.h.b16 %v6205
    %v6608 = vunpack.c.l.b16 %v6206
    %v6609 = vunpack.c.h.b16 %v6206
    %v6610 = vunpack.c.l.b16 %v6207
    %v6611 = vunpack.c.h.b16 %v6207
    %v6612 = vunpack.c.l.b16 %v6208
    %v6613 = vunpack.c.h.b16 %v6208
    %v6614 = vunpack.c.l.b16 %v6209
    %v6615 = vunpack.c.h.b16 %v6209
    %v6616 = vunpack.c.l.b16 %v6210
    %v6617 = vunpack.c.h.b16 %v6210
    %v6618 = vunpack.c.l.b16 %v6211
    %v6619 = vunpack.c.h.b16 %v6211
    %v6620 = vpack.c.b16 %v6608, %v6604
    %v6621 = vpack.c.b16 %v6609, %v6605
    %v6622 = vpack.c.b16 %v6610, %v6606
    %v6623 = vpack.c.b16 %v6611, %v6607
    %v6624 = vpack.c.b16 %v6616, %v6612
    %v6625 = vpack.c.b16 %v6617, %v6613
    %v6626 = vpack.c.b16 %v6618, %v6614
    %v6627 = vpack.c.b16 %v6619, %v6615
    %v6644 = vunpack.c.l.b16 %v6276
    %v6645 = vunpack.c.h.b16 %v6276
    %v6646 = vunpack.c.l.b16 %v6277
    %v6647 = vunpack.c.h.b16 %v6277
    %v6648 = vunpack.c.l.b16 %v6278
    %v6649 = vunpack.c.h.b16 %v6278
    %v6650 = vunpack.c.l.b16 %v6279
    %v6651 = vunpack.c.h.b16 %v6279
    %v6652 = vunpack.c.l.b16 %v6280
    %v6653 = vunpack.c.h.b16 %v6280
    %v6654 = vunpack.c.l.b16 %v6281
    %v6655 = vunpack.c.h.b16 %v6281
    %v6656 = vunpack.c.l.b16 %v6282
    %v6657 = vunpack.c.h.b16 %v6282
    %v6658 = vunpack.c.l.b16 %v6283
    %v6659 = vunpack.c.h.b16 %v6283
    %v6660 = vpack.c.b16 %v6648, %v6644
    %v6661 = vpack.c.b16 %v6649, %v6645
    %v6662 = vpack.c.b16 %v6650, %v6646
    %v6663 = vpack.c.b16 %v6651, %v6647
    %v6664 = vpack.c.b16 %v6656, %v6652
    %v6665 = vpack.c.b16 %v6657, %v6653
    %v6666 = vpack.c.b16 %v6658, %v6654
    %v6667 = vpack.c.b16 %v6659, %v6655
    %v6684 = vunpack.c.l.b16 %v6348
    %v6685 = vunpack.c.h.b16 %v6348
    %v6686 = vunpack.c.l.b16 %v6349
    %v6687 = vunpack.c.h.b16 %v6349
    %v6688 = vunpack.c.l.b16 %v6350
    %v6689 = vunpack.c.h.b16 %v6350
    %v6690 = vunpack.c.l.b16 %v6351
    %v6691 = vunpack.c.h.b16 %v6351
    %v6692 = vunpack.c.l.b16 %v6352
    %v6693 = vunpack.c.h.b16 %v6352
    %v6694 = vunpack.c.l.b16 %v6353
    %v6695 = vunpack.c.h.b16 %v6353
    %v6696 = vunpack.c.l.b16 %v6354
    %v6697 = vunpack.c.h.b16 %v6354
    %v6698 = vunpack.c.l.b16 %v6355
    %v6699 = vunpack.c.h.b16 %v6355
    %v6700 = vpack.c.b16 %v6688, %v6684
    %v6701 = vpack.c.b16 %v6689, %v6685
    %v6702 = vpack.c.b16 %v6690, %v6686
    %v6703 = vpack.c.b16 %v6691, %v6687
    %v6704 = vpack.c.b16 %v6696, %v6692
    %v6705 = vpack.c.b16 %v6697, %v6693
    %v6706 = vpack.c.b16 %v6698, %v6694
    %v6707 = vpack.c.b16 %v6699, %v6695
    %v6716 = vld [vmem:[%s22] sm:$0xff]
    %v6717 = vld [vmem:[%s22 + $0x8] sm:$0xf]
    %v6718 = vld [vmem:[%s23] sm:$0xff]
    %6720 = vset.pattern.permute.xlu0 0
    %6721 = vperm.xlu0 %6720, %v6718
    %v6722 = vpop.permute.xlu0 %6721
    %v6726 = vunpack.c.l.b16 %v6716
    %v6727 = vunpack.c.h.b16 %v6716
    %v6728 = vunpack.c.l.b16 %v6717
    %v6729 = vpack.c.b16 %v6726, %v6726
    %v6730 = vpack.c.b16 %v6727, %v6727
    %v6731 = vpack.c.b16 %v6728, %v6728
    %v6735 = vsel %vm646, %v6731, 0
    %6737 = vmatpush.bf16.msra.mxu0 %v6504
    %6738 = vmatpush.bf16.msra.mxu0 %v6500
    %6739 = vmatpush.bf16.msra.mxu0 %v6464
    %6740 = vmatpush.bf16.msra.mxu0 %v6460
    %6741 = vmatpush.bf16.msra.mxu0 %v6424
    %6742 = vmatpush.bf16.msra.mxu0 %v6420
    %6743 = vmatpush.bf16.msra.mxu0 %v6384
    %6744 = vmatpush.bf16.msra.mxu0 %v6380
    %6745 = vmatmul.bf16.gmra.mxu0 %v6729
    %v6746 = vpop.f32.mrf.mxu0
    %v6747 = vadd.f32 %v6722, %v6746
    %v6748 = vpop.f32.mrf.mxu0
    %6749 = vdwg.mxu0
    %6750 = vmatpush.bf16.msra.mxu0 %v6664
    %6751 = vmatpush.bf16.msra.mxu0 %v6660
    %6752 = vmatpush.bf16.msra.mxu0 %v6624
    %6753 = vmatpush.bf16.msra.mxu0 %v6620
    %6754 = vmatpush.bf16.msra.mxu0 %v6584
    %6755 = vmatpush.bf16.msra.mxu0 %v6580
    %6756 = vmatpush.bf16.msra.mxu0 %v6544
    %6757 = vmatpush.bf16.msra.mxu0 %v6540
    %6758 = vmatmul.bf16.gmra.mxu0 %v6730
    %v6759 = vpop.f32.mrf.mxu0
    %v6760 = vadd.f32 %v6747, %v6759
    %v6761 = vpop.f32.mrf.mxu0
    %6762 = vdwg.mxu0
    %6763 = vmatpush.bf16.msra.mxu0 0
    %6764 = vmatpush.bf16.msra.mxu0 0
    %6765 = vmatpush.bf16.msra.mxu0 0
    %6766 = vmatpush.bf16.msra.mxu0 0
    %6767 = vmatpush.bf16.msra.mxu0 0
    %6768 = vmatpush.bf16.msra.mxu0 0
    %6769 = vmatpush.bf16.msra.mxu0 %v6704
    %6770 = vmatpush.bf16.msra.mxu0 %v6700
    %6771 = vmatmul.bf16.gmra.mxu0 %v6735
    %v6772 = vpop.f32.mrf.mxu0
    %v6773 = vadd.f32 %v6760, %v6772
    %v6774 = vpop.f32.mrf.mxu0
    %6775 = vdwg.mxu0
    %6776 = vmatpush.bf16.msra.mxu0 %v6505
    %6777 = vmatpush.bf16.msra.mxu0 %v6501
    %6778 = vmatpush.bf16.msra.mxu0 %v6465
    %6779 = vmatpush.bf16.msra.mxu0 %v6461
    %6780 = vmatpush.bf16.msra.mxu0 %v6425
    %6781 = vmatpush.bf16.msra.mxu0 %v6421
    %6782 = vmatpush.bf16.msra.mxu0 %v6385
    %6783 = vmatpush.bf16.msra.mxu0 %v6381
    %6784 = vmatmul.bf16.gmra.mxu0 %v6729
    %v6785 = vpop.f32.mrf.mxu0
    %v6786 = vadd.f32 %v6722, %v6785
    %v6787 = vpop.f32.mrf.mxu0
    %6788 = vdwg.mxu0
    %6789 = vmatpush.bf16.msra.mxu0 %v6665
    %6790 = vmatpush.bf16.msra.mxu0 %v6661
    %6791 = vmatpush.bf16.msra.mxu0 %v6625
    %6792 = vmatpush.bf16.msra.mxu0 %v6621
    %6793 = vmatpush.bf16.msra.mxu0 %v6585
    %6794 = vmatpush.bf16.msra.mxu0 %v6581
    %6795 = vmatpush.bf16.msra.mxu0 %v6545
    %6796 = vmatpush.bf16.msra.mxu0 %v6541
    %6797 = vmatmul.bf16.gmra.mxu0 %v6730
    %v6798 = vpop.f32.mrf.mxu0
    %v6799 = vadd.f32 %v6786, %v6798
    %v6800 = vpop.f32.mrf.mxu0
    %6801 = vdwg.mxu0
    %6802 = vmatpush.bf16.msra.mxu0 0
    %6803 = vmatpush.bf16.msra.mxu0 0
    %6804 = vmatpush.bf16.msra.mxu0 0
    %6805 = vmatpush.bf16.msra.mxu0 0
    %6806 = vmatpush.bf16.msra.mxu0 0
    %6807 = vmatpush.bf16.msra.mxu0 0
    %6808 = vmatpush.bf16.msra.mxu0 %v6705
    %6809 = vmatpush.bf16.msra.mxu0 %v6701
    %6810 = vmatmul.bf16.gmra.mxu0 %v6735
    %v6811 = vpop.f32.mrf.mxu0
    %v6812 = vadd.f32 %v6799, %v6811
    %v6813 = vpop.f32.mrf.mxu0
    %6814 = vdwg.mxu0
    %6815 = vmatpush.bf16.msra.mxu0 %v6506
    %6816 = vmatpush.bf16.msra.mxu0 %v6502
    %6817 = vmatpush.bf16.msra.mxu0 %v6466
    %6818 = vmatpush.bf16.msra.mxu0 %v6462
    %6819 = vmatpush.bf16.msra.mxu0 %v6426
    %6820 = vmatpush.bf16.msra.mxu0 %v6422
    %6821 = vmatpush.bf16.msra.mxu0 %v6386
    %6822 = vmatpush.bf16.msra.mxu0 %v6382
    %6823 = vmatmul.bf16.gmra.mxu0 %v6729
    %v6824 = vpop.f32.mrf.mxu0
    %v6825 = vadd.f32 %v6722, %v6824
    %v6826 = vpop.f32.mrf.mxu0
    %6827 = vdwg.mxu0
    %6828 = vmatpush.bf16.msra.mxu0 %v6666
    %6829 = vmatpush.bf16.msra.mxu0 %v6662
    %6830 = vmatpush.bf16.msra.mxu0 %v6626
    %6831 = vmatpush.bf16.msra.mxu0 %v6622
    %6832 = vmatpush.bf16.msra.mxu0 %v6586
    %6833 = vmatpush.bf16.msra.mxu0 %v6582
    %6834 = vmatpush.bf16.msra.mxu0 %v6546
    %6835 = vmatpush.bf16.msra.mxu0 %v6542
    %6836 = vmatmul.bf16.gmra.mxu0 %v6730
    %v6837 = vpop.f32.mrf.mxu0
    %v6838 = vadd.f32 %v6825, %v6837
    %v6839 = vpop.f32.mrf.mxu0
    %6840 = vdwg.mxu0
    %6841 = vmatpush.bf16.msra.mxu0 0
    %6842 = vmatpush.bf16.msra.mxu0 0
    %6843 = vmatpush.bf16.msra.mxu0 0
    %6844 = vmatpush.bf16.msra.mxu0 0
    %6845 = vmatpush.bf16.msra.mxu0 0
    %6846 = vmatpush.bf16.msra.mxu0 0
    %6847 = vmatpush.bf16.msra.mxu0 %v6706
    %6848 = vmatpush.bf16.msra.mxu0 %v6702
    %6849 = vmatmul.bf16.gmra.mxu0 %v6735
    %v6850 = vpop.f32.mrf.mxu0
    %v6851 = vadd.f32 %v6838, %v6850
    %v6852 = vpop.f32.mrf.mxu0
    %6853 = vdwg.mxu0
    %6854 = vmatpush.bf16.msra.mxu0 %v6507
    %6855 = vmatpush.bf16.msra.mxu0 %v6503
    %6856 = vmatpush.bf16.msra.mxu0 %v6467
    %6857 = vmatpush.bf16.msra.mxu0 %v6463
    %6858 = vmatpush.bf16.msra.mxu0 %v6427
    %6859 = vmatpush.bf16.msra.mxu0 %v6423
    %6860 = vmatpush.bf16.msra.mxu0 %v6387
    %6861 = vmatpush.bf16.msra.mxu0 %v6383
    %6862 = vmatmul.bf16.gmra.mxu0 %v6729
    %v6863 = vpop.f32.mrf.mxu0
    %v6864 = vadd.f32 %v6722, %v6863
    %v6865 = vpop.f32.mrf.mxu0
    %6866 = vdwg.mxu0
    %6867 = vmatpush.bf16.msra.mxu0 %v6667
    %6868 = vmatpush.bf16.msra.mxu0 %v6663
    %6869 = vmatpush.bf16.msra.mxu0 %v6627
    %6870 = vmatpush.bf16.msra.mxu0 %v6623
    %6871 = vmatpush.bf16.msra.mxu0 %v6587
    %6872 = vmatpush.bf16.msra.mxu0 %v6583
    %6873 = vmatpush.bf16.msra.mxu0 %v6547
    %6874 = vmatpush.bf16.msra.mxu0 %v6543
    %6875 = vmatmul.bf16.gmra.mxu0 %v6730
    %v6876 = vpop.f32.mrf.mxu0
    %v6877 = vadd.f32 %v6864, %v6876
    %v6878 = vpop.f32.mrf.mxu0
    %6879 = vdwg.mxu0
    %6880 = vmatpush.bf16.msra.mxu0 0
    %6881 = vmatpush.bf16.msra.mxu0 0
    %6882 = vmatpush.bf16.msra.mxu0 0
    %6883 = vmatpush.bf16.msra.mxu0 0
    %6884 = vmatpush.bf16.msra.mxu0 0
    %6885 = vmatpush.bf16.msra.mxu0 0
    %6886 = vmatpush.bf16.msra.mxu0 %v6707
    %6887 = vmatpush.bf16.msra.mxu0 %v6703
    %6888 = vmatmul.bf16.gmra.mxu0 %v6735
    %v6889 = vpop.f32.mrf.mxu0
    %v6890 = vadd.f32 %v6877, %v6889
    %v6891 = vpop.f32.mrf.mxu0
    %6892 = vdwg.mxu0
    %6893 = vst [vmem:[#allocation2] sm:$0xff] %v6773
    %6894 = vst [vmem:[#allocation2 + $0x8] sm:$0xff] %v6812
    %6895 = vst [vmem:[#allocation2 + $0x10] sm:$0xff] %v6851
    %6896 = vst [vmem:[#allocation2 + $0x18] sm:$0xff] %v6890
    // Predicated region
    $region98: #{tpu_custom_call.1} parent=1 // pred_check
      _
    $region99: #{tpu_custom_call.1} parent=1 // pred_check_branch
      %6898 = sbr.rel (0) target = $region101
    $region100: #{tpu_custom_call.1} parent=1 // pred_region
      %6900 = vsyncadd [#allocation3], 0
      %s6902 = sshll.u32 [#allocation2], 4
      %s6903 = int_to_ptr.vmem [resolvable:$true] %s6902
      %s6904 = sshll.u32 %s24, 4
      %s6905 = int_to_ptr.hbm [resolvable:$true] %s6904
      %6907 = dma.vmem_to_hbm [thread:$0]  %s6903, 512, %s6905, [#allocation3]
    $region101: #{tpu_custom_call.1} parent=1 // pred_fallthru
      _
    // Predicated region
    $region102: #{tpu_custom_call.1} parent=1 // pred_check
      _
    $region103: #{tpu_custom_call.1} parent=1 // pred_check_branch
      %6909 = sbr.rel (0) target = $region105
    $region104: #{tpu_custom_call.1} parent=1 // pred_region
      %6911 = dma.done [#allocation3], 512
    $region105: #{tpu_custom_call.1} parent=1 // pred_fallthru
      _
    %6912 = vsyncpa [#allocation3], 1

</llo_original>
